<compile_context>
chip_gen: v5e
topology: v5e:2x2
jax: 0.10.0
libtpu: 0.0.40
codegen_flags: <defaults>
</compile_context>

<pallas_src>
import functools

import numpy as np
import jax
import jax.numpy as jnp
from jax.experimental import pallas as pl
from jax.experimental.pallas import tpu as pltpu

_BN_EPS = 1e-5
_ROW_BLK = 4          # conv1 output rows computed per matmul block
_LANE = 128


def _round_up(v, m):
    return ((v + m - 1) // m) * m


# ------------------------------- Pallas kernel -------------------------------

def _middlecut_kernel(x_ref, w1_ref, w2_ref, m3_ref, a1_ref, a2_ref, a3_ref,
                      o_ref, y1_ref, y2_ref, *,
                      grid_h, row_stride, row_blk, h2, w2n):
    """One batch block (B samples) per grid step; all intermediates on-chip.

    x_ref:  (B, (H+2)^2)          zero-padded input, one dense row per sample
    w1_ref: (120, row_blk*RS)     conv1 row-block weight (BN mask folded in a1)
    w2_ref: (4*RS, h2*C)          conv2 per-output-row weight
    m3_ref: (h2*h2*C, 128)        conv3 (+bias-free) fused with 1/(H3*H3) pool
    a1/a2/a3_ref: (2, width)      per-lane [scale; shift] (BN + bias folds)
    o_ref:  (B, 128)              pooled output rows, C useful lanes
    y1_ref: (B, H*RS)   scratch   padded conv1 activation grid (H x H rows)
    y2_ref: (B, h2*h2*C) scratch  conv2 activation
    """
    f32 = jnp.float32
    B = x_ref.shape[0]
    wp = grid_h + 2                       # padded input width (20)
    k1 = (row_blk + 2) * wp               # conv1 block contraction length
    n_blk = (grid_h - 2) // row_blk       # number of conv1 row blocks

    # Top/bottom padding rows of the conv1 grid (conv2's padding=1 ring).
    zrow = jnp.zeros((B, row_stride), f32)
    y1_ref[:, 0:row_stride] = zrow
    y1_ref[:, (grid_h - 1) * row_stride: grid_h * row_stride] = zrow

    # ---- conv1 + BN + ReLU (+ boundary zeroing via zeroed scale/shift) ------
    s1 = a1_ref[0:1, :]
    b1 = a1_ref[1:2, :]
    for blk in range(n_blk):
        i0 = 1 + row_blk * blk            # first grid row of this block
        xs = x_ref[:, i0 * wp: i0 * wp + k1].astype(f32)
        acc = jnp.dot(xs, w1_ref[...], preferred_element_type=f32)
        y1_ref[:, i0 * row_stride: (i0 + row_blk) * row_stride] = (
            jnp.maximum(acc * s1 + b1, 0.0))

    # ---- conv2 + BN + ReLU, one MXU matmul per output row -------------------
    s2 = a2_ref[0:1, :]
    b2 = a2_ref[1:2, :]
    for h in range(h2):
        g = y1_ref[:, 2 * h * row_stride: (2 * h + 4) * row_stride]
        acc = jnp.dot(g, w2_ref[...], preferred_element_type=f32)
        y2_ref[:, h * w2n: (h + 1) * w2n] = jnp.maximum(acc * s2 + b2, 0.0)

    # ---- conv3 fused with global average pool: one big-K matmul -------------
    s3 = a3_ref[0:1, :]
    b3 = a3_ref[1:2, :]
    pooled = jnp.dot(y2_ref[...], m3_ref[...], preferred_element_type=f32)
    o_ref[...] = (pooled * s3 + b3).astype(o_ref.dtype)


# ------------------------- offline weight packing -----------------------------

def pack_params(params, height, width):
    """Fold convs/BN/pool into the dense lane-aligned matrices the kernel uses.

    Pure (numpy) preprocessing done once, outside jit.
    """
    assert height == width and height % 2 == 0
    H = height
    C = int(params['s1'].shape[0])
    H1 = H - 2                    # conv1 output size (16)
    H2 = H // 2 - 1               # conv2 output size (8)
    H3 = (H2 - 2) // 2 + 1        # conv3 output size (4)
    assert H1 % _ROW_BLK == 0 and H2 >= 2
    WP = H + 2                    # zero-padded input width (20)
    RS = _round_up(H * C, _LANE)  # lane stride of one conv1-grid row (384)
    OUTP = _round_up(C, _LANE)    # padded output width (128)

    w1np = np.asarray(params['w1'], np.float32)      # (3,3,1,C)
    w2np = np.asarray(params['w2'], np.float32)      # (4,4,C,C)
    w3np = np.asarray(params['w3'], np.float32)      # (4,4,C,C)
    s1np, sh1np = np.asarray(params['s1']), np.asarray(params['sh1'])
    s2np, sh2np = np.asarray(params['s2']), np.asarray(params['sh2'])
    s3np, sh3np = np.asarray(params['s3']), np.asarray(params['sh3'])

    # conv1 row-block matrix: rows = (rel. padded-input row r, col s),
    # cols = (rel. output row i_rel, grid col j, channel c).
    w1blk = np.zeros(((_ROW_BLK + 2) * WP, _ROW_BLK * RS), np.float32)
    a1 = np.zeros((2, _ROW_BLK * RS), np.float32)
    for irel in range(_ROW_BLK):
        for j in range(1, H1 + 1):                       # valid grid cols
            col = irel * RS + j * C
            a1[0, col:col + C] = s1np
            a1[1, col:col + C] = sh1np
            for u in range(3):
                for v in range(3):
                    w1blk[(irel + u) * WP + (j + v), col:col + C] = w1np[u, v, 0]

    # conv2 per-output-row matrix: rows = (rel. grid row r, grid col j, c_in),
    # cols = (output col w, c_out).  Shared across the 8 output rows.
    w2row = np.zeros((4 * RS, H2 * C), np.float32)
    a2 = np.zeros((2, H2 * C), np.float32)
    for w in range(H2):
        a2[0, w * C:(w + 1) * C] = s2np
        a2[1, w * C:(w + 1) * C] = sh2np
        for r in range(4):
            for j in range(H):
                jj = j - 2 * w
                if 0 <= jj < 4:
                    w2row[r * RS + j * C: r * RS + (j + 1) * C,
                          w * C:(w + 1) * C] = w2np[r, jj]

    # conv3 + global average pool folded into one matrix (pool is linear).
    m3 = np.zeros((H2 * H2 * C, OUTP), np.float32)
    inv = 1.0 / float(H3 * H3)
    for oh in range(H3):
        for ow in range(H3):
            for i in range(4):
                for j in range(4):
                    hh = 2 * oh + i - 1
                    ww = 2 * ow + j - 1
                    if 0 <= hh < H2 and 0 <= ww < H2:
                        row = (hh * H2 + ww) * C
                        m3[row:row + C, :C] += w3np[i, j] * inv

    a3 = np.zeros((2, OUTP), np.float32)
    a3[0, :C] = s3np
    a3[1, :C] = sh3np

    return {
        'w1blk': jnp.asarray(w1blk), 'w2row': jnp.asarray(w2row),
        'm3': jnp.asarray(m3), 'a1': jnp.asarray(a1),
        'a2': jnp.asarray(a2), 'a3': jnp.asarray(a3),
    }


# -------------------------------- wrapper ------------------------------------

def middlecut_forward(packed, x_nchw, index=0, block_b=32):
    """MiddleCut.forward(x, index). x_nchw: (N, 1, H, W) float32 -> (N, C)."""
    # TODO(synk): residual `block` modules are user-supplied and undefined in
    # the provided source; with index=0 the block loop is a no-op.
    assert index == 0, "residual blocks not defined in provided source"

    n, cin, h, w = x_nchw.shape
    assert cin == 1 and h == w and h % 2 == 0
    H = h
    WP = H + 2
    H2 = H // 2 - 1
    RS = packed['w2row'].shape[0] // 4
    C = packed['a2'].shape[1] // H2
    OUTP = packed['a3'].shape[1]

    # Batch blocking: keep blocks a multiple of 8 and keep >= 2 grid steps
    # when the batch allows (v7x megacore).
    half8 = _round_up((n + 1) // 2, 8)
    bb = max(8, min(block_b, half8))
    n_pad = _round_up(n, bb)

    # One dense 400-lane row per sample (zero-padded spatially for conv1/conv2).
    x2d = x_nchw[:, 0].astype(jnp.float32)                     # (N, H, H)
    xpad = jnp.pad(x2d, ((0, n_pad - n), (1, 1), (1, 1)))      # (NP, H+2, H+2)
    xflat = xpad.reshape(n_pad, WP * WP)                       # (NP, 400)

    kernel = functools.partial(
        _middlecut_kernel, grid_h=H, row_stride=RS, row_blk=_ROW_BLK,
        h2=H2, w2n=H2 * C)

    out = pl.pallas_call(
        kernel,
        out_shape=jax.ShapeDtypeStruct((n_pad, OUTP), jnp.float32),
        grid=(n_pad // bb,),
        in_specs=[
            pl.BlockSpec((bb, WP * WP), lambda i: (i, 0)),
            pl.BlockSpec(packed['w1blk'].shape, lambda i: (0, 0)),
            pl.BlockSpec(packed['w2row'].shape, lambda i: (0, 0)),
            pl.BlockSpec(packed['m3'].shape, lambda i: (0, 0)),
            pl.BlockSpec(packed['a1'].shape, lambda i: (0, 0)),
            pl.BlockSpec(packed['a2'].shape, lambda i: (0, 0)),
            pl.BlockSpec(packed['a3'].shape, lambda i: (0, 0)),
        ],
        out_specs=pl.BlockSpec((bb, OUTP), lambda i: (i, 0)),
        scratch_shapes=[
            pltpu.VMEM((bb, H * RS), jnp.float32),        # padded conv1 grid
            pltpu.VMEM((bb, H2 * H2 * C), jnp.float32),   # conv2 activation
        ],
        compiler_params=pltpu.CompilerParams(
            dimension_semantics=("parallel",)),
    )(xflat, packed['w1blk'], packed['w2row'], packed['m3'],
      packed['a1'], packed['a2'], packed['a3'])

    return out[:n, :C]


# ------------------------------ parameters ------------------------------------

def _fold_bn(gamma, beta, mean, var, conv_bias):
    """Fold eval-mode BatchNorm + conv bias into per-channel scale/shift."""
    scale = gamma / jnp.sqrt(var + _BN_EPS)
    shift = scale * conv_bias + beta - scale * mean
    return scale, shift


def init_params(key, channels):
    """Deterministic synthetic parameters mirroring MNISTModule.downsample."""
    ks = jax.random.split(key, 16)

    def conv_w(k, kh, kw, cin, cout):
        bound = 1.0 / jnp.sqrt(kh * kw * cin)
        return jax.random.uniform(k, (kh, kw, cin, cout), jnp.float32,
                                  -bound, bound)

    def conv_b(k, fan_in, cout):
        bound = 1.0 / jnp.sqrt(fan_in)
        return jax.random.uniform(k, (cout,), jnp.float32, -bound, bound)

    def bn(kg, kb, km, kv, c):
        gamma = 1.0 + 0.1 * jax.random.normal(kg, (c,), jnp.float32)
        beta = 0.1 * jax.random.normal(kb, (c,), jnp.float32)
        mean = 0.1 * jax.random.normal(km, (c,), jnp.float32)
        var = jax.random.uniform(kv, (c,), jnp.float32, 0.5, 1.5)
        return gamma, beta, mean, var

    c = channels
    p = {}
    p['w1'] = conv_w(ks[0], 3, 3, 1, c)
    b1 = conv_b(ks[1], 9, c)
    g1, be1, m1, v1 = bn(ks[2], ks[3], ks[4], ks[5], c)
    p['s1'], p['sh1'] = _fold_bn(g1, be1, m1, v1, b1)
    p['w2'] = conv_w(ks[6], 4, 4, c, c)
    b2 = conv_b(ks[7], 16 * c, c)
    g2, be2, m2, v2 = bn(ks[8], ks[9], ks[10], ks[11], c)
    p['s2'], p['sh2'] = _fold_bn(g2, be2, m2, v2, b2)
    p['w3'] = conv_w(ks[12], 4, 4, c, c)
    b3 = conv_b(ks[13], 16 * c, c)
    p['s3'] = jnp.ones((c,), jnp.float32)
    p['sh3'] = b3
    return p


# ------------------------------- reference ------------------------------------

def _ref_forward(params, x_nchw):
    """Pure-JAX (XLA conv) reference for correctness checking."""
    def conv(x, w, stride, padding):
        return jax.lax.conv_general_dilated(
            x, w, (stride, stride), [(padding, padding)] * 2,
            dimension_numbers=('NHWC', 'HWIO', 'NHWC'))

    x = jnp.transpose(x_nchw, (0, 2, 3, 1))
    y = conv(x, params['w1'], 1, 0) * params['s1'] + params['sh1']
    y = jnp.maximum(y, 0.0)
    y = conv(y, params['w2'], 2, 1) * params['s2'] + params['sh2']
    y = jnp.maximum(y, 0.0)
    y = conv(y, params['w3'], 2, 1) * params['s3'] + params['sh3']
    return jnp.mean(y, axis=(1, 2))


# --------------------------------- main ----------------------------------------

if __name__ == "__main__":
    key = jax.random.PRNGKey(0)
    k_params, k_x = jax.random.split(key)

    CHANNELS = 16
    N, H, W = 64, 18, 18          # (N,1,18,18) -> 16x16 -> 8x8 -> 4x4 -> pool
    x = jax.random.normal(k_x, (N, 1, H, W), jnp.float32)

    params = init_params(k_params, CHANNELS)
    packed = pack_params(params, H, W)        # offline weight folding (numpy)

    fwd = jax.jit(middlecut_forward)          # B=32 -> 2 grid steps for N=64
    out = fwd(packed, x)
    out = jax.block_until_ready(out)
    assert out.shape == (N, CHANNELS), out.shape

    ref = _ref_forward(params, x)
    assert jnp.allclose(out, ref, atol=5e-4, rtol=5e-4), (
        float(jnp.max(jnp.abs(out - ref))))

    print("KERNEL_OK")
</pallas_src>

<mosaic_0001>
module attributes {stable_mosaic.version = 11 : i64} {
  func.func @_middlecut_kernel(%arg0: i32, %arg1: memref<32x400xf32, #tpu.memory_space<vmem>>, %arg2: memref<120x1536xf32, #tpu.memory_space<vmem>>, %arg3: memref<1536x128xf32, #tpu.memory_space<vmem>>, %arg4: memref<1024x128xf32, #tpu.memory_space<vmem>>, %arg5: memref<2x1536xf32, #tpu.memory_space<vmem>>, %arg6: memref<2x128xf32, #tpu.memory_space<vmem>>, %arg7: memref<2x128xf32, #tpu.memory_space<vmem>>, %arg8: memref<32x128xf32, #tpu.memory_space<vmem>>, %arg9: memref<32x6912xf32, #tpu.memory_space<vmem>>, %arg10: memref<32x1024xf32, #tpu.memory_space<vmem>>) attributes {dimension_semantics = [#tpu.dimension_semantics<parallel>], iteration_bounds = array<i64: 2>, scalar_prefetch = 0 : i64, scratch_operands = 2 : i64, tpu.core_type = #tpu.core_type<tc>, window_params = [{transform_indices = @transform_0, window_bounds = array<i64: 32, 400>}, {pipeline_mode = #tpu.pipeline_mode<synchronous>, transform_indices = @transform_1, window_bounds = array<i64: 120, 1536>}, {pipeline_mode = #tpu.pipeline_mode<synchronous>, transform_indices = @transform_2, window_bounds = array<i64: 1536, 128>}, {pipeline_mode = #tpu.pipeline_mode<synchronous>, transform_indices = @transform_3, window_bounds = array<i64: 1024, 128>}, {pipeline_mode = #tpu.pipeline_mode<synchronous>, transform_indices = @transform_4, window_bounds = array<i64: 2, 1536>}, {pipeline_mode = #tpu.pipeline_mode<synchronous>, transform_indices = @transform_5, window_bounds = array<i64: 2, 128>}, {pipeline_mode = #tpu.pipeline_mode<synchronous>, transform_indices = @transform_6, window_bounds = array<i64: 2, 128>}, {transform_indices = @transform_7, window_bounds = array<i64: 32, 128>}]} {
    %cst = arith.constant 0.000000e+00 : f32
    %0 = vector.broadcast %cst : f32 to vector<32x384xf32>
    %c0 = arith.constant 0 : index
    %c0_0 = arith.constant 0 : index
    %1 = vector.load %arg9[%c0, %c0_0] : memref<32x6912xf32, #tpu.memory_space<vmem>>, vector<32x384xf32>
    tpu.vector_store %arg9[%c0, %c0_0], %0 {strides = array<i32>} : memref<32x6912xf32, #tpu.memory_space<vmem>>, vector<32x384xf32>,
    %c0_1 = arith.constant 0 : index
    %c6528 = arith.constant 6528 : index
    %2 = vector.load %arg9[%c0_1, %c6528] : memref<32x6912xf32, #tpu.memory_space<vmem>>, vector<32x384xf32>
    tpu.vector_store %arg9[%c0_1, %c6528], %0 {strides = array<i32>} : memref<32x6912xf32, #tpu.memory_space<vmem>>, vector<32x384xf32>,
    %c0_2 = arith.constant 0 : index
    %c0_3 = arith.constant 0 : index
    %3 = vector.load %arg5[%c0_2, %c0_3] : memref<2x1536xf32, #tpu.memory_space<vmem>>, vector<1x1536xf32>
    %c1 = arith.constant 1 : index
    %c0_4 = arith.constant 0 : index
    %4 = vector.load %arg5[%c1, %c0_4] : memref<2x1536xf32, #tpu.memory_space<vmem>>, vector<1x1536xf32>
    %c0_5 = arith.constant 0 : index
    %c20 = arith.constant 20 : index
    %5 = vector.load %arg1[%c0_5, %c20] : memref<32x400xf32, #tpu.memory_space<vmem>>, vector<32x120xf32>
    %c0_6 = arith.constant 0 : index
    %c0_7 = arith.constant 0 : index
    %6 = vector.load %arg2[%c0_6, %c0_7] : memref<120x1536xf32, #tpu.memory_space<vmem>>, vector<120x1536xf32>
    %cst_8 = arith.constant dense<0.000000e+00> : vector<32x1536xf32>
    %7 = tpu.matmul %5, %6, %cst_8 {dimension_numbers = #tpu.dot_dimension_numbers<[1], [0], [0], [1], [0, 0, 1, 1], [], []>} : vector<32x120xf32>, vector<120x1536xf32>, vector<32x1536xf32> -> vector<32x1536xf32>
    %8 = vector.broadcast %3 : vector<1x1536xf32> to vector<32x1536xf32>
    %9 = arith.mulf %7, %8 : vector<32x1536xf32>
    %10 = vector.broadcast %4 : vector<1x1536xf32> to vector<32x1536xf32>
    %11 = arith.addf %9, %10 : vector<32x1536xf32>
    %cst_9 = arith.constant 0.000000e+00 : f32
    %12 = vector.broadcast %cst_9 : f32 to vector<32x1536xf32>
    %13 = arith.maximumf %11, %12 : vector<32x1536xf32>
    %c0_10 = arith.constant 0 : index
    %c384 = arith.constant 384 : index
    %14 = vector.load %arg9[%c0_10, %c384] : memref<32x6912xf32, #tpu.memory_space<vmem>>, vector<32x1536xf32>
    tpu.vector_store %arg9[%c0_10, %c384], %13 {strides = array<i32>} : memref<32x6912xf32, #tpu.memory_space<vmem>>, vector<32x1536xf32>,
    %c0_11 = arith.constant 0 : index
    %c100 = arith.constant 100 : index
    %15 = vector.load %arg1[%c0_11, %c100] : memref<32x400xf32, #tpu.memory_space<vmem>>, vector<32x120xf32>
    %c0_12 = arith.constant 0 : index
    %c0_13 = arith.constant 0 : index
    %16 = vector.load %arg2[%c0_12, %c0_13] : memref<120x1536xf32, #tpu.memory_space<vmem>>, vector<120x1536xf32>
    %cst_14 = arith.constant dense<0.000000e+00> : vector<32x1536xf32>
    %17 = tpu.matmul %15, %16, %cst_14 {dimension_numbers = #tpu.dot_dimension_numbers<[1], [0], [0], [1], [0, 0, 1, 1], [], []>} : vector<32x120xf32>, vector<120x1536xf32>, vector<32x1536xf32> -> vector<32x1536xf32>
    %18 = vector.broadcast %3 : vector<1x1536xf32> to vector<32x1536xf32>
    %19 = arith.mulf %17, %18 : vector<32x1536xf32>
    %20 = vector.broadcast %4 : vector<1x1536xf32> to vector<32x1536xf32>
    %21 = arith.addf %19, %20 : vector<32x1536xf32>
    %cst_15 = arith.constant 0.000000e+00 : f32
    %22 = vector.broadcast %cst_15 : f32 to vector<32x1536xf32>
    %23 = arith.maximumf %21, %22 : vector<32x1536xf32>
    %c0_16 = arith.constant 0 : index
    %c1920 = arith.constant 1920 : index
    %24 = vector.load %arg9[%c0_16, %c1920] : memref<32x6912xf32, #tpu.memory_space<vmem>>, vector<32x1536xf32>
    tpu.vector_store %arg9[%c0_16, %c1920], %23 {strides = array<i32>} : memref<32x6912xf32, #tpu.memory_space<vmem>>, vector<32x1536xf32>,
    %c0_17 = arith.constant 0 : index
    %c180 = arith.constant 180 : index
    %25 = vector.load %arg1[%c0_17, %c180] : memref<32x400xf32, #tpu.memory_space<vmem>>, vector<32x120xf32>
    %c0_18 = arith.constant 0 : index
    %c0_19 = arith.constant 0 : index
    %26 = vector.load %arg2[%c0_18, %c0_19] : memref<120x1536xf32, #tpu.memory_space<vmem>>, vector<120x1536xf32>
    %cst_20 = arith.constant dense<0.000000e+00> : vector<32x1536xf32>
    %27 = tpu.matmul %25, %26, %cst_20 {dimension_numbers = #tpu.dot_dimension_numbers<[1], [0], [0], [1], [0, 0, 1, 1], [], []>} : vector<32x120xf32>, vector<120x1536xf32>, vector<32x1536xf32> -> vector<32x1536xf32>
    %28 = vector.broadcast %3 : vector<1x1536xf32> to vector<32x1536xf32>
    %29 = arith.mulf %27, %28 : vector<32x1536xf32>
    %30 = vector.broadcast %4 : vector<1x1536xf32> to vector<32x1536xf32>
    %31 = arith.addf %29, %30 : vector<32x1536xf32>
    %cst_21 = arith.constant 0.000000e+00 : f32
    %32 = vector.broadcast %cst_21 : f32 to vector<32x1536xf32>
    %33 = arith.maximumf %31, %32 : vector<32x1536xf32>
    %c0_22 = arith.constant 0 : index
    %c3456 = arith.constant 3456 : index
    %34 = vector.load %arg9[%c0_22, %c3456] : memref<32x6912xf32, #tpu.memory_space<vmem>>, vector<32x1536xf32>
    tpu.vector_store %arg9[%c0_22, %c3456], %33 {strides = array<i32>} : memref<32x6912xf32, #tpu.memory_space<vmem>>, vector<32x1536xf32>,
    %c0_23 = arith.constant 0 : index
    %c260 = arith.constant 260 : index
    %35 = vector.load %arg1[%c0_23, %c260] : memref<32x400xf32, #tpu.memory_space<vmem>>, vector<32x120xf32>
    %c0_24 = arith.constant 0 : index
    %c0_25 = arith.constant 0 : index
    %36 = vector.load %arg2[%c0_24, %c0_25] : memref<120x1536xf32, #tpu.memory_space<vmem>>, vector<120x1536xf32>
    %cst_26 = arith.constant dense<0.000000e+00> : vector<32x1536xf32>
    %37 = tpu.matmul %35, %36, %cst_26 {dimension_numbers = #tpu.dot_dimension_numbers<[1], [0], [0], [1], [0, 0, 1, 1], [], []>} : vector<32x120xf32>, vector<120x1536xf32>, vector<32x1536xf32> -> vector<32x1536xf32>
    %38 = vector.broadcast %3 : vector<1x1536xf32> to vector<32x1536xf32>
    %39 = arith.mulf %37, %38 : vector<32x1536xf32>
    %40 = vector.broadcast %4 : vector<1x1536xf32> to vector<32x1536xf32>
    %41 = arith.addf %39, %40 : vector<32x1536xf32>
    %cst_27 = arith.constant 0.000000e+00 : f32
    %42 = vector.broadcast %cst_27 : f32 to vector<32x1536xf32>
    %43 = arith.maximumf %41, %42 : vector<32x1536xf32>
    %c0_28 = arith.constant 0 : index
    %c4992 = arith.constant 4992 : index
    %44 = vector.load %arg9[%c0_28, %c4992] : memref<32x6912xf32, #tpu.memory_space<vmem>>, vector<32x1536xf32>
    tpu.vector_store %arg9[%c0_28, %c4992], %43 {strides = array<i32>} : memref<32x6912xf32, #tpu.memory_space<vmem>>, vector<32x1536xf32>,
    %c0_29 = arith.constant 0 : index
    %c0_30 = arith.constant 0 : index
    %45 = vector.load %arg6[%c0_29, %c0_30] : memref<2x128xf32, #tpu.memory_space<vmem>>, vector<1x128xf32>
    %c1_31 = arith.constant 1 : index
    %c0_32 = arith.constant 0 : index
    %46 = vector.load %arg6[%c1_31, %c0_32] : memref<2x128xf32, #tpu.memory_space<vmem>>, vector<1x128xf32>
    %c0_33 = arith.constant 0 : index
    %c0_34 = arith.constant 0 : index
    %47 = vector.load %arg9[%c0_33, %c0_34] : memref<32x6912xf32, #tpu.memory_space<vmem>>, vector<32x1536xf32>
    %c0_35 = arith.constant 0 : index
    %c0_36 = arith.constant 0 : index
    %48 = vector.load %arg3[%c0_35, %c0_36] : memref<1536x128xf32, #tpu.memory_space<vmem>>, vector<1536x128xf32>
    %cst_37 = arith.constant dense<0.000000e+00> : vector<32x128xf32>
    %49 = tpu.matmul %47, %48, %cst_37 {dimension_numbers = #tpu.dot_dimension_numbers<[1], [0], [0], [1], [0, 0, 1, 1], [], []>} : vector<32x1536xf32>, vector<1536x128xf32>, vector<32x128xf32> -> vector<32x128xf32>
    %50 = vector.broadcast %45 : vector<1x128xf32> to vector<32x128xf32>
    %51 = arith.mulf %49, %50 : vector<32x128xf32>
    %52 = vector.broadcast %46 : vector<1x128xf32> to vector<32x128xf32>
    %53 = arith.addf %51, %52 : vector<32x128xf32>
    %cst_38 = arith.constant 0.000000e+00 : f32
    %54 = vector.broadcast %cst_38 : f32 to vector<32x128xf32>
    %55 = arith.maximumf %53, %54 : vector<32x128xf32>
    %c0_39 = arith.constant 0 : index
    %c0_40 = arith.constant 0 : index
    %56 = vector.load %arg10[%c0_39, %c0_40] : memref<32x1024xf32, #tpu.memory_space<vmem>>, vector<32x128xf32>
    tpu.vector_store %arg10[%c0_39, %c0_40], %55 {strides = array<i32>} : memref<32x1024xf32, #tpu.memory_space<vmem>>, vector<32x128xf32>,
    %c0_41 = arith.constant 0 : index
    %c768 = arith.constant 768 : index
    %57 = vector.load %arg9[%c0_41, %c768] : memref<32x6912xf32, #tpu.memory_space<vmem>>, vector<32x1536xf32>
    %c0_42 = arith.constant 0 : index
    %c0_43 = arith.constant 0 : index
    %58 = vector.load %arg3[%c0_42, %c0_43] : memref<1536x128xf32, #tpu.memory_space<vmem>>, vector<1536x128xf32>
    %cst_44 = arith.constant dense<0.000000e+00> : vector<32x128xf32>
    %59 = tpu.matmul %57, %58, %cst_44 {dimension_numbers = #tpu.dot_dimension_numbers<[1], [0], [0], [1], [0, 0, 1, 1], [], []>} : vector<32x1536xf32>, vector<1536x128xf32>, vector<32x128xf32> -> vector<32x128xf32>
    %60 = vector.broadcast %45 : vector<1x128xf32> to vector<32x128xf32>
    %61 = arith.mulf %59, %60 : vector<32x128xf32>
    %62 = vector.broadcast %46 : vector<1x128xf32> to vector<32x128xf32>
    %63 = arith.addf %61, %62 : vector<32x128xf32>
    %cst_45 = arith.constant 0.000000e+00 : f32
    %64 = vector.broadcast %cst_45 : f32 to vector<32x128xf32>
    %65 = arith.maximumf %63, %64 : vector<32x128xf32>
    %c0_46 = arith.constant 0 : index
    %c128 = arith.constant 128 : index
    %66 = vector.load %arg10[%c0_46, %c128] : memref<32x1024xf32, #tpu.memory_space<vmem>>, vector<32x128xf32>
    tpu.vector_store %arg10[%c0_46, %c128], %65 {strides = array<i32>} : memref<32x1024xf32, #tpu.memory_space<vmem>>, vector<32x128xf32>,
    %c0_47 = arith.constant 0 : index
    %c1536 = arith.constant 1536 : index
    %67 = vector.load %arg9[%c0_47, %c1536] : memref<32x6912xf32, #tpu.memory_space<vmem>>, vector<32x1536xf32>
    %c0_48 = arith.constant 0 : index
    %c0_49 = arith.constant 0 : index
    %68 = vector.load %arg3[%c0_48, %c0_49] : memref<1536x128xf32, #tpu.memory_space<vmem>>, vector<1536x128xf32>
    %cst_50 = arith.constant dense<0.000000e+00> : vector<32x128xf32>
    %69 = tpu.matmul %67, %68, %cst_50 {dimension_numbers = #tpu.dot_dimension_numbers<[1], [0], [0], [1], [0, 0, 1, 1], [], []>} : vector<32x1536xf32>, vector<1536x128xf32>, vector<32x128xf32> -> vector<32x128xf32>
    %70 = vector.broadcast %45 : vector<1x128xf32> to vector<32x128xf32>
    %71 = arith.mulf %69, %70 : vector<32x128xf32>
    %72 = vector.broadcast %46 : vector<1x128xf32> to vector<32x128xf32>
    %73 = arith.addf %71, %72 : vector<32x128xf32>
    %cst_51 = arith.constant 0.000000e+00 : f32
    %74 = vector.broadcast %cst_51 : f32 to vector<32x128xf32>
    %75 = arith.maximumf %73, %74 : vector<32x128xf32>
    %c0_52 = arith.constant 0 : index
    %c256 = arith.constant 256 : index
    %76 = vector.load %arg10[%c0_52, %c256] : memref<32x1024xf32, #tpu.memory_space<vmem>>, vector<32x128xf32>
    tpu.vector_store %arg10[%c0_52, %c256], %75 {strides = array<i32>} : memref<32x1024xf32, #tpu.memory_space<vmem>>, vector<32x128xf32>,
    %c0_53 = arith.constant 0 : index
    %c2304 = arith.constant 2304 : index
    %77 = vector.load %arg9[%c0_53, %c2304] : memref<32x6912xf32, #tpu.memory_space<vmem>>, vector<32x1536xf32>
    %c0_54 = arith.constant 0 : index
    %c0_55 = arith.constant 0 : index
    %78 = vector.load %arg3[%c0_54, %c0_55] : memref<1536x128xf32, #tpu.memory_space<vmem>>, vector<1536x128xf32>
    %cst_56 = arith.constant dense<0.000000e+00> : vector<32x128xf32>
    %79 = tpu.matmul %77, %78, %cst_56 {dimension_numbers = #tpu.dot_dimension_numbers<[1], [0], [0], [1], [0, 0, 1, 1], [], []>} : vector<32x1536xf32>, vector<1536x128xf32>, vector<32x128xf32> -> vector<32x128xf32>
    %80 = vector.broadcast %45 : vector<1x128xf32> to vector<32x128xf32>
    %81 = arith.mulf %79, %80 : vector<32x128xf32>
    %82 = vector.broadcast %46 : vector<1x128xf32> to vector<32x128xf32>
    %83 = arith.addf %81, %82 : vector<32x128xf32>
    %cst_57 = arith.constant 0.000000e+00 : f32
    %84 = vector.broadcast %cst_57 : f32 to vector<32x128xf32>
    %85 = arith.maximumf %83, %84 : vector<32x128xf32>
    %c0_58 = arith.constant 0 : index
    %c384_59 = arith.constant 384 : index
    %86 = vector.load %arg10[%c0_58, %c384_59] : memref<32x1024xf32, #tpu.memory_space<vmem>>, vector<32x128xf32>
    tpu.vector_store %arg10[%c0_58, %c384_59], %85 {strides = array<i32>} : memref<32x1024xf32, #tpu.memory_space<vmem>>, vector<32x128xf32>,
    %c0_60 = arith.constant 0 : index
    %c3072 = arith.constant 3072 : index
    %87 = vector.load %arg9[%c0_60, %c3072] : memref<32x6912xf32, #tpu.memory_space<vmem>>, vector<32x1536xf32>
    %c0_61 = arith.constant 0 : index
    %c0_62 = arith.constant 0 : index
    %88 = vector.load %arg3[%c0_61, %c0_62] : memref<1536x128xf32, #tpu.memory_space<vmem>>, vector<1536x128xf32>
    %cst_63 = arith.constant dense<0.000000e+00> : vector<32x128xf32>
    %89 = tpu.matmul %87, %88, %cst_63 {dimension_numbers = #tpu.dot_dimension_numbers<[1], [0], [0], [1], [0, 0, 1, 1], [], []>} : vector<32x1536xf32>, vector<1536x128xf32>, vector<32x128xf32> -> vector<32x128xf32>
    %90 = vector.broadcast %45 : vector<1x128xf32> to vector<32x128xf32>
    %91 = arith.mulf %89, %90 : vector<32x128xf32>
    %92 = vector.broadcast %46 : vector<1x128xf32> to vector<32x128xf32>
    %93 = arith.addf %91, %92 : vector<32x128xf32>
    %cst_64 = arith.constant 0.000000e+00 : f32
    %94 = vector.broadcast %cst_64 : f32 to vector<32x128xf32>
    %95 = arith.maximumf %93, %94 : vector<32x128xf32>
    %c0_65 = arith.constant 0 : index
    %c512 = arith.constant 512 : index
    %96 = vector.load %arg10[%c0_65, %c512] : memref<32x1024xf32, #tpu.memory_space<vmem>>, vector<32x128xf32>
    tpu.vector_store %arg10[%c0_65, %c512], %95 {strides = array<i32>} : memref<32x1024xf32, #tpu.memory_space<vmem>>, vector<32x128xf32>,
    %c0_66 = arith.constant 0 : index
    %c3840 = arith.constant 3840 : index
    %97 = vector.load %arg9[%c0_66, %c3840] : memref<32x6912xf32, #tpu.memory_space<vmem>>, vector<32x1536xf32>
    %c0_67 = arith.constant 0 : index
    %c0_68 = arith.constant 0 : index
    %98 = vector.load %arg3[%c0_67, %c0_68] : memref<1536x128xf32, #tpu.memory_space<vmem>>, vector<1536x128xf32>
    %cst_69 = arith.constant dense<0.000000e+00> : vector<32x128xf32>
    %99 = tpu.matmul %97, %98, %cst_69 {dimension_numbers = #tpu.dot_dimension_numbers<[1], [0], [0], [1], [0, 0, 1, 1], [], []>} : vector<32x1536xf32>, vector<1536x128xf32>, vector<32x128xf32> -> vector<32x128xf32>
    %100 = vector.broadcast %45 : vector<1x128xf32> to vector<32x128xf32>
    %101 = arith.mulf %99, %100 : vector<32x128xf32>
    %102 = vector.broadcast %46 : vector<1x128xf32> to vector<32x128xf32>
    %103 = arith.addf %101, %102 : vector<32x128xf32>
    %cst_70 = arith.constant 0.000000e+00 : f32
    %104 = vector.broadcast %cst_70 : f32 to vector<32x128xf32>
    %105 = arith.maximumf %103, %104 : vector<32x128xf32>
    %c0_71 = arith.constant 0 : index
    %c640 = arith.constant 640 : index
    %106 = vector.load %arg10[%c0_71, %c640] : memref<32x1024xf32, #tpu.memory_space<vmem>>, vector<32x128xf32>
    tpu.vector_store %arg10[%c0_71, %c640], %105 {strides = array<i32>} : memref<32x1024xf32, #tpu.memory_space<vmem>>, vector<32x128xf32>,
    %c0_72 = arith.constant 0 : index
    %c4608 = arith.constant 4608 : index
    %107 = vector.load %arg9[%c0_72, %c4608] : memref<32x6912xf32, #tpu.memory_space<vmem>>, vector<32x1536xf32>
    %c0_73 = arith.constant 0 : index
    %c0_74 = arith.constant 0 : index
    %108 = vector.load %arg3[%c0_73, %c0_74] : memref<1536x128xf32, #tpu.memory_space<vmem>>, vector<1536x128xf32>
    %cst_75 = arith.constant dense<0.000000e+00> : vector<32x128xf32>
    %109 = tpu.matmul %107, %108, %cst_75 {dimension_numbers = #tpu.dot_dimension_numbers<[1], [0], [0], [1], [0, 0, 1, 1], [], []>} : vector<32x1536xf32>, vector<1536x128xf32>, vector<32x128xf32> -> vector<32x128xf32>
    %110 = vector.broadcast %45 : vector<1x128xf32> to vector<32x128xf32>
    %111 = arith.mulf %109, %110 : vector<32x128xf32>
    %112 = vector.broadcast %46 : vector<1x128xf32> to vector<32x128xf32>
    %113 = arith.addf %111, %112 : vector<32x128xf32>
    %cst_76 = arith.constant 0.000000e+00 : f32
    %114 = vector.broadcast %cst_76 : f32 to vector<32x128xf32>
    %115 = arith.maximumf %113, %114 : vector<32x128xf32>
    %c0_77 = arith.constant 0 : index
    %c768_78 = arith.constant 768 : index
    %116 = vector.load %arg10[%c0_77, %c768_78] : memref<32x1024xf32, #tpu.memory_space<vmem>>, vector<32x128xf32>
    tpu.vector_store %arg10[%c0_77, %c768_78], %115 {strides = array<i32>} : memref<32x1024xf32, #tpu.memory_space<vmem>>, vector<32x128xf32>,
    %c0_79 = arith.constant 0 : index
    %c5376 = arith.constant 5376 : index
    %117 = vector.load %arg9[%c0_79, %c5376] : memref<32x6912xf32, #tpu.memory_space<vmem>>, vector<32x1536xf32>
    %c0_80 = arith.constant 0 : index
    %c0_81 = arith.constant 0 : index
    %118 = vector.load %arg3[%c0_80, %c0_81] : memref<1536x128xf32, #tpu.memory_space<vmem>>, vector<1536x128xf32>
    %cst_82 = arith.constant dense<0.000000e+00> : vector<32x128xf32>
    %119 = tpu.matmul %117, %118, %cst_82 {dimension_numbers = #tpu.dot_dimension_numbers<[1], [0], [0], [1], [0, 0, 1, 1], [], []>} : vector<32x1536xf32>, vector<1536x128xf32>, vector<32x128xf32> -> vector<32x128xf32>
    %120 = vector.broadcast %45 : vector<1x128xf32> to vector<32x128xf32>
    %121 = arith.mulf %119, %120 : vector<32x128xf32>
    %122 = vector.broadcast %46 : vector<1x128xf32> to vector<32x128xf32>
    %123 = arith.addf %121, %122 : vector<32x128xf32>
    %cst_83 = arith.constant 0.000000e+00 : f32
    %124 = vector.broadcast %cst_83 : f32 to vector<32x128xf32>
    %125 = arith.maximumf %123, %124 : vector<32x128xf32>
    %c0_84 = arith.constant 0 : index
    %c896 = arith.constant 896 : index
    %126 = vector.load %arg10[%c0_84, %c896] : memref<32x1024xf32, #tpu.memory_space<vmem>>, vector<32x128xf32>
    tpu.vector_store %arg10[%c0_84, %c896], %125 {strides = array<i32>} : memref<32x1024xf32, #tpu.memory_space<vmem>>, vector<32x128xf32>,
    %c0_85 = arith.constant 0 : index
    %c0_86 = arith.constant 0 : index
    %127 = vector.load %arg7[%c0_85, %c0_86] : memref<2x128xf32, #tpu.memory_space<vmem>>, vector<1x128xf32>
    %c1_87 = arith.constant 1 : index
    %c0_88 = arith.constant 0 : index
    %128 = vector.load %arg7[%c1_87, %c0_88] : memref<2x128xf32, #tpu.memory_space<vmem>>, vector<1x128xf32>
    %c0_89 = arith.constant 0 : index
    %c0_90 = arith.constant 0 : index
    %129 = vector.load %arg10[%c0_89, %c0_90] : memref<32x1024xf32, #tpu.memory_space<vmem>>, vector<32x1024xf32>
    %c0_91 = arith.constant 0 : index
    %c0_92 = arith.constant 0 : index
    %130 = vector.load %arg4[%c0_91, %c0_92] : memref<1024x128xf32, #tpu.memory_space<vmem>>, vector<1024x128xf32>
    %cst_93 = arith.constant dense<0.000000e+00> : vector<32x128xf32>
    %131 = tpu.matmul %129, %130, %cst_93 {dimension_numbers = #tpu.dot_dimension_numbers<[1], [0], [0], [1], [0, 0, 1, 1], [], []>} : vector<32x1024xf32>, vector<1024x128xf32>, vector<32x128xf32> -> vector<32x128xf32>
    %132 = vector.broadcast %127 : vector<1x128xf32> to vector<32x128xf32>
    %133 = arith.mulf %131, %132 : vector<32x128xf32>
    %134 = vector.broadcast %128 : vector<1x128xf32> to vector<32x128xf32>
    %135 = arith.addf %133, %134 : vector<32x128xf32>
    %c0_94 = arith.constant 0 : index
    %c0_95 = arith.constant 0 : index
    %136 = vector.load %arg8[%c0_94, %c0_95] : memref<32x128xf32, #tpu.memory_space<vmem>>, vector<32x128xf32>
    tpu.vector_store %arg8[%c0_94, %c0_95], %135 {strides = array<i32>} : memref<32x128xf32, #tpu.memory_space<vmem>>, vector<32x128xf32>,
    return
  }
  func.func @transform_0(%arg0: i32) -> (i32, i32) {
    %c0_i32 = arith.constant 0 : i32
    %c0_i32_0 = arith.constant 0 : i32
    return %arg0, %c0_i32 : i32, i32
  }
  func.func @transform_1(%arg0: i32) -> (i32, i32) {
    %c0_i32 = arith.constant 0 : i32
    %c0_i32_0 = arith.constant 0 : i32
    %c0_i32_1 = arith.constant 0 : i32
    return %c0_i32, %c0_i32_0 : i32, i32
  }
  func.func @transform_2(%arg0: i32) -> (i32, i32) {
    %c0_i32 = arith.constant 0 : i32
    %c0_i32_0 = arith.constant 0 : i32
    %c0_i32_1 = arith.constant 0 : i32
    return %c0_i32, %c0_i32_0 : i32, i32
  }
  func.func @transform_3(%arg0: i32) -> (i32, i32) {
    %c0_i32 = arith.constant 0 : i32
    %c0_i32_0 = arith.constant 0 : i32
    %c0_i32_1 = arith.constant 0 : i32
    return %c0_i32, %c0_i32_0 : i32, i32
  }
  func.func @transform_4(%arg0: i32) -> (i32, i32) {
    %c0_i32 = arith.constant 0 : i32
    %c0_i32_0 = arith.constant 0 : i32
    %c0_i32_1 = arith.constant 0 : i32
    return %c0_i32, %c0_i32_0 : i32, i32
  }
  func.func @transform_5(%arg0: i32) -> (i32, i32) {
    %c0_i32 = arith.constant 0 : i32
    %c0_i32_0 = arith.constant 0 : i32
    %c0_i32_1 = arith.constant 0 : i32
    return %c0_i32, %c0_i32_0 : i32, i32
  }
  func.func @transform_6(%arg0: i32) -> (i32, i32) {
    %c0_i32 = arith.constant 0 : i32
    %c0_i32_0 = arith.constant 0 : i32
    %c0_i32_1 = arith.constant 0 : i32
    return %c0_i32, %c0_i32_0 : i32, i32
  }
  func.func @transform_7(%arg0: i32) -> (i32, i32) {
    %c0_i32 = arith.constant 0 : i32
    %c0_i32_0 = arith.constant 0 : i32
    return %arg0, %c0_i32 : i32, i32
  }
}

</mosaic_0001>

<llo_original>
// kernel: middlecut_forward.1
$region0: #{middlecut_forward.1}
  #allocation0 [shape = 'u32[]', space=smem, size = 0x4, offset = 0x4, fixed_abs, tag = 'smem constant byte address 0x4 - core index']
  #allocation1 [shape = 'u32[72,128]{1,0:T(1,128)}', space=vmem, size = 0x9000, scoped, tag = 'internal scratch']
  #allocation2 [shape = 'f32[32,6912]{1,0:T(8,128)}', space=vmem, size = 0xd8000, scoped, tag = 'scratch operand']
  #allocation3 [shape = 'f32[32,1024]{1,0:T(8,128)}', space=vmem, size = 0x20000, scoped, tag = 'scratch operand']
  %s0 = inlined_call_operand.vmem [shape: f32[64,400], index: 0, kind: input, shape index: {}]
  %s1 = inlined_call_operand.vmem [shape: f32[120,1536], index: 1, kind: input, shape index: {}]
  %s2 = inlined_call_operand.vmem [shape: f32[1536,128], index: 2, kind: input, shape index: {}]
  %s3 = inlined_call_operand.hbm [shape: f32[1024,128], index: 3, kind: input, shape index: {}]
  %s4 = inlined_call_operand.vmem [shape: f32[2,1536], index: 4, kind: input, shape index: {}]
  %s5 = inlined_call_operand.vmem [shape: f32[2,128], index: 5, kind: input, shape index: {}]
  %s6 = inlined_call_operand.vmem [shape: f32[2,128], index: 6, kind: input, shape index: {}]
  %s7 = inlined_call_operand.vmem [shape: f32[64,128], index: 7, kind: output, shape index: {}]
  %s8 = sld [smem:[#allocation0]]
  $region65: #{middlecut_forward.1} parent=0
    _
  %s10 = ssub.s32 1, %s8
  %s11 = scalar_select 0, %s10, %s8
  $region1: #{middlecut_forward.1} parent=0
    #allocation4 [shape = 'u8[524288]{0}', space=vmem, size = 0x80000, scoped, tag = 'input window, operand 3, single buffered']
    #allocation5 [shape = 's32[2]{0}', space=sflag, size = 0x8, scoped, tag = 'scoped memory for middlecut_forward.1']
    %12 = vsyncpa [#allocation5], 0
    loop: start=0, step=1, limit=4
    $region2: #{middlecut_forward.1} parent=1 // loop_pre_header
      _
    $region3: #{middlecut_forward.1} parent=1 // loop_header
      %s14 = sphi 0, %s18
      %p15 = scmp.ge.s32.totalorder %s14, 4
      %s24 = sphi 0, %s26
      %s27 = sphi 0, %s24
      %s28 = sphi 0, %s27
      %s44 = sphi 0, %s28
      %s48 = sphi 0, %s48
      %s50 = sphi 0, %s48
      %s51 = sphi 0, %s50
      %s65 = sphi 0, %s51
      %s69 = sphi 0, %s69
      %s71 = sphi 0, %s69
      %s72 = sphi 0, %s71
      %s86 = sphi 0, %s72
      %s90 = sphi 0, %s90
      %s92 = sphi 0, %s90
      %s93 = sphi 0, %s92
      %s107 = sphi 0, %s93
      %s111 = sphi 0, %s111
      %s113 = sphi 0, %s111
      %s114 = sphi 0, %s113
      %s128 = sphi 0, %s114
      %s132 = sphi 0, %s132
      %s134 = sphi 0, %s132
      %s135 = sphi 0, %s134
      %s149 = sphi 0, %s135
      %s153 = sphi 0, %s153
      %s155 = sphi 0, %s153
      %s156 = sphi 0, %s155
      %s170 = sphi 0, %s156
      %s176 = sphi 0, %s178
      %s179 = sphi 0, %s176
      %s180 = sphi 0, %s179
      %s196 = sphi 0, %s180
    $region4: #{middlecut_forward.1} parent=1 // loop_header_branch
      %17 = sbr.rel (%p15) target = $region8
    $region5: #{middlecut_forward.1} parent=1 // loop_body
      %s19 = ssub.s32 %s14, 1
      %s20 = ssub.s32 %s14, 2
      %s21 = sadd.s32 %s14, 1
      %s22 = ssub.s32 %s14, %s21
      %p23 = scmp.eq.s32.totalorder %s22, 0
      %s25 = sadd.s32 %s24, 1
      %s26 = scalar_select %p23, %s24, %s25
      %p29 = pneg %p23
      %p30 = scmp.eq.s32.totalorder %s14, 1
      %p31 = por %p29, %p30
      %p32 = scmp.ne.s32.totalorder %s24, %s27
      %p33 = scmp.eq.s32.totalorder %s14, 0
      %p34 = por %p32, %p33
      %p35 = scmp.ne.s32.totalorder %s24, %s27
      %p36 = scmp.eq.s32.totalorder %s19, 1
      %p37 = por %p35, %p36
      %p38 = scmp.ne.s32.totalorder %s27, %s28
      %p39 = scmp.eq.s32.totalorder %s19, 0
      %p40 = por %p38, %p39
      %p41 = scmp.ne.s32.totalorder %s27, %s28
      %p42 = scmp.eq.s32.totalorder %s20, 1
      %p43 = por %p41, %p42
      %p45 = scmp.ne.s32.totalorder %s28, %s44
      %p46 = scmp.eq.s32.totalorder %s20, 0
      %p47 = por %p45, %p46
      %s49 = sadd.s32 %s48, 1
      %p52 = scmp.eq.s32.totalorder %s14, 1
      %p53 = scmp.ne.s32.totalorder %s48, %s50
      %p54 = scmp.eq.s32.totalorder %s14, 0
      %p55 = por %p53, %p54
      %p56 = scmp.ne.s32.totalorder %s48, %s50
      %p57 = scmp.eq.s32.totalorder %s19, 1
      %p58 = por %p56, %p57
      %p59 = scmp.ne.s32.totalorder %s50, %s51
      %p60 = scmp.eq.s32.totalorder %s19, 0
      %p61 = por %p59, %p60
      %p62 = scmp.ne.s32.totalorder %s50, %s51
      %p63 = scmp.eq.s32.totalorder %s20, 1
      %p64 = por %p62, %p63
      %p66 = scmp.ne.s32.totalorder %s51, %s65
      %p67 = scmp.eq.s32.totalorder %s20, 0
      %p68 = por %p66, %p67
      %s70 = sadd.s32 %s69, 1
      %p73 = scmp.eq.s32.totalorder %s14, 1
      %p74 = scmp.ne.s32.totalorder %s69, %s71
      %p75 = scmp.eq.s32.totalorder %s14, 0
      %p76 = por %p74, %p75
      %p77 = scmp.ne.s32.totalorder %s69, %s71
      %p78 = scmp.eq.s32.totalorder %s19, 1
      %p79 = por %p77, %p78
      %p80 = scmp.ne.s32.totalorder %s71, %s72
      %p81 = scmp.eq.s32.totalorder %s19, 0
      %p82 = por %p80, %p81
      %p83 = scmp.ne.s32.totalorder %s71, %s72
      %p84 = scmp.eq.s32.totalorder %s20, 1
      %p85 = por %p83, %p84
      %p87 = scmp.ne.s32.totalorder %s72, %s86
      %p88 = scmp.eq.s32.totalorder %s20, 0
      %p89 = por %p87, %p88
      %s91 = sadd.s32 %s90, 1
      %p94 = scmp.eq.s32.totalorder %s14, 1
      %p95 = scmp.ne.s32.totalorder %s90, %s92
      %p96 = scmp.eq.s32.totalorder %s14, 0
      %p97 = por %p95, %p96
      %p98 = scmp.ne.s32.totalorder %s90, %s92
      %p99 = scmp.eq.s32.totalorder %s19, 1
      %p100 = por %p98, %p99
      %p101 = scmp.ne.s32.totalorder %s92, %s93
      %p102 = scmp.eq.s32.totalorder %s19, 0
      %p103 = por %p101, %p102
      %p104 = scmp.ne.s32.totalorder %s92, %s93
      %p105 = scmp.eq.s32.totalorder %s20, 1
      %p106 = por %p104, %p105
      %p108 = scmp.ne.s32.totalorder %s93, %s107
      %p109 = scmp.eq.s32.totalorder %s20, 0
      %p110 = por %p108, %p109
      %s112 = sadd.s32 %s111, 1
      %p115 = scmp.eq.s32.totalorder %s14, 1
      %p116 = scmp.ne.s32.totalorder %s111, %s113
      %p117 = scmp.eq.s32.totalorder %s14, 0
      %p118 = por %p116, %p117
      %p119 = scmp.ne.s32.totalorder %s111, %s113
      %p120 = scmp.eq.s32.totalorder %s19, 1
      %p121 = por %p119, %p120
      %p122 = scmp.ne.s32.totalorder %s113, %s114
      %p123 = scmp.eq.s32.totalorder %s19, 0
      %p124 = por %p122, %p123
      %p125 = scmp.ne.s32.totalorder %s113, %s114
      %p126 = scmp.eq.s32.totalorder %s20, 1
      %p127 = por %p125, %p126
      %p129 = scmp.ne.s32.totalorder %s114, %s128
      %p130 = scmp.eq.s32.totalorder %s20, 0
      %p131 = por %p129, %p130
      %s133 = sadd.s32 %s132, 1
      %p136 = scmp.eq.s32.totalorder %s14, 1
      %p137 = scmp.ne.s32.totalorder %s132, %s134
      %p138 = scmp.eq.s32.totalorder %s14, 0
      %p139 = por %p137, %p138
      %p140 = scmp.ne.s32.totalorder %s132, %s134
      %p141 = scmp.eq.s32.totalorder %s19, 1
      %p142 = por %p140, %p141
      %p143 = scmp.ne.s32.totalorder %s134, %s135
      %p144 = scmp.eq.s32.totalorder %s19, 0
      %p145 = por %p143, %p144
      %p146 = scmp.ne.s32.totalorder %s134, %s135
      %p147 = scmp.eq.s32.totalorder %s20, 1
      %p148 = por %p146, %p147
      %p150 = scmp.ne.s32.totalorder %s135, %s149
      %p151 = scmp.eq.s32.totalorder %s20, 0
      %p152 = por %p150, %p151
      %s154 = sadd.s32 %s153, 1
      %p157 = scmp.eq.s32.totalorder %s14, 1
      %p158 = scmp.ne.s32.totalorder %s153, %s155
      %p159 = scmp.eq.s32.totalorder %s14, 0
      %p160 = por %p158, %p159
      %p161 = scmp.ne.s32.totalorder %s153, %s155
      %p162 = scmp.eq.s32.totalorder %s19, 1
      %p163 = por %p161, %p162
      %p164 = scmp.ne.s32.totalorder %s155, %s156
      %p165 = scmp.eq.s32.totalorder %s19, 0
      %p166 = por %p164, %p165
      %p167 = scmp.ne.s32.totalorder %s155, %s156
      %p168 = scmp.eq.s32.totalorder %s20, 1
      %p169 = por %p167, %p168
      %p171 = scmp.ne.s32.totalorder %s156, %s170
      %p172 = scmp.eq.s32.totalorder %s20, 0
      %p173 = por %p171, %p172
      %s174 = ssub.s32 %s14, %s21
      %p175 = scmp.eq.s32.totalorder %s174, 0
      %s177 = sadd.s32 %s176, 1
      %s178 = scalar_select %p175, %s176, %s177
      %p181 = pneg %p175
      %p182 = scmp.eq.s32.totalorder %s14, 1
      %p183 = por %p181, %p182
      %p184 = scmp.ne.s32.totalorder %s176, %s179
      %p185 = scmp.eq.s32.totalorder %s14, 0
      %p186 = por %p184, %p185
      %p187 = scmp.ne.s32.totalorder %s176, %s179
      %p188 = scmp.eq.s32.totalorder %s19, 1
      %p189 = por %p187, %p188
      %p190 = scmp.ne.s32.totalorder %s179, %s180
      %p191 = scmp.eq.s32.totalorder %s19, 0
      %p192 = por %p190, %p191
      %p193 = scmp.ne.s32.totalorder %s179, %s180
      %p194 = scmp.eq.s32.totalorder %s20, 1
      %p195 = por %p193, %p194
      %p197 = scmp.ne.s32.totalorder %s180, %s196
      %p198 = scmp.eq.s32.totalorder %s20, 0
      %p199 = por %p197, %p198
      %p200 = scmp.le.s32.totalorder 1, %s14
      %p201 = scmp.lt.s32.totalorder %s14, 3
      %p202 = pnand %p200, %p201
      %p203 = pneg %p202
      // Predicated region
      $region9: #{middlecut_forward.1} parent=5 // pred_check
        _
      $region10: #{middlecut_forward.1} parent=5 // pred_check_branch
        %205 = sbr.rel (%p202) target = $region12
      $region11: #{middlecut_forward.1} parent=5 // pred_region
        %s206 = ssub.s32 %s14, 1
        // Predicated region
        $region13: #{middlecut_forward.1} parent=11 // pred_check
          %p207 = pneg %p61
        $region14: #{middlecut_forward.1} parent=11 // pred_check_branch
          %209 = sbr.rel (%p207) target = $region16
        $region15: #{middlecut_forward.1} parent=11 // pred_region
          _
        $region16: #{middlecut_forward.1} parent=11 // pred_fallthru
          _
        // Predicated region
        $region17: #{middlecut_forward.1} parent=11 // pred_check
          %p210 = pneg %p82
        $region18: #{middlecut_forward.1} parent=11 // pred_check_branch
          %212 = sbr.rel (%p210) target = $region20
        $region19: #{middlecut_forward.1} parent=11 // pred_region
          _
        $region20: #{middlecut_forward.1} parent=11 // pred_fallthru
          _
        // Predicated region
        $region21: #{middlecut_forward.1} parent=11 // pred_check
          %p213 = pneg %p103
        $region22: #{middlecut_forward.1} parent=11 // pred_check_branch
          %215 = sbr.rel (%p213) target = $region24
        $region23: #{middlecut_forward.1} parent=11 // pred_region
          %217 = vsyncadd [#allocation5], 0
          %s218 = sshll.u32 %s3, 4
          %s219 = int_to_ptr.hbm [resolvable:$true] %s218
          %s220 = sshll.u32 [#allocation4], 4
          %s221 = int_to_ptr.vmem [resolvable:$true] %s220
          %226 = dma.hbm_to_vmem [thread:$0]  %s219, 16384, %s221, [#allocation5], 128, 128, 8
        $region24: #{middlecut_forward.1} parent=11 // pred_fallthru
          _
        // Predicated region
        $region25: #{middlecut_forward.1} parent=11 // pred_check
          %p227 = pneg %p124
        $region26: #{middlecut_forward.1} parent=11 // pred_check_branch
          %229 = sbr.rel (%p227) target = $region28
        $region27: #{middlecut_forward.1} parent=11 // pred_region
          _
        $region28: #{middlecut_forward.1} parent=11 // pred_fallthru
          _
        // Predicated region
        $region29: #{middlecut_forward.1} parent=11 // pred_check
          %p230 = pneg %p145
        $region30: #{middlecut_forward.1} parent=11 // pred_check_branch
          %232 = sbr.rel (%p230) target = $region32
        $region31: #{middlecut_forward.1} parent=11 // pred_region
          _
        $region32: #{middlecut_forward.1} parent=11 // pred_fallthru
          _
        // Predicated region
        $region33: #{middlecut_forward.1} parent=11 // pred_check
          %p233 = pneg %p166
        $region34: #{middlecut_forward.1} parent=11 // pred_check_branch
          %235 = sbr.rel (%p233) target = $region36
        $region35: #{middlecut_forward.1} parent=11 // pred_region
          _
        $region36: #{middlecut_forward.1} parent=11 // pred_fallthru
          _
      $region12: #{middlecut_forward.1} parent=5 // pred_fallthru
        _
      %p236 = scmp.lt.s32.totalorder %s14, 2
      // Predicated region
      $region37: #{middlecut_forward.1} parent=5 // pred_check
        %p237 = pneg %p236
      $region38: #{middlecut_forward.1} parent=5 // pred_check_branch
        %239 = sbr.rel (%p237) target = $region40
      $region39: #{middlecut_forward.1} parent=5 // pred_region
        // Predicated region
        $region41: #{middlecut_forward.1} parent=39 // pred_check
          %p240 = pneg %p34
        $region42: #{middlecut_forward.1} parent=39 // pred_check_branch
          %242 = sbr.rel (%p240) target = $region44
        $region43: #{middlecut_forward.1} parent=39 // pred_region
          %s243 = smul.u32 4, %s14
          %p244 = scmp.lt.s32.totalorder %s243, 7
          %s245 = scalar_select %p244, %s243, 7
          %s246 = smul.addr %s245, 4
          %s247 = smul.addr %s246, 8
          %s248 = scalar_lea.vmem %s0, %s247
          %s249 = smul.u32 4, %s14
        $region44: #{middlecut_forward.1} parent=39 // pred_fallthru
          _
      $region40: #{middlecut_forward.1} parent=5 // pred_fallthru
        _
      %p250 = scmp.le.s32.totalorder 1, %s14
      %p251 = scmp.lt.s32.totalorder %s14, 3
      %p252 = pnand %p250, %p251
      %p253 = pneg %p252
      // Predicated region
      $region45: #{middlecut_forward.1} parent=5 // pred_check
        _
      $region46: #{middlecut_forward.1} parent=5 // pred_check_branch
        %255 = sbr.rel (%p252) target = $region48
      $region47: #{middlecut_forward.1} parent=5 // pred_region
        %s256 = ssub.s32 %s14, 1
        // Predicated region
        $region49: #{middlecut_forward.1} parent=47 // pred_check
          %p257 = pneg %p103
        $region50: #{middlecut_forward.1} parent=47 // pred_check_branch
          %259 = sbr.rel (%p257) target = $region52
        $region51: #{middlecut_forward.1} parent=47 // pred_region
          %261 = dma.done [#allocation5], 16384
        $region52: #{middlecut_forward.1} parent=47 // pred_fallthru
          _
        %s262 = smul.u32 4, %s19
        %p263 = scmp.lt.s32.totalorder %s262, 7
        %s264 = scalar_select %p263, %s262, 7
        %s265 = smul.addr %s264, 4
        %s266 = smul.addr %s265, 8
        %s267 = scalar_lea.vmem %s0, %s266
        %p268 = pneg %p40
        %p269 = pneg %p37
        %p270 = pneg %p61
        %p271 = pneg %p58
        %p272 = pneg %p82
        %p273 = pneg %p79
        %p274 = pneg %p103
        %p275 = pneg %p100
        %p276 = pneg %p124
        %p277 = pneg %p121
        %p278 = pneg %p145
        %p279 = pneg %p142
        %p280 = pneg %p166
        %p281 = pneg %p163
        %p282 = pneg %p192
        %p283 = pneg %p189
        %s284 = smul.u32 4, %s19
        %p285 = scmp.lt.s32.totalorder %s284, 7
        %s286 = scalar_select %p285, %s284, 7
        %s287 = smul.addr %s286, 8
        %s288 = scalar_lea.vmem %s7, %s287
        %s289 = smul.u32 4, %s19
        %p290 = scmp.lt.s32.totalorder %s289, 7
        %s291 = scalar_select %p290, %s289, 7
        %s292 = smul.addr %s291, 4
        %s293 = smul.addr %s292, 8
        %s294 = scalar_lea.vmem %s0, %s293
        %s295 = smul.u32 4, %s19
        %s296 = smul.u32 4, %s19
        %p297 = scmp.lt.s32.totalorder %s296, 7
        %s298 = scalar_select %p297, %s296, 7
        %s299 = smul.addr %s298, 8
        %s300 = scalar_lea.vmem %s7, %s299
        %s301 = smul.u32 4, %s19
        %302 = vst [vmem:[#allocation2] sm:$0xff] 0.0
        %303 = vst [vmem:[#allocation2 + $0x8] sm:$0xff] 0.0
        %304 = vst [vmem:[#allocation2 + $0x10] sm:$0xff] 0.0
        %305 = vst [vmem:[#allocation2 + $0x1b0] sm:$0xff] 0.0
        %306 = vst [vmem:[#allocation2 + $0x1b8] sm:$0xff] 0.0
        %307 = vst [vmem:[#allocation2 + $0x1c0] sm:$0xff] 0.0
        %308 = vst [vmem:[#allocation2 + $0x360] sm:$0xff] 0.0
        %309 = vst [vmem:[#allocation2 + $0x368] sm:$0xff] 0.0
        %310 = vst [vmem:[#allocation2 + $0x370] sm:$0xff] 0.0
        %311 = vst [vmem:[#allocation2 + $0x510] sm:$0xff] 0.0
        %312 = vst [vmem:[#allocation2 + $0x518] sm:$0xff] 0.0
        %313 = vst [vmem:[#allocation2 + $0x520] sm:$0xff] 0.0
        %314 = vst [vmem:[#allocation2 + $0x198] sm:$0xff] 0.0
        %315 = vst [vmem:[#allocation2 + $0x1a0] sm:$0xff] 0.0
        %316 = vst [vmem:[#allocation2 + $0x1a8] sm:$0xff] 0.0
        %317 = vst [vmem:[#allocation2 + $0x348] sm:$0xff] 0.0
        %318 = vst [vmem:[#allocation2 + $0x350] sm:$0xff] 0.0
        %319 = vst [vmem:[#allocation2 + $0x358] sm:$0xff] 0.0
        %320 = vst [vmem:[#allocation2 + $0x4f8] sm:$0xff] 0.0
        %321 = vst [vmem:[#allocation2 + $0x500] sm:$0xff] 0.0
        %322 = vst [vmem:[#allocation2 + $0x508] sm:$0xff] 0.0
        %323 = vst [vmem:[#allocation2 + $0x6a8] sm:$0xff] 0.0
        %324 = vst [vmem:[#allocation2 + $0x6b0] sm:$0xff] 0.0
        %325 = vst [vmem:[#allocation2 + $0x6b8] sm:$0xff] 0.0
        %v326 = vld [vmem:[%s4] ss:$2 sm:$0xff]
        %s327 = scalar_lea.vmem %s4, 16
        %v328 = vld [vmem:[%s327] ss:$2 sm:$0xf]
        %s329 = scalar_lea.vmem %s4, 1
        %v330 = vld [vmem:[%s329] ss:$2 sm:$0xff]
        %s331 = scalar_lea.vmem %s4, 17
        %v332 = vld [vmem:[%s331] ss:$2 sm:$0xf]
        %v333 = vld [vmem:[%s294] sm:$0xff]
        %v334 = vld [vmem:[%s294 + $0x8] sm:$0xff]
        %v335 = vld [vmem:[%s294 + $0x20] sm:$0xff]
        %v336 = vld [vmem:[%s294 + $0x28] sm:$0xff]
        %v337 = vld [vmem:[%s294 + $0x40] sm:$0xff]
        %v338 = vld [vmem:[%s294 + $0x48] sm:$0xff]
        %v339 = vld [vmem:[%s294 + $0x60] sm:$0xff]
        %v340 = vld [vmem:[%s294 + $0x68] sm:$0xff]
        %v341 = vld [vmem:[%s1] sm:$0xff]
        %v342 = vld [vmem:[%s1 + $0x8] sm:$0xff]
        %v343 = vld [vmem:[%s1 + $0x10] sm:$0xff]
        %v344 = vld [vmem:[%s1 + $0x18] sm:$0xff]
        %v345 = vld [vmem:[%s1 + $0x20] sm:$0xff]
        %v346 = vld [vmem:[%s1 + $0x28] sm:$0xff]
        %v347 = vld [vmem:[%s1 + $0x30] sm:$0xff]
        %v348 = vld [vmem:[%s1 + $0x38] sm:$0xff]
        %v349 = vld [vmem:[%s1 + $0x40] sm:$0xff]
        %v350 = vld [vmem:[%s1 + $0x48] sm:$0xff]
        %v351 = vld [vmem:[%s1 + $0x50] sm:$0xff]
        %v352 = vld [vmem:[%s1 + $0x58] sm:$0xff]
        %v353 = vld [vmem:[%s1 + $0x60] sm:$0xff]
        %v354 = vld [vmem:[%s1 + $0x68] sm:$0xff]
        %v355 = vld [vmem:[%s1 + $0x70] sm:$0xff]
        %v356 = vld [vmem:[%s1 + $0x78] sm:$0xff]
        %v357 = vld [vmem:[%s1 + $0x80] sm:$0xff]
        %v358 = vld [vmem:[%s1 + $0x88] sm:$0xff]
        %v359 = vld [vmem:[%s1 + $0x90] sm:$0xff]
        %v360 = vld [vmem:[%s1 + $0x98] sm:$0xff]
        %v361 = vld [vmem:[%s1 + $0xa0] sm:$0xff]
        %v362 = vld [vmem:[%s1 + $0xa8] sm:$0xff]
        %v363 = vld [vmem:[%s1 + $0xb0] sm:$0xff]
        %v364 = vld [vmem:[%s1 + $0xb8] sm:$0xff]
        %v365 = vld [vmem:[%s1 + $0xc0] sm:$0xff]
        %v366 = vld [vmem:[%s1 + $0xc8] sm:$0xff]
        %v367 = vld [vmem:[%s1 + $0xd0] sm:$0xff]
        %v368 = vld [vmem:[%s1 + $0xd8] sm:$0xff]
        %v369 = vld [vmem:[%s1 + $0xe0] sm:$0xff]
        %v370 = vld [vmem:[%s1 + $0xe8] sm:$0xff]
        %v371 = vld [vmem:[%s1 + $0xf0] sm:$0xff]
        %v372 = vld [vmem:[%s1 + $0xf8] sm:$0xff]
        %v373 = vld [vmem:[%s1 + $0x100] sm:$0xff]
        %v374 = vld [vmem:[%s1 + $0x108] sm:$0xff]
        %v375 = vld [vmem:[%s1 + $0x110] sm:$0xff]
        %v376 = vld [vmem:[%s1 + $0x118] sm:$0xff]
        %v377 = vld [vmem:[%s1 + $0x120] sm:$0xff]
        %v378 = vld [vmem:[%s1 + $0x128] sm:$0xff]
        %v379 = vld [vmem:[%s1 + $0x130] sm:$0xff]
        %v380 = vld [vmem:[%s1 + $0x138] sm:$0xff]
        %v381 = vld [vmem:[%s1 + $0x140] sm:$0xff]
        %v382 = vld [vmem:[%s1 + $0x148] sm:$0xff]
        %v383 = vld [vmem:[%s1 + $0x150] sm:$0xff]
        %v384 = vld [vmem:[%s1 + $0x158] sm:$0xff]
        %v385 = vld [vmem:[%s1 + $0x160] sm:$0xff]
        %v386 = vld [vmem:[%s1 + $0x168] sm:$0xff]
        %v387 = vld [vmem:[%s1 + $0x170] sm:$0xff]
        %v388 = vld [vmem:[%s1 + $0x178] sm:$0xff]
        %v389 = vld [vmem:[%s1 + $0x180] sm:$0xff]
        %v390 = vld [vmem:[%s1 + $0x188] sm:$0xff]
        %v391 = vld [vmem:[%s1 + $0x190] sm:$0xff]
        %v392 = vld [vmem:[%s1 + $0x198] sm:$0xff]
        %v393 = vld [vmem:[%s1 + $0x1a0] sm:$0xff]
        %v394 = vld [vmem:[%s1 + $0x1a8] sm:$0xff]
        %v395 = vld [vmem:[%s1 + $0x1b0] sm:$0xff]
        %v396 = vld [vmem:[%s1 + $0x1b8] sm:$0xff]
        %v397 = vld [vmem:[%s1 + $0x1c0] sm:$0xff]
        %v398 = vld [vmem:[%s1 + $0x1c8] sm:$0xff]
        %v399 = vld [vmem:[%s1 + $0x1d0] sm:$0xff]
        %v400 = vld [vmem:[%s1 + $0x1d8] sm:$0xff]
        %v401 = vld [vmem:[%s1 + $0x1e0] sm:$0xff]
        %v402 = vld [vmem:[%s1 + $0x1e8] sm:$0xff]
        %v403 = vld [vmem:[%s1 + $0x1f0] sm:$0xff]
        %v404 = vld [vmem:[%s1 + $0x1f8] sm:$0xff]
        %v405 = vld [vmem:[%s1 + $0x200] sm:$0xff]
        %v406 = vld [vmem:[%s1 + $0x208] sm:$0xff]
        %v407 = vld [vmem:[%s1 + $0x210] sm:$0xff]
        %v408 = vld [vmem:[%s1 + $0x218] sm:$0xff]
        %v409 = vld [vmem:[%s1 + $0x220] sm:$0xff]
        %v410 = vld [vmem:[%s1 + $0x228] sm:$0xff]
        %v411 = vld [vmem:[%s1 + $0x230] sm:$0xff]
        %v412 = vld [vmem:[%s1 + $0x238] sm:$0xff]
        %v413 = vld [vmem:[%s1 + $0x240] sm:$0xff]
        %v414 = vld [vmem:[%s1 + $0x248] sm:$0xff]
        %v415 = vld [vmem:[%s1 + $0x250] sm:$0xff]
        %v416 = vld [vmem:[%s1 + $0x258] sm:$0xff]
        %v417 = vld [vmem:[%s1 + $0x260] sm:$0xff]
        %v418 = vld [vmem:[%s1 + $0x268] sm:$0xff]
        %v419 = vld [vmem:[%s1 + $0x270] sm:$0xff]
        %v420 = vld [vmem:[%s1 + $0x278] sm:$0xff]
        %v421 = vld [vmem:[%s1 + $0x280] sm:$0xff]
        %v422 = vld [vmem:[%s1 + $0x288] sm:$0xff]
        %v423 = vld [vmem:[%s1 + $0x290] sm:$0xff]
        %v424 = vld [vmem:[%s1 + $0x298] sm:$0xff]
        %v425 = vld [vmem:[%s1 + $0x2a0] sm:$0xff]
        %v426 = vld [vmem:[%s1 + $0x2a8] sm:$0xff]
        %v427 = vld [vmem:[%s1 + $0x2b0] sm:$0xff]
        %v428 = vld [vmem:[%s1 + $0x2b8] sm:$0xff]
        %v429 = vld [vmem:[%s1 + $0x2c0] sm:$0xff]
        %v430 = vld [vmem:[%s1 + $0x2c8] sm:$0xff]
        %v431 = vld [vmem:[%s1 + $0x2d0] sm:$0xff]
        %v432 = vld [vmem:[%s1 + $0x2d8] sm:$0xff]
        %v433 = vld [vmem:[%s1 + $0x2e0] sm:$0xff]
        %v434 = vld [vmem:[%s1 + $0x2e8] sm:$0xff]
        %v435 = vld [vmem:[%s1 + $0x2f0] sm:$0xff]
        %v436 = vld [vmem:[%s1 + $0x2f8] sm:$0xff]
        %v437 = vld [vmem:[%s1 + $0x300] sm:$0xff]
        %v438 = vld [vmem:[%s1 + $0x308] sm:$0xff]
        %v439 = vld [vmem:[%s1 + $0x310] sm:$0xff]
        %v440 = vld [vmem:[%s1 + $0x318] sm:$0xff]
        %v441 = vld [vmem:[%s1 + $0x320] sm:$0xff]
        %v442 = vld [vmem:[%s1 + $0x328] sm:$0xff]
        %v443 = vld [vmem:[%s1 + $0x330] sm:$0xff]
        %v444 = vld [vmem:[%s1 + $0x338] sm:$0xff]
        %v445 = vld [vmem:[%s1 + $0x340] sm:$0xff]
        %v446 = vld [vmem:[%s1 + $0x348] sm:$0xff]
        %v447 = vld [vmem:[%s1 + $0x350] sm:$0xff]
        %v448 = vld [vmem:[%s1 + $0x358] sm:$0xff]
        %v449 = vld [vmem:[%s1 + $0x360] sm:$0xff]
        %v450 = vld [vmem:[%s1 + $0x368] sm:$0xff]
        %v451 = vld [vmem:[%s1 + $0x370] sm:$0xff]
        %v452 = vld [vmem:[%s1 + $0x378] sm:$0xff]
        %v453 = vld [vmem:[%s1 + $0x380] sm:$0xff]
        %v454 = vld [vmem:[%s1 + $0x388] sm:$0xff]
        %v455 = vld [vmem:[%s1 + $0x390] sm:$0xff]
        %v456 = vld [vmem:[%s1 + $0x398] sm:$0xff]
        %v457 = vld [vmem:[%s1 + $0x3a0] sm:$0xff]
        %v458 = vld [vmem:[%s1 + $0x3a8] sm:$0xff]
        %v459 = vld [vmem:[%s1 + $0x3b0] sm:$0xff]
        %v460 = vld [vmem:[%s1 + $0x3b8] sm:$0xff]
        %v461 = vld [vmem:[%s1 + $0x3c0] sm:$0xff]
        %v462 = vld [vmem:[%s1 + $0x3c8] sm:$0xff]
        %v463 = vld [vmem:[%s1 + $0x3d0] sm:$0xff]
        %v464 = vld [vmem:[%s1 + $0x3d8] sm:$0xff]
        %v465 = vld [vmem:[%s1 + $0x3e0] sm:$0xff]
        %v466 = vld [vmem:[%s1 + $0x3e8] sm:$0xff]
        %v467 = vld [vmem:[%s1 + $0x3f0] sm:$0xff]
        %v468 = vld [vmem:[%s1 + $0x3f8] sm:$0xff]
        %v469 = vld [vmem:[%s1 + $0x400] sm:$0xff]
        %v470 = vld [vmem:[%s1 + $0x408] sm:$0xff]
        %v471 = vld [vmem:[%s1 + $0x410] sm:$0xff]
        %v472 = vld [vmem:[%s1 + $0x418] sm:$0xff]
        %v473 = vld [vmem:[%s1 + $0x420] sm:$0xff]
        %v474 = vld [vmem:[%s1 + $0x428] sm:$0xff]
        %v475 = vld [vmem:[%s1 + $0x430] sm:$0xff]
        %v476 = vld [vmem:[%s1 + $0x438] sm:$0xff]
        %v477 = vld [vmem:[%s1 + $0x440] sm:$0xff]
        %v478 = vld [vmem:[%s1 + $0x448] sm:$0xff]
        %v479 = vld [vmem:[%s1 + $0x450] sm:$0xff]
        %v480 = vld [vmem:[%s1 + $0x458] sm:$0xff]
        %v481 = vld [vmem:[%s1 + $0x460] sm:$0xff]
        %v482 = vld [vmem:[%s1 + $0x468] sm:$0xff]
        %v483 = vld [vmem:[%s1 + $0x470] sm:$0xff]
        %v484 = vld [vmem:[%s1 + $0x478] sm:$0xff]
        %v485 = vld [vmem:[%s1 + $0x480] sm:$0xff]
        %v486 = vld [vmem:[%s1 + $0x488] sm:$0xff]
        %v487 = vld [vmem:[%s1 + $0x490] sm:$0xff]
        %v488 = vld [vmem:[%s1 + $0x498] sm:$0xff]
        %v489 = vld [vmem:[%s1 + $0x4a0] sm:$0xff]
        %v490 = vld [vmem:[%s1 + $0x4a8] sm:$0xff]
        %v491 = vld [vmem:[%s1 + $0x4b0] sm:$0xff]
        %v492 = vld [vmem:[%s1 + $0x4b8] sm:$0xff]
        %v493 = vld [vmem:[%s1 + $0x4c0] sm:$0xff]
        %v494 = vld [vmem:[%s1 + $0x4c8] sm:$0xff]
        %v495 = vld [vmem:[%s1 + $0x4d0] sm:$0xff]
        %v496 = vld [vmem:[%s1 + $0x4d8] sm:$0xff]
        %v497 = vld [vmem:[%s1 + $0x4e0] sm:$0xff]
        %v498 = vld [vmem:[%s1 + $0x4e8] sm:$0xff]
        %v499 = vld [vmem:[%s1 + $0x4f0] sm:$0xff]
        %v500 = vld [vmem:[%s1 + $0x4f8] sm:$0xff]
        %v501 = vld [vmem:[%s1 + $0x500] sm:$0xff]
        %v502 = vld [vmem:[%s1 + $0x508] sm:$0xff]
        %v503 = vld [vmem:[%s1 + $0x510] sm:$0xff]
        %v504 = vld [vmem:[%s1 + $0x518] sm:$0xff]
        %v505 = vld [vmem:[%s1 + $0x520] sm:$0xff]
        %v506 = vld [vmem:[%s1 + $0x528] sm:$0xff]
        %v507 = vld [vmem:[%s1 + $0x530] sm:$0xff]
        %v508 = vld [vmem:[%s1 + $0x538] sm:$0xff]
        %v509 = vld [vmem:[%s1 + $0x540] sm:$0xff]
        %v510 = vld [vmem:[%s1 + $0x548] sm:$0xff]
        %v511 = vld [vmem:[%s1 + $0x550] sm:$0xff]
        %v512 = vld [vmem:[%s1 + $0x558] sm:$0xff]
        %v513 = vld [vmem:[%s1 + $0x560] sm:$0xff]
        %v514 = vld [vmem:[%s1 + $0x568] sm:$0xff]
        %v515 = vld [vmem:[%s1 + $0x570] sm:$0xff]
        %v516 = vld [vmem:[%s1 + $0x578] sm:$0xff]
        %v517 = vld [vmem:[%s1 + $0x580] sm:$0xff]
        %v518 = vld [vmem:[%s1 + $0x588] sm:$0xff]
        %v519 = vld [vmem:[%s1 + $0x590] sm:$0xff]
        %v520 = vld [vmem:[%s1 + $0x598] sm:$0xff]
        %529 = vrot.lane.b32.xlu0 %v333, 108
        %v530 = vpop.permute.xlu0 %529
        %531 = vrot.lane.b32.xlu0 %v334, 108
        %v532 = vpop.permute.xlu0 %531
        %533 = vrot.lane.b32.xlu0 %v335, 108
        %v534 = vpop.permute.xlu0 %533
        %535 = vrot.lane.b32.xlu0 %v336, 108
        %v536 = vpop.permute.xlu0 %535
        %537 = vrot.lane.b32.xlu0 %v337, 108
        %v538 = vpop.permute.xlu0 %537
        %539 = vrot.lane.b32.xlu0 %v338, 108
        %v540 = vpop.permute.xlu0 %539
        %541 = vrot.lane.b32.xlu0 %v339, 108
        %v542 = vpop.permute.xlu0 %541
        %543 = vrot.lane.b32.xlu0 %v340, 108
        %v544 = vpop.permute.xlu0 %543
        %vm545 = vcmask 883712
        %v546 = vsel %vm545, %v530, %v532
        %v547 = vsel %vm545, %v534, %v536
        %v548 = vsel %vm545, %v538, %v540
        %v549 = vsel %vm545, %v542, %v544
        %vm550 = vcmask 982016
        %v551 = vsel %vm550, %v546, 0
        %v553 = vsel %vm550, %v547, 0
        %v555 = vsel %vm550, %v548, 0
        %v557 = vsel %vm550, %v549, 0
        %559 = vmatpush.msra.mxu0 0.0
        %560 = vmatpush.msra.mxu0 %v509
        %561 = vmatpush.msra.mxu0 %v497
        %562 = vmatpush.msra.mxu0 %v485
        %563 = vmatpush.msra.mxu0 %v473
        %564 = vmatpush.msra.mxu0 %v461
        %565 = vmatpush.msra.mxu0 %v449
        %566 = vmatpush.msra.mxu0 %v437
        %567 = vmatpush.msra.mxu0 %v425
        %568 = vmatpush.msra.mxu0 %v413
        %569 = vmatpush.msra.mxu0 %v401
        %570 = vmatpush.msra.mxu0 %v389
        %571 = vmatpush.msra.mxu0 %v377
        %572 = vmatpush.msra.mxu0 %v365
        %573 = vmatpush.msra.mxu0 %v353
        %574 = vmatpush.msra.mxu0 %v341
        %575 = vmatmul.f32.gmra.mxu0 %v551
        %v576 = vpop.f32.mrf.mxu0
        %v577 = vadd.f32 0.0, %v576
        %578 = vmatmul.f32.gmra.mxu0 %v553
        %v579 = vpop.f32.mrf.mxu0
        %v580 = vadd.f32 0.0, %v579
        %581 = vmatmul.f32.gmra.mxu0 %v555
        %v582 = vpop.f32.mrf.mxu0
        %v583 = vadd.f32 0.0, %v582
        %584 = vmatmul.f32.gmra.mxu0 %v557
        %v585 = vpop.f32.mrf.mxu0
        %v586 = vadd.f32 0.0, %v585
        %587 = vdwg.mxu0
        %588 = vmatpush.msra.mxu0 0.0
        %589 = vmatpush.msra.mxu0 %v510
        %590 = vmatpush.msra.mxu0 %v498
        %591 = vmatpush.msra.mxu0 %v486
        %592 = vmatpush.msra.mxu0 %v474
        %593 = vmatpush.msra.mxu0 %v462
        %594 = vmatpush.msra.mxu0 %v450
        %595 = vmatpush.msra.mxu0 %v438
        %596 = vmatpush.msra.mxu0 %v426
        %597 = vmatpush.msra.mxu0 %v414
        %598 = vmatpush.msra.mxu0 %v402
        %599 = vmatpush.msra.mxu0 %v390
        %600 = vmatpush.msra.mxu0 %v378
        %601 = vmatpush.msra.mxu0 %v366
        %602 = vmatpush.msra.mxu0 %v354
        %603 = vmatpush.msra.mxu0 %v342
        %604 = vmatmul.f32.gmra.mxu0 %v551
        %v605 = vpop.f32.mrf.mxu0
        %v606 = vadd.f32 0.0, %v605
        %607 = vmatmul.f32.gmra.mxu0 %v553
        %v608 = vpop.f32.mrf.mxu0
        %v609 = vadd.f32 0.0, %v608
        %610 = vmatmul.f32.gmra.mxu0 %v555
        %v611 = vpop.f32.mrf.mxu0
        %v612 = vadd.f32 0.0, %v611
        %613 = vmatmul.f32.gmra.mxu0 %v557
        %v614 = vpop.f32.mrf.mxu0
        %v615 = vadd.f32 0.0, %v614
        %616 = vdwg.mxu0
        %617 = vmatpush.msra.mxu0 0.0
        %618 = vmatpush.msra.mxu0 %v511
        %619 = vmatpush.msra.mxu0 %v499
        %620 = vmatpush.msra.mxu0 %v487
        %621 = vmatpush.msra.mxu0 %v475
        %622 = vmatpush.msra.mxu0 %v463
        %623 = vmatpush.msra.mxu0 %v451
        %624 = vmatpush.msra.mxu0 %v439
        %625 = vmatpush.msra.mxu0 %v427
        %626 = vmatpush.msra.mxu0 %v415
        %627 = vmatpush.msra.mxu0 %v403
        %628 = vmatpush.msra.mxu0 %v391
        %629 = vmatpush.msra.mxu0 %v379
        %630 = vmatpush.msra.mxu0 %v367
        %631 = vmatpush.msra.mxu0 %v355
        %632 = vmatpush.msra.mxu0 %v343
        %633 = vmatmul.f32.gmra.mxu0 %v551
        %v634 = vpop.f32.mrf.mxu0
        %v635 = vadd.f32 0.0, %v634
        %636 = vmatmul.f32.gmra.mxu0 %v553
        %v637 = vpop.f32.mrf.mxu0
        %v638 = vadd.f32 0.0, %v637
        %639 = vmatmul.f32.gmra.mxu0 %v555
        %v640 = vpop.f32.mrf.mxu0
        %v641 = vadd.f32 0.0, %v640
        %642 = vmatmul.f32.gmra.mxu0 %v557
        %v643 = vpop.f32.mrf.mxu0
        %v644 = vadd.f32 0.0, %v643
        %645 = vdwg.mxu0
        %646 = vmatpush.msra.mxu0 0.0
        %647 = vmatpush.msra.mxu0 %v512
        %648 = vmatpush.msra.mxu0 %v500
        %649 = vmatpush.msra.mxu0 %v488
        %650 = vmatpush.msra.mxu0 %v476
        %651 = vmatpush.msra.mxu0 %v464
        %652 = vmatpush.msra.mxu0 %v452
        %653 = vmatpush.msra.mxu0 %v440
        %654 = vmatpush.msra.mxu0 %v428
        %655 = vmatpush.msra.mxu0 %v416
        %656 = vmatpush.msra.mxu0 %v404
        %657 = vmatpush.msra.mxu0 %v392
        %658 = vmatpush.msra.mxu0 %v380
        %659 = vmatpush.msra.mxu0 %v368
        %660 = vmatpush.msra.mxu0 %v356
        %661 = vmatpush.msra.mxu0 %v344
        %662 = vmatmul.f32.gmra.mxu0 %v551
        %v663 = vpop.f32.mrf.mxu0
        %v664 = vadd.f32 0.0, %v663
        %665 = vmatmul.f32.gmra.mxu0 %v553
        %v666 = vpop.f32.mrf.mxu0
        %v667 = vadd.f32 0.0, %v666
        %668 = vmatmul.f32.gmra.mxu0 %v555
        %v669 = vpop.f32.mrf.mxu0
        %v670 = vadd.f32 0.0, %v669
        %671 = vmatmul.f32.gmra.mxu0 %v557
        %v672 = vpop.f32.mrf.mxu0
        %v673 = vadd.f32 0.0, %v672
        %674 = vdwg.mxu0
        %675 = vmatpush.msra.mxu0 0.0
        %676 = vmatpush.msra.mxu0 %v513
        %677 = vmatpush.msra.mxu0 %v501
        %678 = vmatpush.msra.mxu0 %v489
        %679 = vmatpush.msra.mxu0 %v477
        %680 = vmatpush.msra.mxu0 %v465
        %681 = vmatpush.msra.mxu0 %v453
        %682 = vmatpush.msra.mxu0 %v441
        %683 = vmatpush.msra.mxu0 %v429
        %684 = vmatpush.msra.mxu0 %v417
        %685 = vmatpush.msra.mxu0 %v405
        %686 = vmatpush.msra.mxu0 %v393
        %687 = vmatpush.msra.mxu0 %v381
        %688 = vmatpush.msra.mxu0 %v369
        %689 = vmatpush.msra.mxu0 %v357
        %690 = vmatpush.msra.mxu0 %v345
        %691 = vmatmul.f32.gmra.mxu0 %v551
        %v692 = vpop.f32.mrf.mxu0
        %v693 = vadd.f32 0.0, %v692
        %694 = vmatmul.f32.gmra.mxu0 %v553
        %v695 = vpop.f32.mrf.mxu0
        %v696 = vadd.f32 0.0, %v695
        %697 = vmatmul.f32.gmra.mxu0 %v555
        %v698 = vpop.f32.mrf.mxu0
        %v699 = vadd.f32 0.0, %v698
        %700 = vmatmul.f32.gmra.mxu0 %v557
        %v701 = vpop.f32.mrf.mxu0
        %v702 = vadd.f32 0.0, %v701
        %703 = vdwg.mxu0
        %704 = vmatpush.msra.mxu0 0.0
        %705 = vmatpush.msra.mxu0 %v514
        %706 = vmatpush.msra.mxu0 %v502
        %707 = vmatpush.msra.mxu0 %v490
        %708 = vmatpush.msra.mxu0 %v478
        %709 = vmatpush.msra.mxu0 %v466
        %710 = vmatpush.msra.mxu0 %v454
        %711 = vmatpush.msra.mxu0 %v442
        %712 = vmatpush.msra.mxu0 %v430
        %713 = vmatpush.msra.mxu0 %v418
        %714 = vmatpush.msra.mxu0 %v406
        %715 = vmatpush.msra.mxu0 %v394
        %716 = vmatpush.msra.mxu0 %v382
        %717 = vmatpush.msra.mxu0 %v370
        %718 = vmatpush.msra.mxu0 %v358
        %719 = vmatpush.msra.mxu0 %v346
        %720 = vmatmul.f32.gmra.mxu0 %v551
        %v721 = vpop.f32.mrf.mxu0
        %v722 = vadd.f32 0.0, %v721
        %723 = vmatmul.f32.gmra.mxu0 %v553
        %v724 = vpop.f32.mrf.mxu0
        %v725 = vadd.f32 0.0, %v724
        %726 = vmatmul.f32.gmra.mxu0 %v555
        %v727 = vpop.f32.mrf.mxu0
        %v728 = vadd.f32 0.0, %v727
        %729 = vmatmul.f32.gmra.mxu0 %v557
        %v730 = vpop.f32.mrf.mxu0
        %v731 = vadd.f32 0.0, %v730
        %732 = vdwg.mxu0
        %733 = vmatpush.msra.mxu0 0.0
        %734 = vmatpush.msra.mxu0 %v515
        %735 = vmatpush.msra.mxu0 %v503
        %736 = vmatpush.msra.mxu0 %v491
        %737 = vmatpush.msra.mxu0 %v479
        %738 = vmatpush.msra.mxu0 %v467
        %739 = vmatpush.msra.mxu0 %v455
        %740 = vmatpush.msra.mxu0 %v443
        %741 = vmatpush.msra.mxu0 %v431
        %742 = vmatpush.msra.mxu0 %v419
        %743 = vmatpush.msra.mxu0 %v407
        %744 = vmatpush.msra.mxu0 %v395
        %745 = vmatpush.msra.mxu0 %v383
        %746 = vmatpush.msra.mxu0 %v371
        %747 = vmatpush.msra.mxu0 %v359
        %748 = vmatpush.msra.mxu0 %v347
        %749 = vmatmul.f32.gmra.mxu0 %v551
        %v750 = vpop.f32.mrf.mxu0
        %v751 = vadd.f32 0.0, %v750
        %752 = vmatmul.f32.gmra.mxu0 %v553
        %v753 = vpop.f32.mrf.mxu0
        %v754 = vadd.f32 0.0, %v753
        %755 = vmatmul.f32.gmra.mxu0 %v555
        %v756 = vpop.f32.mrf.mxu0
        %v757 = vadd.f32 0.0, %v756
        %758 = vmatmul.f32.gmra.mxu0 %v557
        %v759 = vpop.f32.mrf.mxu0
        %v760 = vadd.f32 0.0, %v759
        %761 = vdwg.mxu0
        %762 = vmatpush.msra.mxu0 0.0
        %763 = vmatpush.msra.mxu0 %v516
        %764 = vmatpush.msra.mxu0 %v504
        %765 = vmatpush.msra.mxu0 %v492
        %766 = vmatpush.msra.mxu0 %v480
        %767 = vmatpush.msra.mxu0 %v468
        %768 = vmatpush.msra.mxu0 %v456
        %769 = vmatpush.msra.mxu0 %v444
        %770 = vmatpush.msra.mxu0 %v432
        %771 = vmatpush.msra.mxu0 %v420
        %772 = vmatpush.msra.mxu0 %v408
        %773 = vmatpush.msra.mxu0 %v396
        %774 = vmatpush.msra.mxu0 %v384
        %775 = vmatpush.msra.mxu0 %v372
        %776 = vmatpush.msra.mxu0 %v360
        %777 = vmatpush.msra.mxu0 %v348
        %778 = vmatmul.f32.gmra.mxu0 %v551
        %v779 = vpop.f32.mrf.mxu0
        %v780 = vadd.f32 0.0, %v779
        %781 = vmatmul.f32.gmra.mxu0 %v553
        %v782 = vpop.f32.mrf.mxu0
        %v783 = vadd.f32 0.0, %v782
        %784 = vmatmul.f32.gmra.mxu0 %v555
        %v785 = vpop.f32.mrf.mxu0
        %v786 = vadd.f32 0.0, %v785
        %787 = vmatmul.f32.gmra.mxu0 %v557
        %v788 = vpop.f32.mrf.mxu0
        %v789 = vadd.f32 0.0, %v788
        %790 = vdwg.mxu0
        %791 = vmatpush.msra.mxu0 0.0
        %792 = vmatpush.msra.mxu0 %v517
        %793 = vmatpush.msra.mxu0 %v505
        %794 = vmatpush.msra.mxu0 %v493
        %795 = vmatpush.msra.mxu0 %v481
        %796 = vmatpush.msra.mxu0 %v469
        %797 = vmatpush.msra.mxu0 %v457
        %798 = vmatpush.msra.mxu0 %v445
        %799 = vmatpush.msra.mxu0 %v433
        %800 = vmatpush.msra.mxu0 %v421
        %801 = vmatpush.msra.mxu0 %v409
        %802 = vmatpush.msra.mxu0 %v397
        %803 = vmatpush.msra.mxu0 %v385
        %804 = vmatpush.msra.mxu0 %v373
        %805 = vmatpush.msra.mxu0 %v361
        %806 = vmatpush.msra.mxu0 %v349
        %807 = vmatmul.f32.gmra.mxu0 %v551
        %v808 = vpop.f32.mrf.mxu0
        %v809 = vadd.f32 0.0, %v808
        %810 = vmatmul.f32.gmra.mxu0 %v553
        %v811 = vpop.f32.mrf.mxu0
        %v812 = vadd.f32 0.0, %v811
        %813 = vmatmul.f32.gmra.mxu0 %v555
        %v814 = vpop.f32.mrf.mxu0
        %v815 = vadd.f32 0.0, %v814
        %816 = vmatmul.f32.gmra.mxu0 %v557
        %v817 = vpop.f32.mrf.mxu0
        %v818 = vadd.f32 0.0, %v817
        %819 = vdwg.mxu0
        %820 = vmatpush.msra.mxu0 0.0
        %821 = vmatpush.msra.mxu0 %v518
        %822 = vmatpush.msra.mxu0 %v506
        %823 = vmatpush.msra.mxu0 %v494
        %824 = vmatpush.msra.mxu0 %v482
        %825 = vmatpush.msra.mxu0 %v470
        %826 = vmatpush.msra.mxu0 %v458
        %827 = vmatpush.msra.mxu0 %v446
        %828 = vmatpush.msra.mxu0 %v434
        %829 = vmatpush.msra.mxu0 %v422
        %830 = vmatpush.msra.mxu0 %v410
        %831 = vmatpush.msra.mxu0 %v398
        %832 = vmatpush.msra.mxu0 %v386
        %833 = vmatpush.msra.mxu0 %v374
        %834 = vmatpush.msra.mxu0 %v362
        %835 = vmatpush.msra.mxu0 %v350
        %836 = vmatmul.f32.gmra.mxu0 %v551
        %v837 = vpop.f32.mrf.mxu0
        %v838 = vadd.f32 0.0, %v837
        %839 = vmatmul.f32.gmra.mxu0 %v553
        %v840 = vpop.f32.mrf.mxu0
        %v841 = vadd.f32 0.0, %v840
        %842 = vmatmul.f32.gmra.mxu0 %v555
        %v843 = vpop.f32.mrf.mxu0
        %v844 = vadd.f32 0.0, %v843
        %845 = vmatmul.f32.gmra.mxu0 %v557
        %v846 = vpop.f32.mrf.mxu0
        %v847 = vadd.f32 0.0, %v846
        %848 = vdwg.mxu0
        %849 = vmatpush.msra.mxu0 0.0
        %850 = vmatpush.msra.mxu0 %v519
        %851 = vmatpush.msra.mxu0 %v507
        %852 = vmatpush.msra.mxu0 %v495
        %853 = vmatpush.msra.mxu0 %v483
        %854 = vmatpush.msra.mxu0 %v471
        %855 = vmatpush.msra.mxu0 %v459
        %856 = vmatpush.msra.mxu0 %v447
        %857 = vmatpush.msra.mxu0 %v435
        %858 = vmatpush.msra.mxu0 %v423
        %859 = vmatpush.msra.mxu0 %v411
        %860 = vmatpush.msra.mxu0 %v399
        %861 = vmatpush.msra.mxu0 %v387
        %862 = vmatpush.msra.mxu0 %v375
        %863 = vmatpush.msra.mxu0 %v363
        %864 = vmatpush.msra.mxu0 %v351
        %865 = vmatmul.f32.gmra.mxu0 %v551
        %v866 = vpop.f32.mrf.mxu0
        %v867 = vadd.f32 0.0, %v866
        %868 = vmatmul.f32.gmra.mxu0 %v553
        %v869 = vpop.f32.mrf.mxu0
        %v870 = vadd.f32 0.0, %v869
        %871 = vmatmul.f32.gmra.mxu0 %v555
        %v872 = vpop.f32.mrf.mxu0
        %v873 = vadd.f32 0.0, %v872
        %874 = vmatmul.f32.gmra.mxu0 %v557
        %v875 = vpop.f32.mrf.mxu0
        %v876 = vadd.f32 0.0, %v875
        %877 = vdwg.mxu0
        %878 = vmatpush.msra.mxu0 0.0
        %879 = vmatpush.msra.mxu0 %v520
        %880 = vmatpush.msra.mxu0 %v508
        %881 = vmatpush.msra.mxu0 %v496
        %882 = vmatpush.msra.mxu0 %v484
        %883 = vmatpush.msra.mxu0 %v472
        %884 = vmatpush.msra.mxu0 %v460
        %885 = vmatpush.msra.mxu0 %v448
        %886 = vmatpush.msra.mxu0 %v436
        %887 = vmatpush.msra.mxu0 %v424
        %888 = vmatpush.msra.mxu0 %v412
        %889 = vmatpush.msra.mxu0 %v400
        %890 = vmatpush.msra.mxu0 %v388
        %891 = vmatpush.msra.mxu0 %v376
        %892 = vmatpush.msra.mxu0 %v364
        %893 = vmatpush.msra.mxu0 %v352
        %894 = vmatmul.f32.gmra.mxu0 %v551
        %v895 = vpop.f32.mrf.mxu0
        %v896 = vadd.f32 0.0, %v895
        %897 = vmatmul.f32.gmra.mxu0 %v553
        %v898 = vpop.f32.mrf.mxu0
        %v899 = vadd.f32 0.0, %v898
        %900 = vmatmul.f32.gmra.mxu0 %v555
        %v901 = vpop.f32.mrf.mxu0
        %v902 = vadd.f32 0.0, %v901
        %903 = vmatmul.f32.gmra.mxu0 %v557
        %v904 = vpop.f32.mrf.mxu0
        %v905 = vadd.f32 0.0, %v904
        %906 = vdwg.mxu0
        %v909 = vperm.slane %v326, 0
        %v910 = vperm.slane %v326, 1
        %v911 = vperm.slane %v326, 2
        %v912 = vperm.slane %v326, 3
        %v913 = vperm.slane %v326, 4
        %v914 = vperm.slane %v326, 5
        %v915 = vperm.slane %v326, 6
        %v916 = vperm.slane %v326, 7
        %v917 = vperm.slane %v328, 0
        %v918 = vperm.slane %v328, 1
        %v919 = vperm.slane %v328, 2
        %v920 = vperm.slane %v328, 3
        %v933 = vmul.f32 %v577, %v909
        %v934 = vmul.f32 %v606, %v910
        %v935 = vmul.f32 %v635, %v911
        %v936 = vmul.f32 %v664, %v912
        %v937 = vmul.f32 %v693, %v913
        %v938 = vmul.f32 %v722, %v914
        %v939 = vmul.f32 %v751, %v915
        %v940 = vmul.f32 %v780, %v916
        %v941 = vmul.f32 %v809, %v917
        %v942 = vmul.f32 %v838, %v918
        %v943 = vmul.f32 %v867, %v919
        %v944 = vmul.f32 %v896, %v920
        %v945 = vmul.f32 %v580, %v909
        %v946 = vmul.f32 %v609, %v910
        %v947 = vmul.f32 %v638, %v911
        %v948 = vmul.f32 %v667, %v912
        %v949 = vmul.f32 %v696, %v913
        %v950 = vmul.f32 %v725, %v914
        %v951 = vmul.f32 %v754, %v915
        %v952 = vmul.f32 %v783, %v916
        %v953 = vmul.f32 %v812, %v917
        %v954 = vmul.f32 %v841, %v918
        %v955 = vmul.f32 %v870, %v919
        %v956 = vmul.f32 %v899, %v920
        %v957 = vmul.f32 %v583, %v909
        %v958 = vmul.f32 %v612, %v910
        %v959 = vmul.f32 %v641, %v911
        %v960 = vmul.f32 %v670, %v912
        %v961 = vmul.f32 %v699, %v913
        %v962 = vmul.f32 %v728, %v914
        %v963 = vmul.f32 %v757, %v915
        %v964 = vmul.f32 %v786, %v916
        %v965 = vmul.f32 %v815, %v917
        %v966 = vmul.f32 %v844, %v918
        %v967 = vmul.f32 %v873, %v919
        %v968 = vmul.f32 %v902, %v920
        %v969 = vmul.f32 %v586, %v909
        %v970 = vmul.f32 %v615, %v910
        %v971 = vmul.f32 %v644, %v911
        %v972 = vmul.f32 %v673, %v912
        %v973 = vmul.f32 %v702, %v913
        %v974 = vmul.f32 %v731, %v914
        %v975 = vmul.f32 %v760, %v915
        %v976 = vmul.f32 %v789, %v916
        %v977 = vmul.f32 %v818, %v917
        %v978 = vmul.f32 %v847, %v918
        %v979 = vmul.f32 %v876, %v919
        %v980 = vmul.f32 %v905, %v920
        %v983 = vperm.slane %v330, 0
        %v984 = vperm.slane %v330, 1
        %v985 = vperm.slane %v330, 2
        %v986 = vperm.slane %v330, 3
        %v987 = vperm.slane %v330, 4
        %v988 = vperm.slane %v330, 5
        %v989 = vperm.slane %v330, 6
        %v990 = vperm.slane %v330, 7
        %v991 = vperm.slane %v332, 0
        %v992 = vperm.slane %v332, 1
        %v993 = vperm.slane %v332, 2
        %v994 = vperm.slane %v332, 3
        %v1007 = vadd.f32 %v933, %v983
        %v1008 = vadd.f32 %v934, %v984
        %v1009 = vadd.f32 %v935, %v985
        %v1010 = vadd.f32 %v936, %v986
        %v1011 = vadd.f32 %v937, %v987
        %v1012 = vadd.f32 %v938, %v988
        %v1013 = vadd.f32 %v939, %v989
        %v1014 = vadd.f32 %v940, %v990
        %v1015 = vadd.f32 %v941, %v991
        %v1016 = vadd.f32 %v942, %v992
        %v1017 = vadd.f32 %v943, %v993
        %v1018 = vadd.f32 %v944, %v994
        %v1019 = vadd.f32 %v945, %v983
        %v1020 = vadd.f32 %v946, %v984
        %v1021 = vadd.f32 %v947, %v985
        %v1022 = vadd.f32 %v948, %v986
        %v1023 = vadd.f32 %v949, %v987
        %v1024 = vadd.f32 %v950, %v988
        %v1025 = vadd.f32 %v951, %v989
        %v1026 = vadd.f32 %v952, %v990
        %v1027 = vadd.f32 %v953, %v991
        %v1028 = vadd.f32 %v954, %v992
        %v1029 = vadd.f32 %v955, %v993
        %v1030 = vadd.f32 %v956, %v994
        %v1031 = vadd.f32 %v957, %v983
        %v1032 = vadd.f32 %v958, %v984
        %v1033 = vadd.f32 %v959, %v985
        %v1034 = vadd.f32 %v960, %v986
        %v1035 = vadd.f32 %v961, %v987
        %v1036 = vadd.f32 %v962, %v988
        %v1037 = vadd.f32 %v963, %v989
        %v1038 = vadd.f32 %v964, %v990
        %v1039 = vadd.f32 %v965, %v991
        %v1040 = vadd.f32 %v966, %v992
        %v1041 = vadd.f32 %v967, %v993
        %v1042 = vadd.f32 %v968, %v994
        %v1043 = vadd.f32 %v969, %v983
        %v1044 = vadd.f32 %v970, %v984
        %v1045 = vadd.f32 %v971, %v985
        %v1046 = vadd.f32 %v972, %v986
        %v1047 = vadd.f32 %v973, %v987
        %v1048 = vadd.f32 %v974, %v988
        %v1049 = vadd.f32 %v975, %v989
        %v1050 = vadd.f32 %v976, %v990
        %v1051 = vadd.f32 %v977, %v991
        %v1052 = vadd.f32 %v978, %v992
        %v1053 = vadd.f32 %v979, %v993
        %v1054 = vadd.f32 %v980, %v994
        %v1055 = vmax.f32 %v1007, 0.0
        %v1056 = vmax.f32 %v1008, 0.0
        %v1057 = vmax.f32 %v1009, 0.0
        %v1058 = vmax.f32 %v1010, 0.0
        %v1059 = vmax.f32 %v1011, 0.0
        %v1060 = vmax.f32 %v1012, 0.0
        %v1061 = vmax.f32 %v1013, 0.0
        %v1062 = vmax.f32 %v1014, 0.0
        %v1063 = vmax.f32 %v1015, 0.0
        %v1064 = vmax.f32 %v1016, 0.0
        %v1065 = vmax.f32 %v1017, 0.0
        %v1066 = vmax.f32 %v1018, 0.0
        %v1067 = vmax.f32 %v1019, 0.0
        %v1068 = vmax.f32 %v1020, 0.0
        %v1069 = vmax.f32 %v1021, 0.0
        %v1070 = vmax.f32 %v1022, 0.0
        %v1071 = vmax.f32 %v1023, 0.0
        %v1072 = vmax.f32 %v1024, 0.0
        %v1073 = vmax.f32 %v1025, 0.0
        %v1074 = vmax.f32 %v1026, 0.0
        %v1075 = vmax.f32 %v1027, 0.0
        %v1076 = vmax.f32 %v1028, 0.0
        %v1077 = vmax.f32 %v1029, 0.0
        %v1078 = vmax.f32 %v1030, 0.0
        %v1079 = vmax.f32 %v1031, 0.0
        %v1080 = vmax.f32 %v1032, 0.0
        %v1081 = vmax.f32 %v1033, 0.0
        %v1082 = vmax.f32 %v1034, 0.0
        %v1083 = vmax.f32 %v1035, 0.0
        %v1084 = vmax.f32 %v1036, 0.0
        %v1085 = vmax.f32 %v1037, 0.0
        %v1086 = vmax.f32 %v1038, 0.0
        %v1087 = vmax.f32 %v1039, 0.0
        %v1088 = vmax.f32 %v1040, 0.0
        %v1089 = vmax.f32 %v1041, 0.0
        %v1090 = vmax.f32 %v1042, 0.0
        %v1091 = vmax.f32 %v1043, 0.0
        %v1092 = vmax.f32 %v1044, 0.0
        %v1093 = vmax.f32 %v1045, 0.0
        %v1094 = vmax.f32 %v1046, 0.0
        %v1095 = vmax.f32 %v1047, 0.0
        %v1096 = vmax.f32 %v1048, 0.0
        %v1097 = vmax.f32 %v1049, 0.0
        %v1098 = vmax.f32 %v1050, 0.0
        %v1099 = vmax.f32 %v1051, 0.0
        %v1100 = vmax.f32 %v1052, 0.0
        %v1101 = vmax.f32 %v1053, 0.0
        %v1102 = vmax.f32 %v1054, 0.0
        %1103 = vst [vmem:[#allocation2 + $0x18] sm:$0xff] %v1055
        %1104 = vst [vmem:[#allocation2 + $0x20] sm:$0xff] %v1056
        %1105 = vst [vmem:[#allocation2 + $0x28] sm:$0xff] %v1057
        %1106 = vst [vmem:[#allocation2 + $0x30] sm:$0xff] %v1058
        %1107 = vst [vmem:[#allocation2 + $0x38] sm:$0xff] %v1059
        %1108 = vst [vmem:[#allocation2 + $0x40] sm:$0xff] %v1060
        %1109 = vst [vmem:[#allocation2 + $0x48] sm:$0xff] %v1061
        %1110 = vst [vmem:[#allocation2 + $0x50] sm:$0xff] %v1062
        %1111 = vst [vmem:[#allocation2 + $0x58] sm:$0xff] %v1063
        %1112 = vst [vmem:[#allocation2 + $0x60] sm:$0xff] %v1064
        %1113 = vst [vmem:[#allocation2 + $0x68] sm:$0xff] %v1065
        %1114 = vst [vmem:[#allocation2 + $0x70] sm:$0xff] %v1066
        %1115 = vst [vmem:[#allocation2 + $0x1c8] sm:$0xff] %v1067
        %1116 = vst [vmem:[#allocation2 + $0x1d0] sm:$0xff] %v1068
        %1117 = vst [vmem:[#allocation2 + $0x1d8] sm:$0xff] %v1069
        %1118 = vst [vmem:[#allocation2 + $0x1e0] sm:$0xff] %v1070
        %1119 = vst [vmem:[#allocation2 + $0x1e8] sm:$0xff] %v1071
        %1120 = vst [vmem:[#allocation2 + $0x1f0] sm:$0xff] %v1072
        %1121 = vst [vmem:[#allocation2 + $0x1f8] sm:$0xff] %v1073
        %1122 = vst [vmem:[#allocation2 + $0x200] sm:$0xff] %v1074
        %1123 = vst [vmem:[#allocation2 + $0x208] sm:$0xff] %v1075
        %1124 = vst [vmem:[#allocation2 + $0x210] sm:$0xff] %v1076
        %1125 = vst [vmem:[#allocation2 + $0x218] sm:$0xff] %v1077
        %1126 = vst [vmem:[#allocation2 + $0x220] sm:$0xff] %v1078
        %1127 = vst [vmem:[#allocation2 + $0x378] sm:$0xff] %v1079
        %1128 = vst [vmem:[#allocation2 + $0x380] sm:$0xff] %v1080
        %1129 = vst [vmem:[#allocation2 + $0x388] sm:$0xff] %v1081
        %1130 = vst [vmem:[#allocation2 + $0x390] sm:$0xff] %v1082
        %1131 = vst [vmem:[#allocation2 + $0x398] sm:$0xff] %v1083
        %1132 = vst [vmem:[#allocation2 + $0x3a0] sm:$0xff] %v1084
        %1133 = vst [vmem:[#allocation2 + $0x3a8] sm:$0xff] %v1085
        %1134 = vst [vmem:[#allocation2 + $0x3b0] sm:$0xff] %v1086
        %1135 = vst [vmem:[#allocation2 + $0x3b8] sm:$0xff] %v1087
        %1136 = vst [vmem:[#allocation2 + $0x3c0] sm:$0xff] %v1088
        %1137 = vst [vmem:[#allocation2 + $0x3c8] sm:$0xff] %v1089
        %1138 = vst [vmem:[#allocation2 + $0x3d0] sm:$0xff] %v1090
        %1139 = vst [vmem:[#allocation2 + $0x528] sm:$0xff] %v1091
        %1140 = vst [vmem:[#allocation2 + $0x530] sm:$0xff] %v1092
        %1141 = vst [vmem:[#allocation2 + $0x538] sm:$0xff] %v1093
        %1142 = vst [vmem:[#allocation2 + $0x540] sm:$0xff] %v1094
        %1143 = vst [vmem:[#allocation2 + $0x548] sm:$0xff] %v1095
        %1144 = vst [vmem:[#allocation2 + $0x550] sm:$0xff] %v1096
        %1145 = vst [vmem:[#allocation2 + $0x558] sm:$0xff] %v1097
        %1146 = vst [vmem:[#allocation2 + $0x560] sm:$0xff] %v1098
        %1147 = vst [vmem:[#allocation2 + $0x568] sm:$0xff] %v1099
        %1148 = vst [vmem:[#allocation2 + $0x570] sm:$0xff] %v1100
        %1149 = vst [vmem:[#allocation2 + $0x578] sm:$0xff] %v1101
        %1150 = vst [vmem:[#allocation2 + $0x580] sm:$0xff] %v1102
        %v1151 = vld [vmem:[%s294] sm:$0xff]
        %v1152 = vld [vmem:[%s294 + $0x8] sm:$0xff]
        %v1153 = vld [vmem:[%s294 + $0x20] sm:$0xff]
        %v1154 = vld [vmem:[%s294 + $0x28] sm:$0xff]
        %v1155 = vld [vmem:[%s294 + $0x40] sm:$0xff]
        %v1156 = vld [vmem:[%s294 + $0x48] sm:$0xff]
        %v1157 = vld [vmem:[%s294 + $0x60] sm:$0xff]
        %v1158 = vld [vmem:[%s294 + $0x68] sm:$0xff]
        %v1159 = vld [vmem:[%s1] sm:$0xff]
        %v1160 = vld [vmem:[%s1 + $0x8] sm:$0xff]
        %v1161 = vld [vmem:[%s1 + $0x10] sm:$0xff]
        %v1162 = vld [vmem:[%s1 + $0x18] sm:$0xff]
        %v1163 = vld [vmem:[%s1 + $0x20] sm:$0xff]
        %v1164 = vld [vmem:[%s1 + $0x28] sm:$0xff]
        %v1165 = vld [vmem:[%s1 + $0x30] sm:$0xff]
        %v1166 = vld [vmem:[%s1 + $0x38] sm:$0xff]
        %v1167 = vld [vmem:[%s1 + $0x40] sm:$0xff]
        %v1168 = vld [vmem:[%s1 + $0x48] sm:$0xff]
        %v1169 = vld [vmem:[%s1 + $0x50] sm:$0xff]
        %v1170 = vld [vmem:[%s1 + $0x58] sm:$0xff]
        %v1171 = vld [vmem:[%s1 + $0x60] sm:$0xff]
        %v1172 = vld [vmem:[%s1 + $0x68] sm:$0xff]
        %v1173 = vld [vmem:[%s1 + $0x70] sm:$0xff]
        %v1174 = vld [vmem:[%s1 + $0x78] sm:$0xff]
        %v1175 = vld [vmem:[%s1 + $0x80] sm:$0xff]
        %v1176 = vld [vmem:[%s1 + $0x88] sm:$0xff]
        %v1177 = vld [vmem:[%s1 + $0x90] sm:$0xff]
        %v1178 = vld [vmem:[%s1 + $0x98] sm:$0xff]
        %v1179 = vld [vmem:[%s1 + $0xa0] sm:$0xff]
        %v1180 = vld [vmem:[%s1 + $0xa8] sm:$0xff]
        %v1181 = vld [vmem:[%s1 + $0xb0] sm:$0xff]
        %v1182 = vld [vmem:[%s1 + $0xb8] sm:$0xff]
        %v1183 = vld [vmem:[%s1 + $0xc0] sm:$0xff]
        %v1184 = vld [vmem:[%s1 + $0xc8] sm:$0xff]
        %v1185 = vld [vmem:[%s1 + $0xd0] sm:$0xff]
        %v1186 = vld [vmem:[%s1 + $0xd8] sm:$0xff]
        %v1187 = vld [vmem:[%s1 + $0xe0] sm:$0xff]
        %v1188 = vld [vmem:[%s1 + $0xe8] sm:$0xff]
        %v1189 = vld [vmem:[%s1 + $0xf0] sm:$0xff]
        %v1190 = vld [vmem:[%s1 + $0xf8] sm:$0xff]
        %v1191 = vld [vmem:[%s1 + $0x100] sm:$0xff]
        %v1192 = vld [vmem:[%s1 + $0x108] sm:$0xff]
        %v1193 = vld [vmem:[%s1 + $0x110] sm:$0xff]
        %v1194 = vld [vmem:[%s1 + $0x118] sm:$0xff]
        %v1195 = vld [vmem:[%s1 + $0x120] sm:$0xff]
        %v1196 = vld [vmem:[%s1 + $0x128] sm:$0xff]
        %v1197 = vld [vmem:[%s1 + $0x130] sm:$0xff]
        %v1198 = vld [vmem:[%s1 + $0x138] sm:$0xff]
        %v1199 = vld [vmem:[%s1 + $0x140] sm:$0xff]
        %v1200 = vld [vmem:[%s1 + $0x148] sm:$0xff]
        %v1201 = vld [vmem:[%s1 + $0x150] sm:$0xff]
        %v1202 = vld [vmem:[%s1 + $0x158] sm:$0xff]
        %v1203 = vld [vmem:[%s1 + $0x160] sm:$0xff]
        %v1204 = vld [vmem:[%s1 + $0x168] sm:$0xff]
        %v1205 = vld [vmem:[%s1 + $0x170] sm:$0xff]
        %v1206 = vld [vmem:[%s1 + $0x178] sm:$0xff]
        %v1207 = vld [vmem:[%s1 + $0x180] sm:$0xff]
        %v1208 = vld [vmem:[%s1 + $0x188] sm:$0xff]
        %v1209 = vld [vmem:[%s1 + $0x190] sm:$0xff]
        %v1210 = vld [vmem:[%s1 + $0x198] sm:$0xff]
        %v1211 = vld [vmem:[%s1 + $0x1a0] sm:$0xff]
        %v1212 = vld [vmem:[%s1 + $0x1a8] sm:$0xff]
        %v1213 = vld [vmem:[%s1 + $0x1b0] sm:$0xff]
        %v1214 = vld [vmem:[%s1 + $0x1b8] sm:$0xff]
        %v1215 = vld [vmem:[%s1 + $0x1c0] sm:$0xff]
        %v1216 = vld [vmem:[%s1 + $0x1c8] sm:$0xff]
        %v1217 = vld [vmem:[%s1 + $0x1d0] sm:$0xff]
        %v1218 = vld [vmem:[%s1 + $0x1d8] sm:$0xff]
        %v1219 = vld [vmem:[%s1 + $0x1e0] sm:$0xff]
        %v1220 = vld [vmem:[%s1 + $0x1e8] sm:$0xff]
        %v1221 = vld [vmem:[%s1 + $0x1f0] sm:$0xff]
        %v1222 = vld [vmem:[%s1 + $0x1f8] sm:$0xff]
        %v1223 = vld [vmem:[%s1 + $0x200] sm:$0xff]
        %v1224 = vld [vmem:[%s1 + $0x208] sm:$0xff]
        %v1225 = vld [vmem:[%s1 + $0x210] sm:$0xff]
        %v1226 = vld [vmem:[%s1 + $0x218] sm:$0xff]
        %v1227 = vld [vmem:[%s1 + $0x220] sm:$0xff]
        %v1228 = vld [vmem:[%s1 + $0x228] sm:$0xff]
        %v1229 = vld [vmem:[%s1 + $0x230] sm:$0xff]
        %v1230 = vld [vmem:[%s1 + $0x238] sm:$0xff]
        %v1231 = vld [vmem:[%s1 + $0x240] sm:$0xff]
        %v1232 = vld [vmem:[%s1 + $0x248] sm:$0xff]
        %v1233 = vld [vmem:[%s1 + $0x250] sm:$0xff]
        %v1234 = vld [vmem:[%s1 + $0x258] sm:$0xff]
        %v1235 = vld [vmem:[%s1 + $0x260] sm:$0xff]
        %v1236 = vld [vmem:[%s1 + $0x268] sm:$0xff]
        %v1237 = vld [vmem:[%s1 + $0x270] sm:$0xff]
        %v1238 = vld [vmem:[%s1 + $0x278] sm:$0xff]
        %v1239 = vld [vmem:[%s1 + $0x280] sm:$0xff]
        %v1240 = vld [vmem:[%s1 + $0x288] sm:$0xff]
        %v1241 = vld [vmem:[%s1 + $0x290] sm:$0xff]
        %v1242 = vld [vmem:[%s1 + $0x298] sm:$0xff]
        %v1243 = vld [vmem:[%s1 + $0x2a0] sm:$0xff]
        %v1244 = vld [vmem:[%s1 + $0x2a8] sm:$0xff]
        %v1245 = vld [vmem:[%s1 + $0x2b0] sm:$0xff]
        %v1246 = vld [vmem:[%s1 + $0x2b8] sm:$0xff]
        %v1247 = vld [vmem:[%s1 + $0x2c0] sm:$0xff]
        %v1248 = vld [vmem:[%s1 + $0x2c8] sm:$0xff]
        %v1249 = vld [vmem:[%s1 + $0x2d0] sm:$0xff]
        %v1250 = vld [vmem:[%s1 + $0x2d8] sm:$0xff]
        %v1251 = vld [vmem:[%s1 + $0x2e0] sm:$0xff]
        %v1252 = vld [vmem:[%s1 + $0x2e8] sm:$0xff]
        %v1253 = vld [vmem:[%s1 + $0x2f0] sm:$0xff]
        %v1254 = vld [vmem:[%s1 + $0x2f8] sm:$0xff]
        %v1255 = vld [vmem:[%s1 + $0x300] sm:$0xff]
        %v1256 = vld [vmem:[%s1 + $0x308] sm:$0xff]
        %v1257 = vld [vmem:[%s1 + $0x310] sm:$0xff]
        %v1258 = vld [vmem:[%s1 + $0x318] sm:$0xff]
        %v1259 = vld [vmem:[%s1 + $0x320] sm:$0xff]
        %v1260 = vld [vmem:[%s1 + $0x328] sm:$0xff]
        %v1261 = vld [vmem:[%s1 + $0x330] sm:$0xff]
        %v1262 = vld [vmem:[%s1 + $0x338] sm:$0xff]
        %v1263 = vld [vmem:[%s1 + $0x340] sm:$0xff]
        %v1264 = vld [vmem:[%s1 + $0x348] sm:$0xff]
        %v1265 = vld [vmem:[%s1 + $0x350] sm:$0xff]
        %v1266 = vld [vmem:[%s1 + $0x358] sm:$0xff]
        %v1267 = vld [vmem:[%s1 + $0x360] sm:$0xff]
        %v1268 = vld [vmem:[%s1 + $0x368] sm:$0xff]
        %v1269 = vld [vmem:[%s1 + $0x370] sm:$0xff]
        %v1270 = vld [vmem:[%s1 + $0x378] sm:$0xff]
        %v1271 = vld [vmem:[%s1 + $0x380] sm:$0xff]
        %v1272 = vld [vmem:[%s1 + $0x388] sm:$0xff]
        %v1273 = vld [vmem:[%s1 + $0x390] sm:$0xff]
        %v1274 = vld [vmem:[%s1 + $0x398] sm:$0xff]
        %v1275 = vld [vmem:[%s1 + $0x3a0] sm:$0xff]
        %v1276 = vld [vmem:[%s1 + $0x3a8] sm:$0xff]
        %v1277 = vld [vmem:[%s1 + $0x3b0] sm:$0xff]
        %v1278 = vld [vmem:[%s1 + $0x3b8] sm:$0xff]
        %v1279 = vld [vmem:[%s1 + $0x3c0] sm:$0xff]
        %v1280 = vld [vmem:[%s1 + $0x3c8] sm:$0xff]
        %v1281 = vld [vmem:[%s1 + $0x3d0] sm:$0xff]
        %v1282 = vld [vmem:[%s1 + $0x3d8] sm:$0xff]
        %v1283 = vld [vmem:[%s1 + $0x3e0] sm:$0xff]
        %v1284 = vld [vmem:[%s1 + $0x3e8] sm:$0xff]
        %v1285 = vld [vmem:[%s1 + $0x3f0] sm:$0xff]
        %v1286 = vld [vmem:[%s1 + $0x3f8] sm:$0xff]
        %v1287 = vld [vmem:[%s1 + $0x400] sm:$0xff]
        %v1288 = vld [vmem:[%s1 + $0x408] sm:$0xff]
        %v1289 = vld [vmem:[%s1 + $0x410] sm:$0xff]
        %v1290 = vld [vmem:[%s1 + $0x418] sm:$0xff]
        %v1291 = vld [vmem:[%s1 + $0x420] sm:$0xff]
        %v1292 = vld [vmem:[%s1 + $0x428] sm:$0xff]
        %v1293 = vld [vmem:[%s1 + $0x430] sm:$0xff]
        %v1294 = vld [vmem:[%s1 + $0x438] sm:$0xff]
        %v1295 = vld [vmem:[%s1 + $0x440] sm:$0xff]
        %v1296 = vld [vmem:[%s1 + $0x448] sm:$0xff]
        %v1297 = vld [vmem:[%s1 + $0x450] sm:$0xff]
        %v1298 = vld [vmem:[%s1 + $0x458] sm:$0xff]
        %v1299 = vld [vmem:[%s1 + $0x460] sm:$0xff]
        %v1300 = vld [vmem:[%s1 + $0x468] sm:$0xff]
        %v1301 = vld [vmem:[%s1 + $0x470] sm:$0xff]
        %v1302 = vld [vmem:[%s1 + $0x478] sm:$0xff]
        %v1303 = vld [vmem:[%s1 + $0x480] sm:$0xff]
        %v1304 = vld [vmem:[%s1 + $0x488] sm:$0xff]
        %v1305 = vld [vmem:[%s1 + $0x490] sm:$0xff]
        %v1306 = vld [vmem:[%s1 + $0x498] sm:$0xff]
        %v1307 = vld [vmem:[%s1 + $0x4a0] sm:$0xff]
        %v1308 = vld [vmem:[%s1 + $0x4a8] sm:$0xff]
        %v1309 = vld [vmem:[%s1 + $0x4b0] sm:$0xff]
        %v1310 = vld [vmem:[%s1 + $0x4b8] sm:$0xff]
        %v1311 = vld [vmem:[%s1 + $0x4c0] sm:$0xff]
        %v1312 = vld [vmem:[%s1 + $0x4c8] sm:$0xff]
        %v1313 = vld [vmem:[%s1 + $0x4d0] sm:$0xff]
        %v1314 = vld [vmem:[%s1 + $0x4d8] sm:$0xff]
        %v1315 = vld [vmem:[%s1 + $0x4e0] sm:$0xff]
        %v1316 = vld [vmem:[%s1 + $0x4e8] sm:$0xff]
        %v1317 = vld [vmem:[%s1 + $0x4f0] sm:$0xff]
        %v1318 = vld [vmem:[%s1 + $0x4f8] sm:$0xff]
        %v1319 = vld [vmem:[%s1 + $0x500] sm:$0xff]
        %v1320 = vld [vmem:[%s1 + $0x508] sm:$0xff]
        %v1321 = vld [vmem:[%s1 + $0x510] sm:$0xff]
        %v1322 = vld [vmem:[%s1 + $0x518] sm:$0xff]
        %v1323 = vld [vmem:[%s1 + $0x520] sm:$0xff]
        %v1324 = vld [vmem:[%s1 + $0x528] sm:$0xff]
        %v1325 = vld [vmem:[%s1 + $0x530] sm:$0xff]
        %v1326 = vld [vmem:[%s1 + $0x538] sm:$0xff]
        %v1327 = vld [vmem:[%s1 + $0x540] sm:$0xff]
        %v1328 = vld [vmem:[%s1 + $0x548] sm:$0xff]
        %v1329 = vld [vmem:[%s1 + $0x550] sm:$0xff]
        %v1330 = vld [vmem:[%s1 + $0x558] sm:$0xff]
        %v1331 = vld [vmem:[%s1 + $0x560] sm:$0xff]
        %v1332 = vld [vmem:[%s1 + $0x568] sm:$0xff]
        %v1333 = vld [vmem:[%s1 + $0x570] sm:$0xff]
        %v1334 = vld [vmem:[%s1 + $0x578] sm:$0xff]
        %v1335 = vld [vmem:[%s1 + $0x580] sm:$0xff]
        %v1336 = vld [vmem:[%s1 + $0x588] sm:$0xff]
        %v1337 = vld [vmem:[%s1 + $0x590] sm:$0xff]
        %v1338 = vld [vmem:[%s1 + $0x598] sm:$0xff]
        %1347 = vrot.lane.b32.xlu0 %v1151, 28
        %v1348 = vpop.permute.xlu0 %1347
        %1349 = vrot.lane.b32.xlu0 %v1152, 28
        %v1350 = vpop.permute.xlu0 %1349
        %1351 = vrot.lane.b32.xlu0 %v1153, 28
        %v1352 = vpop.permute.xlu0 %1351
        %1353 = vrot.lane.b32.xlu0 %v1154, 28
        %v1354 = vpop.permute.xlu0 %1353
        %1355 = vrot.lane.b32.xlu0 %v1155, 28
        %v1356 = vpop.permute.xlu0 %1355
        %1357 = vrot.lane.b32.xlu0 %v1156, 28
        %v1358 = vpop.permute.xlu0 %1357
        %1359 = vrot.lane.b32.xlu0 %v1157, 28
        %v1360 = vpop.permute.xlu0 %1359
        %1361 = vrot.lane.b32.xlu0 %v1158, 28
        %v1362 = vpop.permute.xlu0 %1361
        %vm1363 = vcmask 228352
        %v1364 = vsel %vm1363, %v1348, %v1350
        %v1365 = vsel %vm1363, %v1352, %v1354
        %v1366 = vsel %vm1363, %v1356, %v1358
        %v1367 = vsel %vm1363, %v1360, %v1362
        %v1368 = vsel %vm550, %v1364, 0
        %v1370 = vsel %vm550, %v1365, 0
        %v1372 = vsel %vm550, %v1366, 0
        %v1374 = vsel %vm550, %v1367, 0
        %1376 = vmatpush.msra.mxu0 0.0
        %1377 = vmatpush.msra.mxu0 %v1327
        %1378 = vmatpush.msra.mxu0 %v1315
        %1379 = vmatpush.msra.mxu0 %v1303
        %1380 = vmatpush.msra.mxu0 %v1291
        %1381 = vmatpush.msra.mxu0 %v1279
        %1382 = vmatpush.msra.mxu0 %v1267
        %1383 = vmatpush.msra.mxu0 %v1255
        %1384 = vmatpush.msra.mxu0 %v1243
        %1385 = vmatpush.msra.mxu0 %v1231
        %1386 = vmatpush.msra.mxu0 %v1219
        %1387 = vmatpush.msra.mxu0 %v1207
        %1388 = vmatpush.msra.mxu0 %v1195
        %1389 = vmatpush.msra.mxu0 %v1183
        %1390 = vmatpush.msra.mxu0 %v1171
        %1391 = vmatpush.msra.mxu0 %v1159
        %1392 = vmatmul.f32.gmra.mxu0 %v1368
        %v1393 = vpop.f32.mrf.mxu0
        %v1394 = vadd.f32 0.0, %v1393
        %1395 = vmatmul.f32.gmra.mxu0 %v1370
        %v1396 = vpop.f32.mrf.mxu0
        %v1397 = vadd.f32 0.0, %v1396
        %1398 = vmatmul.f32.gmra.mxu0 %v1372
        %v1399 = vpop.f32.mrf.mxu0
        %v1400 = vadd.f32 0.0, %v1399
        %1401 = vmatmul.f32.gmra.mxu0 %v1374
        %v1402 = vpop.f32.mrf.mxu0
        %v1403 = vadd.f32 0.0, %v1402
        %1404 = vdwg.mxu0
        %1405 = vmatpush.msra.mxu0 0.0
        %1406 = vmatpush.msra.mxu0 %v1328
        %1407 = vmatpush.msra.mxu0 %v1316
        %1408 = vmatpush.msra.mxu0 %v1304
        %1409 = vmatpush.msra.mxu0 %v1292
        %1410 = vmatpush.msra.mxu0 %v1280
        %1411 = vmatpush.msra.mxu0 %v1268
        %1412 = vmatpush.msra.mxu0 %v1256
        %1413 = vmatpush.msra.mxu0 %v1244
        %1414 = vmatpush.msra.mxu0 %v1232
        %1415 = vmatpush.msra.mxu0 %v1220
        %1416 = vmatpush.msra.mxu0 %v1208
        %1417 = vmatpush.msra.mxu0 %v1196
        %1418 = vmatpush.msra.mxu0 %v1184
        %1419 = vmatpush.msra.mxu0 %v1172
        %1420 = vmatpush.msra.mxu0 %v1160
        %1421 = vmatmul.f32.gmra.mxu0 %v1368
        %v1422 = vpop.f32.mrf.mxu0
        %v1423 = vadd.f32 0.0, %v1422
        %1424 = vmatmul.f32.gmra.mxu0 %v1370
        %v1425 = vpop.f32.mrf.mxu0
        %v1426 = vadd.f32 0.0, %v1425
        %1427 = vmatmul.f32.gmra.mxu0 %v1372
        %v1428 = vpop.f32.mrf.mxu0
        %v1429 = vadd.f32 0.0, %v1428
        %1430 = vmatmul.f32.gmra.mxu0 %v1374
        %v1431 = vpop.f32.mrf.mxu0
        %v1432 = vadd.f32 0.0, %v1431
        %1433 = vdwg.mxu0
        %1434 = vmatpush.msra.mxu0 0.0
        %1435 = vmatpush.msra.mxu0 %v1329
        %1436 = vmatpush.msra.mxu0 %v1317
        %1437 = vmatpush.msra.mxu0 %v1305
        %1438 = vmatpush.msra.mxu0 %v1293
        %1439 = vmatpush.msra.mxu0 %v1281
        %1440 = vmatpush.msra.mxu0 %v1269
        %1441 = vmatpush.msra.mxu0 %v1257
        %1442 = vmatpush.msra.mxu0 %v1245
        %1443 = vmatpush.msra.mxu0 %v1233
        %1444 = vmatpush.msra.mxu0 %v1221
        %1445 = vmatpush.msra.mxu0 %v1209
        %1446 = vmatpush.msra.mxu0 %v1197
        %1447 = vmatpush.msra.mxu0 %v1185
        %1448 = vmatpush.msra.mxu0 %v1173
        %1449 = vmatpush.msra.mxu0 %v1161
        %1450 = vmatmul.f32.gmra.mxu0 %v1368
        %v1451 = vpop.f32.mrf.mxu0
        %v1452 = vadd.f32 0.0, %v1451
        %1453 = vmatmul.f32.gmra.mxu0 %v1370
        %v1454 = vpop.f32.mrf.mxu0
        %v1455 = vadd.f32 0.0, %v1454
        %1456 = vmatmul.f32.gmra.mxu0 %v1372
        %v1457 = vpop.f32.mrf.mxu0
        %v1458 = vadd.f32 0.0, %v1457
        %1459 = vmatmul.f32.gmra.mxu0 %v1374
        %v1460 = vpop.f32.mrf.mxu0
        %v1461 = vadd.f32 0.0, %v1460
        %1462 = vdwg.mxu0
        %1463 = vmatpush.msra.mxu0 0.0
        %1464 = vmatpush.msra.mxu0 %v1330
        %1465 = vmatpush.msra.mxu0 %v1318
        %1466 = vmatpush.msra.mxu0 %v1306
        %1467 = vmatpush.msra.mxu0 %v1294
        %1468 = vmatpush.msra.mxu0 %v1282
        %1469 = vmatpush.msra.mxu0 %v1270
        %1470 = vmatpush.msra.mxu0 %v1258
        %1471 = vmatpush.msra.mxu0 %v1246
        %1472 = vmatpush.msra.mxu0 %v1234
        %1473 = vmatpush.msra.mxu0 %v1222
        %1474 = vmatpush.msra.mxu0 %v1210
        %1475 = vmatpush.msra.mxu0 %v1198
        %1476 = vmatpush.msra.mxu0 %v1186
        %1477 = vmatpush.msra.mxu0 %v1174
        %1478 = vmatpush.msra.mxu0 %v1162
        %1479 = vmatmul.f32.gmra.mxu0 %v1368
        %v1480 = vpop.f32.mrf.mxu0
        %v1481 = vadd.f32 0.0, %v1480
        %1482 = vmatmul.f32.gmra.mxu0 %v1370
        %v1483 = vpop.f32.mrf.mxu0
        %v1484 = vadd.f32 0.0, %v1483
        %1485 = vmatmul.f32.gmra.mxu0 %v1372
        %v1486 = vpop.f32.mrf.mxu0
        %v1487 = vadd.f32 0.0, %v1486
        %1488 = vmatmul.f32.gmra.mxu0 %v1374
        %v1489 = vpop.f32.mrf.mxu0
        %v1490 = vadd.f32 0.0, %v1489
        %1491 = vdwg.mxu0
        %1492 = vmatpush.msra.mxu0 0.0
        %1493 = vmatpush.msra.mxu0 %v1331
        %1494 = vmatpush.msra.mxu0 %v1319
        %1495 = vmatpush.msra.mxu0 %v1307
        %1496 = vmatpush.msra.mxu0 %v1295
        %1497 = vmatpush.msra.mxu0 %v1283
        %1498 = vmatpush.msra.mxu0 %v1271
        %1499 = vmatpush.msra.mxu0 %v1259
        %1500 = vmatpush.msra.mxu0 %v1247
        %1501 = vmatpush.msra.mxu0 %v1235
        %1502 = vmatpush.msra.mxu0 %v1223
        %1503 = vmatpush.msra.mxu0 %v1211
        %1504 = vmatpush.msra.mxu0 %v1199
        %1505 = vmatpush.msra.mxu0 %v1187
        %1506 = vmatpush.msra.mxu0 %v1175
        %1507 = vmatpush.msra.mxu0 %v1163
        %1508 = vmatmul.f32.gmra.mxu0 %v1368
        %v1509 = vpop.f32.mrf.mxu0
        %v1510 = vadd.f32 0.0, %v1509
        %1511 = vmatmul.f32.gmra.mxu0 %v1370
        %v1512 = vpop.f32.mrf.mxu0
        %v1513 = vadd.f32 0.0, %v1512
        %1514 = vmatmul.f32.gmra.mxu0 %v1372
        %v1515 = vpop.f32.mrf.mxu0
        %v1516 = vadd.f32 0.0, %v1515
        %1517 = vmatmul.f32.gmra.mxu0 %v1374
        %v1518 = vpop.f32.mrf.mxu0
        %v1519 = vadd.f32 0.0, %v1518
        %1520 = vdwg.mxu0
        %1521 = vmatpush.msra.mxu0 0.0
        %1522 = vmatpush.msra.mxu0 %v1332
        %1523 = vmatpush.msra.mxu0 %v1320
        %1524 = vmatpush.msra.mxu0 %v1308
        %1525 = vmatpush.msra.mxu0 %v1296
        %1526 = vmatpush.msra.mxu0 %v1284
        %1527 = vmatpush.msra.mxu0 %v1272
        %1528 = vmatpush.msra.mxu0 %v1260
        %1529 = vmatpush.msra.mxu0 %v1248
        %1530 = vmatpush.msra.mxu0 %v1236
        %1531 = vmatpush.msra.mxu0 %v1224
        %1532 = vmatpush.msra.mxu0 %v1212
        %1533 = vmatpush.msra.mxu0 %v1200
        %1534 = vmatpush.msra.mxu0 %v1188
        %1535 = vmatpush.msra.mxu0 %v1176
        %1536 = vmatpush.msra.mxu0 %v1164
        %1537 = vmatmul.f32.gmra.mxu0 %v1368
        %v1538 = vpop.f32.mrf.mxu0
        %v1539 = vadd.f32 0.0, %v1538
        %1540 = vmatmul.f32.gmra.mxu0 %v1370
        %v1541 = vpop.f32.mrf.mxu0
        %v1542 = vadd.f32 0.0, %v1541
        %1543 = vmatmul.f32.gmra.mxu0 %v1372
        %v1544 = vpop.f32.mrf.mxu0
        %v1545 = vadd.f32 0.0, %v1544
        %1546 = vmatmul.f32.gmra.mxu0 %v1374
        %v1547 = vpop.f32.mrf.mxu0
        %v1548 = vadd.f32 0.0, %v1547
        %1549 = vdwg.mxu0
        %1550 = vmatpush.msra.mxu0 0.0
        %1551 = vmatpush.msra.mxu0 %v1333
        %1552 = vmatpush.msra.mxu0 %v1321
        %1553 = vmatpush.msra.mxu0 %v1309
        %1554 = vmatpush.msra.mxu0 %v1297
        %1555 = vmatpush.msra.mxu0 %v1285
        %1556 = vmatpush.msra.mxu0 %v1273
        %1557 = vmatpush.msra.mxu0 %v1261
        %1558 = vmatpush.msra.mxu0 %v1249
        %1559 = vmatpush.msra.mxu0 %v1237
        %1560 = vmatpush.msra.mxu0 %v1225
        %1561 = vmatpush.msra.mxu0 %v1213
        %1562 = vmatpush.msra.mxu0 %v1201
        %1563 = vmatpush.msra.mxu0 %v1189
        %1564 = vmatpush.msra.mxu0 %v1177
        %1565 = vmatpush.msra.mxu0 %v1165
        %1566 = vmatmul.f32.gmra.mxu0 %v1368
        %v1567 = vpop.f32.mrf.mxu0
        %v1568 = vadd.f32 0.0, %v1567
        %1569 = vmatmul.f32.gmra.mxu0 %v1370
        %v1570 = vpop.f32.mrf.mxu0
        %v1571 = vadd.f32 0.0, %v1570
        %1572 = vmatmul.f32.gmra.mxu0 %v1372
        %v1573 = vpop.f32.mrf.mxu0
        %v1574 = vadd.f32 0.0, %v1573
        %1575 = vmatmul.f32.gmra.mxu0 %v1374
        %v1576 = vpop.f32.mrf.mxu0
        %v1577 = vadd.f32 0.0, %v1576
        %1578 = vdwg.mxu0
        %1579 = vmatpush.msra.mxu0 0.0
        %1580 = vmatpush.msra.mxu0 %v1334
        %1581 = vmatpush.msra.mxu0 %v1322
        %1582 = vmatpush.msra.mxu0 %v1310
        %1583 = vmatpush.msra.mxu0 %v1298
        %1584 = vmatpush.msra.mxu0 %v1286
        %1585 = vmatpush.msra.mxu0 %v1274
        %1586 = vmatpush.msra.mxu0 %v1262
        %1587 = vmatpush.msra.mxu0 %v1250
        %1588 = vmatpush.msra.mxu0 %v1238
        %1589 = vmatpush.msra.mxu0 %v1226
        %1590 = vmatpush.msra.mxu0 %v1214
        %1591 = vmatpush.msra.mxu0 %v1202
        %1592 = vmatpush.msra.mxu0 %v1190
        %1593 = vmatpush.msra.mxu0 %v1178
        %1594 = vmatpush.msra.mxu0 %v1166
        %1595 = vmatmul.f32.gmra.mxu0 %v1368
        %v1596 = vpop.f32.mrf.mxu0
        %v1597 = vadd.f32 0.0, %v1596
        %1598 = vmatmul.f32.gmra.mxu0 %v1370
        %v1599 = vpop.f32.mrf.mxu0
        %v1600 = vadd.f32 0.0, %v1599
        %1601 = vmatmul.f32.gmra.mxu0 %v1372
        %v1602 = vpop.f32.mrf.mxu0
        %v1603 = vadd.f32 0.0, %v1602
        %1604 = vmatmul.f32.gmra.mxu0 %v1374
        %v1605 = vpop.f32.mrf.mxu0
        %v1606 = vadd.f32 0.0, %v1605
        %1607 = vdwg.mxu0
        %1608 = vmatpush.msra.mxu0 0.0
        %1609 = vmatpush.msra.mxu0 %v1335
        %1610 = vmatpush.msra.mxu0 %v1323
        %1611 = vmatpush.msra.mxu0 %v1311
        %1612 = vmatpush.msra.mxu0 %v1299
        %1613 = vmatpush.msra.mxu0 %v1287
        %1614 = vmatpush.msra.mxu0 %v1275
        %1615 = vmatpush.msra.mxu0 %v1263
        %1616 = vmatpush.msra.mxu0 %v1251
        %1617 = vmatpush.msra.mxu0 %v1239
        %1618 = vmatpush.msra.mxu0 %v1227
        %1619 = vmatpush.msra.mxu0 %v1215
        %1620 = vmatpush.msra.mxu0 %v1203
        %1621 = vmatpush.msra.mxu0 %v1191
        %1622 = vmatpush.msra.mxu0 %v1179
        %1623 = vmatpush.msra.mxu0 %v1167
        %1624 = vmatmul.f32.gmra.mxu0 %v1368
        %v1625 = vpop.f32.mrf.mxu0
        %v1626 = vadd.f32 0.0, %v1625
        %1627 = vmatmul.f32.gmra.mxu0 %v1370
        %v1628 = vpop.f32.mrf.mxu0
        %v1629 = vadd.f32 0.0, %v1628
        %1630 = vmatmul.f32.gmra.mxu0 %v1372
        %v1631 = vpop.f32.mrf.mxu0
        %v1632 = vadd.f32 0.0, %v1631
        %1633 = vmatmul.f32.gmra.mxu0 %v1374
        %v1634 = vpop.f32.mrf.mxu0
        %v1635 = vadd.f32 0.0, %v1634
        %1636 = vdwg.mxu0
        %1637 = vmatpush.msra.mxu0 0.0
        %1638 = vmatpush.msra.mxu0 %v1336
        %1639 = vmatpush.msra.mxu0 %v1324
        %1640 = vmatpush.msra.mxu0 %v1312
        %1641 = vmatpush.msra.mxu0 %v1300
        %1642 = vmatpush.msra.mxu0 %v1288
        %1643 = vmatpush.msra.mxu0 %v1276
        %1644 = vmatpush.msra.mxu0 %v1264
        %1645 = vmatpush.msra.mxu0 %v1252
        %1646 = vmatpush.msra.mxu0 %v1240
        %1647 = vmatpush.msra.mxu0 %v1228
        %1648 = vmatpush.msra.mxu0 %v1216
        %1649 = vmatpush.msra.mxu0 %v1204
        %1650 = vmatpush.msra.mxu0 %v1192
        %1651 = vmatpush.msra.mxu0 %v1180
        %1652 = vmatpush.msra.mxu0 %v1168
        %1653 = vmatmul.f32.gmra.mxu0 %v1368
        %v1654 = vpop.f32.mrf.mxu0
        %v1655 = vadd.f32 0.0, %v1654
        %1656 = vmatmul.f32.gmra.mxu0 %v1370
        %v1657 = vpop.f32.mrf.mxu0
        %v1658 = vadd.f32 0.0, %v1657
        %1659 = vmatmul.f32.gmra.mxu0 %v1372
        %v1660 = vpop.f32.mrf.mxu0
        %v1661 = vadd.f32 0.0, %v1660
        %1662 = vmatmul.f32.gmra.mxu0 %v1374
        %v1663 = vpop.f32.mrf.mxu0
        %v1664 = vadd.f32 0.0, %v1663
        %1665 = vdwg.mxu0
        %1666 = vmatpush.msra.mxu0 0.0
        %1667 = vmatpush.msra.mxu0 %v1337
        %1668 = vmatpush.msra.mxu0 %v1325
        %1669 = vmatpush.msra.mxu0 %v1313
        %1670 = vmatpush.msra.mxu0 %v1301
        %1671 = vmatpush.msra.mxu0 %v1289
        %1672 = vmatpush.msra.mxu0 %v1277
        %1673 = vmatpush.msra.mxu0 %v1265
        %1674 = vmatpush.msra.mxu0 %v1253
        %1675 = vmatpush.msra.mxu0 %v1241
        %1676 = vmatpush.msra.mxu0 %v1229
        %1677 = vmatpush.msra.mxu0 %v1217
        %1678 = vmatpush.msra.mxu0 %v1205
        %1679 = vmatpush.msra.mxu0 %v1193
        %1680 = vmatpush.msra.mxu0 %v1181
        %1681 = vmatpush.msra.mxu0 %v1169
        %1682 = vmatmul.f32.gmra.mxu0 %v1368
        %v1683 = vpop.f32.mrf.mxu0
        %v1684 = vadd.f32 0.0, %v1683
        %1685 = vmatmul.f32.gmra.mxu0 %v1370
        %v1686 = vpop.f32.mrf.mxu0
        %v1687 = vadd.f32 0.0, %v1686
        %1688 = vmatmul.f32.gmra.mxu0 %v1372
        %v1689 = vpop.f32.mrf.mxu0
        %v1690 = vadd.f32 0.0, %v1689
        %1691 = vmatmul.f32.gmra.mxu0 %v1374
        %v1692 = vpop.f32.mrf.mxu0
        %v1693 = vadd.f32 0.0, %v1692
        %1694 = vdwg.mxu0
        %1695 = vmatpush.msra.mxu0 0.0
        %1696 = vmatpush.msra.mxu0 %v1338
        %1697 = vmatpush.msra.mxu0 %v1326
        %1698 = vmatpush.msra.mxu0 %v1314
        %1699 = vmatpush.msra.mxu0 %v1302
        %1700 = vmatpush.msra.mxu0 %v1290
        %1701 = vmatpush.msra.mxu0 %v1278
        %1702 = vmatpush.msra.mxu0 %v1266
        %1703 = vmatpush.msra.mxu0 %v1254
        %1704 = vmatpush.msra.mxu0 %v1242
        %1705 = vmatpush.msra.mxu0 %v1230
        %1706 = vmatpush.msra.mxu0 %v1218
        %1707 = vmatpush.msra.mxu0 %v1206
        %1708 = vmatpush.msra.mxu0 %v1194
        %1709 = vmatpush.msra.mxu0 %v1182
        %1710 = vmatpush.msra.mxu0 %v1170
        %1711 = vmatmul.f32.gmra.mxu0 %v1368
        %v1712 = vpop.f32.mrf.mxu0
        %v1713 = vadd.f32 0.0, %v1712
        %1714 = vmatmul.f32.gmra.mxu0 %v1370
        %v1715 = vpop.f32.mrf.mxu0
        %v1716 = vadd.f32 0.0, %v1715
        %1717 = vmatmul.f32.gmra.mxu0 %v1372
        %v1718 = vpop.f32.mrf.mxu0
        %v1719 = vadd.f32 0.0, %v1718
        %1720 = vmatmul.f32.gmra.mxu0 %v1374
        %v1721 = vpop.f32.mrf.mxu0
        %v1722 = vadd.f32 0.0, %v1721
        %1723 = vdwg.mxu0
        %v1724 = vmul.f32 %v1394, %v909
        %v1725 = vmul.f32 %v1423, %v910
        %v1726 = vmul.f32 %v1452, %v911
        %v1727 = vmul.f32 %v1481, %v912
        %v1728 = vmul.f32 %v1510, %v913
        %v1729 = vmul.f32 %v1539, %v914
        %v1730 = vmul.f32 %v1568, %v915
        %v1731 = vmul.f32 %v1597, %v916
        %v1732 = vmul.f32 %v1626, %v917
        %v1733 = vmul.f32 %v1655, %v918
        %v1734 = vmul.f32 %v1684, %v919
        %v1735 = vmul.f32 %v1713, %v920
        %v1736 = vmul.f32 %v1397, %v909
        %v1737 = vmul.f32 %v1426, %v910
        %v1738 = vmul.f32 %v1455, %v911
        %v1739 = vmul.f32 %v1484, %v912
        %v1740 = vmul.f32 %v1513, %v913
        %v1741 = vmul.f32 %v1542, %v914
        %v1742 = vmul.f32 %v1571, %v915
        %v1743 = vmul.f32 %v1600, %v916
        %v1744 = vmul.f32 %v1629, %v917
        %v1745 = vmul.f32 %v1658, %v918
        %v1746 = vmul.f32 %v1687, %v919
        %v1747 = vmul.f32 %v1716, %v920
        %v1748 = vmul.f32 %v1400, %v909
        %v1749 = vmul.f32 %v1429, %v910
        %v1750 = vmul.f32 %v1458, %v911
        %v1751 = vmul.f32 %v1487, %v912
        %v1752 = vmul.f32 %v1516, %v913
        %v1753 = vmul.f32 %v1545, %v914
        %v1754 = vmul.f32 %v1574, %v915
        %v1755 = vmul.f32 %v1603, %v916
        %v1756 = vmul.f32 %v1632, %v917
        %v1757 = vmul.f32 %v1661, %v918
        %v1758 = vmul.f32 %v1690, %v919
        %v1759 = vmul.f32 %v1719, %v920
        %v1760 = vmul.f32 %v1403, %v909
        %v1761 = vmul.f32 %v1432, %v910
        %v1762 = vmul.f32 %v1461, %v911
        %v1763 = vmul.f32 %v1490, %v912
        %v1764 = vmul.f32 %v1519, %v913
        %v1765 = vmul.f32 %v1548, %v914
        %v1766 = vmul.f32 %v1577, %v915
        %v1767 = vmul.f32 %v1606, %v916
        %v1768 = vmul.f32 %v1635, %v917
        %v1769 = vmul.f32 %v1664, %v918
        %v1770 = vmul.f32 %v1693, %v919
        %v1771 = vmul.f32 %v1722, %v920
        %v1772 = vadd.f32 %v1724, %v983
        %v1773 = vadd.f32 %v1725, %v984
        %v1774 = vadd.f32 %v1726, %v985
        %v1775 = vadd.f32 %v1727, %v986
        %v1776 = vadd.f32 %v1728, %v987
        %v1777 = vadd.f32 %v1729, %v988
        %v1778 = vadd.f32 %v1730, %v989
        %v1779 = vadd.f32 %v1731, %v990
        %v1780 = vadd.f32 %v1732, %v991
        %v1781 = vadd.f32 %v1733, %v992
        %v1782 = vadd.f32 %v1734, %v993
        %v1783 = vadd.f32 %v1735, %v994
        %v1784 = vadd.f32 %v1736, %v983
        %v1785 = vadd.f32 %v1737, %v984
        %v1786 = vadd.f32 %v1738, %v985
        %v1787 = vadd.f32 %v1739, %v986
        %v1788 = vadd.f32 %v1740, %v987
        %v1789 = vadd.f32 %v1741, %v988
        %v1790 = vadd.f32 %v1742, %v989
        %v1791 = vadd.f32 %v1743, %v990
        %v1792 = vadd.f32 %v1744, %v991
        %v1793 = vadd.f32 %v1745, %v992
        %v1794 = vadd.f32 %v1746, %v993
        %v1795 = vadd.f32 %v1747, %v994
        %v1796 = vadd.f32 %v1748, %v983
        %v1797 = vadd.f32 %v1749, %v984
        %v1798 = vadd.f32 %v1750, %v985
        %v1799 = vadd.f32 %v1751, %v986
        %v1800 = vadd.f32 %v1752, %v987
        %v1801 = vadd.f32 %v1753, %v988
        %v1802 = vadd.f32 %v1754, %v989
        %v1803 = vadd.f32 %v1755, %v990
        %v1804 = vadd.f32 %v1756, %v991
        %v1805 = vadd.f32 %v1757, %v992
        %v1806 = vadd.f32 %v1758, %v993
        %v1807 = vadd.f32 %v1759, %v994
        %v1808 = vadd.f32 %v1760, %v983
        %v1809 = vadd.f32 %v1761, %v984
        %v1810 = vadd.f32 %v1762, %v985
        %v1811 = vadd.f32 %v1763, %v986
        %v1812 = vadd.f32 %v1764, %v987
        %v1813 = vadd.f32 %v1765, %v988
        %v1814 = vadd.f32 %v1766, %v989
        %v1815 = vadd.f32 %v1767, %v990
        %v1816 = vadd.f32 %v1768, %v991
        %v1817 = vadd.f32 %v1769, %v992
        %v1818 = vadd.f32 %v1770, %v993
        %v1819 = vadd.f32 %v1771, %v994
        %v1820 = vmax.f32 %v1772, 0.0
        %v1821 = vmax.f32 %v1773, 0.0
        %v1822 = vmax.f32 %v1774, 0.0
        %v1823 = vmax.f32 %v1775, 0.0
        %v1824 = vmax.f32 %v1776, 0.0
        %v1825 = vmax.f32 %v1777, 0.0
        %v1826 = vmax.f32 %v1778, 0.0
        %v1827 = vmax.f32 %v1779, 0.0
        %v1828 = vmax.f32 %v1780, 0.0
        %v1829 = vmax.f32 %v1781, 0.0
        %v1830 = vmax.f32 %v1782, 0.0
        %v1831 = vmax.f32 %v1783, 0.0
        %v1832 = vmax.f32 %v1784, 0.0
        %v1833 = vmax.f32 %v1785, 0.0
        %v1834 = vmax.f32 %v1786, 0.0
        %v1835 = vmax.f32 %v1787, 0.0
        %v1836 = vmax.f32 %v1788, 0.0
        %v1837 = vmax.f32 %v1789, 0.0
        %v1838 = vmax.f32 %v1790, 0.0
        %v1839 = vmax.f32 %v1791, 0.0
        %v1840 = vmax.f32 %v1792, 0.0
        %v1841 = vmax.f32 %v1793, 0.0
        %v1842 = vmax.f32 %v1794, 0.0
        %v1843 = vmax.f32 %v1795, 0.0
        %v1844 = vmax.f32 %v1796, 0.0
        %v1845 = vmax.f32 %v1797, 0.0
        %v1846 = vmax.f32 %v1798, 0.0
        %v1847 = vmax.f32 %v1799, 0.0
        %v1848 = vmax.f32 %v1800, 0.0
        %v1849 = vmax.f32 %v1801, 0.0
        %v1850 = vmax.f32 %v1802, 0.0
        %v1851 = vmax.f32 %v1803, 0.0
        %v1852 = vmax.f32 %v1804, 0.0
        %v1853 = vmax.f32 %v1805, 0.0
        %v1854 = vmax.f32 %v1806, 0.0
        %v1855 = vmax.f32 %v1807, 0.0
        %v1856 = vmax.f32 %v1808, 0.0
        %v1857 = vmax.f32 %v1809, 0.0
        %v1858 = vmax.f32 %v1810, 0.0
        %v1859 = vmax.f32 %v1811, 0.0
        %v1860 = vmax.f32 %v1812, 0.0
        %v1861 = vmax.f32 %v1813, 0.0
        %v1862 = vmax.f32 %v1814, 0.0
        %v1863 = vmax.f32 %v1815, 0.0
        %v1864 = vmax.f32 %v1816, 0.0
        %v1865 = vmax.f32 %v1817, 0.0
        %v1866 = vmax.f32 %v1818, 0.0
        %v1867 = vmax.f32 %v1819, 0.0
        %1868 = vst [vmem:[#allocation2 + $0x78] sm:$0xff] %v1820
        %1869 = vst [vmem:[#allocation2 + $0x80] sm:$0xff] %v1821
        %1870 = vst [vmem:[#allocation2 + $0x88] sm:$0xff] %v1822
        %1871 = vst [vmem:[#allocation2 + $0x90] sm:$0xff] %v1823
        %1872 = vst [vmem:[#allocation2 + $0x98] sm:$0xff] %v1824
        %1873 = vst [vmem:[#allocation2 + $0xa0] sm:$0xff] %v1825
        %1874 = vst [vmem:[#allocation2 + $0xa8] sm:$0xff] %v1826
        %1875 = vst [vmem:[#allocation2 + $0xb0] sm:$0xff] %v1827
        %1876 = vst [vmem:[#allocation2 + $0xb8] sm:$0xff] %v1828
        %1877 = vst [vmem:[#allocation2 + $0xc0] sm:$0xff] %v1829
        %1878 = vst [vmem:[#allocation2 + $0xc8] sm:$0xff] %v1830
        %1879 = vst [vmem:[#allocation2 + $0xd0] sm:$0xff] %v1831
        %1880 = vst [vmem:[#allocation2 + $0x228] sm:$0xff] %v1832
        %1881 = vst [vmem:[#allocation2 + $0x230] sm:$0xff] %v1833
        %1882 = vst [vmem:[#allocation2 + $0x238] sm:$0xff] %v1834
        %1883 = vst [vmem:[#allocation2 + $0x240] sm:$0xff] %v1835
        %1884 = vst [vmem:[#allocation2 + $0x248] sm:$0xff] %v1836
        %1885 = vst [vmem:[#allocation2 + $0x250] sm:$0xff] %v1837
        %1886 = vst [vmem:[#allocation2 + $0x258] sm:$0xff] %v1838
        %1887 = vst [vmem:[#allocation2 + $0x260] sm:$0xff] %v1839
        %1888 = vst [vmem:[#allocation2 + $0x268] sm:$0xff] %v1840
        %1889 = vst [vmem:[#allocation2 + $0x270] sm:$0xff] %v1841
        %1890 = vst [vmem:[#allocation2 + $0x278] sm:$0xff] %v1842
        %1891 = vst [vmem:[#allocation2 + $0x280] sm:$0xff] %v1843
        %1892 = vst [vmem:[#allocation2 + $0x3d8] sm:$0xff] %v1844
        %1893 = vst [vmem:[#allocation2 + $0x3e0] sm:$0xff] %v1845
        %1894 = vst [vmem:[#allocation2 + $0x3e8] sm:$0xff] %v1846
        %1895 = vst [vmem:[#allocation2 + $0x3f0] sm:$0xff] %v1847
        %1896 = vst [vmem:[#allocation2 + $0x3f8] sm:$0xff] %v1848
        %1897 = vst [vmem:[#allocation2 + $0x400] sm:$0xff] %v1849
        %1898 = vst [vmem:[#allocation2 + $0x408] sm:$0xff] %v1850
        %1899 = vst [vmem:[#allocation2 + $0x410] sm:$0xff] %v1851
        %1900 = vst [vmem:[#allocation2 + $0x418] sm:$0xff] %v1852
        %1901 = vst [vmem:[#allocation2 + $0x420] sm:$0xff] %v1853
        %1902 = vst [vmem:[#allocation2 + $0x428] sm:$0xff] %v1854
        %1903 = vst [vmem:[#allocation2 + $0x430] sm:$0xff] %v1855
        %1904 = vst [vmem:[#allocation2 + $0x588] sm:$0xff] %v1856
        %1905 = vst [vmem:[#allocation2 + $0x590] sm:$0xff] %v1857
        %1906 = vst [vmem:[#allocation2 + $0x598] sm:$0xff] %v1858
        %1907 = vst [vmem:[#allocation2 + $0x5a0] sm:$0xff] %v1859
        %1908 = vst [vmem:[#allocation2 + $0x5a8] sm:$0xff] %v1860
        %1909 = vst [vmem:[#allocation2 + $0x5b0] sm:$0xff] %v1861
        %1910 = vst [vmem:[#allocation2 + $0x5b8] sm:$0xff] %v1862
        %1911 = vst [vmem:[#allocation2 + $0x5c0] sm:$0xff] %v1863
        %1912 = vst [vmem:[#allocation2 + $0x5c8] sm:$0xff] %v1864
        %1913 = vst [vmem:[#allocation2 + $0x5d0] sm:$0xff] %v1865
        %1914 = vst [vmem:[#allocation2 + $0x5d8] sm:$0xff] %v1866
        %1915 = vst [vmem:[#allocation2 + $0x5e0] sm:$0xff] %v1867
        %v1916 = vld [vmem:[%s294 + $0x8] sm:$0xff]
        %v1917 = vld [vmem:[%s294 + $0x10] sm:$0xff]
        %v1918 = vld [vmem:[%s294 + $0x28] sm:$0xff]
        %v1919 = vld [vmem:[%s294 + $0x30] sm:$0xff]
        %v1920 = vld [vmem:[%s294 + $0x48] sm:$0xff]
        %v1921 = vld [vmem:[%s294 + $0x50] sm:$0xff]
        %v1922 = vld [vmem:[%s294 + $0x68] sm:$0xff]
        %v1923 = vld [vmem:[%s294 + $0x70] sm:$0xff]
        %v1924 = vld [vmem:[%s1] sm:$0xff]
        %v1925 = vld [vmem:[%s1 + $0x8] sm:$0xff]
        %v1926 = vld [vmem:[%s1 + $0x10] sm:$0xff]
        %v1927 = vld [vmem:[%s1 + $0x18] sm:$0xff]
        %v1928 = vld [vmem:[%s1 + $0x20] sm:$0xff]
        %v1929 = vld [vmem:[%s1 + $0x28] sm:$0xff]
        %v1930 = vld [vmem:[%s1 + $0x30] sm:$0xff]
        %v1931 = vld [vmem:[%s1 + $0x38] sm:$0xff]
        %v1932 = vld [vmem:[%s1 + $0x40] sm:$0xff]
        %v1933 = vld [vmem:[%s1 + $0x48] sm:$0xff]
        %v1934 = vld [vmem:[%s1 + $0x50] sm:$0xff]
        %v1935 = vld [vmem:[%s1 + $0x58] sm:$0xff]
        %v1936 = vld [vmem:[%s1 + $0x60] sm:$0xff]
        %v1937 = vld [vmem:[%s1 + $0x68] sm:$0xff]
        %v1938 = vld [vmem:[%s1 + $0x70] sm:$0xff]
        %v1939 = vld [vmem:[%s1 + $0x78] sm:$0xff]
        %v1940 = vld [vmem:[%s1 + $0x80] sm:$0xff]
        %v1941 = vld [vmem:[%s1 + $0x88] sm:$0xff]
        %v1942 = vld [vmem:[%s1 + $0x90] sm:$0xff]
        %v1943 = vld [vmem:[%s1 + $0x98] sm:$0xff]
        %v1944 = vld [vmem:[%s1 + $0xa0] sm:$0xff]
        %v1945 = vld [vmem:[%s1 + $0xa8] sm:$0xff]
        %v1946 = vld [vmem:[%s1 + $0xb0] sm:$0xff]
        %v1947 = vld [vmem:[%s1 + $0xb8] sm:$0xff]
        %v1948 = vld [vmem:[%s1 + $0xc0] sm:$0xff]
        %v1949 = vld [vmem:[%s1 + $0xc8] sm:$0xff]
        %v1950 = vld [vmem:[%s1 + $0xd0] sm:$0xff]
        %v1951 = vld [vmem:[%s1 + $0xd8] sm:$0xff]
        %v1952 = vld [vmem:[%s1 + $0xe0] sm:$0xff]
        %v1953 = vld [vmem:[%s1 + $0xe8] sm:$0xff]
        %v1954 = vld [vmem:[%s1 + $0xf0] sm:$0xff]
        %v1955 = vld [vmem:[%s1 + $0xf8] sm:$0xff]
        %v1956 = vld [vmem:[%s1 + $0x100] sm:$0xff]
        %v1957 = vld [vmem:[%s1 + $0x108] sm:$0xff]
        %v1958 = vld [vmem:[%s1 + $0x110] sm:$0xff]
        %v1959 = vld [vmem:[%s1 + $0x118] sm:$0xff]
        %v1960 = vld [vmem:[%s1 + $0x120] sm:$0xff]
        %v1961 = vld [vmem:[%s1 + $0x128] sm:$0xff]
        %v1962 = vld [vmem:[%s1 + $0x130] sm:$0xff]
        %v1963 = vld [vmem:[%s1 + $0x138] sm:$0xff]
        %v1964 = vld [vmem:[%s1 + $0x140] sm:$0xff]
        %v1965 = vld [vmem:[%s1 + $0x148] sm:$0xff]
        %v1966 = vld [vmem:[%s1 + $0x150] sm:$0xff]
        %v1967 = vld [vmem:[%s1 + $0x158] sm:$0xff]
        %v1968 = vld [vmem:[%s1 + $0x160] sm:$0xff]
        %v1969 = vld [vmem:[%s1 + $0x168] sm:$0xff]
        %v1970 = vld [vmem:[%s1 + $0x170] sm:$0xff]
        %v1971 = vld [vmem:[%s1 + $0x178] sm:$0xff]
        %v1972 = vld [vmem:[%s1 + $0x180] sm:$0xff]
        %v1973 = vld [vmem:[%s1 + $0x188] sm:$0xff]
        %v1974 = vld [vmem:[%s1 + $0x190] sm:$0xff]
        %v1975 = vld [vmem:[%s1 + $0x198] sm:$0xff]
        %v1976 = vld [vmem:[%s1 + $0x1a0] sm:$0xff]
        %v1977 = vld [vmem:[%s1 + $0x1a8] sm:$0xff]
        %v1978 = vld [vmem:[%s1 + $0x1b0] sm:$0xff]
        %v1979 = vld [vmem:[%s1 + $0x1b8] sm:$0xff]
        %v1980 = vld [vmem:[%s1 + $0x1c0] sm:$0xff]
        %v1981 = vld [vmem:[%s1 + $0x1c8] sm:$0xff]
        %v1982 = vld [vmem:[%s1 + $0x1d0] sm:$0xff]
        %v1983 = vld [vmem:[%s1 + $0x1d8] sm:$0xff]
        %v1984 = vld [vmem:[%s1 + $0x1e0] sm:$0xff]
        %v1985 = vld [vmem:[%s1 + $0x1e8] sm:$0xff]
        %v1986 = vld [vmem:[%s1 + $0x1f0] sm:$0xff]
        %v1987 = vld [vmem:[%s1 + $0x1f8] sm:$0xff]
        %v1988 = vld [vmem:[%s1 + $0x200] sm:$0xff]
        %v1989 = vld [vmem:[%s1 + $0x208] sm:$0xff]
        %v1990 = vld [vmem:[%s1 + $0x210] sm:$0xff]
        %v1991 = vld [vmem:[%s1 + $0x218] sm:$0xff]
        %v1992 = vld [vmem:[%s1 + $0x220] sm:$0xff]
        %v1993 = vld [vmem:[%s1 + $0x228] sm:$0xff]
        %v1994 = vld [vmem:[%s1 + $0x230] sm:$0xff]
        %v1995 = vld [vmem:[%s1 + $0x238] sm:$0xff]
        %v1996 = vld [vmem:[%s1 + $0x240] sm:$0xff]
        %v1997 = vld [vmem:[%s1 + $0x248] sm:$0xff]
        %v1998 = vld [vmem:[%s1 + $0x250] sm:$0xff]
        %v1999 = vld [vmem:[%s1 + $0x258] sm:$0xff]
        %v2000 = vld [vmem:[%s1 + $0x260] sm:$0xff]
        %v2001 = vld [vmem:[%s1 + $0x268] sm:$0xff]
        %v2002 = vld [vmem:[%s1 + $0x270] sm:$0xff]
        %v2003 = vld [vmem:[%s1 + $0x278] sm:$0xff]
        %v2004 = vld [vmem:[%s1 + $0x280] sm:$0xff]
        %v2005 = vld [vmem:[%s1 + $0x288] sm:$0xff]
        %v2006 = vld [vmem:[%s1 + $0x290] sm:$0xff]
        %v2007 = vld [vmem:[%s1 + $0x298] sm:$0xff]
        %v2008 = vld [vmem:[%s1 + $0x2a0] sm:$0xff]
        %v2009 = vld [vmem:[%s1 + $0x2a8] sm:$0xff]
        %v2010 = vld [vmem:[%s1 + $0x2b0] sm:$0xff]
        %v2011 = vld [vmem:[%s1 + $0x2b8] sm:$0xff]
        %v2012 = vld [vmem:[%s1 + $0x2c0] sm:$0xff]
        %v2013 = vld [vmem:[%s1 + $0x2c8] sm:$0xff]
        %v2014 = vld [vmem:[%s1 + $0x2d0] sm:$0xff]
        %v2015 = vld [vmem:[%s1 + $0x2d8] sm:$0xff]
        %v2016 = vld [vmem:[%s1 + $0x2e0] sm:$0xff]
        %v2017 = vld [vmem:[%s1 + $0x2e8] sm:$0xff]
        %v2018 = vld [vmem:[%s1 + $0x2f0] sm:$0xff]
        %v2019 = vld [vmem:[%s1 + $0x2f8] sm:$0xff]
        %v2020 = vld [vmem:[%s1 + $0x300] sm:$0xff]
        %v2021 = vld [vmem:[%s1 + $0x308] sm:$0xff]
        %v2022 = vld [vmem:[%s1 + $0x310] sm:$0xff]
        %v2023 = vld [vmem:[%s1 + $0x318] sm:$0xff]
        %v2024 = vld [vmem:[%s1 + $0x320] sm:$0xff]
        %v2025 = vld [vmem:[%s1 + $0x328] sm:$0xff]
        %v2026 = vld [vmem:[%s1 + $0x330] sm:$0xff]
        %v2027 = vld [vmem:[%s1 + $0x338] sm:$0xff]
        %v2028 = vld [vmem:[%s1 + $0x340] sm:$0xff]
        %v2029 = vld [vmem:[%s1 + $0x348] sm:$0xff]
        %v2030 = vld [vmem:[%s1 + $0x350] sm:$0xff]
        %v2031 = vld [vmem:[%s1 + $0x358] sm:$0xff]
        %v2032 = vld [vmem:[%s1 + $0x360] sm:$0xff]
        %v2033 = vld [vmem:[%s1 + $0x368] sm:$0xff]
        %v2034 = vld [vmem:[%s1 + $0x370] sm:$0xff]
        %v2035 = vld [vmem:[%s1 + $0x378] sm:$0xff]
        %v2036 = vld [vmem:[%s1 + $0x380] sm:$0xff]
        %v2037 = vld [vmem:[%s1 + $0x388] sm:$0xff]
        %v2038 = vld [vmem:[%s1 + $0x390] sm:$0xff]
        %v2039 = vld [vmem:[%s1 + $0x398] sm:$0xff]
        %v2040 = vld [vmem:[%s1 + $0x3a0] sm:$0xff]
        %v2041 = vld [vmem:[%s1 + $0x3a8] sm:$0xff]
        %v2042 = vld [vmem:[%s1 + $0x3b0] sm:$0xff]
        %v2043 = vld [vmem:[%s1 + $0x3b8] sm:$0xff]
        %v2044 = vld [vmem:[%s1 + $0x3c0] sm:$0xff]
        %v2045 = vld [vmem:[%s1 + $0x3c8] sm:$0xff]
        %v2046 = vld [vmem:[%s1 + $0x3d0] sm:$0xff]
        %v2047 = vld [vmem:[%s1 + $0x3d8] sm:$0xff]
        %v2048 = vld [vmem:[%s1 + $0x3e0] sm:$0xff]
        %v2049 = vld [vmem:[%s1 + $0x3e8] sm:$0xff]
        %v2050 = vld [vmem:[%s1 + $0x3f0] sm:$0xff]
        %v2051 = vld [vmem:[%s1 + $0x3f8] sm:$0xff]
        %v2052 = vld [vmem:[%s1 + $0x400] sm:$0xff]
        %v2053 = vld [vmem:[%s1 + $0x408] sm:$0xff]
        %v2054 = vld [vmem:[%s1 + $0x410] sm:$0xff]
        %v2055 = vld [vmem:[%s1 + $0x418] sm:$0xff]
        %v2056 = vld [vmem:[%s1 + $0x420] sm:$0xff]
        %v2057 = vld [vmem:[%s1 + $0x428] sm:$0xff]
        %v2058 = vld [vmem:[%s1 + $0x430] sm:$0xff]
        %v2059 = vld [vmem:[%s1 + $0x438] sm:$0xff]
        %v2060 = vld [vmem:[%s1 + $0x440] sm:$0xff]
        %v2061 = vld [vmem:[%s1 + $0x448] sm:$0xff]
        %v2062 = vld [vmem:[%s1 + $0x450] sm:$0xff]
        %v2063 = vld [vmem:[%s1 + $0x458] sm:$0xff]
        %v2064 = vld [vmem:[%s1 + $0x460] sm:$0xff]
        %v2065 = vld [vmem:[%s1 + $0x468] sm:$0xff]
        %v2066 = vld [vmem:[%s1 + $0x470] sm:$0xff]
        %v2067 = vld [vmem:[%s1 + $0x478] sm:$0xff]
        %v2068 = vld [vmem:[%s1 + $0x480] sm:$0xff]
        %v2069 = vld [vmem:[%s1 + $0x488] sm:$0xff]
        %v2070 = vld [vmem:[%s1 + $0x490] sm:$0xff]
        %v2071 = vld [vmem:[%s1 + $0x498] sm:$0xff]
        %v2072 = vld [vmem:[%s1 + $0x4a0] sm:$0xff]
        %v2073 = vld [vmem:[%s1 + $0x4a8] sm:$0xff]
        %v2074 = vld [vmem:[%s1 + $0x4b0] sm:$0xff]
        %v2075 = vld [vmem:[%s1 + $0x4b8] sm:$0xff]
        %v2076 = vld [vmem:[%s1 + $0x4c0] sm:$0xff]
        %v2077 = vld [vmem:[%s1 + $0x4c8] sm:$0xff]
        %v2078 = vld [vmem:[%s1 + $0x4d0] sm:$0xff]
        %v2079 = vld [vmem:[%s1 + $0x4d8] sm:$0xff]
        %v2080 = vld [vmem:[%s1 + $0x4e0] sm:$0xff]
        %v2081 = vld [vmem:[%s1 + $0x4e8] sm:$0xff]
        %v2082 = vld [vmem:[%s1 + $0x4f0] sm:$0xff]
        %v2083 = vld [vmem:[%s1 + $0x4f8] sm:$0xff]
        %v2084 = vld [vmem:[%s1 + $0x500] sm:$0xff]
        %v2085 = vld [vmem:[%s1 + $0x508] sm:$0xff]
        %v2086 = vld [vmem:[%s1 + $0x510] sm:$0xff]
        %v2087 = vld [vmem:[%s1 + $0x518] sm:$0xff]
        %v2088 = vld [vmem:[%s1 + $0x520] sm:$0xff]
        %v2089 = vld [vmem:[%s1 + $0x528] sm:$0xff]
        %v2090 = vld [vmem:[%s1 + $0x530] sm:$0xff]
        %v2091 = vld [vmem:[%s1 + $0x538] sm:$0xff]
        %v2092 = vld [vmem:[%s1 + $0x540] sm:$0xff]
        %v2093 = vld [vmem:[%s1 + $0x548] sm:$0xff]
        %v2094 = vld [vmem:[%s1 + $0x550] sm:$0xff]
        %v2095 = vld [vmem:[%s1 + $0x558] sm:$0xff]
        %v2096 = vld [vmem:[%s1 + $0x560] sm:$0xff]
        %v2097 = vld [vmem:[%s1 + $0x568] sm:$0xff]
        %v2098 = vld [vmem:[%s1 + $0x570] sm:$0xff]
        %v2099 = vld [vmem:[%s1 + $0x578] sm:$0xff]
        %v2100 = vld [vmem:[%s1 + $0x580] sm:$0xff]
        %v2101 = vld [vmem:[%s1 + $0x588] sm:$0xff]
        %v2102 = vld [vmem:[%s1 + $0x590] sm:$0xff]
        %v2103 = vld [vmem:[%s1 + $0x598] sm:$0xff]
        %2112 = vrot.lane.b32.xlu0 %v1916, 76
        %v2113 = vpop.permute.xlu0 %2112
        %2114 = vrot.lane.b32.xlu0 %v1917, 76
        %v2115 = vpop.permute.xlu0 %2114
        %2116 = vrot.lane.b32.xlu0 %v1918, 76
        %v2117 = vpop.permute.xlu0 %2116
        %2118 = vrot.lane.b32.xlu0 %v1919, 76
        %v2119 = vpop.permute.xlu0 %2118
        %2120 = vrot.lane.b32.xlu0 %v1920, 76
        %v2121 = vpop.permute.xlu0 %2120
        %2122 = vrot.lane.b32.xlu0 %v1921, 76
        %v2123 = vpop.permute.xlu0 %2122
        %2124 = vrot.lane.b32.xlu0 %v1922, 76
        %v2125 = vpop.permute.xlu0 %2124
        %2126 = vrot.lane.b32.xlu0 %v1923, 76
        %v2127 = vpop.permute.xlu0 %2126
        %vm2128 = vcmask 621568
        %v2129 = vsel %vm2128, %v2113, %v2115
        %v2130 = vsel %vm2128, %v2117, %v2119
        %v2131 = vsel %vm2128, %v2121, %v2123
        %v2132 = vsel %vm2128, %v2125, %v2127
        %v2133 = vsel %vm550, %v2129, 0
        %v2135 = vsel %vm550, %v2130, 0
        %v2137 = vsel %vm550, %v2131, 0
        %v2139 = vsel %vm550, %v2132, 0
        %2141 = vmatpush.msra.mxu0 0.0
        %2142 = vmatpush.msra.mxu0 %v2092
        %2143 = vmatpush.msra.mxu0 %v2080
        %2144 = vmatpush.msra.mxu0 %v2068
        %2145 = vmatpush.msra.mxu0 %v2056
        %2146 = vmatpush.msra.mxu0 %v2044
        %2147 = vmatpush.msra.mxu0 %v2032
        %2148 = vmatpush.msra.mxu0 %v2020
        %2149 = vmatpush.msra.mxu0 %v2008
        %2150 = vmatpush.msra.mxu0 %v1996
        %2151 = vmatpush.msra.mxu0 %v1984
        %2152 = vmatpush.msra.mxu0 %v1972
        %2153 = vmatpush.msra.mxu0 %v1960
        %2154 = vmatpush.msra.mxu0 %v1948
        %2155 = vmatpush.msra.mxu0 %v1936
        %2156 = vmatpush.msra.mxu0 %v1924
        %2157 = vmatmul.f32.gmra.mxu0 %v2133
        %v2158 = vpop.f32.mrf.mxu0
        %v2159 = vadd.f32 0.0, %v2158
        %2160 = vmatmul.f32.gmra.mxu0 %v2135
        %v2161 = vpop.f32.mrf.mxu0
        %v2162 = vadd.f32 0.0, %v2161
        %2163 = vmatmul.f32.gmra.mxu0 %v2137
        %v2164 = vpop.f32.mrf.mxu0
        %v2165 = vadd.f32 0.0, %v2164
        %2166 = vmatmul.f32.gmra.mxu0 %v2139
        %v2167 = vpop.f32.mrf.mxu0
        %v2168 = vadd.f32 0.0, %v2167
        %2169 = vdwg.mxu0
        %2170 = vmatpush.msra.mxu0 0.0
        %2171 = vmatpush.msra.mxu0 %v2093
        %2172 = vmatpush.msra.mxu0 %v2081
        %2173 = vmatpush.msra.mxu0 %v2069
        %2174 = vmatpush.msra.mxu0 %v2057
        %2175 = vmatpush.msra.mxu0 %v2045
        %2176 = vmatpush.msra.mxu0 %v2033
        %2177 = vmatpush.msra.mxu0 %v2021
        %2178 = vmatpush.msra.mxu0 %v2009
        %2179 = vmatpush.msra.mxu0 %v1997
        %2180 = vmatpush.msra.mxu0 %v1985
        %2181 = vmatpush.msra.mxu0 %v1973
        %2182 = vmatpush.msra.mxu0 %v1961
        %2183 = vmatpush.msra.mxu0 %v1949
        %2184 = vmatpush.msra.mxu0 %v1937
        %2185 = vmatpush.msra.mxu0 %v1925
        %2186 = vmatmul.f32.gmra.mxu0 %v2133
        %v2187 = vpop.f32.mrf.mxu0
        %v2188 = vadd.f32 0.0, %v2187
        %2189 = vmatmul.f32.gmra.mxu0 %v2135
        %v2190 = vpop.f32.mrf.mxu0
        %v2191 = vadd.f32 0.0, %v2190
        %2192 = vmatmul.f32.gmra.mxu0 %v2137
        %v2193 = vpop.f32.mrf.mxu0
        %v2194 = vadd.f32 0.0, %v2193
        %2195 = vmatmul.f32.gmra.mxu0 %v2139
        %v2196 = vpop.f32.mrf.mxu0
        %v2197 = vadd.f32 0.0, %v2196
        %2198 = vdwg.mxu0
        %2199 = vmatpush.msra.mxu0 0.0
        %2200 = vmatpush.msra.mxu0 %v2094
        %2201 = vmatpush.msra.mxu0 %v2082
        %2202 = vmatpush.msra.mxu0 %v2070
        %2203 = vmatpush.msra.mxu0 %v2058
        %2204 = vmatpush.msra.mxu0 %v2046
        %2205 = vmatpush.msra.mxu0 %v2034
        %2206 = vmatpush.msra.mxu0 %v2022
        %2207 = vmatpush.msra.mxu0 %v2010
        %2208 = vmatpush.msra.mxu0 %v1998
        %2209 = vmatpush.msra.mxu0 %v1986
        %2210 = vmatpush.msra.mxu0 %v1974
        %2211 = vmatpush.msra.mxu0 %v1962
        %2212 = vmatpush.msra.mxu0 %v1950
        %2213 = vmatpush.msra.mxu0 %v1938
        %2214 = vmatpush.msra.mxu0 %v1926
        %2215 = vmatmul.f32.gmra.mxu0 %v2133
        %v2216 = vpop.f32.mrf.mxu0
        %v2217 = vadd.f32 0.0, %v2216
        %2218 = vmatmul.f32.gmra.mxu0 %v2135
        %v2219 = vpop.f32.mrf.mxu0
        %v2220 = vadd.f32 0.0, %v2219
        %2221 = vmatmul.f32.gmra.mxu0 %v2137
        %v2222 = vpop.f32.mrf.mxu0
        %v2223 = vadd.f32 0.0, %v2222
        %2224 = vmatmul.f32.gmra.mxu0 %v2139
        %v2225 = vpop.f32.mrf.mxu0
        %v2226 = vadd.f32 0.0, %v2225
        %2227 = vdwg.mxu0
        %2228 = vmatpush.msra.mxu0 0.0
        %2229 = vmatpush.msra.mxu0 %v2095
        %2230 = vmatpush.msra.mxu0 %v2083
        %2231 = vmatpush.msra.mxu0 %v2071
        %2232 = vmatpush.msra.mxu0 %v2059
        %2233 = vmatpush.msra.mxu0 %v2047
        %2234 = vmatpush.msra.mxu0 %v2035
        %2235 = vmatpush.msra.mxu0 %v2023
        %2236 = vmatpush.msra.mxu0 %v2011
        %2237 = vmatpush.msra.mxu0 %v1999
        %2238 = vmatpush.msra.mxu0 %v1987
        %2239 = vmatpush.msra.mxu0 %v1975
        %2240 = vmatpush.msra.mxu0 %v1963
        %2241 = vmatpush.msra.mxu0 %v1951
        %2242 = vmatpush.msra.mxu0 %v1939
        %2243 = vmatpush.msra.mxu0 %v1927
        %2244 = vmatmul.f32.gmra.mxu0 %v2133
        %v2245 = vpop.f32.mrf.mxu0
        %v2246 = vadd.f32 0.0, %v2245
        %2247 = vmatmul.f32.gmra.mxu0 %v2135
        %v2248 = vpop.f32.mrf.mxu0
        %v2249 = vadd.f32 0.0, %v2248
        %2250 = vmatmul.f32.gmra.mxu0 %v2137
        %v2251 = vpop.f32.mrf.mxu0
        %v2252 = vadd.f32 0.0, %v2251
        %2253 = vmatmul.f32.gmra.mxu0 %v2139
        %v2254 = vpop.f32.mrf.mxu0
        %v2255 = vadd.f32 0.0, %v2254
        %2256 = vdwg.mxu0
        %2257 = vmatpush.msra.mxu0 0.0
        %2258 = vmatpush.msra.mxu0 %v2096
        %2259 = vmatpush.msra.mxu0 %v2084
        %2260 = vmatpush.msra.mxu0 %v2072
        %2261 = vmatpush.msra.mxu0 %v2060
        %2262 = vmatpush.msra.mxu0 %v2048
        %2263 = vmatpush.msra.mxu0 %v2036
        %2264 = vmatpush.msra.mxu0 %v2024
        %2265 = vmatpush.msra.mxu0 %v2012
        %2266 = vmatpush.msra.mxu0 %v2000
        %2267 = vmatpush.msra.mxu0 %v1988
        %2268 = vmatpush.msra.mxu0 %v1976
        %2269 = vmatpush.msra.mxu0 %v1964
        %2270 = vmatpush.msra.mxu0 %v1952
        %2271 = vmatpush.msra.mxu0 %v1940
        %2272 = vmatpush.msra.mxu0 %v1928
        %2273 = vmatmul.f32.gmra.mxu0 %v2133
        %v2274 = vpop.f32.mrf.mxu0
        %v2275 = vadd.f32 0.0, %v2274
        %2276 = vmatmul.f32.gmra.mxu0 %v2135
        %v2277 = vpop.f32.mrf.mxu0
        %v2278 = vadd.f32 0.0, %v2277
        %2279 = vmatmul.f32.gmra.mxu0 %v2137
        %v2280 = vpop.f32.mrf.mxu0
        %v2281 = vadd.f32 0.0, %v2280
        %2282 = vmatmul.f32.gmra.mxu0 %v2139
        %v2283 = vpop.f32.mrf.mxu0
        %v2284 = vadd.f32 0.0, %v2283
        %2285 = vdwg.mxu0
        %2286 = vmatpush.msra.mxu0 0.0
        %2287 = vmatpush.msra.mxu0 %v2097
        %2288 = vmatpush.msra.mxu0 %v2085
        %2289 = vmatpush.msra.mxu0 %v2073
        %2290 = vmatpush.msra.mxu0 %v2061
        %2291 = vmatpush.msra.mxu0 %v2049
        %2292 = vmatpush.msra.mxu0 %v2037
        %2293 = vmatpush.msra.mxu0 %v2025
        %2294 = vmatpush.msra.mxu0 %v2013
        %2295 = vmatpush.msra.mxu0 %v2001
        %2296 = vmatpush.msra.mxu0 %v1989
        %2297 = vmatpush.msra.mxu0 %v1977
        %2298 = vmatpush.msra.mxu0 %v1965
        %2299 = vmatpush.msra.mxu0 %v1953
        %2300 = vmatpush.msra.mxu0 %v1941
        %2301 = vmatpush.msra.mxu0 %v1929
        %2302 = vmatmul.f32.gmra.mxu0 %v2133
        %v2303 = vpop.f32.mrf.mxu0
        %v2304 = vadd.f32 0.0, %v2303
        %2305 = vmatmul.f32.gmra.mxu0 %v2135
        %v2306 = vpop.f32.mrf.mxu0
        %v2307 = vadd.f32 0.0, %v2306
        %2308 = vmatmul.f32.gmra.mxu0 %v2137
        %v2309 = vpop.f32.mrf.mxu0
        %v2310 = vadd.f32 0.0, %v2309
        %2311 = vmatmul.f32.gmra.mxu0 %v2139
        %v2312 = vpop.f32.mrf.mxu0
        %v2313 = vadd.f32 0.0, %v2312
        %2314 = vdwg.mxu0
        %2315 = vmatpush.msra.mxu0 0.0
        %2316 = vmatpush.msra.mxu0 %v2098
        %2317 = vmatpush.msra.mxu0 %v2086
        %2318 = vmatpush.msra.mxu0 %v2074
        %2319 = vmatpush.msra.mxu0 %v2062
        %2320 = vmatpush.msra.mxu0 %v2050
        %2321 = vmatpush.msra.mxu0 %v2038
        %2322 = vmatpush.msra.mxu0 %v2026
        %2323 = vmatpush.msra.mxu0 %v2014
        %2324 = vmatpush.msra.mxu0 %v2002
        %2325 = vmatpush.msra.mxu0 %v1990
        %2326 = vmatpush.msra.mxu0 %v1978
        %2327 = vmatpush.msra.mxu0 %v1966
        %2328 = vmatpush.msra.mxu0 %v1954
        %2329 = vmatpush.msra.mxu0 %v1942
        %2330 = vmatpush.msra.mxu0 %v1930
        %2331 = vmatmul.f32.gmra.mxu0 %v2133
        %v2332 = vpop.f32.mrf.mxu0
        %v2333 = vadd.f32 0.0, %v2332
        %2334 = vmatmul.f32.gmra.mxu0 %v2135
        %v2335 = vpop.f32.mrf.mxu0
        %v2336 = vadd.f32 0.0, %v2335
        %2337 = vmatmul.f32.gmra.mxu0 %v2137
        %v2338 = vpop.f32.mrf.mxu0
        %v2339 = vadd.f32 0.0, %v2338
        %2340 = vmatmul.f32.gmra.mxu0 %v2139
        %v2341 = vpop.f32.mrf.mxu0
        %v2342 = vadd.f32 0.0, %v2341
        %2343 = vdwg.mxu0
        %2344 = vmatpush.msra.mxu0 0.0
        %2345 = vmatpush.msra.mxu0 %v2099
        %2346 = vmatpush.msra.mxu0 %v2087
        %2347 = vmatpush.msra.mxu0 %v2075
        %2348 = vmatpush.msra.mxu0 %v2063
        %2349 = vmatpush.msra.mxu0 %v2051
        %2350 = vmatpush.msra.mxu0 %v2039
        %2351 = vmatpush.msra.mxu0 %v2027
        %2352 = vmatpush.msra.mxu0 %v2015
        %2353 = vmatpush.msra.mxu0 %v2003
        %2354 = vmatpush.msra.mxu0 %v1991
        %2355 = vmatpush.msra.mxu0 %v1979
        %2356 = vmatpush.msra.mxu0 %v1967
        %2357 = vmatpush.msra.mxu0 %v1955
        %2358 = vmatpush.msra.mxu0 %v1943
        %2359 = vmatpush.msra.mxu0 %v1931
        %2360 = vmatmul.f32.gmra.mxu0 %v2133
        %v2361 = vpop.f32.mrf.mxu0
        %v2362 = vadd.f32 0.0, %v2361
        %2363 = vmatmul.f32.gmra.mxu0 %v2135
        %v2364 = vpop.f32.mrf.mxu0
        %v2365 = vadd.f32 0.0, %v2364
        %2366 = vmatmul.f32.gmra.mxu0 %v2137
        %v2367 = vpop.f32.mrf.mxu0
        %v2368 = vadd.f32 0.0, %v2367
        %2369 = vmatmul.f32.gmra.mxu0 %v2139
        %v2370 = vpop.f32.mrf.mxu0
        %v2371 = vadd.f32 0.0, %v2370
        %2372 = vdwg.mxu0
        %2373 = vmatpush.msra.mxu0 0.0
        %2374 = vmatpush.msra.mxu0 %v2100
        %2375 = vmatpush.msra.mxu0 %v2088
        %2376 = vmatpush.msra.mxu0 %v2076
        %2377 = vmatpush.msra.mxu0 %v2064
        %2378 = vmatpush.msra.mxu0 %v2052
        %2379 = vmatpush.msra.mxu0 %v2040
        %2380 = vmatpush.msra.mxu0 %v2028
        %2381 = vmatpush.msra.mxu0 %v2016
        %2382 = vmatpush.msra.mxu0 %v2004
        %2383 = vmatpush.msra.mxu0 %v1992
        %2384 = vmatpush.msra.mxu0 %v1980
        %2385 = vmatpush.msra.mxu0 %v1968
        %2386 = vmatpush.msra.mxu0 %v1956
        %2387 = vmatpush.msra.mxu0 %v1944
        %2388 = vmatpush.msra.mxu0 %v1932
        %2389 = vmatmul.f32.gmra.mxu0 %v2133
        %v2390 = vpop.f32.mrf.mxu0
        %v2391 = vadd.f32 0.0, %v2390
        %2392 = vmatmul.f32.gmra.mxu0 %v2135
        %v2393 = vpop.f32.mrf.mxu0
        %v2394 = vadd.f32 0.0, %v2393
        %2395 = vmatmul.f32.gmra.mxu0 %v2137
        %v2396 = vpop.f32.mrf.mxu0
        %v2397 = vadd.f32 0.0, %v2396
        %2398 = vmatmul.f32.gmra.mxu0 %v2139
        %v2399 = vpop.f32.mrf.mxu0
        %v2400 = vadd.f32 0.0, %v2399
        %2401 = vdwg.mxu0
        %2402 = vmatpush.msra.mxu0 0.0
        %2403 = vmatpush.msra.mxu0 %v2101
        %2404 = vmatpush.msra.mxu0 %v2089
        %2405 = vmatpush.msra.mxu0 %v2077
        %2406 = vmatpush.msra.mxu0 %v2065
        %2407 = vmatpush.msra.mxu0 %v2053
        %2408 = vmatpush.msra.mxu0 %v2041
        %2409 = vmatpush.msra.mxu0 %v2029
        %2410 = vmatpush.msra.mxu0 %v2017
        %2411 = vmatpush.msra.mxu0 %v2005
        %2412 = vmatpush.msra.mxu0 %v1993
        %2413 = vmatpush.msra.mxu0 %v1981
        %2414 = vmatpush.msra.mxu0 %v1969
        %2415 = vmatpush.msra.mxu0 %v1957
        %2416 = vmatpush.msra.mxu0 %v1945
        %2417 = vmatpush.msra.mxu0 %v1933
        %2418 = vmatmul.f32.gmra.mxu0 %v2133
        %v2419 = vpop.f32.mrf.mxu0
        %v2420 = vadd.f32 0.0, %v2419
        %2421 = vmatmul.f32.gmra.mxu0 %v2135
        %v2422 = vpop.f32.mrf.mxu0
        %v2423 = vadd.f32 0.0, %v2422
        %2424 = vmatmul.f32.gmra.mxu0 %v2137
        %v2425 = vpop.f32.mrf.mxu0
        %v2426 = vadd.f32 0.0, %v2425
        %2427 = vmatmul.f32.gmra.mxu0 %v2139
        %v2428 = vpop.f32.mrf.mxu0
        %v2429 = vadd.f32 0.0, %v2428
        %2430 = vdwg.mxu0
        %2431 = vmatpush.msra.mxu0 0.0
        %2432 = vmatpush.msra.mxu0 %v2102
        %2433 = vmatpush.msra.mxu0 %v2090
        %2434 = vmatpush.msra.mxu0 %v2078
        %2435 = vmatpush.msra.mxu0 %v2066
        %2436 = vmatpush.msra.mxu0 %v2054
        %2437 = vmatpush.msra.mxu0 %v2042
        %2438 = vmatpush.msra.mxu0 %v2030
        %2439 = vmatpush.msra.mxu0 %v2018
        %2440 = vmatpush.msra.mxu0 %v2006
        %2441 = vmatpush.msra.mxu0 %v1994
        %2442 = vmatpush.msra.mxu0 %v1982
        %2443 = vmatpush.msra.mxu0 %v1970
        %2444 = vmatpush.msra.mxu0 %v1958
        %2445 = vmatpush.msra.mxu0 %v1946
        %2446 = vmatpush.msra.mxu0 %v1934
        %2447 = vmatmul.f32.gmra.mxu0 %v2133
        %v2448 = vpop.f32.mrf.mxu0
        %v2449 = vadd.f32 0.0, %v2448
        %2450 = vmatmul.f32.gmra.mxu0 %v2135
        %v2451 = vpop.f32.mrf.mxu0
        %v2452 = vadd.f32 0.0, %v2451
        %2453 = vmatmul.f32.gmra.mxu0 %v2137
        %v2454 = vpop.f32.mrf.mxu0
        %v2455 = vadd.f32 0.0, %v2454
        %2456 = vmatmul.f32.gmra.mxu0 %v2139
        %v2457 = vpop.f32.mrf.mxu0
        %v2458 = vadd.f32 0.0, %v2457
        %2459 = vdwg.mxu0
        %2460 = vmatpush.msra.mxu0 0.0
        %2461 = vmatpush.msra.mxu0 %v2103
        %2462 = vmatpush.msra.mxu0 %v2091
        %2463 = vmatpush.msra.mxu0 %v2079
        %2464 = vmatpush.msra.mxu0 %v2067
        %2465 = vmatpush.msra.mxu0 %v2055
        %2466 = vmatpush.msra.mxu0 %v2043
        %2467 = vmatpush.msra.mxu0 %v2031
        %2468 = vmatpush.msra.mxu0 %v2019
        %2469 = vmatpush.msra.mxu0 %v2007
        %2470 = vmatpush.msra.mxu0 %v1995
        %2471 = vmatpush.msra.mxu0 %v1983
        %2472 = vmatpush.msra.mxu0 %v1971
        %2473 = vmatpush.msra.mxu0 %v1959
        %2474 = vmatpush.msra.mxu0 %v1947
        %2475 = vmatpush.msra.mxu0 %v1935
        %2476 = vmatmul.f32.gmra.mxu0 %v2133
        %v2477 = vpop.f32.mrf.mxu0
        %v2478 = vadd.f32 0.0, %v2477
        %2479 = vmatmul.f32.gmra.mxu0 %v2135
        %v2480 = vpop.f32.mrf.mxu0
        %v2481 = vadd.f32 0.0, %v2480
        %2482 = vmatmul.f32.gmra.mxu0 %v2137
        %v2483 = vpop.f32.mrf.mxu0
        %v2484 = vadd.f32 0.0, %v2483
        %2485 = vmatmul.f32.gmra.mxu0 %v2139
        %v2486 = vpop.f32.mrf.mxu0
        %v2487 = vadd.f32 0.0, %v2486
        %2488 = vdwg.mxu0
        %v2489 = vmul.f32 %v2159, %v909
        %v2490 = vmul.f32 %v2188, %v910
        %v2491 = vmul.f32 %v2217, %v911
        %v2492 = vmul.f32 %v2246, %v912
        %v2493 = vmul.f32 %v2275, %v913
        %v2494 = vmul.f32 %v2304, %v914
        %v2495 = vmul.f32 %v2333, %v915
        %v2496 = vmul.f32 %v2362, %v916
        %v2497 = vmul.f32 %v2391, %v917
        %v2498 = vmul.f32 %v2420, %v918
        %v2499 = vmul.f32 %v2449, %v919
        %v2500 = vmul.f32 %v2478, %v920
        %v2501 = vmul.f32 %v2162, %v909
        %v2502 = vmul.f32 %v2191, %v910
        %v2503 = vmul.f32 %v2220, %v911
        %v2504 = vmul.f32 %v2249, %v912
        %v2505 = vmul.f32 %v2278, %v913
        %v2506 = vmul.f32 %v2307, %v914
        %v2507 = vmul.f32 %v2336, %v915
        %v2508 = vmul.f32 %v2365, %v916
        %v2509 = vmul.f32 %v2394, %v917
        %v2510 = vmul.f32 %v2423, %v918
        %v2511 = vmul.f32 %v2452, %v919
        %v2512 = vmul.f32 %v2481, %v920
        %v2513 = vmul.f32 %v2165, %v909
        %v2514 = vmul.f32 %v2194, %v910
        %v2515 = vmul.f32 %v2223, %v911
        %v2516 = vmul.f32 %v2252, %v912
        %v2517 = vmul.f32 %v2281, %v913
        %v2518 = vmul.f32 %v2310, %v914
        %v2519 = vmul.f32 %v2339, %v915
        %v2520 = vmul.f32 %v2368, %v916
        %v2521 = vmul.f32 %v2397, %v917
        %v2522 = vmul.f32 %v2426, %v918
        %v2523 = vmul.f32 %v2455, %v919
        %v2524 = vmul.f32 %v2484, %v920
        %v2525 = vmul.f32 %v2168, %v909
        %v2526 = vmul.f32 %v2197, %v910
        %v2527 = vmul.f32 %v2226, %v911
        %v2528 = vmul.f32 %v2255, %v912
        %v2529 = vmul.f32 %v2284, %v913
        %v2530 = vmul.f32 %v2313, %v914
        %v2531 = vmul.f32 %v2342, %v915
        %v2532 = vmul.f32 %v2371, %v916
        %v2533 = vmul.f32 %v2400, %v917
        %v2534 = vmul.f32 %v2429, %v918
        %v2535 = vmul.f32 %v2458, %v919
        %v2536 = vmul.f32 %v2487, %v920
        %v2537 = vadd.f32 %v2489, %v983
        %v2538 = vadd.f32 %v2490, %v984
        %v2539 = vadd.f32 %v2491, %v985
        %v2540 = vadd.f32 %v2492, %v986
        %v2541 = vadd.f32 %v2493, %v987
        %v2542 = vadd.f32 %v2494, %v988
        %v2543 = vadd.f32 %v2495, %v989
        %v2544 = vadd.f32 %v2496, %v990
        %v2545 = vadd.f32 %v2497, %v991
        %v2546 = vadd.f32 %v2498, %v992
        %v2547 = vadd.f32 %v2499, %v993
        %v2548 = vadd.f32 %v2500, %v994
        %v2549 = vadd.f32 %v2501, %v983
        %v2550 = vadd.f32 %v2502, %v984
        %v2551 = vadd.f32 %v2503, %v985
        %v2552 = vadd.f32 %v2504, %v986
        %v2553 = vadd.f32 %v2505, %v987
        %v2554 = vadd.f32 %v2506, %v988
        %v2555 = vadd.f32 %v2507, %v989
        %v2556 = vadd.f32 %v2508, %v990
        %v2557 = vadd.f32 %v2509, %v991
        %v2558 = vadd.f32 %v2510, %v992
        %v2559 = vadd.f32 %v2511, %v993
        %v2560 = vadd.f32 %v2512, %v994
        %v2561 = vadd.f32 %v2513, %v983
        %v2562 = vadd.f32 %v2514, %v984
        %v2563 = vadd.f32 %v2515, %v985
        %v2564 = vadd.f32 %v2516, %v986
        %v2565 = vadd.f32 %v2517, %v987
        %v2566 = vadd.f32 %v2518, %v988
        %v2567 = vadd.f32 %v2519, %v989
        %v2568 = vadd.f32 %v2520, %v990
        %v2569 = vadd.f32 %v2521, %v991
        %v2570 = vadd.f32 %v2522, %v992
        %v2571 = vadd.f32 %v2523, %v993
        %v2572 = vadd.f32 %v2524, %v994
        %v2573 = vadd.f32 %v2525, %v983
        %v2574 = vadd.f32 %v2526, %v984
        %v2575 = vadd.f32 %v2527, %v985
        %v2576 = vadd.f32 %v2528, %v986
        %v2577 = vadd.f32 %v2529, %v987
        %v2578 = vadd.f32 %v2530, %v988
        %v2579 = vadd.f32 %v2531, %v989
        %v2580 = vadd.f32 %v2532, %v990
        %v2581 = vadd.f32 %v2533, %v991
        %v2582 = vadd.f32 %v2534, %v992
        %v2583 = vadd.f32 %v2535, %v993
        %v2584 = vadd.f32 %v2536, %v994
        %v2585 = vmax.f32 %v2537, 0.0
        %v2586 = vmax.f32 %v2538, 0.0
        %v2587 = vmax.f32 %v2539, 0.0
        %v2588 = vmax.f32 %v2540, 0.0
        %v2589 = vmax.f32 %v2541, 0.0
        %v2590 = vmax.f32 %v2542, 0.0
        %v2591 = vmax.f32 %v2543, 0.0
        %v2592 = vmax.f32 %v2544, 0.0
        %v2593 = vmax.f32 %v2545, 0.0
        %v2594 = vmax.f32 %v2546, 0.0
        %v2595 = vmax.f32 %v2547, 0.0
        %v2596 = vmax.f32 %v2548, 0.0
        %v2597 = vmax.f32 %v2549, 0.0
        %v2598 = vmax.f32 %v2550, 0.0
        %v2599 = vmax.f32 %v2551, 0.0
        %v2600 = vmax.f32 %v2552, 0.0
        %v2601 = vmax.f32 %v2553, 0.0
        %v2602 = vmax.f32 %v2554, 0.0
        %v2603 = vmax.f32 %v2555, 0.0
        %v2604 = vmax.f32 %v2556, 0.0
        %v2605 = vmax.f32 %v2557, 0.0
        %v2606 = vmax.f32 %v2558, 0.0
        %v2607 = vmax.f32 %v2559, 0.0
        %v2608 = vmax.f32 %v2560, 0.0
        %v2609 = vmax.f32 %v2561, 0.0
        %v2610 = vmax.f32 %v2562, 0.0
        %v2611 = vmax.f32 %v2563, 0.0
        %v2612 = vmax.f32 %v2564, 0.0
        %v2613 = vmax.f32 %v2565, 0.0
        %v2614 = vmax.f32 %v2566, 0.0
        %v2615 = vmax.f32 %v2567, 0.0
        %v2616 = vmax.f32 %v2568, 0.0
        %v2617 = vmax.f32 %v2569, 0.0
        %v2618 = vmax.f32 %v2570, 0.0
        %v2619 = vmax.f32 %v2571, 0.0
        %v2620 = vmax.f32 %v2572, 0.0
        %v2621 = vmax.f32 %v2573, 0.0
        %v2622 = vmax.f32 %v2574, 0.0
        %v2623 = vmax.f32 %v2575, 0.0
        %v2624 = vmax.f32 %v2576, 0.0
        %v2625 = vmax.f32 %v2577, 0.0
        %v2626 = vmax.f32 %v2578, 0.0
        %v2627 = vmax.f32 %v2579, 0.0
        %v2628 = vmax.f32 %v2580, 0.0
        %v2629 = vmax.f32 %v2581, 0.0
        %v2630 = vmax.f32 %v2582, 0.0
        %v2631 = vmax.f32 %v2583, 0.0
        %v2632 = vmax.f32 %v2584, 0.0
        %2633 = vst [vmem:[#allocation2 + $0xd8] sm:$0xff] %v2585
        %2634 = vst [vmem:[#allocation2 + $0xe0] sm:$0xff] %v2586
        %2635 = vst [vmem:[#allocation2 + $0xe8] sm:$0xff] %v2587
        %2636 = vst [vmem:[#allocation2 + $0xf0] sm:$0xff] %v2588
        %2637 = vst [vmem:[#allocation2 + $0xf8] sm:$0xff] %v2589
        %2638 = vst [vmem:[#allocation2 + $0x100] sm:$0xff] %v2590
        %2639 = vst [vmem:[#allocation2 + $0x108] sm:$0xff] %v2591
        %2640 = vst [vmem:[#allocation2 + $0x110] sm:$0xff] %v2592
        %2641 = vst [vmem:[#allocation2 + $0x118] sm:$0xff] %v2593
        %2642 = vst [vmem:[#allocation2 + $0x120] sm:$0xff] %v2594
        %2643 = vst [vmem:[#allocation2 + $0x128] sm:$0xff] %v2595
        %2644 = vst [vmem:[#allocation2 + $0x130] sm:$0xff] %v2596
        %2645 = vst [vmem:[#allocation2 + $0x288] sm:$0xff] %v2597
        %2646 = vst [vmem:[#allocation2 + $0x290] sm:$0xff] %v2598
        %2647 = vst [vmem:[#allocation2 + $0x298] sm:$0xff] %v2599
        %2648 = vst [vmem:[#allocation2 + $0x2a0] sm:$0xff] %v2600
        %2649 = vst [vmem:[#allocation2 + $0x2a8] sm:$0xff] %v2601
        %2650 = vst [vmem:[#allocation2 + $0x2b0] sm:$0xff] %v2602
        %2651 = vst [vmem:[#allocation2 + $0x2b8] sm:$0xff] %v2603
        %2652 = vst [vmem:[#allocation2 + $0x2c0] sm:$0xff] %v2604
        %2653 = vst [vmem:[#allocation2 + $0x2c8] sm:$0xff] %v2605
        %2654 = vst [vmem:[#allocation2 + $0x2d0] sm:$0xff] %v2606
        %2655 = vst [vmem:[#allocation2 + $0x2d8] sm:$0xff] %v2607
        %2656 = vst [vmem:[#allocation2 + $0x2e0] sm:$0xff] %v2608
        %2657 = vst [vmem:[#allocation2 + $0x438] sm:$0xff] %v2609
        %2658 = vst [vmem:[#allocation2 + $0x440] sm:$0xff] %v2610
        %2659 = vst [vmem:[#allocation2 + $0x448] sm:$0xff] %v2611
        %2660 = vst [vmem:[#allocation2 + $0x450] sm:$0xff] %v2612
        %2661 = vst [vmem:[#allocation2 + $0x458] sm:$0xff] %v2613
        %2662 = vst [vmem:[#allocation2 + $0x460] sm:$0xff] %v2614
        %2663 = vst [vmem:[#allocation2 + $0x468] sm:$0xff] %v2615
        %2664 = vst [vmem:[#allocation2 + $0x470] sm:$0xff] %v2616
        %2665 = vst [vmem:[#allocation2 + $0x478] sm:$0xff] %v2617
        %2666 = vst [vmem:[#allocation2 + $0x480] sm:$0xff] %v2618
        %2667 = vst [vmem:[#allocation2 + $0x488] sm:$0xff] %v2619
        %2668 = vst [vmem:[#allocation2 + $0x490] sm:$0xff] %v2620
        %2669 = vst [vmem:[#allocation2 + $0x5e8] sm:$0xff] %v2621
        %2670 = vst [vmem:[#allocation2 + $0x5f0] sm:$0xff] %v2622
        %2671 = vst [vmem:[#allocation2 + $0x5f8] sm:$0xff] %v2623
        %2672 = vst [vmem:[#allocation2 + $0x600] sm:$0xff] %v2624
        %2673 = vst [vmem:[#allocation2 + $0x608] sm:$0xff] %v2625
        %2674 = vst [vmem:[#allocation2 + $0x610] sm:$0xff] %v2626
        %2675 = vst [vmem:[#allocation2 + $0x618] sm:$0xff] %v2627
        %2676 = vst [vmem:[#allocation2 + $0x620] sm:$0xff] %v2628
        %2677 = vst [vmem:[#allocation2 + $0x628] sm:$0xff] %v2629
        %2678 = vst [vmem:[#allocation2 + $0x630] sm:$0xff] %v2630
        %2679 = vst [vmem:[#allocation2 + $0x638] sm:$0xff] %v2631
        %2680 = vst [vmem:[#allocation2 + $0x640] sm:$0xff] %v2632
        %v2681 = vld [vmem:[%s294 + $0x10] sm:$0xff]
        %v2682 = vld [vmem:[%s294 + $0x30] sm:$0xff]
        %v2683 = vld [vmem:[%s294 + $0x50] sm:$0xff]
        %v2684 = vld [vmem:[%s294 + $0x70] sm:$0xff]
        %v2685 = vld [vmem:[%s1] sm:$0xff]
        %v2686 = vld [vmem:[%s1 + $0x8] sm:$0xff]
        %v2687 = vld [vmem:[%s1 + $0x10] sm:$0xff]
        %v2688 = vld [vmem:[%s1 + $0x18] sm:$0xff]
        %v2689 = vld [vmem:[%s1 + $0x20] sm:$0xff]
        %v2690 = vld [vmem:[%s1 + $0x28] sm:$0xff]
        %v2691 = vld [vmem:[%s1 + $0x30] sm:$0xff]
        %v2692 = vld [vmem:[%s1 + $0x38] sm:$0xff]
        %v2693 = vld [vmem:[%s1 + $0x40] sm:$0xff]
        %v2694 = vld [vmem:[%s1 + $0x48] sm:$0xff]
        %v2695 = vld [vmem:[%s1 + $0x50] sm:$0xff]
        %v2696 = vld [vmem:[%s1 + $0x58] sm:$0xff]
        %v2697 = vld [vmem:[%s1 + $0x60] sm:$0xff]
        %v2698 = vld [vmem:[%s1 + $0x68] sm:$0xff]
        %v2699 = vld [vmem:[%s1 + $0x70] sm:$0xff]
        %v2700 = vld [vmem:[%s1 + $0x78] sm:$0xff]
        %v2701 = vld [vmem:[%s1 + $0x80] sm:$0xff]
        %v2702 = vld [vmem:[%s1 + $0x88] sm:$0xff]
        %v2703 = vld [vmem:[%s1 + $0x90] sm:$0xff]
        %v2704 = vld [vmem:[%s1 + $0x98] sm:$0xff]
        %v2705 = vld [vmem:[%s1 + $0xa0] sm:$0xff]
        %v2706 = vld [vmem:[%s1 + $0xa8] sm:$0xff]
        %v2707 = vld [vmem:[%s1 + $0xb0] sm:$0xff]
        %v2708 = vld [vmem:[%s1 + $0xb8] sm:$0xff]
        %v2709 = vld [vmem:[%s1 + $0xc0] sm:$0xff]
        %v2710 = vld [vmem:[%s1 + $0xc8] sm:$0xff]
        %v2711 = vld [vmem:[%s1 + $0xd0] sm:$0xff]
        %v2712 = vld [vmem:[%s1 + $0xd8] sm:$0xff]
        %v2713 = vld [vmem:[%s1 + $0xe0] sm:$0xff]
        %v2714 = vld [vmem:[%s1 + $0xe8] sm:$0xff]
        %v2715 = vld [vmem:[%s1 + $0xf0] sm:$0xff]
        %v2716 = vld [vmem:[%s1 + $0xf8] sm:$0xff]
        %v2717 = vld [vmem:[%s1 + $0x100] sm:$0xff]
        %v2718 = vld [vmem:[%s1 + $0x108] sm:$0xff]
        %v2719 = vld [vmem:[%s1 + $0x110] sm:$0xff]
        %v2720 = vld [vmem:[%s1 + $0x118] sm:$0xff]
        %v2721 = vld [vmem:[%s1 + $0x120] sm:$0xff]
        %v2722 = vld [vmem:[%s1 + $0x128] sm:$0xff]
        %v2723 = vld [vmem:[%s1 + $0x130] sm:$0xff]
        %v2724 = vld [vmem:[%s1 + $0x138] sm:$0xff]
        %v2725 = vld [vmem:[%s1 + $0x140] sm:$0xff]
        %v2726 = vld [vmem:[%s1 + $0x148] sm:$0xff]
        %v2727 = vld [vmem:[%s1 + $0x150] sm:$0xff]
        %v2728 = vld [vmem:[%s1 + $0x158] sm:$0xff]
        %v2729 = vld [vmem:[%s1 + $0x160] sm:$0xff]
        %v2730 = vld [vmem:[%s1 + $0x168] sm:$0xff]
        %v2731 = vld [vmem:[%s1 + $0x170] sm:$0xff]
        %v2732 = vld [vmem:[%s1 + $0x178] sm:$0xff]
        %v2733 = vld [vmem:[%s1 + $0x180] sm:$0xff]
        %v2734 = vld [vmem:[%s1 + $0x188] sm:$0xff]
        %v2735 = vld [vmem:[%s1 + $0x190] sm:$0xff]
        %v2736 = vld [vmem:[%s1 + $0x198] sm:$0xff]
        %v2737 = vld [vmem:[%s1 + $0x1a0] sm:$0xff]
        %v2738 = vld [vmem:[%s1 + $0x1a8] sm:$0xff]
        %v2739 = vld [vmem:[%s1 + $0x1b0] sm:$0xff]
        %v2740 = vld [vmem:[%s1 + $0x1b8] sm:$0xff]
        %v2741 = vld [vmem:[%s1 + $0x1c0] sm:$0xff]
        %v2742 = vld [vmem:[%s1 + $0x1c8] sm:$0xff]
        %v2743 = vld [vmem:[%s1 + $0x1d0] sm:$0xff]
        %v2744 = vld [vmem:[%s1 + $0x1d8] sm:$0xff]
        %v2745 = vld [vmem:[%s1 + $0x1e0] sm:$0xff]
        %v2746 = vld [vmem:[%s1 + $0x1e8] sm:$0xff]
        %v2747 = vld [vmem:[%s1 + $0x1f0] sm:$0xff]
        %v2748 = vld [vmem:[%s1 + $0x1f8] sm:$0xff]
        %v2749 = vld [vmem:[%s1 + $0x200] sm:$0xff]
        %v2750 = vld [vmem:[%s1 + $0x208] sm:$0xff]
        %v2751 = vld [vmem:[%s1 + $0x210] sm:$0xff]
        %v2752 = vld [vmem:[%s1 + $0x218] sm:$0xff]
        %v2753 = vld [vmem:[%s1 + $0x220] sm:$0xff]
        %v2754 = vld [vmem:[%s1 + $0x228] sm:$0xff]
        %v2755 = vld [vmem:[%s1 + $0x230] sm:$0xff]
        %v2756 = vld [vmem:[%s1 + $0x238] sm:$0xff]
        %v2757 = vld [vmem:[%s1 + $0x240] sm:$0xff]
        %v2758 = vld [vmem:[%s1 + $0x248] sm:$0xff]
        %v2759 = vld [vmem:[%s1 + $0x250] sm:$0xff]
        %v2760 = vld [vmem:[%s1 + $0x258] sm:$0xff]
        %v2761 = vld [vmem:[%s1 + $0x260] sm:$0xff]
        %v2762 = vld [vmem:[%s1 + $0x268] sm:$0xff]
        %v2763 = vld [vmem:[%s1 + $0x270] sm:$0xff]
        %v2764 = vld [vmem:[%s1 + $0x278] sm:$0xff]
        %v2765 = vld [vmem:[%s1 + $0x280] sm:$0xff]
        %v2766 = vld [vmem:[%s1 + $0x288] sm:$0xff]
        %v2767 = vld [vmem:[%s1 + $0x290] sm:$0xff]
        %v2768 = vld [vmem:[%s1 + $0x298] sm:$0xff]
        %v2769 = vld [vmem:[%s1 + $0x2a0] sm:$0xff]
        %v2770 = vld [vmem:[%s1 + $0x2a8] sm:$0xff]
        %v2771 = vld [vmem:[%s1 + $0x2b0] sm:$0xff]
        %v2772 = vld [vmem:[%s1 + $0x2b8] sm:$0xff]
        %v2773 = vld [vmem:[%s1 + $0x2c0] sm:$0xff]
        %v2774 = vld [vmem:[%s1 + $0x2c8] sm:$0xff]
        %v2775 = vld [vmem:[%s1 + $0x2d0] sm:$0xff]
        %v2776 = vld [vmem:[%s1 + $0x2d8] sm:$0xff]
        %v2777 = vld [vmem:[%s1 + $0x2e0] sm:$0xff]
        %v2778 = vld [vmem:[%s1 + $0x2e8] sm:$0xff]
        %v2779 = vld [vmem:[%s1 + $0x2f0] sm:$0xff]
        %v2780 = vld [vmem:[%s1 + $0x2f8] sm:$0xff]
        %v2781 = vld [vmem:[%s1 + $0x300] sm:$0xff]
        %v2782 = vld [vmem:[%s1 + $0x308] sm:$0xff]
        %v2783 = vld [vmem:[%s1 + $0x310] sm:$0xff]
        %v2784 = vld [vmem:[%s1 + $0x318] sm:$0xff]
        %v2785 = vld [vmem:[%s1 + $0x320] sm:$0xff]
        %v2786 = vld [vmem:[%s1 + $0x328] sm:$0xff]
        %v2787 = vld [vmem:[%s1 + $0x330] sm:$0xff]
        %v2788 = vld [vmem:[%s1 + $0x338] sm:$0xff]
        %v2789 = vld [vmem:[%s1 + $0x340] sm:$0xff]
        %v2790 = vld [vmem:[%s1 + $0x348] sm:$0xff]
        %v2791 = vld [vmem:[%s1 + $0x350] sm:$0xff]
        %v2792 = vld [vmem:[%s1 + $0x358] sm:$0xff]
        %v2793 = vld [vmem:[%s1 + $0x360] sm:$0xff]
        %v2794 = vld [vmem:[%s1 + $0x368] sm:$0xff]
        %v2795 = vld [vmem:[%s1 + $0x370] sm:$0xff]
        %v2796 = vld [vmem:[%s1 + $0x378] sm:$0xff]
        %v2797 = vld [vmem:[%s1 + $0x380] sm:$0xff]
        %v2798 = vld [vmem:[%s1 + $0x388] sm:$0xff]
        %v2799 = vld [vmem:[%s1 + $0x390] sm:$0xff]
        %v2800 = vld [vmem:[%s1 + $0x398] sm:$0xff]
        %v2801 = vld [vmem:[%s1 + $0x3a0] sm:$0xff]
        %v2802 = vld [vmem:[%s1 + $0x3a8] sm:$0xff]
        %v2803 = vld [vmem:[%s1 + $0x3b0] sm:$0xff]
        %v2804 = vld [vmem:[%s1 + $0x3b8] sm:$0xff]
        %v2805 = vld [vmem:[%s1 + $0x3c0] sm:$0xff]
        %v2806 = vld [vmem:[%s1 + $0x3c8] sm:$0xff]
        %v2807 = vld [vmem:[%s1 + $0x3d0] sm:$0xff]
        %v2808 = vld [vmem:[%s1 + $0x3d8] sm:$0xff]
        %v2809 = vld [vmem:[%s1 + $0x3e0] sm:$0xff]
        %v2810 = vld [vmem:[%s1 + $0x3e8] sm:$0xff]
        %v2811 = vld [vmem:[%s1 + $0x3f0] sm:$0xff]
        %v2812 = vld [vmem:[%s1 + $0x3f8] sm:$0xff]
        %v2813 = vld [vmem:[%s1 + $0x400] sm:$0xff]
        %v2814 = vld [vmem:[%s1 + $0x408] sm:$0xff]
        %v2815 = vld [vmem:[%s1 + $0x410] sm:$0xff]
        %v2816 = vld [vmem:[%s1 + $0x418] sm:$0xff]
        %v2817 = vld [vmem:[%s1 + $0x420] sm:$0xff]
        %v2818 = vld [vmem:[%s1 + $0x428] sm:$0xff]
        %v2819 = vld [vmem:[%s1 + $0x430] sm:$0xff]
        %v2820 = vld [vmem:[%s1 + $0x438] sm:$0xff]
        %v2821 = vld [vmem:[%s1 + $0x440] sm:$0xff]
        %v2822 = vld [vmem:[%s1 + $0x448] sm:$0xff]
        %v2823 = vld [vmem:[%s1 + $0x450] sm:$0xff]
        %v2824 = vld [vmem:[%s1 + $0x458] sm:$0xff]
        %v2825 = vld [vmem:[%s1 + $0x460] sm:$0xff]
        %v2826 = vld [vmem:[%s1 + $0x468] sm:$0xff]
        %v2827 = vld [vmem:[%s1 + $0x470] sm:$0xff]
        %v2828 = vld [vmem:[%s1 + $0x478] sm:$0xff]
        %v2829 = vld [vmem:[%s1 + $0x480] sm:$0xff]
        %v2830 = vld [vmem:[%s1 + $0x488] sm:$0xff]
        %v2831 = vld [vmem:[%s1 + $0x490] sm:$0xff]
        %v2832 = vld [vmem:[%s1 + $0x498] sm:$0xff]
        %v2833 = vld [vmem:[%s1 + $0x4a0] sm:$0xff]
        %v2834 = vld [vmem:[%s1 + $0x4a8] sm:$0xff]
        %v2835 = vld [vmem:[%s1 + $0x4b0] sm:$0xff]
        %v2836 = vld [vmem:[%s1 + $0x4b8] sm:$0xff]
        %v2837 = vld [vmem:[%s1 + $0x4c0] sm:$0xff]
        %v2838 = vld [vmem:[%s1 + $0x4c8] sm:$0xff]
        %v2839 = vld [vmem:[%s1 + $0x4d0] sm:$0xff]
        %v2840 = vld [vmem:[%s1 + $0x4d8] sm:$0xff]
        %v2841 = vld [vmem:[%s1 + $0x4e0] sm:$0xff]
        %v2842 = vld [vmem:[%s1 + $0x4e8] sm:$0xff]
        %v2843 = vld [vmem:[%s1 + $0x4f0] sm:$0xff]
        %v2844 = vld [vmem:[%s1 + $0x4f8] sm:$0xff]
        %v2845 = vld [vmem:[%s1 + $0x500] sm:$0xff]
        %v2846 = vld [vmem:[%s1 + $0x508] sm:$0xff]
        %v2847 = vld [vmem:[%s1 + $0x510] sm:$0xff]
        %v2848 = vld [vmem:[%s1 + $0x518] sm:$0xff]
        %v2849 = vld [vmem:[%s1 + $0x520] sm:$0xff]
        %v2850 = vld [vmem:[%s1 + $0x528] sm:$0xff]
        %v2851 = vld [vmem:[%s1 + $0x530] sm:$0xff]
        %v2852 = vld [vmem:[%s1 + $0x538] sm:$0xff]
        %v2853 = vld [vmem:[%s1 + $0x540] sm:$0xff]
        %v2854 = vld [vmem:[%s1 + $0x548] sm:$0xff]
        %v2855 = vld [vmem:[%s1 + $0x550] sm:$0xff]
        %v2856 = vld [vmem:[%s1 + $0x558] sm:$0xff]
        %v2857 = vld [vmem:[%s1 + $0x560] sm:$0xff]
        %v2858 = vld [vmem:[%s1 + $0x568] sm:$0xff]
        %v2859 = vld [vmem:[%s1 + $0x570] sm:$0xff]
        %v2860 = vld [vmem:[%s1 + $0x578] sm:$0xff]
        %v2861 = vld [vmem:[%s1 + $0x580] sm:$0xff]
        %v2862 = vld [vmem:[%s1 + $0x588] sm:$0xff]
        %v2863 = vld [vmem:[%s1 + $0x590] sm:$0xff]
        %v2864 = vld [vmem:[%s1 + $0x598] sm:$0xff]
        %2869 = vrot.lane.b32.xlu0 %v2681, 124
        %v2870 = vpop.permute.xlu0 %2869
        %2871 = vrot.lane.b32.xlu0 %v2682, 124
        %v2872 = vpop.permute.xlu0 %2871
        %2873 = vrot.lane.b32.xlu0 %v2683, 124
        %v2874 = vpop.permute.xlu0 %2873
        %2875 = vrot.lane.b32.xlu0 %v2684, 124
        %v2876 = vpop.permute.xlu0 %2875
        %v2877 = vsel %vm550, %v2870, 0
        %v2879 = vsel %vm550, %v2872, 0
        %v2881 = vsel %vm550, %v2874, 0
        %v2883 = vsel %vm550, %v2876, 0
        %2885 = vmatpush.msra.mxu0 0.0
        %2886 = vmatpush.msra.mxu0 %v2853
        %2887 = vmatpush.msra.mxu0 %v2841
        %2888 = vmatpush.msra.mxu0 %v2829
        %2889 = vmatpush.msra.mxu0 %v2817
        %2890 = vmatpush.msra.mxu0 %v2805
        %2891 = vmatpush.msra.mxu0 %v2793
        %2892 = vmatpush.msra.mxu0 %v2781
        %2893 = vmatpush.msra.mxu0 %v2769
        %2894 = vmatpush.msra.mxu0 %v2757
        %2895 = vmatpush.msra.mxu0 %v2745
        %2896 = vmatpush.msra.mxu0 %v2733
        %2897 = vmatpush.msra.mxu0 %v2721
        %2898 = vmatpush.msra.mxu0 %v2709
        %2899 = vmatpush.msra.mxu0 %v2697
        %2900 = vmatpush.msra.mxu0 %v2685
        %2901 = vmatmul.f32.gmra.mxu0 %v2877
        %v2902 = vpop.f32.mrf.mxu0
        %v2903 = vadd.f32 0.0, %v2902
        %2904 = vmatmul.f32.gmra.mxu0 %v2879
        %v2905 = vpop.f32.mrf.mxu0
        %v2906 = vadd.f32 0.0, %v2905
        %2907 = vmatmul.f32.gmra.mxu0 %v2881
        %v2908 = vpop.f32.mrf.mxu0
        %v2909 = vadd.f32 0.0, %v2908
        %2910 = vmatmul.f32.gmra.mxu0 %v2883
        %v2911 = vpop.f32.mrf.mxu0
        %v2912 = vadd.f32 0.0, %v2911
        %2913 = vdwg.mxu0
        %2914 = vmatpush.msra.mxu0 0.0
        %2915 = vmatpush.msra.mxu0 %v2854
        %2916 = vmatpush.msra.mxu0 %v2842
        %2917 = vmatpush.msra.mxu0 %v2830
        %2918 = vmatpush.msra.mxu0 %v2818
        %2919 = vmatpush.msra.mxu0 %v2806
        %2920 = vmatpush.msra.mxu0 %v2794
        %2921 = vmatpush.msra.mxu0 %v2782
        %2922 = vmatpush.msra.mxu0 %v2770
        %2923 = vmatpush.msra.mxu0 %v2758
        %2924 = vmatpush.msra.mxu0 %v2746
        %2925 = vmatpush.msra.mxu0 %v2734
        %2926 = vmatpush.msra.mxu0 %v2722
        %2927 = vmatpush.msra.mxu0 %v2710
        %2928 = vmatpush.msra.mxu0 %v2698
        %2929 = vmatpush.msra.mxu0 %v2686
        %2930 = vmatmul.f32.gmra.mxu0 %v2877
        %v2931 = vpop.f32.mrf.mxu0
        %v2932 = vadd.f32 0.0, %v2931
        %2933 = vmatmul.f32.gmra.mxu0 %v2879
        %v2934 = vpop.f32.mrf.mxu0
        %v2935 = vadd.f32 0.0, %v2934
        %2936 = vmatmul.f32.gmra.mxu0 %v2881
        %v2937 = vpop.f32.mrf.mxu0
        %v2938 = vadd.f32 0.0, %v2937
        %2939 = vmatmul.f32.gmra.mxu0 %v2883
        %v2940 = vpop.f32.mrf.mxu0
        %v2941 = vadd.f32 0.0, %v2940
        %2942 = vdwg.mxu0
        %2943 = vmatpush.msra.mxu0 0.0
        %2944 = vmatpush.msra.mxu0 %v2855
        %2945 = vmatpush.msra.mxu0 %v2843
        %2946 = vmatpush.msra.mxu0 %v2831
        %2947 = vmatpush.msra.mxu0 %v2819
        %2948 = vmatpush.msra.mxu0 %v2807
        %2949 = vmatpush.msra.mxu0 %v2795
        %2950 = vmatpush.msra.mxu0 %v2783
        %2951 = vmatpush.msra.mxu0 %v2771
        %2952 = vmatpush.msra.mxu0 %v2759
        %2953 = vmatpush.msra.mxu0 %v2747
        %2954 = vmatpush.msra.mxu0 %v2735
        %2955 = vmatpush.msra.mxu0 %v2723
        %2956 = vmatpush.msra.mxu0 %v2711
        %2957 = vmatpush.msra.mxu0 %v2699
        %2958 = vmatpush.msra.mxu0 %v2687
        %2959 = vmatmul.f32.gmra.mxu0 %v2877
        %v2960 = vpop.f32.mrf.mxu0
        %v2961 = vadd.f32 0.0, %v2960
        %2962 = vmatmul.f32.gmra.mxu0 %v2879
        %v2963 = vpop.f32.mrf.mxu0
        %v2964 = vadd.f32 0.0, %v2963
        %2965 = vmatmul.f32.gmra.mxu0 %v2881
        %v2966 = vpop.f32.mrf.mxu0
        %v2967 = vadd.f32 0.0, %v2966
        %2968 = vmatmul.f32.gmra.mxu0 %v2883
        %v2969 = vpop.f32.mrf.mxu0
        %v2970 = vadd.f32 0.0, %v2969
        %2971 = vdwg.mxu0
        %2972 = vmatpush.msra.mxu0 0.0
        %2973 = vmatpush.msra.mxu0 %v2856
        %2974 = vmatpush.msra.mxu0 %v2844
        %2975 = vmatpush.msra.mxu0 %v2832
        %2976 = vmatpush.msra.mxu0 %v2820
        %2977 = vmatpush.msra.mxu0 %v2808
        %2978 = vmatpush.msra.mxu0 %v2796
        %2979 = vmatpush.msra.mxu0 %v2784
        %2980 = vmatpush.msra.mxu0 %v2772
        %2981 = vmatpush.msra.mxu0 %v2760
        %2982 = vmatpush.msra.mxu0 %v2748
        %2983 = vmatpush.msra.mxu0 %v2736
        %2984 = vmatpush.msra.mxu0 %v2724
        %2985 = vmatpush.msra.mxu0 %v2712
        %2986 = vmatpush.msra.mxu0 %v2700
        %2987 = vmatpush.msra.mxu0 %v2688
        %2988 = vmatmul.f32.gmra.mxu0 %v2877
        %v2989 = vpop.f32.mrf.mxu0
        %v2990 = vadd.f32 0.0, %v2989
        %2991 = vmatmul.f32.gmra.mxu0 %v2879
        %v2992 = vpop.f32.mrf.mxu0
        %v2993 = vadd.f32 0.0, %v2992
        %2994 = vmatmul.f32.gmra.mxu0 %v2881
        %v2995 = vpop.f32.mrf.mxu0
        %v2996 = vadd.f32 0.0, %v2995
        %2997 = vmatmul.f32.gmra.mxu0 %v2883
        %v2998 = vpop.f32.mrf.mxu0
        %v2999 = vadd.f32 0.0, %v2998
        %3000 = vdwg.mxu0
        %3001 = vmatpush.msra.mxu0 0.0
        %3002 = vmatpush.msra.mxu0 %v2857
        %3003 = vmatpush.msra.mxu0 %v2845
        %3004 = vmatpush.msra.mxu0 %v2833
        %3005 = vmatpush.msra.mxu0 %v2821
        %3006 = vmatpush.msra.mxu0 %v2809
        %3007 = vmatpush.msra.mxu0 %v2797
        %3008 = vmatpush.msra.mxu0 %v2785
        %3009 = vmatpush.msra.mxu0 %v2773
        %3010 = vmatpush.msra.mxu0 %v2761
        %3011 = vmatpush.msra.mxu0 %v2749
        %3012 = vmatpush.msra.mxu0 %v2737
        %3013 = vmatpush.msra.mxu0 %v2725
        %3014 = vmatpush.msra.mxu0 %v2713
        %3015 = vmatpush.msra.mxu0 %v2701
        %3016 = vmatpush.msra.mxu0 %v2689
        %3017 = vmatmul.f32.gmra.mxu0 %v2877
        %v3018 = vpop.f32.mrf.mxu0
        %v3019 = vadd.f32 0.0, %v3018
        %3020 = vmatmul.f32.gmra.mxu0 %v2879
        %v3021 = vpop.f32.mrf.mxu0
        %v3022 = vadd.f32 0.0, %v3021
        %3023 = vmatmul.f32.gmra.mxu0 %v2881
        %v3024 = vpop.f32.mrf.mxu0
        %v3025 = vadd.f32 0.0, %v3024
        %3026 = vmatmul.f32.gmra.mxu0 %v2883
        %v3027 = vpop.f32.mrf.mxu0
        %v3028 = vadd.f32 0.0, %v3027
        %3029 = vdwg.mxu0
        %3030 = vmatpush.msra.mxu0 0.0
        %3031 = vmatpush.msra.mxu0 %v2858
        %3032 = vmatpush.msra.mxu0 %v2846
        %3033 = vmatpush.msra.mxu0 %v2834
        %3034 = vmatpush.msra.mxu0 %v2822
        %3035 = vmatpush.msra.mxu0 %v2810
        %3036 = vmatpush.msra.mxu0 %v2798
        %3037 = vmatpush.msra.mxu0 %v2786
        %3038 = vmatpush.msra.mxu0 %v2774
        %3039 = vmatpush.msra.mxu0 %v2762
        %3040 = vmatpush.msra.mxu0 %v2750
        %3041 = vmatpush.msra.mxu0 %v2738
        %3042 = vmatpush.msra.mxu0 %v2726
        %3043 = vmatpush.msra.mxu0 %v2714
        %3044 = vmatpush.msra.mxu0 %v2702
        %3045 = vmatpush.msra.mxu0 %v2690
        %3046 = vmatmul.f32.gmra.mxu0 %v2877
        %v3047 = vpop.f32.mrf.mxu0
        %v3048 = vadd.f32 0.0, %v3047
        %3049 = vmatmul.f32.gmra.mxu0 %v2879
        %v3050 = vpop.f32.mrf.mxu0
        %v3051 = vadd.f32 0.0, %v3050
        %3052 = vmatmul.f32.gmra.mxu0 %v2881
        %v3053 = vpop.f32.mrf.mxu0
        %v3054 = vadd.f32 0.0, %v3053
        %3055 = vmatmul.f32.gmra.mxu0 %v2883
        %v3056 = vpop.f32.mrf.mxu0
        %v3057 = vadd.f32 0.0, %v3056
        %3058 = vdwg.mxu0
        %3059 = vmatpush.msra.mxu0 0.0
        %3060 = vmatpush.msra.mxu0 %v2859
        %3061 = vmatpush.msra.mxu0 %v2847
        %3062 = vmatpush.msra.mxu0 %v2835
        %3063 = vmatpush.msra.mxu0 %v2823
        %3064 = vmatpush.msra.mxu0 %v2811
        %3065 = vmatpush.msra.mxu0 %v2799
        %3066 = vmatpush.msra.mxu0 %v2787
        %3067 = vmatpush.msra.mxu0 %v2775
        %3068 = vmatpush.msra.mxu0 %v2763
        %3069 = vmatpush.msra.mxu0 %v2751
        %3070 = vmatpush.msra.mxu0 %v2739
        %3071 = vmatpush.msra.mxu0 %v2727
        %3072 = vmatpush.msra.mxu0 %v2715
        %3073 = vmatpush.msra.mxu0 %v2703
        %3074 = vmatpush.msra.mxu0 %v2691
        %3075 = vmatmul.f32.gmra.mxu0 %v2877
        %v3076 = vpop.f32.mrf.mxu0
        %v3077 = vadd.f32 0.0, %v3076
        %3078 = vmatmul.f32.gmra.mxu0 %v2879
        %v3079 = vpop.f32.mrf.mxu0
        %v3080 = vadd.f32 0.0, %v3079
        %3081 = vmatmul.f32.gmra.mxu0 %v2881
        %v3082 = vpop.f32.mrf.mxu0
        %v3083 = vadd.f32 0.0, %v3082
        %3084 = vmatmul.f32.gmra.mxu0 %v2883
        %v3085 = vpop.f32.mrf.mxu0
        %v3086 = vadd.f32 0.0, %v3085
        %3087 = vdwg.mxu0
        %3088 = vmatpush.msra.mxu0 0.0
        %3089 = vmatpush.msra.mxu0 %v2860
        %3090 = vmatpush.msra.mxu0 %v2848
        %3091 = vmatpush.msra.mxu0 %v2836
        %3092 = vmatpush.msra.mxu0 %v2824
        %3093 = vmatpush.msra.mxu0 %v2812
        %3094 = vmatpush.msra.mxu0 %v2800
        %3095 = vmatpush.msra.mxu0 %v2788
        %3096 = vmatpush.msra.mxu0 %v2776
        %3097 = vmatpush.msra.mxu0 %v2764
        %3098 = vmatpush.msra.mxu0 %v2752
        %3099 = vmatpush.msra.mxu0 %v2740
        %3100 = vmatpush.msra.mxu0 %v2728
        %3101 = vmatpush.msra.mxu0 %v2716
        %3102 = vmatpush.msra.mxu0 %v2704
        %3103 = vmatpush.msra.mxu0 %v2692
        %3104 = vmatmul.f32.gmra.mxu0 %v2877
        %v3105 = vpop.f32.mrf.mxu0
        %v3106 = vadd.f32 0.0, %v3105
        %3107 = vmatmul.f32.gmra.mxu0 %v2879
        %v3108 = vpop.f32.mrf.mxu0
        %v3109 = vadd.f32 0.0, %v3108
        %3110 = vmatmul.f32.gmra.mxu0 %v2881
        %v3111 = vpop.f32.mrf.mxu0
        %v3112 = vadd.f32 0.0, %v3111
        %3113 = vmatmul.f32.gmra.mxu0 %v2883
        %v3114 = vpop.f32.mrf.mxu0
        %v3115 = vadd.f32 0.0, %v3114
        %3116 = vdwg.mxu0
        %3117 = vmatpush.msra.mxu0 0.0
        %3118 = vmatpush.msra.mxu0 %v2861
        %3119 = vmatpush.msra.mxu0 %v2849
        %3120 = vmatpush.msra.mxu0 %v2837
        %3121 = vmatpush.msra.mxu0 %v2825
        %3122 = vmatpush.msra.mxu0 %v2813
        %3123 = vmatpush.msra.mxu0 %v2801
        %3124 = vmatpush.msra.mxu0 %v2789
        %3125 = vmatpush.msra.mxu0 %v2777
        %3126 = vmatpush.msra.mxu0 %v2765
        %3127 = vmatpush.msra.mxu0 %v2753
        %3128 = vmatpush.msra.mxu0 %v2741
        %3129 = vmatpush.msra.mxu0 %v2729
        %3130 = vmatpush.msra.mxu0 %v2717
        %3131 = vmatpush.msra.mxu0 %v2705
        %3132 = vmatpush.msra.mxu0 %v2693
        %3133 = vmatmul.f32.gmra.mxu0 %v2877
        %v3134 = vpop.f32.mrf.mxu0
        %v3135 = vadd.f32 0.0, %v3134
        %3136 = vmatmul.f32.gmra.mxu0 %v2879
        %v3137 = vpop.f32.mrf.mxu0
        %v3138 = vadd.f32 0.0, %v3137
        %3139 = vmatmul.f32.gmra.mxu0 %v2881
        %v3140 = vpop.f32.mrf.mxu0
        %v3141 = vadd.f32 0.0, %v3140
        %3142 = vmatmul.f32.gmra.mxu0 %v2883
        %v3143 = vpop.f32.mrf.mxu0
        %v3144 = vadd.f32 0.0, %v3143
        %3145 = vdwg.mxu0
        %3146 = vmatpush.msra.mxu0 0.0
        %3147 = vmatpush.msra.mxu0 %v2862
        %3148 = vmatpush.msra.mxu0 %v2850
        %3149 = vmatpush.msra.mxu0 %v2838
        %3150 = vmatpush.msra.mxu0 %v2826
        %3151 = vmatpush.msra.mxu0 %v2814
        %3152 = vmatpush.msra.mxu0 %v2802
        %3153 = vmatpush.msra.mxu0 %v2790
        %3154 = vmatpush.msra.mxu0 %v2778
        %3155 = vmatpush.msra.mxu0 %v2766
        %3156 = vmatpush.msra.mxu0 %v2754
        %3157 = vmatpush.msra.mxu0 %v2742
        %3158 = vmatpush.msra.mxu0 %v2730
        %3159 = vmatpush.msra.mxu0 %v2718
        %3160 = vmatpush.msra.mxu0 %v2706
        %3161 = vmatpush.msra.mxu0 %v2694
        %3162 = vmatmul.f32.gmra.mxu0 %v2877
        %v3163 = vpop.f32.mrf.mxu0
        %v3164 = vadd.f32 0.0, %v3163
        %3165 = vmatmul.f32.gmra.mxu0 %v2879
        %v3166 = vpop.f32.mrf.mxu0
        %v3167 = vadd.f32 0.0, %v3166
        %3168 = vmatmul.f32.gmra.mxu0 %v2881
        %v3169 = vpop.f32.mrf.mxu0
        %v3170 = vadd.f32 0.0, %v3169
        %3171 = vmatmul.f32.gmra.mxu0 %v2883
        %v3172 = vpop.f32.mrf.mxu0
        %v3173 = vadd.f32 0.0, %v3172
        %3174 = vdwg.mxu0
        %3175 = vmatpush.msra.mxu0 0.0
        %3176 = vmatpush.msra.mxu0 %v2863
        %3177 = vmatpush.msra.mxu0 %v2851
        %3178 = vmatpush.msra.mxu0 %v2839
        %3179 = vmatpush.msra.mxu0 %v2827
        %3180 = vmatpush.msra.mxu0 %v2815
        %3181 = vmatpush.msra.mxu0 %v2803
        %3182 = vmatpush.msra.mxu0 %v2791
        %3183 = vmatpush.msra.mxu0 %v2779
        %3184 = vmatpush.msra.mxu0 %v2767
        %3185 = vmatpush.msra.mxu0 %v2755
        %3186 = vmatpush.msra.mxu0 %v2743
        %3187 = vmatpush.msra.mxu0 %v2731
        %3188 = vmatpush.msra.mxu0 %v2719
        %3189 = vmatpush.msra.mxu0 %v2707
        %3190 = vmatpush.msra.mxu0 %v2695
        %3191 = vmatmul.f32.gmra.mxu0 %v2877
        %v3192 = vpop.f32.mrf.mxu0
        %v3193 = vadd.f32 0.0, %v3192
        %3194 = vmatmul.f32.gmra.mxu0 %v2879
        %v3195 = vpop.f32.mrf.mxu0
        %v3196 = vadd.f32 0.0, %v3195
        %3197 = vmatmul.f32.gmra.mxu0 %v2881
        %v3198 = vpop.f32.mrf.mxu0
        %v3199 = vadd.f32 0.0, %v3198
        %3200 = vmatmul.f32.gmra.mxu0 %v2883
        %v3201 = vpop.f32.mrf.mxu0
        %v3202 = vadd.f32 0.0, %v3201
        %3203 = vdwg.mxu0
        %3204 = vmatpush.msra.mxu0 0.0
        %3205 = vmatpush.msra.mxu0 %v2864
        %3206 = vmatpush.msra.mxu0 %v2852
        %3207 = vmatpush.msra.mxu0 %v2840
        %3208 = vmatpush.msra.mxu0 %v2828
        %3209 = vmatpush.msra.mxu0 %v2816
        %3210 = vmatpush.msra.mxu0 %v2804
        %3211 = vmatpush.msra.mxu0 %v2792
        %3212 = vmatpush.msra.mxu0 %v2780
        %3213 = vmatpush.msra.mxu0 %v2768
        %3214 = vmatpush.msra.mxu0 %v2756
        %3215 = vmatpush.msra.mxu0 %v2744
        %3216 = vmatpush.msra.mxu0 %v2732
        %3217 = vmatpush.msra.mxu0 %v2720
        %3218 = vmatpush.msra.mxu0 %v2708
        %3219 = vmatpush.msra.mxu0 %v2696
        %3220 = vmatmul.f32.gmra.mxu0 %v2877
        %v3221 = vpop.f32.mrf.mxu0
        %v3222 = vadd.f32 0.0, %v3221
        %3223 = vmatmul.f32.gmra.mxu0 %v2879
        %v3224 = vpop.f32.mrf.mxu0
        %v3225 = vadd.f32 0.0, %v3224
        %3226 = vmatmul.f32.gmra.mxu0 %v2881
        %v3227 = vpop.f32.mrf.mxu0
        %v3228 = vadd.f32 0.0, %v3227
        %3229 = vmatmul.f32.gmra.mxu0 %v2883
        %v3230 = vpop.f32.mrf.mxu0
        %v3231 = vadd.f32 0.0, %v3230
        %3232 = vdwg.mxu0
        %v3233 = vmul.f32 %v2903, %v909
        %v3234 = vmul.f32 %v2932, %v910
        %v3235 = vmul.f32 %v2961, %v911
        %v3236 = vmul.f32 %v2990, %v912
        %v3237 = vmul.f32 %v3019, %v913
        %v3238 = vmul.f32 %v3048, %v914
        %v3239 = vmul.f32 %v3077, %v915
        %v3240 = vmul.f32 %v3106, %v916
        %v3241 = vmul.f32 %v3135, %v917
        %v3242 = vmul.f32 %v3164, %v918
        %v3243 = vmul.f32 %v3193, %v919
        %v3244 = vmul.f32 %v3222, %v920
        %v3245 = vmul.f32 %v2906, %v909
        %v3246 = vmul.f32 %v2935, %v910
        %v3247 = vmul.f32 %v2964, %v911
        %v3248 = vmul.f32 %v2993, %v912
        %v3249 = vmul.f32 %v3022, %v913
        %v3250 = vmul.f32 %v3051, %v914
        %v3251 = vmul.f32 %v3080, %v915
        %v3252 = vmul.f32 %v3109, %v916
        %v3253 = vmul.f32 %v3138, %v917
        %v3254 = vmul.f32 %v3167, %v918
        %v3255 = vmul.f32 %v3196, %v919
        %v3256 = vmul.f32 %v3225, %v920
        %v3257 = vmul.f32 %v2909, %v909
        %v3258 = vmul.f32 %v2938, %v910
        %v3259 = vmul.f32 %v2967, %v911
        %v3260 = vmul.f32 %v2996, %v912
        %v3261 = vmul.f32 %v3025, %v913
        %v3262 = vmul.f32 %v3054, %v914
        %v3263 = vmul.f32 %v3083, %v915
        %v3264 = vmul.f32 %v3112, %v916
        %v3265 = vmul.f32 %v3141, %v917
        %v3266 = vmul.f32 %v3170, %v918
        %v3267 = vmul.f32 %v3199, %v919
        %v3268 = vmul.f32 %v3228, %v920
        %v3269 = vmul.f32 %v2912, %v909
        %v3270 = vmul.f32 %v2941, %v910
        %v3271 = vmul.f32 %v2970, %v911
        %v3272 = vmul.f32 %v2999, %v912
        %v3273 = vmul.f32 %v3028, %v913
        %v3274 = vmul.f32 %v3057, %v914
        %v3275 = vmul.f32 %v3086, %v915
        %v3276 = vmul.f32 %v3115, %v916
        %v3277 = vmul.f32 %v3144, %v917
        %v3278 = vmul.f32 %v3173, %v918
        %v3279 = vmul.f32 %v3202, %v919
        %v3280 = vmul.f32 %v3231, %v920
        %v3281 = vadd.f32 %v3233, %v983
        %v3282 = vadd.f32 %v3234, %v984
        %v3283 = vadd.f32 %v3235, %v985
        %v3284 = vadd.f32 %v3236, %v986
        %v3285 = vadd.f32 %v3237, %v987
        %v3286 = vadd.f32 %v3238, %v988
        %v3287 = vadd.f32 %v3239, %v989
        %v3288 = vadd.f32 %v3240, %v990
        %v3289 = vadd.f32 %v3241, %v991
        %v3290 = vadd.f32 %v3242, %v992
        %v3291 = vadd.f32 %v3243, %v993
        %v3292 = vadd.f32 %v3244, %v994
        %v3293 = vadd.f32 %v3245, %v983
        %v3294 = vadd.f32 %v3246, %v984
        %v3295 = vadd.f32 %v3247, %v985
        %v3296 = vadd.f32 %v3248, %v986
        %v3297 = vadd.f32 %v3249, %v987
        %v3298 = vadd.f32 %v3250, %v988
        %v3299 = vadd.f32 %v3251, %v989
        %v3300 = vadd.f32 %v3252, %v990
        %v3301 = vadd.f32 %v3253, %v991
        %v3302 = vadd.f32 %v3254, %v992
        %v3303 = vadd.f32 %v3255, %v993
        %v3304 = vadd.f32 %v3256, %v994
        %v3305 = vadd.f32 %v3257, %v983
        %v3306 = vadd.f32 %v3258, %v984
        %v3307 = vadd.f32 %v3259, %v985
        %v3308 = vadd.f32 %v3260, %v986
        %v3309 = vadd.f32 %v3261, %v987
        %v3310 = vadd.f32 %v3262, %v988
        %v3311 = vadd.f32 %v3263, %v989
        %v3312 = vadd.f32 %v3264, %v990
        %v3313 = vadd.f32 %v3265, %v991
        %v3314 = vadd.f32 %v3266, %v992
        %v3315 = vadd.f32 %v3267, %v993
        %v3316 = vadd.f32 %v3268, %v994
        %v3317 = vadd.f32 %v3269, %v983
        %v3318 = vadd.f32 %v3270, %v984
        %v3319 = vadd.f32 %v3271, %v985
        %v3320 = vadd.f32 %v3272, %v986
        %v3321 = vadd.f32 %v3273, %v987
        %v3322 = vadd.f32 %v3274, %v988
        %v3323 = vadd.f32 %v3275, %v989
        %v3324 = vadd.f32 %v3276, %v990
        %v3325 = vadd.f32 %v3277, %v991
        %v3326 = vadd.f32 %v3278, %v992
        %v3327 = vadd.f32 %v3279, %v993
        %v3328 = vadd.f32 %v3280, %v994
        %v3329 = vmax.f32 %v3281, 0.0
        %v3330 = vmax.f32 %v3282, 0.0
        %v3331 = vmax.f32 %v3283, 0.0
        %v3332 = vmax.f32 %v3284, 0.0
        %v3333 = vmax.f32 %v3285, 0.0
        %v3334 = vmax.f32 %v3286, 0.0
        %v3335 = vmax.f32 %v3287, 0.0
        %v3336 = vmax.f32 %v3288, 0.0
        %v3337 = vmax.f32 %v3289, 0.0
        %v3338 = vmax.f32 %v3290, 0.0
        %v3339 = vmax.f32 %v3291, 0.0
        %v3340 = vmax.f32 %v3292, 0.0
        %v3341 = vmax.f32 %v3293, 0.0
        %v3342 = vmax.f32 %v3294, 0.0
        %v3343 = vmax.f32 %v3295, 0.0
        %v3344 = vmax.f32 %v3296, 0.0
        %v3345 = vmax.f32 %v3297, 0.0
        %v3346 = vmax.f32 %v3298, 0.0
        %v3347 = vmax.f32 %v3299, 0.0
        %v3348 = vmax.f32 %v3300, 0.0
        %v3349 = vmax.f32 %v3301, 0.0
        %v3350 = vmax.f32 %v3302, 0.0
        %v3351 = vmax.f32 %v3303, 0.0
        %v3352 = vmax.f32 %v3304, 0.0
        %v3353 = vmax.f32 %v3305, 0.0
        %v3354 = vmax.f32 %v3306, 0.0
        %v3355 = vmax.f32 %v3307, 0.0
        %v3356 = vmax.f32 %v3308, 0.0
        %v3357 = vmax.f32 %v3309, 0.0
        %v3358 = vmax.f32 %v3310, 0.0
        %v3359 = vmax.f32 %v3311, 0.0
        %v3360 = vmax.f32 %v3312, 0.0
        %v3361 = vmax.f32 %v3313, 0.0
        %v3362 = vmax.f32 %v3314, 0.0
        %v3363 = vmax.f32 %v3315, 0.0
        %v3364 = vmax.f32 %v3316, 0.0
        %v3365 = vmax.f32 %v3317, 0.0
        %v3366 = vmax.f32 %v3318, 0.0
        %v3367 = vmax.f32 %v3319, 0.0
        %v3368 = vmax.f32 %v3320, 0.0
        %v3369 = vmax.f32 %v3321, 0.0
        %v3370 = vmax.f32 %v3322, 0.0
        %v3371 = vmax.f32 %v3323, 0.0
        %v3372 = vmax.f32 %v3324, 0.0
        %v3373 = vmax.f32 %v3325, 0.0
        %v3374 = vmax.f32 %v3326, 0.0
        %v3375 = vmax.f32 %v3327, 0.0
        %v3376 = vmax.f32 %v3328, 0.0
        %3377 = vst [vmem:[#allocation2 + $0x138] sm:$0xff] %v3329
        %3378 = vst [vmem:[#allocation2 + $0x140] sm:$0xff] %v3330
        %3379 = vst [vmem:[#allocation2 + $0x148] sm:$0xff] %v3331
        %3380 = vst [vmem:[#allocation2 + $0x150] sm:$0xff] %v3332
        %3381 = vst [vmem:[#allocation2 + $0x158] sm:$0xff] %v3333
        %3382 = vst [vmem:[#allocation2 + $0x160] sm:$0xff] %v3334
        %3383 = vst [vmem:[#allocation2 + $0x168] sm:$0xff] %v3335
        %3384 = vst [vmem:[#allocation2 + $0x170] sm:$0xff] %v3336
        %3385 = vst [vmem:[#allocation2 + $0x178] sm:$0xff] %v3337
        %3386 = vst [vmem:[#allocation2 + $0x180] sm:$0xff] %v3338
        %3387 = vst [vmem:[#allocation2 + $0x188] sm:$0xff] %v3339
        %3388 = vst [vmem:[#allocation2 + $0x190] sm:$0xff] %v3340
        %3389 = vst [vmem:[#allocation2 + $0x2e8] sm:$0xff] %v3341
        %3390 = vst [vmem:[#allocation2 + $0x2f0] sm:$0xff] %v3342
        %3391 = vst [vmem:[#allocation2 + $0x2f8] sm:$0xff] %v3343
        %3392 = vst [vmem:[#allocation2 + $0x300] sm:$0xff] %v3344
        %3393 = vst [vmem:[#allocation2 + $0x308] sm:$0xff] %v3345
        %3394 = vst [vmem:[#allocation2 + $0x310] sm:$0xff] %v3346
        %3395 = vst [vmem:[#allocation2 + $0x318] sm:$0xff] %v3347
        %3396 = vst [vmem:[#allocation2 + $0x320] sm:$0xff] %v3348
        %3397 = vst [vmem:[#allocation2 + $0x328] sm:$0xff] %v3349
        %3398 = vst [vmem:[#allocation2 + $0x330] sm:$0xff] %v3350
        %3399 = vst [vmem:[#allocation2 + $0x338] sm:$0xff] %v3351
        %3400 = vst [vmem:[#allocation2 + $0x340] sm:$0xff] %v3352
        %3401 = vst [vmem:[#allocation2 + $0x498] sm:$0xff] %v3353
        %3402 = vst [vmem:[#allocation2 + $0x4a0] sm:$0xff] %v3354
        %3403 = vst [vmem:[#allocation2 + $0x4a8] sm:$0xff] %v3355
        %3404 = vst [vmem:[#allocation2 + $0x4b0] sm:$0xff] %v3356
        %3405 = vst [vmem:[#allocation2 + $0x4b8] sm:$0xff] %v3357
        %3406 = vst [vmem:[#allocation2 + $0x4c0] sm:$0xff] %v3358
        %3407 = vst [vmem:[#allocation2 + $0x4c8] sm:$0xff] %v3359
        %3408 = vst [vmem:[#allocation2 + $0x4d0] sm:$0xff] %v3360
        %3409 = vst [vmem:[#allocation2 + $0x4d8] sm:$0xff] %v3361
        %3410 = vst [vmem:[#allocation2 + $0x4e0] sm:$0xff] %v3362
        %3411 = vst [vmem:[#allocation2 + $0x4e8] sm:$0xff] %v3363
        %3412 = vst [vmem:[#allocation2 + $0x4f0] sm:$0xff] %v3364
        %3413 = vst [vmem:[#allocation2 + $0x648] sm:$0xff] %v3365
        %3414 = vst [vmem:[#allocation2 + $0x650] sm:$0xff] %v3366
        %3415 = vst [vmem:[#allocation2 + $0x658] sm:$0xff] %v3367
        %3416 = vst [vmem:[#allocation2 + $0x660] sm:$0xff] %v3368
        %3417 = vst [vmem:[#allocation2 + $0x668] sm:$0xff] %v3369
        %3418 = vst [vmem:[#allocation2 + $0x670] sm:$0xff] %v3370
        %3419 = vst [vmem:[#allocation2 + $0x678] sm:$0xff] %v3371
        %3420 = vst [vmem:[#allocation2 + $0x680] sm:$0xff] %v3372
        %3421 = vst [vmem:[#allocation2 + $0x688] sm:$0xff] %v3373
        %3422 = vst [vmem:[#allocation2 + $0x690] sm:$0xff] %v3374
        %3423 = vst [vmem:[#allocation2 + $0x698] sm:$0xff] %v3375
        %3424 = vst [vmem:[#allocation2 + $0x6a0] sm:$0xff] %v3376
        %v3425 = vld [vmem:[%s5] sm:$0x1]
        %v3426 = vld [vmem:[%s5 + $0x1] sm:$0x1]
        %v3427 = vld [vmem:[#allocation2] sm:$0xff]
        %v3428 = vld [vmem:[#allocation2 + $0x8] sm:$0xff]
        %v3429 = vld [vmem:[#allocation2 + $0x10] sm:$0xff]
        %v3430 = vld [vmem:[#allocation2 + $0x18] sm:$0xff]
        %v3431 = vld [vmem:[#allocation2 + $0x20] sm:$0xff]
        %v3432 = vld [vmem:[#allocation2 + $0x28] sm:$0xff]
        %v3433 = vld [vmem:[#allocation2 + $0x30] sm:$0xff]
        %v3434 = vld [vmem:[#allocation2 + $0x38] sm:$0xff]
        %v3435 = vld [vmem:[#allocation2 + $0x40] sm:$0xff]
        %v3436 = vld [vmem:[#allocation2 + $0x48] sm:$0xff]
        %v3437 = vld [vmem:[#allocation2 + $0x50] sm:$0xff]
        %v3438 = vld [vmem:[#allocation2 + $0x58] sm:$0xff]
        %v3439 = vld [vmem:[#allocation2 + $0x1b0] sm:$0xff]
        %v3440 = vld [vmem:[#allocation2 + $0x1b8] sm:$0xff]
        %v3441 = vld [vmem:[#allocation2 + $0x1c0] sm:$0xff]
        %v3442 = vld [vmem:[#allocation2 + $0x1c8] sm:$0xff]
        %v3443 = vld [vmem:[#allocation2 + $0x1d0] sm:$0xff]
        %v3444 = vld [vmem:[#allocation2 + $0x1d8] sm:$0xff]
        %v3445 = vld [vmem:[#allocation2 + $0x1e0] sm:$0xff]
        %v3446 = vld [vmem:[#allocation2 + $0x1e8] sm:$0xff]
        %v3447 = vld [vmem:[#allocation2 + $0x1f0] sm:$0xff]
        %v3448 = vld [vmem:[#allocation2 + $0x1f8] sm:$0xff]
        %v3449 = vld [vmem:[#allocation2 + $0x200] sm:$0xff]
        %v3450 = vld [vmem:[#allocation2 + $0x208] sm:$0xff]
        %v3451 = vld [vmem:[#allocation2 + $0x360] sm:$0xff]
        %v3452 = vld [vmem:[#allocation2 + $0x368] sm:$0xff]
        %v3453 = vld [vmem:[#allocation2 + $0x370] sm:$0xff]
        %v3454 = vld [vmem:[#allocation2 + $0x378] sm:$0xff]
        %v3455 = vld [vmem:[#allocation2 + $0x380] sm:$0xff]
        %v3456 = vld [vmem:[#allocation2 + $0x388] sm:$0xff]
        %v3457 = vld [vmem:[#allocation2 + $0x390] sm:$0xff]
        %v3458 = vld [vmem:[#allocation2 + $0x398] sm:$0xff]
        %v3459 = vld [vmem:[#allocation2 + $0x3a0] sm:$0xff]
        %v3460 = vld [vmem:[#allocation2 + $0x3a8] sm:$0xff]
        %v3461 = vld [vmem:[#allocation2 + $0x3b0] sm:$0xff]
        %v3462 = vld [vmem:[#allocation2 + $0x3b8] sm:$0xff]
        %v3463 = vld [vmem:[#allocation2 + $0x510] sm:$0xff]
        %v3464 = vld [vmem:[#allocation2 + $0x518] sm:$0xff]
        %v3465 = vld [vmem:[#allocation2 + $0x520] sm:$0xff]
        %v3466 = vld [vmem:[#allocation2 + $0x528] sm:$0xff]
        %v3467 = vld [vmem:[#allocation2 + $0x530] sm:$0xff]
        %v3468 = vld [vmem:[#allocation2 + $0x538] sm:$0xff]
        %v3469 = vld [vmem:[#allocation2 + $0x540] sm:$0xff]
        %v3470 = vld [vmem:[#allocation2 + $0x548] sm:$0xff]
        %v3471 = vld [vmem:[#allocation2 + $0x550] sm:$0xff]
        %v3472 = vld [vmem:[#allocation2 + $0x558] sm:$0xff]
        %v3473 = vld [vmem:[#allocation2 + $0x560] sm:$0xff]
        %v3474 = vld [vmem:[#allocation2 + $0x568] sm:$0xff]
        %v3475 = vld [vmem:[%s2] sm:$0xff]
        %v3476 = vld [vmem:[%s2 + $0x8] sm:$0xff]
        %v3477 = vld [vmem:[%s2 + $0x10] sm:$0xff]
        %v3478 = vld [vmem:[%s2 + $0x18] sm:$0xff]
        %v3479 = vld [vmem:[%s2 + $0x20] sm:$0xff]
        %v3480 = vld [vmem:[%s2 + $0x28] sm:$0xff]
        %v3481 = vld [vmem:[%s2 + $0x30] sm:$0xff]
        %v3482 = vld [vmem:[%s2 + $0x38] sm:$0xff]
        %v3483 = vld [vmem:[%s2 + $0x40] sm:$0xff]
        %v3484 = vld [vmem:[%s2 + $0x48] sm:$0xff]
        %v3485 = vld [vmem:[%s2 + $0x50] sm:$0xff]
        %v3486 = vld [vmem:[%s2 + $0x58] sm:$0xff]
        %v3487 = vld [vmem:[%s2 + $0x60] sm:$0xff]
        %v3488 = vld [vmem:[%s2 + $0x68] sm:$0xff]
        %v3489 = vld [vmem:[%s2 + $0x70] sm:$0xff]
        %v3490 = vld [vmem:[%s2 + $0x78] sm:$0xff]
        %v3491 = vld [vmem:[%s2 + $0x80] sm:$0xff]
        %v3492 = vld [vmem:[%s2 + $0x88] sm:$0xff]
        %v3493 = vld [vmem:[%s2 + $0x90] sm:$0xff]
        %v3494 = vld [vmem:[%s2 + $0x98] sm:$0xff]
        %v3495 = vld [vmem:[%s2 + $0xa0] sm:$0xff]
        %v3496 = vld [vmem:[%s2 + $0xa8] sm:$0xff]
        %v3497 = vld [vmem:[%s2 + $0xb0] sm:$0xff]
        %v3498 = vld [vmem:[%s2 + $0xb8] sm:$0xff]
        %v3499 = vld [vmem:[%s2 + $0xc0] sm:$0xff]
        %v3500 = vld [vmem:[%s2 + $0xc8] sm:$0xff]
        %v3501 = vld [vmem:[%s2 + $0xd0] sm:$0xff]
        %v3502 = vld [vmem:[%s2 + $0xd8] sm:$0xff]
        %v3503 = vld [vmem:[%s2 + $0xe0] sm:$0xff]
        %v3504 = vld [vmem:[%s2 + $0xe8] sm:$0xff]
        %v3505 = vld [vmem:[%s2 + $0xf0] sm:$0xff]
        %v3506 = vld [vmem:[%s2 + $0xf8] sm:$0xff]
        %v3507 = vld [vmem:[%s2 + $0x100] sm:$0xff]
        %v3508 = vld [vmem:[%s2 + $0x108] sm:$0xff]
        %v3509 = vld [vmem:[%s2 + $0x110] sm:$0xff]
        %v3510 = vld [vmem:[%s2 + $0x118] sm:$0xff]
        %v3511 = vld [vmem:[%s2 + $0x120] sm:$0xff]
        %v3512 = vld [vmem:[%s2 + $0x128] sm:$0xff]
        %v3513 = vld [vmem:[%s2 + $0x130] sm:$0xff]
        %v3514 = vld [vmem:[%s2 + $0x138] sm:$0xff]
        %v3515 = vld [vmem:[%s2 + $0x140] sm:$0xff]
        %v3516 = vld [vmem:[%s2 + $0x148] sm:$0xff]
        %v3517 = vld [vmem:[%s2 + $0x150] sm:$0xff]
        %v3518 = vld [vmem:[%s2 + $0x158] sm:$0xff]
        %v3519 = vld [vmem:[%s2 + $0x160] sm:$0xff]
        %v3520 = vld [vmem:[%s2 + $0x168] sm:$0xff]
        %v3521 = vld [vmem:[%s2 + $0x170] sm:$0xff]
        %v3522 = vld [vmem:[%s2 + $0x178] sm:$0xff]
        %v3523 = vld [vmem:[%s2 + $0x180] sm:$0xff]
        %v3524 = vld [vmem:[%s2 + $0x188] sm:$0xff]
        %v3525 = vld [vmem:[%s2 + $0x190] sm:$0xff]
        %v3526 = vld [vmem:[%s2 + $0x198] sm:$0xff]
        %v3527 = vld [vmem:[%s2 + $0x1a0] sm:$0xff]
        %v3528 = vld [vmem:[%s2 + $0x1a8] sm:$0xff]
        %v3529 = vld [vmem:[%s2 + $0x1b0] sm:$0xff]
        %v3530 = vld [vmem:[%s2 + $0x1b8] sm:$0xff]
        %v3531 = vld [vmem:[%s2 + $0x1c0] sm:$0xff]
        %v3532 = vld [vmem:[%s2 + $0x1c8] sm:$0xff]
        %v3533 = vld [vmem:[%s2 + $0x1d0] sm:$0xff]
        %v3534 = vld [vmem:[%s2 + $0x1d8] sm:$0xff]
        %v3535 = vld [vmem:[%s2 + $0x1e0] sm:$0xff]
        %v3536 = vld [vmem:[%s2 + $0x1e8] sm:$0xff]
        %v3537 = vld [vmem:[%s2 + $0x1f0] sm:$0xff]
        %v3538 = vld [vmem:[%s2 + $0x1f8] sm:$0xff]
        %v3539 = vld [vmem:[%s2 + $0x200] sm:$0xff]
        %v3540 = vld [vmem:[%s2 + $0x208] sm:$0xff]
        %v3541 = vld [vmem:[%s2 + $0x210] sm:$0xff]
        %v3542 = vld [vmem:[%s2 + $0x218] sm:$0xff]
        %v3543 = vld [vmem:[%s2 + $0x220] sm:$0xff]
        %v3544 = vld [vmem:[%s2 + $0x228] sm:$0xff]
        %v3545 = vld [vmem:[%s2 + $0x230] sm:$0xff]
        %v3546 = vld [vmem:[%s2 + $0x238] sm:$0xff]
        %v3547 = vld [vmem:[%s2 + $0x240] sm:$0xff]
        %v3548 = vld [vmem:[%s2 + $0x248] sm:$0xff]
        %v3549 = vld [vmem:[%s2 + $0x250] sm:$0xff]
        %v3550 = vld [vmem:[%s2 + $0x258] sm:$0xff]
        %v3551 = vld [vmem:[%s2 + $0x260] sm:$0xff]
        %v3552 = vld [vmem:[%s2 + $0x268] sm:$0xff]
        %v3553 = vld [vmem:[%s2 + $0x270] sm:$0xff]
        %v3554 = vld [vmem:[%s2 + $0x278] sm:$0xff]
        %v3555 = vld [vmem:[%s2 + $0x280] sm:$0xff]
        %v3556 = vld [vmem:[%s2 + $0x288] sm:$0xff]
        %v3557 = vld [vmem:[%s2 + $0x290] sm:$0xff]
        %v3558 = vld [vmem:[%s2 + $0x298] sm:$0xff]
        %v3559 = vld [vmem:[%s2 + $0x2a0] sm:$0xff]
        %v3560 = vld [vmem:[%s2 + $0x2a8] sm:$0xff]
        %v3561 = vld [vmem:[%s2 + $0x2b0] sm:$0xff]
        %v3562 = vld [vmem:[%s2 + $0x2b8] sm:$0xff]
        %v3563 = vld [vmem:[%s2 + $0x2c0] sm:$0xff]
        %v3564 = vld [vmem:[%s2 + $0x2c8] sm:$0xff]
        %v3565 = vld [vmem:[%s2 + $0x2d0] sm:$0xff]
        %v3566 = vld [vmem:[%s2 + $0x2d8] sm:$0xff]
        %v3567 = vld [vmem:[%s2 + $0x2e0] sm:$0xff]
        %v3568 = vld [vmem:[%s2 + $0x2e8] sm:$0xff]
        %v3569 = vld [vmem:[%s2 + $0x2f0] sm:$0xff]
        %v3570 = vld [vmem:[%s2 + $0x2f8] sm:$0xff]
        %v3571 = vld [vmem:[%s2 + $0x300] sm:$0xff]
        %v3572 = vld [vmem:[%s2 + $0x308] sm:$0xff]
        %v3573 = vld [vmem:[%s2 + $0x310] sm:$0xff]
        %v3574 = vld [vmem:[%s2 + $0x318] sm:$0xff]
        %v3575 = vld [vmem:[%s2 + $0x320] sm:$0xff]
        %v3576 = vld [vmem:[%s2 + $0x328] sm:$0xff]
        %v3577 = vld [vmem:[%s2 + $0x330] sm:$0xff]
        %v3578 = vld [vmem:[%s2 + $0x338] sm:$0xff]
        %v3579 = vld [vmem:[%s2 + $0x340] sm:$0xff]
        %v3580 = vld [vmem:[%s2 + $0x348] sm:$0xff]
        %v3581 = vld [vmem:[%s2 + $0x350] sm:$0xff]
        %v3582 = vld [vmem:[%s2 + $0x358] sm:$0xff]
        %v3583 = vld [vmem:[%s2 + $0x360] sm:$0xff]
        %v3584 = vld [vmem:[%s2 + $0x368] sm:$0xff]
        %v3585 = vld [vmem:[%s2 + $0x370] sm:$0xff]
        %v3586 = vld [vmem:[%s2 + $0x378] sm:$0xff]
        %v3587 = vld [vmem:[%s2 + $0x380] sm:$0xff]
        %v3588 = vld [vmem:[%s2 + $0x388] sm:$0xff]
        %v3589 = vld [vmem:[%s2 + $0x390] sm:$0xff]
        %v3590 = vld [vmem:[%s2 + $0x398] sm:$0xff]
        %v3591 = vld [vmem:[%s2 + $0x3a0] sm:$0xff]
        %v3592 = vld [vmem:[%s2 + $0x3a8] sm:$0xff]
        %v3593 = vld [vmem:[%s2 + $0x3b0] sm:$0xff]
        %v3594 = vld [vmem:[%s2 + $0x3b8] sm:$0xff]
        %v3595 = vld [vmem:[%s2 + $0x3c0] sm:$0xff]
        %v3596 = vld [vmem:[%s2 + $0x3c8] sm:$0xff]
        %v3597 = vld [vmem:[%s2 + $0x3d0] sm:$0xff]
        %v3598 = vld [vmem:[%s2 + $0x3d8] sm:$0xff]
        %v3599 = vld [vmem:[%s2 + $0x3e0] sm:$0xff]
        %v3600 = vld [vmem:[%s2 + $0x3e8] sm:$0xff]
        %v3601 = vld [vmem:[%s2 + $0x3f0] sm:$0xff]
        %v3602 = vld [vmem:[%s2 + $0x3f8] sm:$0xff]
        %v3603 = vld [vmem:[%s2 + $0x400] sm:$0xff]
        %v3604 = vld [vmem:[%s2 + $0x408] sm:$0xff]
        %v3605 = vld [vmem:[%s2 + $0x410] sm:$0xff]
        %v3606 = vld [vmem:[%s2 + $0x418] sm:$0xff]
        %v3607 = vld [vmem:[%s2 + $0x420] sm:$0xff]
        %v3608 = vld [vmem:[%s2 + $0x428] sm:$0xff]
        %v3609 = vld [vmem:[%s2 + $0x430] sm:$0xff]
        %v3610 = vld [vmem:[%s2 + $0x438] sm:$0xff]
        %v3611 = vld [vmem:[%s2 + $0x440] sm:$0xff]
        %v3612 = vld [vmem:[%s2 + $0x448] sm:$0xff]
        %v3613 = vld [vmem:[%s2 + $0x450] sm:$0xff]
        %v3614 = vld [vmem:[%s2 + $0x458] sm:$0xff]
        %v3615 = vld [vmem:[%s2 + $0x460] sm:$0xff]
        %v3616 = vld [vmem:[%s2 + $0x468] sm:$0xff]
        %v3617 = vld [vmem:[%s2 + $0x470] sm:$0xff]
        %v3618 = vld [vmem:[%s2 + $0x478] sm:$0xff]
        %v3619 = vld [vmem:[%s2 + $0x480] sm:$0xff]
        %v3620 = vld [vmem:[%s2 + $0x488] sm:$0xff]
        %v3621 = vld [vmem:[%s2 + $0x490] sm:$0xff]
        %v3622 = vld [vmem:[%s2 + $0x498] sm:$0xff]
        %v3623 = vld [vmem:[%s2 + $0x4a0] sm:$0xff]
        %v3624 = vld [vmem:[%s2 + $0x4a8] sm:$0xff]
        %v3625 = vld [vmem:[%s2 + $0x4b0] sm:$0xff]
        %v3626 = vld [vmem:[%s2 + $0x4b8] sm:$0xff]
        %v3627 = vld [vmem:[%s2 + $0x4c0] sm:$0xff]
        %v3628 = vld [vmem:[%s2 + $0x4c8] sm:$0xff]
        %v3629 = vld [vmem:[%s2 + $0x4d0] sm:$0xff]
        %v3630 = vld [vmem:[%s2 + $0x4d8] sm:$0xff]
        %v3631 = vld [vmem:[%s2 + $0x4e0] sm:$0xff]
        %v3632 = vld [vmem:[%s2 + $0x4e8] sm:$0xff]
        %v3633 = vld [vmem:[%s2 + $0x4f0] sm:$0xff]
        %v3634 = vld [vmem:[%s2 + $0x4f8] sm:$0xff]
        %v3635 = vld [vmem:[%s2 + $0x500] sm:$0xff]
        %v3636 = vld [vmem:[%s2 + $0x508] sm:$0xff]
        %v3637 = vld [vmem:[%s2 + $0x510] sm:$0xff]
        %v3638 = vld [vmem:[%s2 + $0x518] sm:$0xff]
        %v3639 = vld [vmem:[%s2 + $0x520] sm:$0xff]
        %v3640 = vld [vmem:[%s2 + $0x528] sm:$0xff]
        %v3641 = vld [vmem:[%s2 + $0x530] sm:$0xff]
        %v3642 = vld [vmem:[%s2 + $0x538] sm:$0xff]
        %v3643 = vld [vmem:[%s2 + $0x540] sm:$0xff]
        %v3644 = vld [vmem:[%s2 + $0x548] sm:$0xff]
        %v3645 = vld [vmem:[%s2 + $0x550] sm:$0xff]
        %v3646 = vld [vmem:[%s2 + $0x558] sm:$0xff]
        %v3647 = vld [vmem:[%s2 + $0x560] sm:$0xff]
        %v3648 = vld [vmem:[%s2 + $0x568] sm:$0xff]
        %v3649 = vld [vmem:[%s2 + $0x570] sm:$0xff]
        %v3650 = vld [vmem:[%s2 + $0x578] sm:$0xff]
        %v3651 = vld [vmem:[%s2 + $0x580] sm:$0xff]
        %v3652 = vld [vmem:[%s2 + $0x588] sm:$0xff]
        %v3653 = vld [vmem:[%s2 + $0x590] sm:$0xff]
        %v3654 = vld [vmem:[%s2 + $0x598] sm:$0xff]
        %v3655 = vld [vmem:[%s2 + $0x5a0] sm:$0xff]
        %v3656 = vld [vmem:[%s2 + $0x5a8] sm:$0xff]
        %v3657 = vld [vmem:[%s2 + $0x5b0] sm:$0xff]
        %v3658 = vld [vmem:[%s2 + $0x5b8] sm:$0xff]
        %v3659 = vld [vmem:[%s2 + $0x5c0] sm:$0xff]
        %v3660 = vld [vmem:[%s2 + $0x5c8] sm:$0xff]
        %v3661 = vld [vmem:[%s2 + $0x5d0] sm:$0xff]
        %v3662 = vld [vmem:[%s2 + $0x5d8] sm:$0xff]
        %v3663 = vld [vmem:[%s2 + $0x5e0] sm:$0xff]
        %v3664 = vld [vmem:[%s2 + $0x5e8] sm:$0xff]
        %v3665 = vld [vmem:[%s2 + $0x5f0] sm:$0xff]
        %v3666 = vld [vmem:[%s2 + $0x5f8] sm:$0xff]
        %3667 = vmatpush.msra.mxu0 %v3490
        %3668 = vmatpush.msra.mxu0 %v3489
        %3669 = vmatpush.msra.mxu0 %v3488
        %3670 = vmatpush.msra.mxu0 %v3487
        %3671 = vmatpush.msra.mxu0 %v3486
        %3672 = vmatpush.msra.mxu0 %v3485
        %3673 = vmatpush.msra.mxu0 %v3484
        %3674 = vmatpush.msra.mxu0 %v3483
        %3675 = vmatpush.msra.mxu0 %v3482
        %3676 = vmatpush.msra.mxu0 %v3481
        %3677 = vmatpush.msra.mxu0 %v3480
        %3678 = vmatpush.msra.mxu0 %v3479
        %3679 = vmatpush.msra.mxu0 %v3478
        %3680 = vmatpush.msra.mxu0 %v3477
        %3681 = vmatpush.msra.mxu0 %v3476
        %3682 = vmatpush.msra.mxu0 %v3475
        %3683 = vmatmul.f32.gmra.mxu0 %v3427
        %v3684 = vpop.f32.mrf.mxu0
        %v3685 = vadd.f32 0.0, %v3684
        %3686 = vmatmul.f32.gmra.mxu0 %v3439
        %v3687 = vpop.f32.mrf.mxu0
        %v3688 = vadd.f32 0.0, %v3687
        %3689 = vmatmul.f32.gmra.mxu0 %v3451
        %v3690 = vpop.f32.mrf.mxu0
        %v3691 = vadd.f32 0.0, %v3690
        %3692 = vmatmul.f32.gmra.mxu0 %v3463
        %v3693 = vpop.f32.mrf.mxu0
        %v3694 = vadd.f32 0.0, %v3693
        %3695 = vdwg.mxu0
        %3696 = vmatpush.msra.mxu0 %v3506
        %3697 = vmatpush.msra.mxu0 %v3505
        %3698 = vmatpush.msra.mxu0 %v3504
        %3699 = vmatpush.msra.mxu0 %v3503
        %3700 = vmatpush.msra.mxu0 %v3502
        %3701 = vmatpush.msra.mxu0 %v3501
        %3702 = vmatpush.msra.mxu0 %v3500
        %3703 = vmatpush.msra.mxu0 %v3499
        %3704 = vmatpush.msra.mxu0 %v3498
        %3705 = vmatpush.msra.mxu0 %v3497
        %3706 = vmatpush.msra.mxu0 %v3496
        %3707 = vmatpush.msra.mxu0 %v3495
        %3708 = vmatpush.msra.mxu0 %v3494
        %3709 = vmatpush.msra.mxu0 %v3493
        %3710 = vmatpush.msra.mxu0 %v3492
        %3711 = vmatpush.msra.mxu0 %v3491
        %3712 = vmatmul.f32.gmra.mxu0 %v3428
        %v3713 = vpop.f32.mrf.mxu0
        %v3714 = vadd.f32 %v3685, %v3713
        %3715 = vmatmul.f32.gmra.mxu0 %v3440
        %v3716 = vpop.f32.mrf.mxu0
        %v3717 = vadd.f32 %v3688, %v3716
        %3718 = vmatmul.f32.gmra.mxu0 %v3452
        %v3719 = vpop.f32.mrf.mxu0
        %v3720 = vadd.f32 %v3691, %v3719
        %3721 = vmatmul.f32.gmra.mxu0 %v3464
        %v3722 = vpop.f32.mrf.mxu0
        %v3723 = vadd.f32 %v3694, %v3722
        %3724 = vdwg.mxu0
        %3725 = vmatpush.msra.mxu0 %v3522
        %3726 = vmatpush.msra.mxu0 %v3521
        %3727 = vmatpush.msra.mxu0 %v3520
        %3728 = vmatpush.msra.mxu0 %v3519
        %3729 = vmatpush.msra.mxu0 %v3518
        %3730 = vmatpush.msra.mxu0 %v3517
        %3731 = vmatpush.msra.mxu0 %v3516
        %3732 = vmatpush.msra.mxu0 %v3515
        %3733 = vmatpush.msra.mxu0 %v3514
        %3734 = vmatpush.msra.mxu0 %v3513
        %3735 = vmatpush.msra.mxu0 %v3512
        %3736 = vmatpush.msra.mxu0 %v3511
        %3737 = vmatpush.msra.mxu0 %v3510
        %3738 = vmatpush.msra.mxu0 %v3509
        %3739 = vmatpush.msra.mxu0 %v3508
        %3740 = vmatpush.msra.mxu0 %v3507
        %3741 = vmatmul.f32.gmra.mxu0 %v3429
        %v3742 = vpop.f32.mrf.mxu0
        %v3743 = vadd.f32 %v3714, %v3742
        %3744 = vmatmul.f32.gmra.mxu0 %v3441
        %v3745 = vpop.f32.mrf.mxu0
        %v3746 = vadd.f32 %v3717, %v3745
        %3747 = vmatmul.f32.gmra.mxu0 %v3453
        %v3748 = vpop.f32.mrf.mxu0
        %v3749 = vadd.f32 %v3720, %v3748
        %3750 = vmatmul.f32.gmra.mxu0 %v3465
        %v3751 = vpop.f32.mrf.mxu0
        %v3752 = vadd.f32 %v3723, %v3751
        %3753 = vdwg.mxu0
        %3754 = vmatpush.msra.mxu0 %v3538
        %3755 = vmatpush.msra.mxu0 %v3537
        %3756 = vmatpush.msra.mxu0 %v3536
        %3757 = vmatpush.msra.mxu0 %v3535
        %3758 = vmatpush.msra.mxu0 %v3534
        %3759 = vmatpush.msra.mxu0 %v3533
        %3760 = vmatpush.msra.mxu0 %v3532
        %3761 = vmatpush.msra.mxu0 %v3531
        %3762 = vmatpush.msra.mxu0 %v3530
        %3763 = vmatpush.msra.mxu0 %v3529
        %3764 = vmatpush.msra.mxu0 %v3528
        %3765 = vmatpush.msra.mxu0 %v3527
        %3766 = vmatpush.msra.mxu0 %v3526
        %3767 = vmatpush.msra.mxu0 %v3525
        %3768 = vmatpush.msra.mxu0 %v3524
        %3769 = vmatpush.msra.mxu0 %v3523
        %3770 = vmatmul.f32.gmra.mxu0 %v3430
        %v3771 = vpop.f32.mrf.mxu0
        %v3772 = vadd.f32 %v3743, %v3771
        %3773 = vmatmul.f32.gmra.mxu0 %v3442
        %v3774 = vpop.f32.mrf.mxu0
        %v3775 = vadd.f32 %v3746, %v3774
        %3776 = vmatmul.f32.gmra.mxu0 %v3454
        %v3777 = vpop.f32.mrf.mxu0
        %v3778 = vadd.f32 %v3749, %v3777
        %3779 = vmatmul.f32.gmra.mxu0 %v3466
        %v3780 = vpop.f32.mrf.mxu0
        %v3781 = vadd.f32 %v3752, %v3780
        %3782 = vdwg.mxu0
        %3783 = vmatpush.msra.mxu0 %v3554
        %3784 = vmatpush.msra.mxu0 %v3553
        %3785 = vmatpush.msra.mxu0 %v3552
        %3786 = vmatpush.msra.mxu0 %v3551
        %3787 = vmatpush.msra.mxu0 %v3550
        %3788 = vmatpush.msra.mxu0 %v3549
        %3789 = vmatpush.msra.mxu0 %v3548
        %3790 = vmatpush.msra.mxu0 %v3547
        %3791 = vmatpush.msra.mxu0 %v3546
        %3792 = vmatpush.msra.mxu0 %v3545
        %3793 = vmatpush.msra.mxu0 %v3544
        %3794 = vmatpush.msra.mxu0 %v3543
        %3795 = vmatpush.msra.mxu0 %v3542
        %3796 = vmatpush.msra.mxu0 %v3541
        %3797 = vmatpush.msra.mxu0 %v3540
        %3798 = vmatpush.msra.mxu0 %v3539
        %3799 = vmatmul.f32.gmra.mxu0 %v3431
        %v3800 = vpop.f32.mrf.mxu0
        %v3801 = vadd.f32 %v3772, %v3800
        %3802 = vmatmul.f32.gmra.mxu0 %v3443
        %v3803 = vpop.f32.mrf.mxu0
        %v3804 = vadd.f32 %v3775, %v3803
        %3805 = vmatmul.f32.gmra.mxu0 %v3455
        %v3806 = vpop.f32.mrf.mxu0
        %v3807 = vadd.f32 %v3778, %v3806
        %3808 = vmatmul.f32.gmra.mxu0 %v3467
        %v3809 = vpop.f32.mrf.mxu0
        %v3810 = vadd.f32 %v3781, %v3809
        %3811 = vdwg.mxu0
        %3812 = vmatpush.msra.mxu0 %v3570
        %3813 = vmatpush.msra.mxu0 %v3569
        %3814 = vmatpush.msra.mxu0 %v3568
        %3815 = vmatpush.msra.mxu0 %v3567
        %3816 = vmatpush.msra.mxu0 %v3566
        %3817 = vmatpush.msra.mxu0 %v3565
        %3818 = vmatpush.msra.mxu0 %v3564
        %3819 = vmatpush.msra.mxu0 %v3563
        %3820 = vmatpush.msra.mxu0 %v3562
        %3821 = vmatpush.msra.mxu0 %v3561
        %3822 = vmatpush.msra.mxu0 %v3560
        %3823 = vmatpush.msra.mxu0 %v3559
        %3824 = vmatpush.msra.mxu0 %v3558
        %3825 = vmatpush.msra.mxu0 %v3557
        %3826 = vmatpush.msra.mxu0 %v3556
        %3827 = vmatpush.msra.mxu0 %v3555
        %3828 = vmatmul.f32.gmra.mxu0 %v3432
        %v3829 = vpop.f32.mrf.mxu0
        %v3830 = vadd.f32 %v3801, %v3829
        %3831 = vmatmul.f32.gmra.mxu0 %v3444
        %v3832 = vpop.f32.mrf.mxu0
        %v3833 = vadd.f32 %v3804, %v3832
        %3834 = vmatmul.f32.gmra.mxu0 %v3456
        %v3835 = vpop.f32.mrf.mxu0
        %v3836 = vadd.f32 %v3807, %v3835
        %3837 = vmatmul.f32.gmra.mxu0 %v3468
        %v3838 = vpop.f32.mrf.mxu0
        %v3839 = vadd.f32 %v3810, %v3838
        %3840 = vdwg.mxu0
        %3841 = vmatpush.msra.mxu0 %v3586
        %3842 = vmatpush.msra.mxu0 %v3585
        %3843 = vmatpush.msra.mxu0 %v3584
        %3844 = vmatpush.msra.mxu0 %v3583
        %3845 = vmatpush.msra.mxu0 %v3582
        %3846 = vmatpush.msra.mxu0 %v3581
        %3847 = vmatpush.msra.mxu0 %v3580
        %3848 = vmatpush.msra.mxu0 %v3579
        %3849 = vmatpush.msra.mxu0 %v3578
        %3850 = vmatpush.msra.mxu0 %v3577
        %3851 = vmatpush.msra.mxu0 %v3576
        %3852 = vmatpush.msra.mxu0 %v3575
        %3853 = vmatpush.msra.mxu0 %v3574
        %3854 = vmatpush.msra.mxu0 %v3573
        %3855 = vmatpush.msra.mxu0 %v3572
        %3856 = vmatpush.msra.mxu0 %v3571
        %3857 = vmatmul.f32.gmra.mxu0 %v3433
        %v3858 = vpop.f32.mrf.mxu0
        %v3859 = vadd.f32 %v3830, %v3858
        %3860 = vmatmul.f32.gmra.mxu0 %v3445
        %v3861 = vpop.f32.mrf.mxu0
        %v3862 = vadd.f32 %v3833, %v3861
        %3863 = vmatmul.f32.gmra.mxu0 %v3457
        %v3864 = vpop.f32.mrf.mxu0
        %v3865 = vadd.f32 %v3836, %v3864
        %3866 = vmatmul.f32.gmra.mxu0 %v3469
        %v3867 = vpop.f32.mrf.mxu0
        %v3868 = vadd.f32 %v3839, %v3867
        %3869 = vdwg.mxu0
        %3870 = vmatpush.msra.mxu0 %v3602
        %3871 = vmatpush.msra.mxu0 %v3601
        %3872 = vmatpush.msra.mxu0 %v3600
        %3873 = vmatpush.msra.mxu0 %v3599
        %3874 = vmatpush.msra.mxu0 %v3598
        %3875 = vmatpush.msra.mxu0 %v3597
        %3876 = vmatpush.msra.mxu0 %v3596
        %3877 = vmatpush.msra.mxu0 %v3595
        %3878 = vmatpush.msra.mxu0 %v3594
        %3879 = vmatpush.msra.mxu0 %v3593
        %3880 = vmatpush.msra.mxu0 %v3592
        %3881 = vmatpush.msra.mxu0 %v3591
        %3882 = vmatpush.msra.mxu0 %v3590
        %3883 = vmatpush.msra.mxu0 %v3589
        %3884 = vmatpush.msra.mxu0 %v3588
        %3885 = vmatpush.msra.mxu0 %v3587
        %3886 = vmatmul.f32.gmra.mxu0 %v3434
        %v3887 = vpop.f32.mrf.mxu0
        %v3888 = vadd.f32 %v3859, %v3887
        %3889 = vmatmul.f32.gmra.mxu0 %v3446
        %v3890 = vpop.f32.mrf.mxu0
        %v3891 = vadd.f32 %v3862, %v3890
        %3892 = vmatmul.f32.gmra.mxu0 %v3458
        %v3893 = vpop.f32.mrf.mxu0
        %v3894 = vadd.f32 %v3865, %v3893
        %3895 = vmatmul.f32.gmra.mxu0 %v3470
        %v3896 = vpop.f32.mrf.mxu0
        %v3897 = vadd.f32 %v3868, %v3896
        %3898 = vdwg.mxu0
        %3899 = vmatpush.msra.mxu0 %v3618
        %3900 = vmatpush.msra.mxu0 %v3617
        %3901 = vmatpush.msra.mxu0 %v3616
        %3902 = vmatpush.msra.mxu0 %v3615
        %3903 = vmatpush.msra.mxu0 %v3614
        %3904 = vmatpush.msra.mxu0 %v3613
        %3905 = vmatpush.msra.mxu0 %v3612
        %3906 = vmatpush.msra.mxu0 %v3611
        %3907 = vmatpush.msra.mxu0 %v3610
        %3908 = vmatpush.msra.mxu0 %v3609
        %3909 = vmatpush.msra.mxu0 %v3608
        %3910 = vmatpush.msra.mxu0 %v3607
        %3911 = vmatpush.msra.mxu0 %v3606
        %3912 = vmatpush.msra.mxu0 %v3605
        %3913 = vmatpush.msra.mxu0 %v3604
        %3914 = vmatpush.msra.mxu0 %v3603
        %3915 = vmatmul.f32.gmra.mxu0 %v3435
        %v3916 = vpop.f32.mrf.mxu0
        %v3917 = vadd.f32 %v3888, %v3916
        %3918 = vmatmul.f32.gmra.mxu0 %v3447
        %v3919 = vpop.f32.mrf.mxu0
        %v3920 = vadd.f32 %v3891, %v3919
        %3921 = vmatmul.f32.gmra.mxu0 %v3459
        %v3922 = vpop.f32.mrf.mxu0
        %v3923 = vadd.f32 %v3894, %v3922
        %3924 = vmatmul.f32.gmra.mxu0 %v3471
        %v3925 = vpop.f32.mrf.mxu0
        %v3926 = vadd.f32 %v3897, %v3925
        %3927 = vdwg.mxu0
        %3928 = vmatpush.msra.mxu0 %v3634
        %3929 = vmatpush.msra.mxu0 %v3633
        %3930 = vmatpush.msra.mxu0 %v3632
        %3931 = vmatpush.msra.mxu0 %v3631
        %3932 = vmatpush.msra.mxu0 %v3630
        %3933 = vmatpush.msra.mxu0 %v3629
        %3934 = vmatpush.msra.mxu0 %v3628
        %3935 = vmatpush.msra.mxu0 %v3627
        %3936 = vmatpush.msra.mxu0 %v3626
        %3937 = vmatpush.msra.mxu0 %v3625
        %3938 = vmatpush.msra.mxu0 %v3624
        %3939 = vmatpush.msra.mxu0 %v3623
        %3940 = vmatpush.msra.mxu0 %v3622
        %3941 = vmatpush.msra.mxu0 %v3621
        %3942 = vmatpush.msra.mxu0 %v3620
        %3943 = vmatpush.msra.mxu0 %v3619
        %3944 = vmatmul.f32.gmra.mxu0 %v3436
        %v3945 = vpop.f32.mrf.mxu0
        %v3946 = vadd.f32 %v3917, %v3945
        %3947 = vmatmul.f32.gmra.mxu0 %v3448
        %v3948 = vpop.f32.mrf.mxu0
        %v3949 = vadd.f32 %v3920, %v3948
        %3950 = vmatmul.f32.gmra.mxu0 %v3460
        %v3951 = vpop.f32.mrf.mxu0
        %v3952 = vadd.f32 %v3923, %v3951
        %3953 = vmatmul.f32.gmra.mxu0 %v3472
        %v3954 = vpop.f32.mrf.mxu0
        %v3955 = vadd.f32 %v3926, %v3954
        %3956 = vdwg.mxu0
        %3957 = vmatpush.msra.mxu0 %v3650
        %3958 = vmatpush.msra.mxu0 %v3649
        %3959 = vmatpush.msra.mxu0 %v3648
        %3960 = vmatpush.msra.mxu0 %v3647
        %3961 = vmatpush.msra.mxu0 %v3646
        %3962 = vmatpush.msra.mxu0 %v3645
        %3963 = vmatpush.msra.mxu0 %v3644
        %3964 = vmatpush.msra.mxu0 %v3643
        %3965 = vmatpush.msra.mxu0 %v3642
        %3966 = vmatpush.msra.mxu0 %v3641
        %3967 = vmatpush.msra.mxu0 %v3640
        %3968 = vmatpush.msra.mxu0 %v3639
        %3969 = vmatpush.msra.mxu0 %v3638
        %3970 = vmatpush.msra.mxu0 %v3637
        %3971 = vmatpush.msra.mxu0 %v3636
        %3972 = vmatpush.msra.mxu0 %v3635
        %3973 = vmatmul.f32.gmra.mxu0 %v3437
        %v3974 = vpop.f32.mrf.mxu0
        %v3975 = vadd.f32 %v3946, %v3974
        %3976 = vmatmul.f32.gmra.mxu0 %v3449
        %v3977 = vpop.f32.mrf.mxu0
        %v3978 = vadd.f32 %v3949, %v3977
        %3979 = vmatmul.f32.gmra.mxu0 %v3461
        %v3980 = vpop.f32.mrf.mxu0
        %v3981 = vadd.f32 %v3952, %v3980
        %3982 = vmatmul.f32.gmra.mxu0 %v3473
        %v3983 = vpop.f32.mrf.mxu0
        %v3984 = vadd.f32 %v3955, %v3983
        %3985 = vdwg.mxu0
        %3986 = vmatpush.msra.mxu0 %v3666
        %3987 = vmatpush.msra.mxu0 %v3665
        %3988 = vmatpush.msra.mxu0 %v3664
        %3989 = vmatpush.msra.mxu0 %v3663
        %3990 = vmatpush.msra.mxu0 %v3662
        %3991 = vmatpush.msra.mxu0 %v3661
        %3992 = vmatpush.msra.mxu0 %v3660
        %3993 = vmatpush.msra.mxu0 %v3659
        %3994 = vmatpush.msra.mxu0 %v3658
        %3995 = vmatpush.msra.mxu0 %v3657
        %3996 = vmatpush.msra.mxu0 %v3656
        %3997 = vmatpush.msra.mxu0 %v3655
        %3998 = vmatpush.msra.mxu0 %v3654
        %3999 = vmatpush.msra.mxu0 %v3653
        %4000 = vmatpush.msra.mxu0 %v3652
        %4001 = vmatpush.msra.mxu0 %v3651
        %4002 = vmatmul.f32.gmra.mxu0 %v3438
        %v4003 = vpop.f32.mrf.mxu0
        %v4004 = vadd.f32 %v3975, %v4003
        %4005 = vmatmul.f32.gmra.mxu0 %v3450
        %v4006 = vpop.f32.mrf.mxu0
        %v4007 = vadd.f32 %v3978, %v4006
        %4008 = vmatmul.f32.gmra.mxu0 %v3462
        %v4009 = vpop.f32.mrf.mxu0
        %v4010 = vadd.f32 %v3981, %v4009
        %4011 = vmatmul.f32.gmra.mxu0 %v3474
        %v4012 = vpop.f32.mrf.mxu0
        %v4013 = vadd.f32 %v3984, %v4012
        %4014 = vdwg.mxu0
        %v4015 = vperm.slane %v3425, 0
        %v4016 = vmul.f32 %v4004, %v4015
        %v4017 = vmul.f32 %v4007, %v4015
        %v4018 = vmul.f32 %v4010, %v4015
        %v4019 = vmul.f32 %v4013, %v4015
        %v4020 = vperm.slane %v3426, 0
        %v4021 = vadd.f32 %v4016, %v4020
        %v4022 = vadd.f32 %v4017, %v4020
        %v4023 = vadd.f32 %v4018, %v4020
        %v4024 = vadd.f32 %v4019, %v4020
        %v4025 = vmax.f32 %v4021, 0.0
        %v4026 = vmax.f32 %v4022, 0.0
        %v4027 = vmax.f32 %v4023, 0.0
        %v4028 = vmax.f32 %v4024, 0.0
        %4029 = vst [vmem:[#allocation3] sm:$0xff] %v4025
        %4030 = vst [vmem:[#allocation3 + $0x40] sm:$0xff] %v4026
        %4031 = vst [vmem:[#allocation3 + $0x80] sm:$0xff] %v4027
        %4032 = vst [vmem:[#allocation3 + $0xc0] sm:$0xff] %v4028
        %v4033 = vld [vmem:[#allocation2 + $0x30] sm:$0xff]
        %v4034 = vld [vmem:[#allocation2 + $0x38] sm:$0xff]
        %v4035 = vld [vmem:[#allocation2 + $0x40] sm:$0xff]
        %v4036 = vld [vmem:[#allocation2 + $0x48] sm:$0xff]
        %v4037 = vld [vmem:[#allocation2 + $0x50] sm:$0xff]
        %v4038 = vld [vmem:[#allocation2 + $0x58] sm:$0xff]
        %v4039 = vld [vmem:[#allocation2 + $0x60] sm:$0xff]
        %v4040 = vld [vmem:[#allocation2 + $0x68] sm:$0xff]
        %v4041 = vld [vmem:[#allocation2 + $0x70] sm:$0xff]
        %v4042 = vld [vmem:[#allocation2 + $0x78] sm:$0xff]
        %v4043 = vld [vmem:[#allocation2 + $0x80] sm:$0xff]
        %v4044 = vld [vmem:[#allocation2 + $0x88] sm:$0xff]
        %v4045 = vld [vmem:[#allocation2 + $0x1e0] sm:$0xff]
        %v4046 = vld [vmem:[#allocation2 + $0x1e8] sm:$0xff]
        %v4047 = vld [vmem:[#allocation2 + $0x1f0] sm:$0xff]
        %v4048 = vld [vmem:[#allocation2 + $0x1f8] sm:$0xff]
        %v4049 = vld [vmem:[#allocation2 + $0x200] sm:$0xff]
        %v4050 = vld [vmem:[#allocation2 + $0x208] sm:$0xff]
        %v4051 = vld [vmem:[#allocation2 + $0x210] sm:$0xff]
        %v4052 = vld [vmem:[#allocation2 + $0x218] sm:$0xff]
        %v4053 = vld [vmem:[#allocation2 + $0x220] sm:$0xff]
        %v4054 = vld [vmem:[#allocation2 + $0x228] sm:$0xff]
        %v4055 = vld [vmem:[#allocation2 + $0x230] sm:$0xff]
        %v4056 = vld [vmem:[#allocation2 + $0x238] sm:$0xff]
        %v4057 = vld [vmem:[#allocation2 + $0x390] sm:$0xff]
        %v4058 = vld [vmem:[#allocation2 + $0x398] sm:$0xff]
        %v4059 = vld [vmem:[#allocation2 + $0x3a0] sm:$0xff]
        %v4060 = vld [vmem:[#allocation2 + $0x3a8] sm:$0xff]
        %v4061 = vld [vmem:[#allocation2 + $0x3b0] sm:$0xff]
        %v4062 = vld [vmem:[#allocation2 + $0x3b8] sm:$0xff]
        %v4063 = vld [vmem:[#allocation2 + $0x3c0] sm:$0xff]
        %v4064 = vld [vmem:[#allocation2 + $0x3c8] sm:$0xff]
        %v4065 = vld [vmem:[#allocation2 + $0x3d0] sm:$0xff]
        %v4066 = vld [vmem:[#allocation2 + $0x3d8] sm:$0xff]
        %v4067 = vld [vmem:[#allocation2 + $0x3e0] sm:$0xff]
        %v4068 = vld [vmem:[#allocation2 + $0x3e8] sm:$0xff]
        %v4069 = vld [vmem:[#allocation2 + $0x540] sm:$0xff]
        %v4070 = vld [vmem:[#allocation2 + $0x548] sm:$0xff]
        %v4071 = vld [vmem:[#allocation2 + $0x550] sm:$0xff]
        %v4072 = vld [vmem:[#allocation2 + $0x558] sm:$0xff]
        %v4073 = vld [vmem:[#allocation2 + $0x560] sm:$0xff]
        %v4074 = vld [vmem:[#allocation2 + $0x568] sm:$0xff]
        %v4075 = vld [vmem:[#allocation2 + $0x570] sm:$0xff]
        %v4076 = vld [vmem:[#allocation2 + $0x578] sm:$0xff]
        %v4077 = vld [vmem:[#allocation2 + $0x580] sm:$0xff]
        %v4078 = vld [vmem:[#allocation2 + $0x588] sm:$0xff]
        %v4079 = vld [vmem:[#allocation2 + $0x590] sm:$0xff]
        %v4080 = vld [vmem:[#allocation2 + $0x598] sm:$0xff]
        %v4081 = vld [vmem:[%s2] sm:$0xff]
        %v4082 = vld [vmem:[%s2 + $0x8] sm:$0xff]
        %v4083 = vld [vmem:[%s2 + $0x10] sm:$0xff]
        %v4084 = vld [vmem:[%s2 + $0x18] sm:$0xff]
        %v4085 = vld [vmem:[%s2 + $0x20] sm:$0xff]
        %v4086 = vld [vmem:[%s2 + $0x28] sm:$0xff]
        %v4087 = vld [vmem:[%s2 + $0x30] sm:$0xff]
        %v4088 = vld [vmem:[%s2 + $0x38] sm:$0xff]
        %v4089 = vld [vmem:[%s2 + $0x40] sm:$0xff]
        %v4090 = vld [vmem:[%s2 + $0x48] sm:$0xff]
        %v4091 = vld [vmem:[%s2 + $0x50] sm:$0xff]
        %v4092 = vld [vmem:[%s2 + $0x58] sm:$0xff]
        %v4093 = vld [vmem:[%s2 + $0x60] sm:$0xff]
        %v4094 = vld [vmem:[%s2 + $0x68] sm:$0xff]
        %v4095 = vld [vmem:[%s2 + $0x70] sm:$0xff]
        %v4096 = vld [vmem:[%s2 + $0x78] sm:$0xff]
        %v4097 = vld [vmem:[%s2 + $0x80] sm:$0xff]
        %v4098 = vld [vmem:[%s2 + $0x88] sm:$0xff]
        %v4099 = vld [vmem:[%s2 + $0x90] sm:$0xff]
        %v4100 = vld [vmem:[%s2 + $0x98] sm:$0xff]
        %v4101 = vld [vmem:[%s2 + $0xa0] sm:$0xff]
        %v4102 = vld [vmem:[%s2 + $0xa8] sm:$0xff]
        %v4103 = vld [vmem:[%s2 + $0xb0] sm:$0xff]
        %v4104 = vld [vmem:[%s2 + $0xb8] sm:$0xff]
        %v4105 = vld [vmem:[%s2 + $0xc0] sm:$0xff]
        %v4106 = vld [vmem:[%s2 + $0xc8] sm:$0xff]
        %v4107 = vld [vmem:[%s2 + $0xd0] sm:$0xff]
        %v4108 = vld [vmem:[%s2 + $0xd8] sm:$0xff]
        %v4109 = vld [vmem:[%s2 + $0xe0] sm:$0xff]
        %v4110 = vld [vmem:[%s2 + $0xe8] sm:$0xff]
        %v4111 = vld [vmem:[%s2 + $0xf0] sm:$0xff]
        %v4112 = vld [vmem:[%s2 + $0xf8] sm:$0xff]
        %v4113 = vld [vmem:[%s2 + $0x100] sm:$0xff]
        %v4114 = vld [vmem:[%s2 + $0x108] sm:$0xff]
        %v4115 = vld [vmem:[%s2 + $0x110] sm:$0xff]
        %v4116 = vld [vmem:[%s2 + $0x118] sm:$0xff]
        %v4117 = vld [vmem:[%s2 + $0x120] sm:$0xff]
        %v4118 = vld [vmem:[%s2 + $0x128] sm:$0xff]
        %v4119 = vld [vmem:[%s2 + $0x130] sm:$0xff]
        %v4120 = vld [vmem:[%s2 + $0x138] sm:$0xff]
        %v4121 = vld [vmem:[%s2 + $0x140] sm:$0xff]
        %v4122 = vld [vmem:[%s2 + $0x148] sm:$0xff]
        %v4123 = vld [vmem:[%s2 + $0x150] sm:$0xff]
        %v4124 = vld [vmem:[%s2 + $0x158] sm:$0xff]
        %v4125 = vld [vmem:[%s2 + $0x160] sm:$0xff]
        %v4126 = vld [vmem:[%s2 + $0x168] sm:$0xff]
        %v4127 = vld [vmem:[%s2 + $0x170] sm:$0xff]
        %v4128 = vld [vmem:[%s2 + $0x178] sm:$0xff]
        %v4129 = vld [vmem:[%s2 + $0x180] sm:$0xff]
        %v4130 = vld [vmem:[%s2 + $0x188] sm:$0xff]
        %v4131 = vld [vmem:[%s2 + $0x190] sm:$0xff]
        %v4132 = vld [vmem:[%s2 + $0x198] sm:$0xff]
        %v4133 = vld [vmem:[%s2 + $0x1a0] sm:$0xff]
        %v4134 = vld [vmem:[%s2 + $0x1a8] sm:$0xff]
        %v4135 = vld [vmem:[%s2 + $0x1b0] sm:$0xff]
        %v4136 = vld [vmem:[%s2 + $0x1b8] sm:$0xff]
        %v4137 = vld [vmem:[%s2 + $0x1c0] sm:$0xff]
        %v4138 = vld [vmem:[%s2 + $0x1c8] sm:$0xff]
        %v4139 = vld [vmem:[%s2 + $0x1d0] sm:$0xff]
        %v4140 = vld [vmem:[%s2 + $0x1d8] sm:$0xff]
        %v4141 = vld [vmem:[%s2 + $0x1e0] sm:$0xff]
        %v4142 = vld [vmem:[%s2 + $0x1e8] sm:$0xff]
        %v4143 = vld [vmem:[%s2 + $0x1f0] sm:$0xff]
        %v4144 = vld [vmem:[%s2 + $0x1f8] sm:$0xff]
        %v4145 = vld [vmem:[%s2 + $0x200] sm:$0xff]
        %v4146 = vld [vmem:[%s2 + $0x208] sm:$0xff]
        %v4147 = vld [vmem:[%s2 + $0x210] sm:$0xff]
        %v4148 = vld [vmem:[%s2 + $0x218] sm:$0xff]
        %v4149 = vld [vmem:[%s2 + $0x220] sm:$0xff]
        %v4150 = vld [vmem:[%s2 + $0x228] sm:$0xff]
        %v4151 = vld [vmem:[%s2 + $0x230] sm:$0xff]
        %v4152 = vld [vmem:[%s2 + $0x238] sm:$0xff]
        %v4153 = vld [vmem:[%s2 + $0x240] sm:$0xff]
        %v4154 = vld [vmem:[%s2 + $0x248] sm:$0xff]
        %v4155 = vld [vmem:[%s2 + $0x250] sm:$0xff]
        %v4156 = vld [vmem:[%s2 + $0x258] sm:$0xff]
        %v4157 = vld [vmem:[%s2 + $0x260] sm:$0xff]
        %v4158 = vld [vmem:[%s2 + $0x268] sm:$0xff]
        %v4159 = vld [vmem:[%s2 + $0x270] sm:$0xff]
        %v4160 = vld [vmem:[%s2 + $0x278] sm:$0xff]
        %v4161 = vld [vmem:[%s2 + $0x280] sm:$0xff]
        %v4162 = vld [vmem:[%s2 + $0x288] sm:$0xff]
        %v4163 = vld [vmem:[%s2 + $0x290] sm:$0xff]
        %v4164 = vld [vmem:[%s2 + $0x298] sm:$0xff]
        %v4165 = vld [vmem:[%s2 + $0x2a0] sm:$0xff]
        %v4166 = vld [vmem:[%s2 + $0x2a8] sm:$0xff]
        %v4167 = vld [vmem:[%s2 + $0x2b0] sm:$0xff]
        %v4168 = vld [vmem:[%s2 + $0x2b8] sm:$0xff]
        %v4169 = vld [vmem:[%s2 + $0x2c0] sm:$0xff]
        %v4170 = vld [vmem:[%s2 + $0x2c8] sm:$0xff]
        %v4171 = vld [vmem:[%s2 + $0x2d0] sm:$0xff]
        %v4172 = vld [vmem:[%s2 + $0x2d8] sm:$0xff]
        %v4173 = vld [vmem:[%s2 + $0x2e0] sm:$0xff]
        %v4174 = vld [vmem:[%s2 + $0x2e8] sm:$0xff]
        %v4175 = vld [vmem:[%s2 + $0x2f0] sm:$0xff]
        %v4176 = vld [vmem:[%s2 + $0x2f8] sm:$0xff]
        %v4177 = vld [vmem:[%s2 + $0x300] sm:$0xff]
        %v4178 = vld [vmem:[%s2 + $0x308] sm:$0xff]
        %v4179 = vld [vmem:[%s2 + $0x310] sm:$0xff]
        %v4180 = vld [vmem:[%s2 + $0x318] sm:$0xff]
        %v4181 = vld [vmem:[%s2 + $0x320] sm:$0xff]
        %v4182 = vld [vmem:[%s2 + $0x328] sm:$0xff]
        %v4183 = vld [vmem:[%s2 + $0x330] sm:$0xff]
        %v4184 = vld [vmem:[%s2 + $0x338] sm:$0xff]
        %v4185 = vld [vmem:[%s2 + $0x340] sm:$0xff]
        %v4186 = vld [vmem:[%s2 + $0x348] sm:$0xff]
        %v4187 = vld [vmem:[%s2 + $0x350] sm:$0xff]
        %v4188 = vld [vmem:[%s2 + $0x358] sm:$0xff]
        %v4189 = vld [vmem:[%s2 + $0x360] sm:$0xff]
        %v4190 = vld [vmem:[%s2 + $0x368] sm:$0xff]
        %v4191 = vld [vmem:[%s2 + $0x370] sm:$0xff]
        %v4192 = vld [vmem:[%s2 + $0x378] sm:$0xff]
        %v4193 = vld [vmem:[%s2 + $0x380] sm:$0xff]
        %v4194 = vld [vmem:[%s2 + $0x388] sm:$0xff]
        %v4195 = vld [vmem:[%s2 + $0x390] sm:$0xff]
        %v4196 = vld [vmem:[%s2 + $0x398] sm:$0xff]
        %v4197 = vld [vmem:[%s2 + $0x3a0] sm:$0xff]
        %v4198 = vld [vmem:[%s2 + $0x3a8] sm:$0xff]
        %v4199 = vld [vmem:[%s2 + $0x3b0] sm:$0xff]
        %v4200 = vld [vmem:[%s2 + $0x3b8] sm:$0xff]
        %v4201 = vld [vmem:[%s2 + $0x3c0] sm:$0xff]
        %v4202 = vld [vmem:[%s2 + $0x3c8] sm:$0xff]
        %v4203 = vld [vmem:[%s2 + $0x3d0] sm:$0xff]
        %v4204 = vld [vmem:[%s2 + $0x3d8] sm:$0xff]
        %v4205 = vld [vmem:[%s2 + $0x3e0] sm:$0xff]
        %v4206 = vld [vmem:[%s2 + $0x3e8] sm:$0xff]
        %v4207 = vld [vmem:[%s2 + $0x3f0] sm:$0xff]
        %v4208 = vld [vmem:[%s2 + $0x3f8] sm:$0xff]
        %v4209 = vld [vmem:[%s2 + $0x400] sm:$0xff]
        %v4210 = vld [vmem:[%s2 + $0x408] sm:$0xff]
        %v4211 = vld [vmem:[%s2 + $0x410] sm:$0xff]
        %v4212 = vld [vmem:[%s2 + $0x418] sm:$0xff]
        %v4213 = vld [vmem:[%s2 + $0x420] sm:$0xff]
        %v4214 = vld [vmem:[%s2 + $0x428] sm:$0xff]
        %v4215 = vld [vmem:[%s2 + $0x430] sm:$0xff]
        %v4216 = vld [vmem:[%s2 + $0x438] sm:$0xff]
        %v4217 = vld [vmem:[%s2 + $0x440] sm:$0xff]
        %v4218 = vld [vmem:[%s2 + $0x448] sm:$0xff]
        %v4219 = vld [vmem:[%s2 + $0x450] sm:$0xff]
        %v4220 = vld [vmem:[%s2 + $0x458] sm:$0xff]
        %v4221 = vld [vmem:[%s2 + $0x460] sm:$0xff]
        %v4222 = vld [vmem:[%s2 + $0x468] sm:$0xff]
        %v4223 = vld [vmem:[%s2 + $0x470] sm:$0xff]
        %v4224 = vld [vmem:[%s2 + $0x478] sm:$0xff]
        %v4225 = vld [vmem:[%s2 + $0x480] sm:$0xff]
        %v4226 = vld [vmem:[%s2 + $0x488] sm:$0xff]
        %v4227 = vld [vmem:[%s2 + $0x490] sm:$0xff]
        %v4228 = vld [vmem:[%s2 + $0x498] sm:$0xff]
        %v4229 = vld [vmem:[%s2 + $0x4a0] sm:$0xff]
        %v4230 = vld [vmem:[%s2 + $0x4a8] sm:$0xff]
        %v4231 = vld [vmem:[%s2 + $0x4b0] sm:$0xff]
        %v4232 = vld [vmem:[%s2 + $0x4b8] sm:$0xff]
        %v4233 = vld [vmem:[%s2 + $0x4c0] sm:$0xff]
        %v4234 = vld [vmem:[%s2 + $0x4c8] sm:$0xff]
        %v4235 = vld [vmem:[%s2 + $0x4d0] sm:$0xff]
        %v4236 = vld [vmem:[%s2 + $0x4d8] sm:$0xff]
        %v4237 = vld [vmem:[%s2 + $0x4e0] sm:$0xff]
        %v4238 = vld [vmem:[%s2 + $0x4e8] sm:$0xff]
        %v4239 = vld [vmem:[%s2 + $0x4f0] sm:$0xff]
        %v4240 = vld [vmem:[%s2 + $0x4f8] sm:$0xff]
        %v4241 = vld [vmem:[%s2 + $0x500] sm:$0xff]
        %v4242 = vld [vmem:[%s2 + $0x508] sm:$0xff]
        %v4243 = vld [vmem:[%s2 + $0x510] sm:$0xff]
        %v4244 = vld [vmem:[%s2 + $0x518] sm:$0xff]
        %v4245 = vld [vmem:[%s2 + $0x520] sm:$0xff]
        %v4246 = vld [vmem:[%s2 + $0x528] sm:$0xff]
        %v4247 = vld [vmem:[%s2 + $0x530] sm:$0xff]
        %v4248 = vld [vmem:[%s2 + $0x538] sm:$0xff]
        %v4249 = vld [vmem:[%s2 + $0x540] sm:$0xff]
        %v4250 = vld [vmem:[%s2 + $0x548] sm:$0xff]
        %v4251 = vld [vmem:[%s2 + $0x550] sm:$0xff]
        %v4252 = vld [vmem:[%s2 + $0x558] sm:$0xff]
        %v4253 = vld [vmem:[%s2 + $0x560] sm:$0xff]
        %v4254 = vld [vmem:[%s2 + $0x568] sm:$0xff]
        %v4255 = vld [vmem:[%s2 + $0x570] sm:$0xff]
        %v4256 = vld [vmem:[%s2 + $0x578] sm:$0xff]
        %v4257 = vld [vmem:[%s2 + $0x580] sm:$0xff]
        %v4258 = vld [vmem:[%s2 + $0x588] sm:$0xff]
        %v4259 = vld [vmem:[%s2 + $0x590] sm:$0xff]
        %v4260 = vld [vmem:[%s2 + $0x598] sm:$0xff]
        %v4261 = vld [vmem:[%s2 + $0x5a0] sm:$0xff]
        %v4262 = vld [vmem:[%s2 + $0x5a8] sm:$0xff]
        %v4263 = vld [vmem:[%s2 + $0x5b0] sm:$0xff]
        %v4264 = vld [vmem:[%s2 + $0x5b8] sm:$0xff]
        %v4265 = vld [vmem:[%s2 + $0x5c0] sm:$0xff]
        %v4266 = vld [vmem:[%s2 + $0x5c8] sm:$0xff]
        %v4267 = vld [vmem:[%s2 + $0x5d0] sm:$0xff]
        %v4268 = vld [vmem:[%s2 + $0x5d8] sm:$0xff]
        %v4269 = vld [vmem:[%s2 + $0x5e0] sm:$0xff]
        %v4270 = vld [vmem:[%s2 + $0x5e8] sm:$0xff]
        %v4271 = vld [vmem:[%s2 + $0x5f0] sm:$0xff]
        %v4272 = vld [vmem:[%s2 + $0x5f8] sm:$0xff]
        %4273 = vmatpush.msra.mxu0 %v4096
        %4274 = vmatpush.msra.mxu0 %v4095
        %4275 = vmatpush.msra.mxu0 %v4094
        %4276 = vmatpush.msra.mxu0 %v4093
        %4277 = vmatpush.msra.mxu0 %v4092
        %4278 = vmatpush.msra.mxu0 %v4091
        %4279 = vmatpush.msra.mxu0 %v4090
        %4280 = vmatpush.msra.mxu0 %v4089
        %4281 = vmatpush.msra.mxu0 %v4088
        %4282 = vmatpush.msra.mxu0 %v4087
        %4283 = vmatpush.msra.mxu0 %v4086
        %4284 = vmatpush.msra.mxu0 %v4085
        %4285 = vmatpush.msra.mxu0 %v4084
        %4286 = vmatpush.msra.mxu0 %v4083
        %4287 = vmatpush.msra.mxu0 %v4082
        %4288 = vmatpush.msra.mxu0 %v4081
        %4289 = vmatmul.f32.gmra.mxu0 %v4033
        %v4290 = vpop.f32.mrf.mxu0
        %v4291 = vadd.f32 0.0, %v4290
        %4292 = vmatmul.f32.gmra.mxu0 %v4045
        %v4293 = vpop.f32.mrf.mxu0
        %v4294 = vadd.f32 0.0, %v4293
        %4295 = vmatmul.f32.gmra.mxu0 %v4057
        %v4296 = vpop.f32.mrf.mxu0
        %v4297 = vadd.f32 0.0, %v4296
        %4298 = vmatmul.f32.gmra.mxu0 %v4069
        %v4299 = vpop.f32.mrf.mxu0
        %v4300 = vadd.f32 0.0, %v4299
        %4301 = vdwg.mxu0
        %4302 = vmatpush.msra.mxu0 %v4112
        %4303 = vmatpush.msra.mxu0 %v4111
        %4304 = vmatpush.msra.mxu0 %v4110
        %4305 = vmatpush.msra.mxu0 %v4109
        %4306 = vmatpush.msra.mxu0 %v4108
        %4307 = vmatpush.msra.mxu0 %v4107
        %4308 = vmatpush.msra.mxu0 %v4106
        %4309 = vmatpush.msra.mxu0 %v4105
        %4310 = vmatpush.msra.mxu0 %v4104
        %4311 = vmatpush.msra.mxu0 %v4103
        %4312 = vmatpush.msra.mxu0 %v4102
        %4313 = vmatpush.msra.mxu0 %v4101
        %4314 = vmatpush.msra.mxu0 %v4100
        %4315 = vmatpush.msra.mxu0 %v4099
        %4316 = vmatpush.msra.mxu0 %v4098
        %4317 = vmatpush.msra.mxu0 %v4097
        %4318 = vmatmul.f32.gmra.mxu0 %v4034
        %v4319 = vpop.f32.mrf.mxu0
        %v4320 = vadd.f32 %v4291, %v4319
        %4321 = vmatmul.f32.gmra.mxu0 %v4046
        %v4322 = vpop.f32.mrf.mxu0
        %v4323 = vadd.f32 %v4294, %v4322
        %4324 = vmatmul.f32.gmra.mxu0 %v4058
        %v4325 = vpop.f32.mrf.mxu0
        %v4326 = vadd.f32 %v4297, %v4325
        %4327 = vmatmul.f32.gmra.mxu0 %v4070
        %v4328 = vpop.f32.mrf.mxu0
        %v4329 = vadd.f32 %v4300, %v4328
        %4330 = vdwg.mxu0
        %4331 = vmatpush.msra.mxu0 %v4128
        %4332 = vmatpush.msra.mxu0 %v4127
        %4333 = vmatpush.msra.mxu0 %v4126
        %4334 = vmatpush.msra.mxu0 %v4125
        %4335 = vmatpush.msra.mxu0 %v4124
        %4336 = vmatpush.msra.mxu0 %v4123
        %4337 = vmatpush.msra.mxu0 %v4122
        %4338 = vmatpush.msra.mxu0 %v4121
        %4339 = vmatpush.msra.mxu0 %v4120
        %4340 = vmatpush.msra.mxu0 %v4119
        %4341 = vmatpush.msra.mxu0 %v4118
        %4342 = vmatpush.msra.mxu0 %v4117
        %4343 = vmatpush.msra.mxu0 %v4116
        %4344 = vmatpush.msra.mxu0 %v4115
        %4345 = vmatpush.msra.mxu0 %v4114
        %4346 = vmatpush.msra.mxu0 %v4113
        %4347 = vmatmul.f32.gmra.mxu0 %v4035
        %v4348 = vpop.f32.mrf.mxu0
        %v4349 = vadd.f32 %v4320, %v4348
        %4350 = vmatmul.f32.gmra.mxu0 %v4047
        %v4351 = vpop.f32.mrf.mxu0
        %v4352 = vadd.f32 %v4323, %v4351
        %4353 = vmatmul.f32.gmra.mxu0 %v4059
        %v4354 = vpop.f32.mrf.mxu0
        %v4355 = vadd.f32 %v4326, %v4354
        %4356 = vmatmul.f32.gmra.mxu0 %v4071
        %v4357 = vpop.f32.mrf.mxu0
        %v4358 = vadd.f32 %v4329, %v4357
        %4359 = vdwg.mxu0
        %4360 = vmatpush.msra.mxu0 %v4144
        %4361 = vmatpush.msra.mxu0 %v4143
        %4362 = vmatpush.msra.mxu0 %v4142
        %4363 = vmatpush.msra.mxu0 %v4141
        %4364 = vmatpush.msra.mxu0 %v4140
        %4365 = vmatpush.msra.mxu0 %v4139
        %4366 = vmatpush.msra.mxu0 %v4138
        %4367 = vmatpush.msra.mxu0 %v4137
        %4368 = vmatpush.msra.mxu0 %v4136
        %4369 = vmatpush.msra.mxu0 %v4135
        %4370 = vmatpush.msra.mxu0 %v4134
        %4371 = vmatpush.msra.mxu0 %v4133
        %4372 = vmatpush.msra.mxu0 %v4132
        %4373 = vmatpush.msra.mxu0 %v4131
        %4374 = vmatpush.msra.mxu0 %v4130
        %4375 = vmatpush.msra.mxu0 %v4129
        %4376 = vmatmul.f32.gmra.mxu0 %v4036
        %v4377 = vpop.f32.mrf.mxu0
        %v4378 = vadd.f32 %v4349, %v4377
        %4379 = vmatmul.f32.gmra.mxu0 %v4048
        %v4380 = vpop.f32.mrf.mxu0
        %v4381 = vadd.f32 %v4352, %v4380
        %4382 = vmatmul.f32.gmra.mxu0 %v4060
        %v4383 = vpop.f32.mrf.mxu0
        %v4384 = vadd.f32 %v4355, %v4383
        %4385 = vmatmul.f32.gmra.mxu0 %v4072
        %v4386 = vpop.f32.mrf.mxu0
        %v4387 = vadd.f32 %v4358, %v4386
        %4388 = vdwg.mxu0
        %4389 = vmatpush.msra.mxu0 %v4160
        %4390 = vmatpush.msra.mxu0 %v4159
        %4391 = vmatpush.msra.mxu0 %v4158
        %4392 = vmatpush.msra.mxu0 %v4157
        %4393 = vmatpush.msra.mxu0 %v4156
        %4394 = vmatpush.msra.mxu0 %v4155
        %4395 = vmatpush.msra.mxu0 %v4154
        %4396 = vmatpush.msra.mxu0 %v4153
        %4397 = vmatpush.msra.mxu0 %v4152
        %4398 = vmatpush.msra.mxu0 %v4151
        %4399 = vmatpush.msra.mxu0 %v4150
        %4400 = vmatpush.msra.mxu0 %v4149
        %4401 = vmatpush.msra.mxu0 %v4148
        %4402 = vmatpush.msra.mxu0 %v4147
        %4403 = vmatpush.msra.mxu0 %v4146
        %4404 = vmatpush.msra.mxu0 %v4145
        %4405 = vmatmul.f32.gmra.mxu0 %v4037
        %v4406 = vpop.f32.mrf.mxu0
        %v4407 = vadd.f32 %v4378, %v4406
        %4408 = vmatmul.f32.gmra.mxu0 %v4049
        %v4409 = vpop.f32.mrf.mxu0
        %v4410 = vadd.f32 %v4381, %v4409
        %4411 = vmatmul.f32.gmra.mxu0 %v4061
        %v4412 = vpop.f32.mrf.mxu0
        %v4413 = vadd.f32 %v4384, %v4412
        %4414 = vmatmul.f32.gmra.mxu0 %v4073
        %v4415 = vpop.f32.mrf.mxu0
        %v4416 = vadd.f32 %v4387, %v4415
        %4417 = vdwg.mxu0
        %4418 = vmatpush.msra.mxu0 %v4176
        %4419 = vmatpush.msra.mxu0 %v4175
        %4420 = vmatpush.msra.mxu0 %v4174
        %4421 = vmatpush.msra.mxu0 %v4173
        %4422 = vmatpush.msra.mxu0 %v4172
        %4423 = vmatpush.msra.mxu0 %v4171
        %4424 = vmatpush.msra.mxu0 %v4170
        %4425 = vmatpush.msra.mxu0 %v4169
        %4426 = vmatpush.msra.mxu0 %v4168
        %4427 = vmatpush.msra.mxu0 %v4167
        %4428 = vmatpush.msra.mxu0 %v4166
        %4429 = vmatpush.msra.mxu0 %v4165
        %4430 = vmatpush.msra.mxu0 %v4164
        %4431 = vmatpush.msra.mxu0 %v4163
        %4432 = vmatpush.msra.mxu0 %v4162
        %4433 = vmatpush.msra.mxu0 %v4161
        %4434 = vmatmul.f32.gmra.mxu0 %v4038
        %v4435 = vpop.f32.mrf.mxu0
        %v4436 = vadd.f32 %v4407, %v4435
        %4437 = vmatmul.f32.gmra.mxu0 %v4050
        %v4438 = vpop.f32.mrf.mxu0
        %v4439 = vadd.f32 %v4410, %v4438
        %4440 = vmatmul.f32.gmra.mxu0 %v4062
        %v4441 = vpop.f32.mrf.mxu0
        %v4442 = vadd.f32 %v4413, %v4441
        %4443 = vmatmul.f32.gmra.mxu0 %v4074
        %v4444 = vpop.f32.mrf.mxu0
        %v4445 = vadd.f32 %v4416, %v4444
        %4446 = vdwg.mxu0
        %4447 = vmatpush.msra.mxu0 %v4192
        %4448 = vmatpush.msra.mxu0 %v4191
        %4449 = vmatpush.msra.mxu0 %v4190
        %4450 = vmatpush.msra.mxu0 %v4189
        %4451 = vmatpush.msra.mxu0 %v4188
        %4452 = vmatpush.msra.mxu0 %v4187
        %4453 = vmatpush.msra.mxu0 %v4186
        %4454 = vmatpush.msra.mxu0 %v4185
        %4455 = vmatpush.msra.mxu0 %v4184
        %4456 = vmatpush.msra.mxu0 %v4183
        %4457 = vmatpush.msra.mxu0 %v4182
        %4458 = vmatpush.msra.mxu0 %v4181
        %4459 = vmatpush.msra.mxu0 %v4180
        %4460 = vmatpush.msra.mxu0 %v4179
        %4461 = vmatpush.msra.mxu0 %v4178
        %4462 = vmatpush.msra.mxu0 %v4177
        %4463 = vmatmul.f32.gmra.mxu0 %v4039
        %v4464 = vpop.f32.mrf.mxu0
        %v4465 = vadd.f32 %v4436, %v4464
        %4466 = vmatmul.f32.gmra.mxu0 %v4051
        %v4467 = vpop.f32.mrf.mxu0
        %v4468 = vadd.f32 %v4439, %v4467
        %4469 = vmatmul.f32.gmra.mxu0 %v4063
        %v4470 = vpop.f32.mrf.mxu0
        %v4471 = vadd.f32 %v4442, %v4470
        %4472 = vmatmul.f32.gmra.mxu0 %v4075
        %v4473 = vpop.f32.mrf.mxu0
        %v4474 = vadd.f32 %v4445, %v4473
        %4475 = vdwg.mxu0
        %4476 = vmatpush.msra.mxu0 %v4208
        %4477 = vmatpush.msra.mxu0 %v4207
        %4478 = vmatpush.msra.mxu0 %v4206
        %4479 = vmatpush.msra.mxu0 %v4205
        %4480 = vmatpush.msra.mxu0 %v4204
        %4481 = vmatpush.msra.mxu0 %v4203
        %4482 = vmatpush.msra.mxu0 %v4202
        %4483 = vmatpush.msra.mxu0 %v4201
        %4484 = vmatpush.msra.mxu0 %v4200
        %4485 = vmatpush.msra.mxu0 %v4199
        %4486 = vmatpush.msra.mxu0 %v4198
        %4487 = vmatpush.msra.mxu0 %v4197
        %4488 = vmatpush.msra.mxu0 %v4196
        %4489 = vmatpush.msra.mxu0 %v4195
        %4490 = vmatpush.msra.mxu0 %v4194
        %4491 = vmatpush.msra.mxu0 %v4193
        %4492 = vmatmul.f32.gmra.mxu0 %v4040
        %v4493 = vpop.f32.mrf.mxu0
        %v4494 = vadd.f32 %v4465, %v4493
        %4495 = vmatmul.f32.gmra.mxu0 %v4052
        %v4496 = vpop.f32.mrf.mxu0
        %v4497 = vadd.f32 %v4468, %v4496
        %4498 = vmatmul.f32.gmra.mxu0 %v4064
        %v4499 = vpop.f32.mrf.mxu0
        %v4500 = vadd.f32 %v4471, %v4499
        %4501 = vmatmul.f32.gmra.mxu0 %v4076
        %v4502 = vpop.f32.mrf.mxu0
        %v4503 = vadd.f32 %v4474, %v4502
        %4504 = vdwg.mxu0
        %4505 = vmatpush.msra.mxu0 %v4224
        %4506 = vmatpush.msra.mxu0 %v4223
        %4507 = vmatpush.msra.mxu0 %v4222
        %4508 = vmatpush.msra.mxu0 %v4221
        %4509 = vmatpush.msra.mxu0 %v4220
        %4510 = vmatpush.msra.mxu0 %v4219
        %4511 = vmatpush.msra.mxu0 %v4218
        %4512 = vmatpush.msra.mxu0 %v4217
        %4513 = vmatpush.msra.mxu0 %v4216
        %4514 = vmatpush.msra.mxu0 %v4215
        %4515 = vmatpush.msra.mxu0 %v4214
        %4516 = vmatpush.msra.mxu0 %v4213
        %4517 = vmatpush.msra.mxu0 %v4212
        %4518 = vmatpush.msra.mxu0 %v4211
        %4519 = vmatpush.msra.mxu0 %v4210
        %4520 = vmatpush.msra.mxu0 %v4209
        %4521 = vmatmul.f32.gmra.mxu0 %v4041
        %v4522 = vpop.f32.mrf.mxu0
        %v4523 = vadd.f32 %v4494, %v4522
        %4524 = vmatmul.f32.gmra.mxu0 %v4053
        %v4525 = vpop.f32.mrf.mxu0
        %v4526 = vadd.f32 %v4497, %v4525
        %4527 = vmatmul.f32.gmra.mxu0 %v4065
        %v4528 = vpop.f32.mrf.mxu0
        %v4529 = vadd.f32 %v4500, %v4528
        %4530 = vmatmul.f32.gmra.mxu0 %v4077
        %v4531 = vpop.f32.mrf.mxu0
        %v4532 = vadd.f32 %v4503, %v4531
        %4533 = vdwg.mxu0
        %4534 = vmatpush.msra.mxu0 %v4240
        %4535 = vmatpush.msra.mxu0 %v4239
        %4536 = vmatpush.msra.mxu0 %v4238
        %4537 = vmatpush.msra.mxu0 %v4237
        %4538 = vmatpush.msra.mxu0 %v4236
        %4539 = vmatpush.msra.mxu0 %v4235
        %4540 = vmatpush.msra.mxu0 %v4234
        %4541 = vmatpush.msra.mxu0 %v4233
        %4542 = vmatpush.msra.mxu0 %v4232
        %4543 = vmatpush.msra.mxu0 %v4231
        %4544 = vmatpush.msra.mxu0 %v4230
        %4545 = vmatpush.msra.mxu0 %v4229
        %4546 = vmatpush.msra.mxu0 %v4228
        %4547 = vmatpush.msra.mxu0 %v4227
        %4548 = vmatpush.msra.mxu0 %v4226
        %4549 = vmatpush.msra.mxu0 %v4225
        %4550 = vmatmul.f32.gmra.mxu0 %v4042
        %v4551 = vpop.f32.mrf.mxu0
        %v4552 = vadd.f32 %v4523, %v4551
        %4553 = vmatmul.f32.gmra.mxu0 %v4054
        %v4554 = vpop.f32.mrf.mxu0
        %v4555 = vadd.f32 %v4526, %v4554
        %4556 = vmatmul.f32.gmra.mxu0 %v4066
        %v4557 = vpop.f32.mrf.mxu0
        %v4558 = vadd.f32 %v4529, %v4557
        %4559 = vmatmul.f32.gmra.mxu0 %v4078
        %v4560 = vpop.f32.mrf.mxu0
        %v4561 = vadd.f32 %v4532, %v4560
        %4562 = vdwg.mxu0
        %4563 = vmatpush.msra.mxu0 %v4256
        %4564 = vmatpush.msra.mxu0 %v4255
        %4565 = vmatpush.msra.mxu0 %v4254
        %4566 = vmatpush.msra.mxu0 %v4253
        %4567 = vmatpush.msra.mxu0 %v4252
        %4568 = vmatpush.msra.mxu0 %v4251
        %4569 = vmatpush.msra.mxu0 %v4250
        %4570 = vmatpush.msra.mxu0 %v4249
        %4571 = vmatpush.msra.mxu0 %v4248
        %4572 = vmatpush.msra.mxu0 %v4247
        %4573 = vmatpush.msra.mxu0 %v4246
        %4574 = vmatpush.msra.mxu0 %v4245
        %4575 = vmatpush.msra.mxu0 %v4244
        %4576 = vmatpush.msra.mxu0 %v4243
        %4577 = vmatpush.msra.mxu0 %v4242
        %4578 = vmatpush.msra.mxu0 %v4241
        %4579 = vmatmul.f32.gmra.mxu0 %v4043
        %v4580 = vpop.f32.mrf.mxu0
        %v4581 = vadd.f32 %v4552, %v4580
        %4582 = vmatmul.f32.gmra.mxu0 %v4055
        %v4583 = vpop.f32.mrf.mxu0
        %v4584 = vadd.f32 %v4555, %v4583
        %4585 = vmatmul.f32.gmra.mxu0 %v4067
        %v4586 = vpop.f32.mrf.mxu0
        %v4587 = vadd.f32 %v4558, %v4586
        %4588 = vmatmul.f32.gmra.mxu0 %v4079
        %v4589 = vpop.f32.mrf.mxu0
        %v4590 = vadd.f32 %v4561, %v4589
        %4591 = vdwg.mxu0
        %4592 = vmatpush.msra.mxu0 %v4272
        %4593 = vmatpush.msra.mxu0 %v4271
        %4594 = vmatpush.msra.mxu0 %v4270
        %4595 = vmatpush.msra.mxu0 %v4269
        %4596 = vmatpush.msra.mxu0 %v4268
        %4597 = vmatpush.msra.mxu0 %v4267
        %4598 = vmatpush.msra.mxu0 %v4266
        %4599 = vmatpush.msra.mxu0 %v4265
        %4600 = vmatpush.msra.mxu0 %v4264
        %4601 = vmatpush.msra.mxu0 %v4263
        %4602 = vmatpush.msra.mxu0 %v4262
        %4603 = vmatpush.msra.mxu0 %v4261
        %4604 = vmatpush.msra.mxu0 %v4260
        %4605 = vmatpush.msra.mxu0 %v4259
        %4606 = vmatpush.msra.mxu0 %v4258
        %4607 = vmatpush.msra.mxu0 %v4257
        %4608 = vmatmul.f32.gmra.mxu0 %v4044
        %v4609 = vpop.f32.mrf.mxu0
        %v4610 = vadd.f32 %v4581, %v4609
        %4611 = vmatmul.f32.gmra.mxu0 %v4056
        %v4612 = vpop.f32.mrf.mxu0
        %v4613 = vadd.f32 %v4584, %v4612
        %4614 = vmatmul.f32.gmra.mxu0 %v4068
        %v4615 = vpop.f32.mrf.mxu0
        %v4616 = vadd.f32 %v4587, %v4615
        %4617 = vmatmul.f32.gmra.mxu0 %v4080
        %v4618 = vpop.f32.mrf.mxu0
        %v4619 = vadd.f32 %v4590, %v4618
        %4620 = vdwg.mxu0
        %v4621 = vmul.f32 %v4610, %v4015
        %v4622 = vmul.f32 %v4613, %v4015
        %v4623 = vmul.f32 %v4616, %v4015
        %v4624 = vmul.f32 %v4619, %v4015
        %v4625 = vadd.f32 %v4621, %v4020
        %v4626 = vadd.f32 %v4622, %v4020
        %v4627 = vadd.f32 %v4623, %v4020
        %v4628 = vadd.f32 %v4624, %v4020
        %v4629 = vmax.f32 %v4625, 0.0
        %v4630 = vmax.f32 %v4626, 0.0
        %v4631 = vmax.f32 %v4627, 0.0
        %v4632 = vmax.f32 %v4628, 0.0
        %4633 = vst [vmem:[#allocation3 + $0x8] sm:$0xff] %v4629
        %4634 = vst [vmem:[#allocation3 + $0x48] sm:$0xff] %v4630
        %4635 = vst [vmem:[#allocation3 + $0x88] sm:$0xff] %v4631
        %4636 = vst [vmem:[#allocation3 + $0xc8] sm:$0xff] %v4632
        %v4637 = vld [vmem:[#allocation2 + $0x60] sm:$0xff]
        %v4638 = vld [vmem:[#allocation2 + $0x68] sm:$0xff]
        %v4639 = vld [vmem:[#allocation2 + $0x70] sm:$0xff]
        %v4640 = vld [vmem:[#allocation2 + $0x78] sm:$0xff]
        %v4641 = vld [vmem:[#allocation2 + $0x80] sm:$0xff]
        %v4642 = vld [vmem:[#allocation2 + $0x88] sm:$0xff]
        %v4643 = vld [vmem:[#allocation2 + $0x90] sm:$0xff]
        %v4644 = vld [vmem:[#allocation2 + $0x98] sm:$0xff]
        %v4645 = vld [vmem:[#allocation2 + $0xa0] sm:$0xff]
        %v4646 = vld [vmem:[#allocation2 + $0xa8] sm:$0xff]
        %v4647 = vld [vmem:[#allocation2 + $0xb0] sm:$0xff]
        %v4648 = vld [vmem:[#allocation2 + $0xb8] sm:$0xff]
        %v4649 = vld [vmem:[#allocation2 + $0x210] sm:$0xff]
        %v4650 = vld [vmem:[#allocation2 + $0x218] sm:$0xff]
        %v4651 = vld [vmem:[#allocation2 + $0x220] sm:$0xff]
        %v4652 = vld [vmem:[#allocation2 + $0x228] sm:$0xff]
        %v4653 = vld [vmem:[#allocation2 + $0x230] sm:$0xff]
        %v4654 = vld [vmem:[#allocation2 + $0x238] sm:$0xff]
        %v4655 = vld [vmem:[#allocation2 + $0x240] sm:$0xff]
        %v4656 = vld [vmem:[#allocation2 + $0x248] sm:$0xff]
        %v4657 = vld [vmem:[#allocation2 + $0x250] sm:$0xff]
        %v4658 = vld [vmem:[#allocation2 + $0x258] sm:$0xff]
        %v4659 = vld [vmem:[#allocation2 + $0x260] sm:$0xff]
        %v4660 = vld [vmem:[#allocation2 + $0x268] sm:$0xff]
        %v4661 = vld [vmem:[#allocation2 + $0x3c0] sm:$0xff]
        %v4662 = vld [vmem:[#allocation2 + $0x3c8] sm:$0xff]
        %v4663 = vld [vmem:[#allocation2 + $0x3d0] sm:$0xff]
        %v4664 = vld [vmem:[#allocation2 + $0x3d8] sm:$0xff]
        %v4665 = vld [vmem:[#allocation2 + $0x3e0] sm:$0xff]
        %v4666 = vld [vmem:[#allocation2 + $0x3e8] sm:$0xff]
        %v4667 = vld [vmem:[#allocation2 + $0x3f0] sm:$0xff]
        %v4668 = vld [vmem:[#allocation2 + $0x3f8] sm:$0xff]
        %v4669 = vld [vmem:[#allocation2 + $0x400] sm:$0xff]
        %v4670 = vld [vmem:[#allocation2 + $0x408] sm:$0xff]
        %v4671 = vld [vmem:[#allocation2 + $0x410] sm:$0xff]
        %v4672 = vld [vmem:[#allocation2 + $0x418] sm:$0xff]
        %v4673 = vld [vmem:[#allocation2 + $0x570] sm:$0xff]
        %v4674 = vld [vmem:[#allocation2 + $0x578] sm:$0xff]
        %v4675 = vld [vmem:[#allocation2 + $0x580] sm:$0xff]
        %v4676 = vld [vmem:[#allocation2 + $0x588] sm:$0xff]
        %v4677 = vld [vmem:[#allocation2 + $0x590] sm:$0xff]
        %v4678 = vld [vmem:[#allocation2 + $0x598] sm:$0xff]
        %v4679 = vld [vmem:[#allocation2 + $0x5a0] sm:$0xff]
        %v4680 = vld [vmem:[#allocation2 + $0x5a8] sm:$0xff]
        %v4681 = vld [vmem:[#allocation2 + $0x5b0] sm:$0xff]
        %v4682 = vld [vmem:[#allocation2 + $0x5b8] sm:$0xff]
        %v4683 = vld [vmem:[#allocation2 + $0x5c0] sm:$0xff]
        %v4684 = vld [vmem:[#allocation2 + $0x5c8] sm:$0xff]
        %v4685 = vld [vmem:[%s2] sm:$0xff]
        %v4686 = vld [vmem:[%s2 + $0x8] sm:$0xff]
        %v4687 = vld [vmem:[%s2 + $0x10] sm:$0xff]
        %v4688 = vld [vmem:[%s2 + $0x18] sm:$0xff]
        %v4689 = vld [vmem:[%s2 + $0x20] sm:$0xff]
        %v4690 = vld [vmem:[%s2 + $0x28] sm:$0xff]
        %v4691 = vld [vmem:[%s2 + $0x30] sm:$0xff]
        %v4692 = vld [vmem:[%s2 + $0x38] sm:$0xff]
        %v4693 = vld [vmem:[%s2 + $0x40] sm:$0xff]
        %v4694 = vld [vmem:[%s2 + $0x48] sm:$0xff]
        %v4695 = vld [vmem:[%s2 + $0x50] sm:$0xff]
        %v4696 = vld [vmem:[%s2 + $0x58] sm:$0xff]
        %v4697 = vld [vmem:[%s2 + $0x60] sm:$0xff]
        %v4698 = vld [vmem:[%s2 + $0x68] sm:$0xff]
        %v4699 = vld [vmem:[%s2 + $0x70] sm:$0xff]
        %v4700 = vld [vmem:[%s2 + $0x78] sm:$0xff]
        %v4701 = vld [vmem:[%s2 + $0x80] sm:$0xff]
        %v4702 = vld [vmem:[%s2 + $0x88] sm:$0xff]
        %v4703 = vld [vmem:[%s2 + $0x90] sm:$0xff]
        %v4704 = vld [vmem:[%s2 + $0x98] sm:$0xff]
        %v4705 = vld [vmem:[%s2 + $0xa0] sm:$0xff]
        %v4706 = vld [vmem:[%s2 + $0xa8] sm:$0xff]
        %v4707 = vld [vmem:[%s2 + $0xb0] sm:$0xff]
        %v4708 = vld [vmem:[%s2 + $0xb8] sm:$0xff]
        %v4709 = vld [vmem:[%s2 + $0xc0] sm:$0xff]
        %v4710 = vld [vmem:[%s2 + $0xc8] sm:$0xff]
        %v4711 = vld [vmem:[%s2 + $0xd0] sm:$0xff]
        %v4712 = vld [vmem:[%s2 + $0xd8] sm:$0xff]
        %v4713 = vld [vmem:[%s2 + $0xe0] sm:$0xff]
        %v4714 = vld [vmem:[%s2 + $0xe8] sm:$0xff]
        %v4715 = vld [vmem:[%s2 + $0xf0] sm:$0xff]
        %v4716 = vld [vmem:[%s2 + $0xf8] sm:$0xff]
        %v4717 = vld [vmem:[%s2 + $0x100] sm:$0xff]
        %v4718 = vld [vmem:[%s2 + $0x108] sm:$0xff]
        %v4719 = vld [vmem:[%s2 + $0x110] sm:$0xff]
        %v4720 = vld [vmem:[%s2 + $0x118] sm:$0xff]
        %v4721 = vld [vmem:[%s2 + $0x120] sm:$0xff]
        %v4722 = vld [vmem:[%s2 + $0x128] sm:$0xff]
        %v4723 = vld [vmem:[%s2 + $0x130] sm:$0xff]
        %v4724 = vld [vmem:[%s2 + $0x138] sm:$0xff]
        %v4725 = vld [vmem:[%s2 + $0x140] sm:$0xff]
        %v4726 = vld [vmem:[%s2 + $0x148] sm:$0xff]
        %v4727 = vld [vmem:[%s2 + $0x150] sm:$0xff]
        %v4728 = vld [vmem:[%s2 + $0x158] sm:$0xff]
        %v4729 = vld [vmem:[%s2 + $0x160] sm:$0xff]
        %v4730 = vld [vmem:[%s2 + $0x168] sm:$0xff]
        %v4731 = vld [vmem:[%s2 + $0x170] sm:$0xff]
        %v4732 = vld [vmem:[%s2 + $0x178] sm:$0xff]
        %v4733 = vld [vmem:[%s2 + $0x180] sm:$0xff]
        %v4734 = vld [vmem:[%s2 + $0x188] sm:$0xff]
        %v4735 = vld [vmem:[%s2 + $0x190] sm:$0xff]
        %v4736 = vld [vmem:[%s2 + $0x198] sm:$0xff]
        %v4737 = vld [vmem:[%s2 + $0x1a0] sm:$0xff]
        %v4738 = vld [vmem:[%s2 + $0x1a8] sm:$0xff]
        %v4739 = vld [vmem:[%s2 + $0x1b0] sm:$0xff]
        %v4740 = vld [vmem:[%s2 + $0x1b8] sm:$0xff]
        %v4741 = vld [vmem:[%s2 + $0x1c0] sm:$0xff]
        %v4742 = vld [vmem:[%s2 + $0x1c8] sm:$0xff]
        %v4743 = vld [vmem:[%s2 + $0x1d0] sm:$0xff]
        %v4744 = vld [vmem:[%s2 + $0x1d8] sm:$0xff]
        %v4745 = vld [vmem:[%s2 + $0x1e0] sm:$0xff]
        %v4746 = vld [vmem:[%s2 + $0x1e8] sm:$0xff]
        %v4747 = vld [vmem:[%s2 + $0x1f0] sm:$0xff]
        %v4748 = vld [vmem:[%s2 + $0x1f8] sm:$0xff]
        %v4749 = vld [vmem:[%s2 + $0x200] sm:$0xff]
        %v4750 = vld [vmem:[%s2 + $0x208] sm:$0xff]
        %v4751 = vld [vmem:[%s2 + $0x210] sm:$0xff]
        %v4752 = vld [vmem:[%s2 + $0x218] sm:$0xff]
        %v4753 = vld [vmem:[%s2 + $0x220] sm:$0xff]
        %v4754 = vld [vmem:[%s2 + $0x228] sm:$0xff]
        %v4755 = vld [vmem:[%s2 + $0x230] sm:$0xff]
        %v4756 = vld [vmem:[%s2 + $0x238] sm:$0xff]
        %v4757 = vld [vmem:[%s2 + $0x240] sm:$0xff]
        %v4758 = vld [vmem:[%s2 + $0x248] sm:$0xff]
        %v4759 = vld [vmem:[%s2 + $0x250] sm:$0xff]
        %v4760 = vld [vmem:[%s2 + $0x258] sm:$0xff]
        %v4761 = vld [vmem:[%s2 + $0x260] sm:$0xff]
        %v4762 = vld [vmem:[%s2 + $0x268] sm:$0xff]
        %v4763 = vld [vmem:[%s2 + $0x270] sm:$0xff]
        %v4764 = vld [vmem:[%s2 + $0x278] sm:$0xff]
        %v4765 = vld [vmem:[%s2 + $0x280] sm:$0xff]
        %v4766 = vld [vmem:[%s2 + $0x288] sm:$0xff]
        %v4767 = vld [vmem:[%s2 + $0x290] sm:$0xff]
        %v4768 = vld [vmem:[%s2 + $0x298] sm:$0xff]
        %v4769 = vld [vmem:[%s2 + $0x2a0] sm:$0xff]
        %v4770 = vld [vmem:[%s2 + $0x2a8] sm:$0xff]
        %v4771 = vld [vmem:[%s2 + $0x2b0] sm:$0xff]
        %v4772 = vld [vmem:[%s2 + $0x2b8] sm:$0xff]
        %v4773 = vld [vmem:[%s2 + $0x2c0] sm:$0xff]
        %v4774 = vld [vmem:[%s2 + $0x2c8] sm:$0xff]
        %v4775 = vld [vmem:[%s2 + $0x2d0] sm:$0xff]
        %v4776 = vld [vmem:[%s2 + $0x2d8] sm:$0xff]
        %v4777 = vld [vmem:[%s2 + $0x2e0] sm:$0xff]
        %v4778 = vld [vmem:[%s2 + $0x2e8] sm:$0xff]
        %v4779 = vld [vmem:[%s2 + $0x2f0] sm:$0xff]
        %v4780 = vld [vmem:[%s2 + $0x2f8] sm:$0xff]
        %v4781 = vld [vmem:[%s2 + $0x300] sm:$0xff]
        %v4782 = vld [vmem:[%s2 + $0x308] sm:$0xff]
        %v4783 = vld [vmem:[%s2 + $0x310] sm:$0xff]
        %v4784 = vld [vmem:[%s2 + $0x318] sm:$0xff]
        %v4785 = vld [vmem:[%s2 + $0x320] sm:$0xff]
        %v4786 = vld [vmem:[%s2 + $0x328] sm:$0xff]
        %v4787 = vld [vmem:[%s2 + $0x330] sm:$0xff]
        %v4788 = vld [vmem:[%s2 + $0x338] sm:$0xff]
        %v4789 = vld [vmem:[%s2 + $0x340] sm:$0xff]
        %v4790 = vld [vmem:[%s2 + $0x348] sm:$0xff]
        %v4791 = vld [vmem:[%s2 + $0x350] sm:$0xff]
        %v4792 = vld [vmem:[%s2 + $0x358] sm:$0xff]
        %v4793 = vld [vmem:[%s2 + $0x360] sm:$0xff]
        %v4794 = vld [vmem:[%s2 + $0x368] sm:$0xff]
        %v4795 = vld [vmem:[%s2 + $0x370] sm:$0xff]
        %v4796 = vld [vmem:[%s2 + $0x378] sm:$0xff]
        %v4797 = vld [vmem:[%s2 + $0x380] sm:$0xff]
        %v4798 = vld [vmem:[%s2 + $0x388] sm:$0xff]
        %v4799 = vld [vmem:[%s2 + $0x390] sm:$0xff]
        %v4800 = vld [vmem:[%s2 + $0x398] sm:$0xff]
        %v4801 = vld [vmem:[%s2 + $0x3a0] sm:$0xff]
        %v4802 = vld [vmem:[%s2 + $0x3a8] sm:$0xff]
        %v4803 = vld [vmem:[%s2 + $0x3b0] sm:$0xff]
        %v4804 = vld [vmem:[%s2 + $0x3b8] sm:$0xff]
        %v4805 = vld [vmem:[%s2 + $0x3c0] sm:$0xff]
        %v4806 = vld [vmem:[%s2 + $0x3c8] sm:$0xff]
        %v4807 = vld [vmem:[%s2 + $0x3d0] sm:$0xff]
        %v4808 = vld [vmem:[%s2 + $0x3d8] sm:$0xff]
        %v4809 = vld [vmem:[%s2 + $0x3e0] sm:$0xff]
        %v4810 = vld [vmem:[%s2 + $0x3e8] sm:$0xff]
        %v4811 = vld [vmem:[%s2 + $0x3f0] sm:$0xff]
        %v4812 = vld [vmem:[%s2 + $0x3f8] sm:$0xff]
        %v4813 = vld [vmem:[%s2 + $0x400] sm:$0xff]
        %v4814 = vld [vmem:[%s2 + $0x408] sm:$0xff]
        %v4815 = vld [vmem:[%s2 + $0x410] sm:$0xff]
        %v4816 = vld [vmem:[%s2 + $0x418] sm:$0xff]
        %v4817 = vld [vmem:[%s2 + $0x420] sm:$0xff]
        %v4818 = vld [vmem:[%s2 + $0x428] sm:$0xff]
        %v4819 = vld [vmem:[%s2 + $0x430] sm:$0xff]
        %v4820 = vld [vmem:[%s2 + $0x438] sm:$0xff]
        %v4821 = vld [vmem:[%s2 + $0x440] sm:$0xff]
        %v4822 = vld [vmem:[%s2 + $0x448] sm:$0xff]
        %v4823 = vld [vmem:[%s2 + $0x450] sm:$0xff]
        %v4824 = vld [vmem:[%s2 + $0x458] sm:$0xff]
        %v4825 = vld [vmem:[%s2 + $0x460] sm:$0xff]
        %v4826 = vld [vmem:[%s2 + $0x468] sm:$0xff]
        %v4827 = vld [vmem:[%s2 + $0x470] sm:$0xff]
        %v4828 = vld [vmem:[%s2 + $0x478] sm:$0xff]
        %v4829 = vld [vmem:[%s2 + $0x480] sm:$0xff]
        %v4830 = vld [vmem:[%s2 + $0x488] sm:$0xff]
        %v4831 = vld [vmem:[%s2 + $0x490] sm:$0xff]
        %v4832 = vld [vmem:[%s2 + $0x498] sm:$0xff]
        %v4833 = vld [vmem:[%s2 + $0x4a0] sm:$0xff]
        %v4834 = vld [vmem:[%s2 + $0x4a8] sm:$0xff]
        %v4835 = vld [vmem:[%s2 + $0x4b0] sm:$0xff]
        %v4836 = vld [vmem:[%s2 + $0x4b8] sm:$0xff]
        %v4837 = vld [vmem:[%s2 + $0x4c0] sm:$0xff]
        %v4838 = vld [vmem:[%s2 + $0x4c8] sm:$0xff]
        %v4839 = vld [vmem:[%s2 + $0x4d0] sm:$0xff]
        %v4840 = vld [vmem:[%s2 + $0x4d8] sm:$0xff]
        %v4841 = vld [vmem:[%s2 + $0x4e0] sm:$0xff]
        %v4842 = vld [vmem:[%s2 + $0x4e8] sm:$0xff]
        %v4843 = vld [vmem:[%s2 + $0x4f0] sm:$0xff]
        %v4844 = vld [vmem:[%s2 + $0x4f8] sm:$0xff]
        %v4845 = vld [vmem:[%s2 + $0x500] sm:$0xff]
        %v4846 = vld [vmem:[%s2 + $0x508] sm:$0xff]
        %v4847 = vld [vmem:[%s2 + $0x510] sm:$0xff]
        %v4848 = vld [vmem:[%s2 + $0x518] sm:$0xff]
        %v4849 = vld [vmem:[%s2 + $0x520] sm:$0xff]
        %v4850 = vld [vmem:[%s2 + $0x528] sm:$0xff]
        %v4851 = vld [vmem:[%s2 + $0x530] sm:$0xff]
        %v4852 = vld [vmem:[%s2 + $0x538] sm:$0xff]
        %v4853 = vld [vmem:[%s2 + $0x540] sm:$0xff]
        %v4854 = vld [vmem:[%s2 + $0x548] sm:$0xff]
        %v4855 = vld [vmem:[%s2 + $0x550] sm:$0xff]
        %v4856 = vld [vmem:[%s2 + $0x558] sm:$0xff]
        %v4857 = vld [vmem:[%s2 + $0x560] sm:$0xff]
        %v4858 = vld [vmem:[%s2 + $0x568] sm:$0xff]
        %v4859 = vld [vmem:[%s2 + $0x570] sm:$0xff]
        %v4860 = vld [vmem:[%s2 + $0x578] sm:$0xff]
        %v4861 = vld [vmem:[%s2 + $0x580] sm:$0xff]
        %v4862 = vld [vmem:[%s2 + $0x588] sm:$0xff]
        %v4863 = vld [vmem:[%s2 + $0x590] sm:$0xff]
        %v4864 = vld [vmem:[%s2 + $0x598] sm:$0xff]
        %v4865 = vld [vmem:[%s2 + $0x5a0] sm:$0xff]
        %v4866 = vld [vmem:[%s2 + $0x5a8] sm:$0xff]
        %v4867 = vld [vmem:[%s2 + $0x5b0] sm:$0xff]
        %v4868 = vld [vmem:[%s2 + $0x5b8] sm:$0xff]
        %v4869 = vld [vmem:[%s2 + $0x5c0] sm:$0xff]
        %v4870 = vld [vmem:[%s2 + $0x5c8] sm:$0xff]
        %v4871 = vld [vmem:[%s2 + $0x5d0] sm:$0xff]
        %v4872 = vld [vmem:[%s2 + $0x5d8] sm:$0xff]
        %v4873 = vld [vmem:[%s2 + $0x5e0] sm:$0xff]
        %v4874 = vld [vmem:[%s2 + $0x5e8] sm:$0xff]
        %v4875 = vld [vmem:[%s2 + $0x5f0] sm:$0xff]
        %v4876 = vld [vmem:[%s2 + $0x5f8] sm:$0xff]
        %4877 = vmatpush.msra.mxu0 %v4700
        %4878 = vmatpush.msra.mxu0 %v4699
        %4879 = vmatpush.msra.mxu0 %v4698
        %4880 = vmatpush.msra.mxu0 %v4697
        %4881 = vmatpush.msra.mxu0 %v4696
        %4882 = vmatpush.msra.mxu0 %v4695
        %4883 = vmatpush.msra.mxu0 %v4694
        %4884 = vmatpush.msra.mxu0 %v4693
        %4885 = vmatpush.msra.mxu0 %v4692
        %4886 = vmatpush.msra.mxu0 %v4691
        %4887 = vmatpush.msra.mxu0 %v4690
        %4888 = vmatpush.msra.mxu0 %v4689
        %4889 = vmatpush.msra.mxu0 %v4688
        %4890 = vmatpush.msra.mxu0 %v4687
        %4891 = vmatpush.msra.mxu0 %v4686
        %4892 = vmatpush.msra.mxu0 %v4685
        %4893 = vmatmul.f32.gmra.mxu0 %v4637
        %v4894 = vpop.f32.mrf.mxu0
        %v4895 = vadd.f32 0.0, %v4894
        %4896 = vmatmul.f32.gmra.mxu0 %v4649
        %v4897 = vpop.f32.mrf.mxu0
        %v4898 = vadd.f32 0.0, %v4897
        %4899 = vmatmul.f32.gmra.mxu0 %v4661
        %v4900 = vpop.f32.mrf.mxu0
        %v4901 = vadd.f32 0.0, %v4900
        %4902 = vmatmul.f32.gmra.mxu0 %v4673
        %v4903 = vpop.f32.mrf.mxu0
        %v4904 = vadd.f32 0.0, %v4903
        %4905 = vdwg.mxu0
        %4906 = vmatpush.msra.mxu0 %v4716
        %4907 = vmatpush.msra.mxu0 %v4715
        %4908 = vmatpush.msra.mxu0 %v4714
        %4909 = vmatpush.msra.mxu0 %v4713
        %4910 = vmatpush.msra.mxu0 %v4712
        %4911 = vmatpush.msra.mxu0 %v4711
        %4912 = vmatpush.msra.mxu0 %v4710
        %4913 = vmatpush.msra.mxu0 %v4709
        %4914 = vmatpush.msra.mxu0 %v4708
        %4915 = vmatpush.msra.mxu0 %v4707
        %4916 = vmatpush.msra.mxu0 %v4706
        %4917 = vmatpush.msra.mxu0 %v4705
        %4918 = vmatpush.msra.mxu0 %v4704
        %4919 = vmatpush.msra.mxu0 %v4703
        %4920 = vmatpush.msra.mxu0 %v4702
        %4921 = vmatpush.msra.mxu0 %v4701
        %4922 = vmatmul.f32.gmra.mxu0 %v4638
        %v4923 = vpop.f32.mrf.mxu0
        %v4924 = vadd.f32 %v4895, %v4923
        %4925 = vmatmul.f32.gmra.mxu0 %v4650
        %v4926 = vpop.f32.mrf.mxu0
        %v4927 = vadd.f32 %v4898, %v4926
        %4928 = vmatmul.f32.gmra.mxu0 %v4662
        %v4929 = vpop.f32.mrf.mxu0
        %v4930 = vadd.f32 %v4901, %v4929
        %4931 = vmatmul.f32.gmra.mxu0 %v4674
        %v4932 = vpop.f32.mrf.mxu0
        %v4933 = vadd.f32 %v4904, %v4932
        %4934 = vdwg.mxu0
        %4935 = vmatpush.msra.mxu0 %v4732
        %4936 = vmatpush.msra.mxu0 %v4731
        %4937 = vmatpush.msra.mxu0 %v4730
        %4938 = vmatpush.msra.mxu0 %v4729
        %4939 = vmatpush.msra.mxu0 %v4728
        %4940 = vmatpush.msra.mxu0 %v4727
        %4941 = vmatpush.msra.mxu0 %v4726
        %4942 = vmatpush.msra.mxu0 %v4725
        %4943 = vmatpush.msra.mxu0 %v4724
        %4944 = vmatpush.msra.mxu0 %v4723
        %4945 = vmatpush.msra.mxu0 %v4722
        %4946 = vmatpush.msra.mxu0 %v4721
        %4947 = vmatpush.msra.mxu0 %v4720
        %4948 = vmatpush.msra.mxu0 %v4719
        %4949 = vmatpush.msra.mxu0 %v4718
        %4950 = vmatpush.msra.mxu0 %v4717
        %4951 = vmatmul.f32.gmra.mxu0 %v4639
        %v4952 = vpop.f32.mrf.mxu0
        %v4953 = vadd.f32 %v4924, %v4952
        %4954 = vmatmul.f32.gmra.mxu0 %v4651
        %v4955 = vpop.f32.mrf.mxu0
        %v4956 = vadd.f32 %v4927, %v4955
        %4957 = vmatmul.f32.gmra.mxu0 %v4663
        %v4958 = vpop.f32.mrf.mxu0
        %v4959 = vadd.f32 %v4930, %v4958
        %4960 = vmatmul.f32.gmra.mxu0 %v4675
        %v4961 = vpop.f32.mrf.mxu0
        %v4962 = vadd.f32 %v4933, %v4961
        %4963 = vdwg.mxu0
        %4964 = vmatpush.msra.mxu0 %v4748
        %4965 = vmatpush.msra.mxu0 %v4747
        %4966 = vmatpush.msra.mxu0 %v4746
        %4967 = vmatpush.msra.mxu0 %v4745
        %4968 = vmatpush.msra.mxu0 %v4744
        %4969 = vmatpush.msra.mxu0 %v4743
        %4970 = vmatpush.msra.mxu0 %v4742
        %4971 = vmatpush.msra.mxu0 %v4741
        %4972 = vmatpush.msra.mxu0 %v4740
        %4973 = vmatpush.msra.mxu0 %v4739
        %4974 = vmatpush.msra.mxu0 %v4738
        %4975 = vmatpush.msra.mxu0 %v4737
        %4976 = vmatpush.msra.mxu0 %v4736
        %4977 = vmatpush.msra.mxu0 %v4735
        %4978 = vmatpush.msra.mxu0 %v4734
        %4979 = vmatpush.msra.mxu0 %v4733
        %4980 = vmatmul.f32.gmra.mxu0 %v4640
        %v4981 = vpop.f32.mrf.mxu0
        %v4982 = vadd.f32 %v4953, %v4981
        %4983 = vmatmul.f32.gmra.mxu0 %v4652
        %v4984 = vpop.f32.mrf.mxu0
        %v4985 = vadd.f32 %v4956, %v4984
        %4986 = vmatmul.f32.gmra.mxu0 %v4664
        %v4987 = vpop.f32.mrf.mxu0
        %v4988 = vadd.f32 %v4959, %v4987
        %4989 = vmatmul.f32.gmra.mxu0 %v4676
        %v4990 = vpop.f32.mrf.mxu0
        %v4991 = vadd.f32 %v4962, %v4990
        %4992 = vdwg.mxu0
        %4993 = vmatpush.msra.mxu0 %v4764
        %4994 = vmatpush.msra.mxu0 %v4763
        %4995 = vmatpush.msra.mxu0 %v4762
        %4996 = vmatpush.msra.mxu0 %v4761
        %4997 = vmatpush.msra.mxu0 %v4760
        %4998 = vmatpush.msra.mxu0 %v4759
        %4999 = vmatpush.msra.mxu0 %v4758
        %5000 = vmatpush.msra.mxu0 %v4757
        %5001 = vmatpush.msra.mxu0 %v4756
        %5002 = vmatpush.msra.mxu0 %v4755
        %5003 = vmatpush.msra.mxu0 %v4754
        %5004 = vmatpush.msra.mxu0 %v4753
        %5005 = vmatpush.msra.mxu0 %v4752
        %5006 = vmatpush.msra.mxu0 %v4751
        %5007 = vmatpush.msra.mxu0 %v4750
        %5008 = vmatpush.msra.mxu0 %v4749
        %5009 = vmatmul.f32.gmra.mxu0 %v4641
        %v5010 = vpop.f32.mrf.mxu0
        %v5011 = vadd.f32 %v4982, %v5010
        %5012 = vmatmul.f32.gmra.mxu0 %v4653
        %v5013 = vpop.f32.mrf.mxu0
        %v5014 = vadd.f32 %v4985, %v5013
        %5015 = vmatmul.f32.gmra.mxu0 %v4665
        %v5016 = vpop.f32.mrf.mxu0
        %v5017 = vadd.f32 %v4988, %v5016
        %5018 = vmatmul.f32.gmra.mxu0 %v4677
        %v5019 = vpop.f32.mrf.mxu0
        %v5020 = vadd.f32 %v4991, %v5019
        %5021 = vdwg.mxu0
        %5022 = vmatpush.msra.mxu0 %v4780
        %5023 = vmatpush.msra.mxu0 %v4779
        %5024 = vmatpush.msra.mxu0 %v4778
        %5025 = vmatpush.msra.mxu0 %v4777
        %5026 = vmatpush.msra.mxu0 %v4776
        %5027 = vmatpush.msra.mxu0 %v4775
        %5028 = vmatpush.msra.mxu0 %v4774
        %5029 = vmatpush.msra.mxu0 %v4773
        %5030 = vmatpush.msra.mxu0 %v4772
        %5031 = vmatpush.msra.mxu0 %v4771
        %5032 = vmatpush.msra.mxu0 %v4770
        %5033 = vmatpush.msra.mxu0 %v4769
        %5034 = vmatpush.msra.mxu0 %v4768
        %5035 = vmatpush.msra.mxu0 %v4767
        %5036 = vmatpush.msra.mxu0 %v4766
        %5037 = vmatpush.msra.mxu0 %v4765
        %5038 = vmatmul.f32.gmra.mxu0 %v4642
        %v5039 = vpop.f32.mrf.mxu0
        %v5040 = vadd.f32 %v5011, %v5039
        %5041 = vmatmul.f32.gmra.mxu0 %v4654
        %v5042 = vpop.f32.mrf.mxu0
        %v5043 = vadd.f32 %v5014, %v5042
        %5044 = vmatmul.f32.gmra.mxu0 %v4666
        %v5045 = vpop.f32.mrf.mxu0
        %v5046 = vadd.f32 %v5017, %v5045
        %5047 = vmatmul.f32.gmra.mxu0 %v4678
        %v5048 = vpop.f32.mrf.mxu0
        %v5049 = vadd.f32 %v5020, %v5048
        %5050 = vdwg.mxu0
        %5051 = vmatpush.msra.mxu0 %v4796
        %5052 = vmatpush.msra.mxu0 %v4795
        %5053 = vmatpush.msra.mxu0 %v4794
        %5054 = vmatpush.msra.mxu0 %v4793
        %5055 = vmatpush.msra.mxu0 %v4792
        %5056 = vmatpush.msra.mxu0 %v4791
        %5057 = vmatpush.msra.mxu0 %v4790
        %5058 = vmatpush.msra.mxu0 %v4789
        %5059 = vmatpush.msra.mxu0 %v4788
        %5060 = vmatpush.msra.mxu0 %v4787
        %5061 = vmatpush.msra.mxu0 %v4786
        %5062 = vmatpush.msra.mxu0 %v4785
        %5063 = vmatpush.msra.mxu0 %v4784
        %5064 = vmatpush.msra.mxu0 %v4783
        %5065 = vmatpush.msra.mxu0 %v4782
        %5066 = vmatpush.msra.mxu0 %v4781
        %5067 = vmatmul.f32.gmra.mxu0 %v4643
        %v5068 = vpop.f32.mrf.mxu0
        %v5069 = vadd.f32 %v5040, %v5068
        %5070 = vmatmul.f32.gmra.mxu0 %v4655
        %v5071 = vpop.f32.mrf.mxu0
        %v5072 = vadd.f32 %v5043, %v5071
        %5073 = vmatmul.f32.gmra.mxu0 %v4667
        %v5074 = vpop.f32.mrf.mxu0
        %v5075 = vadd.f32 %v5046, %v5074
        %5076 = vmatmul.f32.gmra.mxu0 %v4679
        %v5077 = vpop.f32.mrf.mxu0
        %v5078 = vadd.f32 %v5049, %v5077
        %5079 = vdwg.mxu0
        %5080 = vmatpush.msra.mxu0 %v4812
        %5081 = vmatpush.msra.mxu0 %v4811
        %5082 = vmatpush.msra.mxu0 %v4810
        %5083 = vmatpush.msra.mxu0 %v4809
        %5084 = vmatpush.msra.mxu0 %v4808
        %5085 = vmatpush.msra.mxu0 %v4807
        %5086 = vmatpush.msra.mxu0 %v4806
        %5087 = vmatpush.msra.mxu0 %v4805
        %5088 = vmatpush.msra.mxu0 %v4804
        %5089 = vmatpush.msra.mxu0 %v4803
        %5090 = vmatpush.msra.mxu0 %v4802
        %5091 = vmatpush.msra.mxu0 %v4801
        %5092 = vmatpush.msra.mxu0 %v4800
        %5093 = vmatpush.msra.mxu0 %v4799
        %5094 = vmatpush.msra.mxu0 %v4798
        %5095 = vmatpush.msra.mxu0 %v4797
        %5096 = vmatmul.f32.gmra.mxu0 %v4644
        %v5097 = vpop.f32.mrf.mxu0
        %v5098 = vadd.f32 %v5069, %v5097
        %5099 = vmatmul.f32.gmra.mxu0 %v4656
        %v5100 = vpop.f32.mrf.mxu0
        %v5101 = vadd.f32 %v5072, %v5100
        %5102 = vmatmul.f32.gmra.mxu0 %v4668
        %v5103 = vpop.f32.mrf.mxu0
        %v5104 = vadd.f32 %v5075, %v5103
        %5105 = vmatmul.f32.gmra.mxu0 %v4680
        %v5106 = vpop.f32.mrf.mxu0
        %v5107 = vadd.f32 %v5078, %v5106
        %5108 = vdwg.mxu0
        %5109 = vmatpush.msra.mxu0 %v4828
        %5110 = vmatpush.msra.mxu0 %v4827
        %5111 = vmatpush.msra.mxu0 %v4826
        %5112 = vmatpush.msra.mxu0 %v4825
        %5113 = vmatpush.msra.mxu0 %v4824
        %5114 = vmatpush.msra.mxu0 %v4823
        %5115 = vmatpush.msra.mxu0 %v4822
        %5116 = vmatpush.msra.mxu0 %v4821
        %5117 = vmatpush.msra.mxu0 %v4820
        %5118 = vmatpush.msra.mxu0 %v4819
        %5119 = vmatpush.msra.mxu0 %v4818
        %5120 = vmatpush.msra.mxu0 %v4817
        %5121 = vmatpush.msra.mxu0 %v4816
        %5122 = vmatpush.msra.mxu0 %v4815
        %5123 = vmatpush.msra.mxu0 %v4814
        %5124 = vmatpush.msra.mxu0 %v4813
        %5125 = vmatmul.f32.gmra.mxu0 %v4645
        %v5126 = vpop.f32.mrf.mxu0
        %v5127 = vadd.f32 %v5098, %v5126
        %5128 = vmatmul.f32.gmra.mxu0 %v4657
        %v5129 = vpop.f32.mrf.mxu0
        %v5130 = vadd.f32 %v5101, %v5129
        %5131 = vmatmul.f32.gmra.mxu0 %v4669
        %v5132 = vpop.f32.mrf.mxu0
        %v5133 = vadd.f32 %v5104, %v5132
        %5134 = vmatmul.f32.gmra.mxu0 %v4681
        %v5135 = vpop.f32.mrf.mxu0
        %v5136 = vadd.f32 %v5107, %v5135
        %5137 = vdwg.mxu0
        %5138 = vmatpush.msra.mxu0 %v4844
        %5139 = vmatpush.msra.mxu0 %v4843
        %5140 = vmatpush.msra.mxu0 %v4842
        %5141 = vmatpush.msra.mxu0 %v4841
        %5142 = vmatpush.msra.mxu0 %v4840
        %5143 = vmatpush.msra.mxu0 %v4839
        %5144 = vmatpush.msra.mxu0 %v4838
        %5145 = vmatpush.msra.mxu0 %v4837
        %5146 = vmatpush.msra.mxu0 %v4836
        %5147 = vmatpush.msra.mxu0 %v4835
        %5148 = vmatpush.msra.mxu0 %v4834
        %5149 = vmatpush.msra.mxu0 %v4833
        %5150 = vmatpush.msra.mxu0 %v4832
        %5151 = vmatpush.msra.mxu0 %v4831
        %5152 = vmatpush.msra.mxu0 %v4830
        %5153 = vmatpush.msra.mxu0 %v4829
        %5154 = vmatmul.f32.gmra.mxu0 %v4646
        %v5155 = vpop.f32.mrf.mxu0
        %v5156 = vadd.f32 %v5127, %v5155
        %5157 = vmatmul.f32.gmra.mxu0 %v4658
        %v5158 = vpop.f32.mrf.mxu0
        %v5159 = vadd.f32 %v5130, %v5158
        %5160 = vmatmul.f32.gmra.mxu0 %v4670
        %v5161 = vpop.f32.mrf.mxu0
        %v5162 = vadd.f32 %v5133, %v5161
        %5163 = vmatmul.f32.gmra.mxu0 %v4682
        %v5164 = vpop.f32.mrf.mxu0
        %v5165 = vadd.f32 %v5136, %v5164
        %5166 = vdwg.mxu0
        %5167 = vmatpush.msra.mxu0 %v4860
        %5168 = vmatpush.msra.mxu0 %v4859
        %5169 = vmatpush.msra.mxu0 %v4858
        %5170 = vmatpush.msra.mxu0 %v4857
        %5171 = vmatpush.msra.mxu0 %v4856
        %5172 = vmatpush.msra.mxu0 %v4855
        %5173 = vmatpush.msra.mxu0 %v4854
        %5174 = vmatpush.msra.mxu0 %v4853
        %5175 = vmatpush.msra.mxu0 %v4852
        %5176 = vmatpush.msra.mxu0 %v4851
        %5177 = vmatpush.msra.mxu0 %v4850
        %5178 = vmatpush.msra.mxu0 %v4849
        %5179 = vmatpush.msra.mxu0 %v4848
        %5180 = vmatpush.msra.mxu0 %v4847
        %5181 = vmatpush.msra.mxu0 %v4846
        %5182 = vmatpush.msra.mxu0 %v4845
        %5183 = vmatmul.f32.gmra.mxu0 %v4647
        %v5184 = vpop.f32.mrf.mxu0
        %v5185 = vadd.f32 %v5156, %v5184
        %5186 = vmatmul.f32.gmra.mxu0 %v4659
        %v5187 = vpop.f32.mrf.mxu0
        %v5188 = vadd.f32 %v5159, %v5187
        %5189 = vmatmul.f32.gmra.mxu0 %v4671
        %v5190 = vpop.f32.mrf.mxu0
        %v5191 = vadd.f32 %v5162, %v5190
        %5192 = vmatmul.f32.gmra.mxu0 %v4683
        %v5193 = vpop.f32.mrf.mxu0
        %v5194 = vadd.f32 %v5165, %v5193
        %5195 = vdwg.mxu0
        %5196 = vmatpush.msra.mxu0 %v4876
        %5197 = vmatpush.msra.mxu0 %v4875
        %5198 = vmatpush.msra.mxu0 %v4874
        %5199 = vmatpush.msra.mxu0 %v4873
        %5200 = vmatpush.msra.mxu0 %v4872
        %5201 = vmatpush.msra.mxu0 %v4871
        %5202 = vmatpush.msra.mxu0 %v4870
        %5203 = vmatpush.msra.mxu0 %v4869
        %5204 = vmatpush.msra.mxu0 %v4868
        %5205 = vmatpush.msra.mxu0 %v4867
        %5206 = vmatpush.msra.mxu0 %v4866
        %5207 = vmatpush.msra.mxu0 %v4865
        %5208 = vmatpush.msra.mxu0 %v4864
        %5209 = vmatpush.msra.mxu0 %v4863
        %5210 = vmatpush.msra.mxu0 %v4862
        %5211 = vmatpush.msra.mxu0 %v4861
        %5212 = vmatmul.f32.gmra.mxu0 %v4648
        %v5213 = vpop.f32.mrf.mxu0
        %v5214 = vadd.f32 %v5185, %v5213
        %5215 = vmatmul.f32.gmra.mxu0 %v4660
        %v5216 = vpop.f32.mrf.mxu0
        %v5217 = vadd.f32 %v5188, %v5216
        %5218 = vmatmul.f32.gmra.mxu0 %v4672
        %v5219 = vpop.f32.mrf.mxu0
        %v5220 = vadd.f32 %v5191, %v5219
        %5221 = vmatmul.f32.gmra.mxu0 %v4684
        %v5222 = vpop.f32.mrf.mxu0
        %v5223 = vadd.f32 %v5194, %v5222
        %5224 = vdwg.mxu0
        %v5225 = vmul.f32 %v5214, %v4015
        %v5226 = vmul.f32 %v5217, %v4015
        %v5227 = vmul.f32 %v5220, %v4015
        %v5228 = vmul.f32 %v5223, %v4015
        %v5229 = vadd.f32 %v5225, %v4020
        %v5230 = vadd.f32 %v5226, %v4020
        %v5231 = vadd.f32 %v5227, %v4020
        %v5232 = vadd.f32 %v5228, %v4020
        %v5233 = vmax.f32 %v5229, 0.0
        %v5234 = vmax.f32 %v5230, 0.0
        %v5235 = vmax.f32 %v5231, 0.0
        %v5236 = vmax.f32 %v5232, 0.0
        %5237 = vst [vmem:[#allocation3 + $0x10] sm:$0xff] %v5233
        %5238 = vst [vmem:[#allocation3 + $0x50] sm:$0xff] %v5234
        %5239 = vst [vmem:[#allocation3 + $0x90] sm:$0xff] %v5235
        %5240 = vst [vmem:[#allocation3 + $0xd0] sm:$0xff] %v5236
        %v5241 = vld [vmem:[#allocation2 + $0x90] sm:$0xff]
        %v5242 = vld [vmem:[#allocation2 + $0x98] sm:$0xff]
        %v5243 = vld [vmem:[#allocation2 + $0xa0] sm:$0xff]
        %v5244 = vld [vmem:[#allocation2 + $0xa8] sm:$0xff]
        %v5245 = vld [vmem:[#allocation2 + $0xb0] sm:$0xff]
        %v5246 = vld [vmem:[#allocation2 + $0xb8] sm:$0xff]
        %v5247 = vld [vmem:[#allocation2 + $0xc0] sm:$0xff]
        %v5248 = vld [vmem:[#allocation2 + $0xc8] sm:$0xff]
        %v5249 = vld [vmem:[#allocation2 + $0xd0] sm:$0xff]
        %v5250 = vld [vmem:[#allocation2 + $0xd8] sm:$0xff]
        %v5251 = vld [vmem:[#allocation2 + $0xe0] sm:$0xff]
        %v5252 = vld [vmem:[#allocation2 + $0xe8] sm:$0xff]
        %v5253 = vld [vmem:[#allocation2 + $0x240] sm:$0xff]
        %v5254 = vld [vmem:[#allocation2 + $0x248] sm:$0xff]
        %v5255 = vld [vmem:[#allocation2 + $0x250] sm:$0xff]
        %v5256 = vld [vmem:[#allocation2 + $0x258] sm:$0xff]
        %v5257 = vld [vmem:[#allocation2 + $0x260] sm:$0xff]
        %v5258 = vld [vmem:[#allocation2 + $0x268] sm:$0xff]
        %v5259 = vld [vmem:[#allocation2 + $0x270] sm:$0xff]
        %v5260 = vld [vmem:[#allocation2 + $0x278] sm:$0xff]
        %v5261 = vld [vmem:[#allocation2 + $0x280] sm:$0xff]
        %v5262 = vld [vmem:[#allocation2 + $0x288] sm:$0xff]
        %v5263 = vld [vmem:[#allocation2 + $0x290] sm:$0xff]
        %v5264 = vld [vmem:[#allocation2 + $0x298] sm:$0xff]
        %v5265 = vld [vmem:[#allocation2 + $0x3f0] sm:$0xff]
        %v5266 = vld [vmem:[#allocation2 + $0x3f8] sm:$0xff]
        %v5267 = vld [vmem:[#allocation2 + $0x400] sm:$0xff]
        %v5268 = vld [vmem:[#allocation2 + $0x408] sm:$0xff]
        %v5269 = vld [vmem:[#allocation2 + $0x410] sm:$0xff]
        %v5270 = vld [vmem:[#allocation2 + $0x418] sm:$0xff]
        %v5271 = vld [vmem:[#allocation2 + $0x420] sm:$0xff]
        %v5272 = vld [vmem:[#allocation2 + $0x428] sm:$0xff]
        %v5273 = vld [vmem:[#allocation2 + $0x430] sm:$0xff]
        %v5274 = vld [vmem:[#allocation2 + $0x438] sm:$0xff]
        %v5275 = vld [vmem:[#allocation2 + $0x440] sm:$0xff]
        %v5276 = vld [vmem:[#allocation2 + $0x448] sm:$0xff]
        %v5277 = vld [vmem:[#allocation2 + $0x5a0] sm:$0xff]
        %v5278 = vld [vmem:[#allocation2 + $0x5a8] sm:$0xff]
        %v5279 = vld [vmem:[#allocation2 + $0x5b0] sm:$0xff]
        %v5280 = vld [vmem:[#allocation2 + $0x5b8] sm:$0xff]
        %v5281 = vld [vmem:[#allocation2 + $0x5c0] sm:$0xff]
        %v5282 = vld [vmem:[#allocation2 + $0x5c8] sm:$0xff]
        %v5283 = vld [vmem:[#allocation2 + $0x5d0] sm:$0xff]
        %v5284 = vld [vmem:[#allocation2 + $0x5d8] sm:$0xff]
        %v5285 = vld [vmem:[#allocation2 + $0x5e0] sm:$0xff]
        %v5286 = vld [vmem:[#allocation2 + $0x5e8] sm:$0xff]
        %v5287 = vld [vmem:[#allocation2 + $0x5f0] sm:$0xff]
        %v5288 = vld [vmem:[#allocation2 + $0x5f8] sm:$0xff]
        %v5289 = vld [vmem:[%s2] sm:$0xff]
        %v5290 = vld [vmem:[%s2 + $0x8] sm:$0xff]
        %v5291 = vld [vmem:[%s2 + $0x10] sm:$0xff]
        %v5292 = vld [vmem:[%s2 + $0x18] sm:$0xff]
        %v5293 = vld [vmem:[%s2 + $0x20] sm:$0xff]
        %v5294 = vld [vmem:[%s2 + $0x28] sm:$0xff]
        %v5295 = vld [vmem:[%s2 + $0x30] sm:$0xff]
        %v5296 = vld [vmem:[%s2 + $0x38] sm:$0xff]
        %v5297 = vld [vmem:[%s2 + $0x40] sm:$0xff]
        %v5298 = vld [vmem:[%s2 + $0x48] sm:$0xff]
        %v5299 = vld [vmem:[%s2 + $0x50] sm:$0xff]
        %v5300 = vld [vmem:[%s2 + $0x58] sm:$0xff]
        %v5301 = vld [vmem:[%s2 + $0x60] sm:$0xff]
        %v5302 = vld [vmem:[%s2 + $0x68] sm:$0xff]
        %v5303 = vld [vmem:[%s2 + $0x70] sm:$0xff]
        %v5304 = vld [vmem:[%s2 + $0x78] sm:$0xff]
        %v5305 = vld [vmem:[%s2 + $0x80] sm:$0xff]
        %v5306 = vld [vmem:[%s2 + $0x88] sm:$0xff]
        %v5307 = vld [vmem:[%s2 + $0x90] sm:$0xff]
        %v5308 = vld [vmem:[%s2 + $0x98] sm:$0xff]
        %v5309 = vld [vmem:[%s2 + $0xa0] sm:$0xff]
        %v5310 = vld [vmem:[%s2 + $0xa8] sm:$0xff]
        %v5311 = vld [vmem:[%s2 + $0xb0] sm:$0xff]
        %v5312 = vld [vmem:[%s2 + $0xb8] sm:$0xff]
        %v5313 = vld [vmem:[%s2 + $0xc0] sm:$0xff]
        %v5314 = vld [vmem:[%s2 + $0xc8] sm:$0xff]
        %v5315 = vld [vmem:[%s2 + $0xd0] sm:$0xff]
        %v5316 = vld [vmem:[%s2 + $0xd8] sm:$0xff]
        %v5317 = vld [vmem:[%s2 + $0xe0] sm:$0xff]
        %v5318 = vld [vmem:[%s2 + $0xe8] sm:$0xff]
        %v5319 = vld [vmem:[%s2 + $0xf0] sm:$0xff]
        %v5320 = vld [vmem:[%s2 + $0xf8] sm:$0xff]
        %v5321 = vld [vmem:[%s2 + $0x100] sm:$0xff]
        %v5322 = vld [vmem:[%s2 + $0x108] sm:$0xff]
        %v5323 = vld [vmem:[%s2 + $0x110] sm:$0xff]
        %v5324 = vld [vmem:[%s2 + $0x118] sm:$0xff]
        %v5325 = vld [vmem:[%s2 + $0x120] sm:$0xff]
        %v5326 = vld [vmem:[%s2 + $0x128] sm:$0xff]
        %v5327 = vld [vmem:[%s2 + $0x130] sm:$0xff]
        %v5328 = vld [vmem:[%s2 + $0x138] sm:$0xff]
        %v5329 = vld [vmem:[%s2 + $0x140] sm:$0xff]
        %v5330 = vld [vmem:[%s2 + $0x148] sm:$0xff]
        %v5331 = vld [vmem:[%s2 + $0x150] sm:$0xff]
        %v5332 = vld [vmem:[%s2 + $0x158] sm:$0xff]
        %v5333 = vld [vmem:[%s2 + $0x160] sm:$0xff]
        %v5334 = vld [vmem:[%s2 + $0x168] sm:$0xff]
        %v5335 = vld [vmem:[%s2 + $0x170] sm:$0xff]
        %v5336 = vld [vmem:[%s2 + $0x178] sm:$0xff]
        %v5337 = vld [vmem:[%s2 + $0x180] sm:$0xff]
        %v5338 = vld [vmem:[%s2 + $0x188] sm:$0xff]
        %v5339 = vld [vmem:[%s2 + $0x190] sm:$0xff]
        %v5340 = vld [vmem:[%s2 + $0x198] sm:$0xff]
        %v5341 = vld [vmem:[%s2 + $0x1a0] sm:$0xff]
        %v5342 = vld [vmem:[%s2 + $0x1a8] sm:$0xff]
        %v5343 = vld [vmem:[%s2 + $0x1b0] sm:$0xff]
        %v5344 = vld [vmem:[%s2 + $0x1b8] sm:$0xff]
        %v5345 = vld [vmem:[%s2 + $0x1c0] sm:$0xff]
        %v5346 = vld [vmem:[%s2 + $0x1c8] sm:$0xff]
        %v5347 = vld [vmem:[%s2 + $0x1d0] sm:$0xff]
        %v5348 = vld [vmem:[%s2 + $0x1d8] sm:$0xff]
        %v5349 = vld [vmem:[%s2 + $0x1e0] sm:$0xff]
        %v5350 = vld [vmem:[%s2 + $0x1e8] sm:$0xff]
        %v5351 = vld [vmem:[%s2 + $0x1f0] sm:$0xff]
        %v5352 = vld [vmem:[%s2 + $0x1f8] sm:$0xff]
        %v5353 = vld [vmem:[%s2 + $0x200] sm:$0xff]
        %v5354 = vld [vmem:[%s2 + $0x208] sm:$0xff]
        %v5355 = vld [vmem:[%s2 + $0x210] sm:$0xff]
        %v5356 = vld [vmem:[%s2 + $0x218] sm:$0xff]
        %v5357 = vld [vmem:[%s2 + $0x220] sm:$0xff]
        %v5358 = vld [vmem:[%s2 + $0x228] sm:$0xff]
        %v5359 = vld [vmem:[%s2 + $0x230] sm:$0xff]
        %v5360 = vld [vmem:[%s2 + $0x238] sm:$0xff]
        %v5361 = vld [vmem:[%s2 + $0x240] sm:$0xff]
        %v5362 = vld [vmem:[%s2 + $0x248] sm:$0xff]
        %v5363 = vld [vmem:[%s2 + $0x250] sm:$0xff]
        %v5364 = vld [vmem:[%s2 + $0x258] sm:$0xff]
        %v5365 = vld [vmem:[%s2 + $0x260] sm:$0xff]
        %v5366 = vld [vmem:[%s2 + $0x268] sm:$0xff]
        %v5367 = vld [vmem:[%s2 + $0x270] sm:$0xff]
        %v5368 = vld [vmem:[%s2 + $0x278] sm:$0xff]
        %v5369 = vld [vmem:[%s2 + $0x280] sm:$0xff]
        %v5370 = vld [vmem:[%s2 + $0x288] sm:$0xff]
        %v5371 = vld [vmem:[%s2 + $0x290] sm:$0xff]
        %v5372 = vld [vmem:[%s2 + $0x298] sm:$0xff]
        %v5373 = vld [vmem:[%s2 + $0x2a0] sm:$0xff]
        %v5374 = vld [vmem:[%s2 + $0x2a8] sm:$0xff]
        %v5375 = vld [vmem:[%s2 + $0x2b0] sm:$0xff]
        %v5376 = vld [vmem:[%s2 + $0x2b8] sm:$0xff]
        %v5377 = vld [vmem:[%s2 + $0x2c0] sm:$0xff]
        %v5378 = vld [vmem:[%s2 + $0x2c8] sm:$0xff]
        %v5379 = vld [vmem:[%s2 + $0x2d0] sm:$0xff]
        %v5380 = vld [vmem:[%s2 + $0x2d8] sm:$0xff]
        %v5381 = vld [vmem:[%s2 + $0x2e0] sm:$0xff]
        %v5382 = vld [vmem:[%s2 + $0x2e8] sm:$0xff]
        %v5383 = vld [vmem:[%s2 + $0x2f0] sm:$0xff]
        %v5384 = vld [vmem:[%s2 + $0x2f8] sm:$0xff]
        %v5385 = vld [vmem:[%s2 + $0x300] sm:$0xff]
        %v5386 = vld [vmem:[%s2 + $0x308] sm:$0xff]
        %v5387 = vld [vmem:[%s2 + $0x310] sm:$0xff]
        %v5388 = vld [vmem:[%s2 + $0x318] sm:$0xff]
        %v5389 = vld [vmem:[%s2 + $0x320] sm:$0xff]
        %v5390 = vld [vmem:[%s2 + $0x328] sm:$0xff]
        %v5391 = vld [vmem:[%s2 + $0x330] sm:$0xff]
        %v5392 = vld [vmem:[%s2 + $0x338] sm:$0xff]
        %v5393 = vld [vmem:[%s2 + $0x340] sm:$0xff]
        %v5394 = vld [vmem:[%s2 + $0x348] sm:$0xff]
        %v5395 = vld [vmem:[%s2 + $0x350] sm:$0xff]
        %v5396 = vld [vmem:[%s2 + $0x358] sm:$0xff]
        %v5397 = vld [vmem:[%s2 + $0x360] sm:$0xff]
        %v5398 = vld [vmem:[%s2 + $0x368] sm:$0xff]
        %v5399 = vld [vmem:[%s2 + $0x370] sm:$0xff]
        %v5400 = vld [vmem:[%s2 + $0x378] sm:$0xff]
        %v5401 = vld [vmem:[%s2 + $0x380] sm:$0xff]
        %v5402 = vld [vmem:[%s2 + $0x388] sm:$0xff]
        %v5403 = vld [vmem:[%s2 + $0x390] sm:$0xff]
        %v5404 = vld [vmem:[%s2 + $0x398] sm:$0xff]
        %v5405 = vld [vmem:[%s2 + $0x3a0] sm:$0xff]
        %v5406 = vld [vmem:[%s2 + $0x3a8] sm:$0xff]
        %v5407 = vld [vmem:[%s2 + $0x3b0] sm:$0xff]
        %v5408 = vld [vmem:[%s2 + $0x3b8] sm:$0xff]
        %v5409 = vld [vmem:[%s2 + $0x3c0] sm:$0xff]
        %v5410 = vld [vmem:[%s2 + $0x3c8] sm:$0xff]
        %v5411 = vld [vmem:[%s2 + $0x3d0] sm:$0xff]
        %v5412 = vld [vmem:[%s2 + $0x3d8] sm:$0xff]
        %v5413 = vld [vmem:[%s2 + $0x3e0] sm:$0xff]
        %v5414 = vld [vmem:[%s2 + $0x3e8] sm:$0xff]
        %v5415 = vld [vmem:[%s2 + $0x3f0] sm:$0xff]
        %v5416 = vld [vmem:[%s2 + $0x3f8] sm:$0xff]
        %v5417 = vld [vmem:[%s2 + $0x400] sm:$0xff]
        %v5418 = vld [vmem:[%s2 + $0x408] sm:$0xff]
        %v5419 = vld [vmem:[%s2 + $0x410] sm:$0xff]
        %v5420 = vld [vmem:[%s2 + $0x418] sm:$0xff]
        %v5421 = vld [vmem:[%s2 + $0x420] sm:$0xff]
        %v5422 = vld [vmem:[%s2 + $0x428] sm:$0xff]
        %v5423 = vld [vmem:[%s2 + $0x430] sm:$0xff]
        %v5424 = vld [vmem:[%s2 + $0x438] sm:$0xff]
        %v5425 = vld [vmem:[%s2 + $0x440] sm:$0xff]
        %v5426 = vld [vmem:[%s2 + $0x448] sm:$0xff]
        %v5427 = vld [vmem:[%s2 + $0x450] sm:$0xff]
        %v5428 = vld [vmem:[%s2 + $0x458] sm:$0xff]
        %v5429 = vld [vmem:[%s2 + $0x460] sm:$0xff]
        %v5430 = vld [vmem:[%s2 + $0x468] sm:$0xff]
        %v5431 = vld [vmem:[%s2 + $0x470] sm:$0xff]
        %v5432 = vld [vmem:[%s2 + $0x478] sm:$0xff]
        %v5433 = vld [vmem:[%s2 + $0x480] sm:$0xff]
        %v5434 = vld [vmem:[%s2 + $0x488] sm:$0xff]
        %v5435 = vld [vmem:[%s2 + $0x490] sm:$0xff]
        %v5436 = vld [vmem:[%s2 + $0x498] sm:$0xff]
        %v5437 = vld [vmem:[%s2 + $0x4a0] sm:$0xff]
        %v5438 = vld [vmem:[%s2 + $0x4a8] sm:$0xff]
        %v5439 = vld [vmem:[%s2 + $0x4b0] sm:$0xff]
        %v5440 = vld [vmem:[%s2 + $0x4b8] sm:$0xff]
        %v5441 = vld [vmem:[%s2 + $0x4c0] sm:$0xff]
        %v5442 = vld [vmem:[%s2 + $0x4c8] sm:$0xff]
        %v5443 = vld [vmem:[%s2 + $0x4d0] sm:$0xff]
        %v5444 = vld [vmem:[%s2 + $0x4d8] sm:$0xff]
        %v5445 = vld [vmem:[%s2 + $0x4e0] sm:$0xff]
        %v5446 = vld [vmem:[%s2 + $0x4e8] sm:$0xff]
        %v5447 = vld [vmem:[%s2 + $0x4f0] sm:$0xff]
        %v5448 = vld [vmem:[%s2 + $0x4f8] sm:$0xff]
        %v5449 = vld [vmem:[%s2 + $0x500] sm:$0xff]
        %v5450 = vld [vmem:[%s2 + $0x508] sm:$0xff]
        %v5451 = vld [vmem:[%s2 + $0x510] sm:$0xff]
        %v5452 = vld [vmem:[%s2 + $0x518] sm:$0xff]
        %v5453 = vld [vmem:[%s2 + $0x520] sm:$0xff]
        %v5454 = vld [vmem:[%s2 + $0x528] sm:$0xff]
        %v5455 = vld [vmem:[%s2 + $0x530] sm:$0xff]
        %v5456 = vld [vmem:[%s2 + $0x538] sm:$0xff]
        %v5457 = vld [vmem:[%s2 + $0x540] sm:$0xff]
        %v5458 = vld [vmem:[%s2 + $0x548] sm:$0xff]
        %v5459 = vld [vmem:[%s2 + $0x550] sm:$0xff]
        %v5460 = vld [vmem:[%s2 + $0x558] sm:$0xff]
        %v5461 = vld [vmem:[%s2 + $0x560] sm:$0xff]
        %v5462 = vld [vmem:[%s2 + $0x568] sm:$0xff]
        %v5463 = vld [vmem:[%s2 + $0x570] sm:$0xff]
        %v5464 = vld [vmem:[%s2 + $0x578] sm:$0xff]
        %v5465 = vld [vmem:[%s2 + $0x580] sm:$0xff]
        %v5466 = vld [vmem:[%s2 + $0x588] sm:$0xff]
        %v5467 = vld [vmem:[%s2 + $0x590] sm:$0xff]
        %v5468 = vld [vmem:[%s2 + $0x598] sm:$0xff]
        %v5469 = vld [vmem:[%s2 + $0x5a0] sm:$0xff]
        %v5470 = vld [vmem:[%s2 + $0x5a8] sm:$0xff]
        %v5471 = vld [vmem:[%s2 + $0x5b0] sm:$0xff]
        %v5472 = vld [vmem:[%s2 + $0x5b8] sm:$0xff]
        %v5473 = vld [vmem:[%s2 + $0x5c0] sm:$0xff]
        %v5474 = vld [vmem:[%s2 + $0x5c8] sm:$0xff]
        %v5475 = vld [vmem:[%s2 + $0x5d0] sm:$0xff]
        %v5476 = vld [vmem:[%s2 + $0x5d8] sm:$0xff]
        %v5477 = vld [vmem:[%s2 + $0x5e0] sm:$0xff]
        %v5478 = vld [vmem:[%s2 + $0x5e8] sm:$0xff]
        %v5479 = vld [vmem:[%s2 + $0x5f0] sm:$0xff]
        %v5480 = vld [vmem:[%s2 + $0x5f8] sm:$0xff]
        %5481 = vmatpush.msra.mxu0 %v5304
        %5482 = vmatpush.msra.mxu0 %v5303
        %5483 = vmatpush.msra.mxu0 %v5302
        %5484 = vmatpush.msra.mxu0 %v5301
        %5485 = vmatpush.msra.mxu0 %v5300
        %5486 = vmatpush.msra.mxu0 %v5299
        %5487 = vmatpush.msra.mxu0 %v5298
        %5488 = vmatpush.msra.mxu0 %v5297
        %5489 = vmatpush.msra.mxu0 %v5296
        %5490 = vmatpush.msra.mxu0 %v5295
        %5491 = vmatpush.msra.mxu0 %v5294
        %5492 = vmatpush.msra.mxu0 %v5293
        %5493 = vmatpush.msra.mxu0 %v5292
        %5494 = vmatpush.msra.mxu0 %v5291
        %5495 = vmatpush.msra.mxu0 %v5290
        %5496 = vmatpush.msra.mxu0 %v5289
        %5497 = vmatmul.f32.gmra.mxu0 %v5241
        %v5498 = vpop.f32.mrf.mxu0
        %v5499 = vadd.f32 0.0, %v5498
        %5500 = vmatmul.f32.gmra.mxu0 %v5253
        %v5501 = vpop.f32.mrf.mxu0
        %v5502 = vadd.f32 0.0, %v5501
        %5503 = vmatmul.f32.gmra.mxu0 %v5265
        %v5504 = vpop.f32.mrf.mxu0
        %v5505 = vadd.f32 0.0, %v5504
        %5506 = vmatmul.f32.gmra.mxu0 %v5277
        %v5507 = vpop.f32.mrf.mxu0
        %v5508 = vadd.f32 0.0, %v5507
        %5509 = vdwg.mxu0
        %5510 = vmatpush.msra.mxu0 %v5320
        %5511 = vmatpush.msra.mxu0 %v5319
        %5512 = vmatpush.msra.mxu0 %v5318
        %5513 = vmatpush.msra.mxu0 %v5317
        %5514 = vmatpush.msra.mxu0 %v5316
        %5515 = vmatpush.msra.mxu0 %v5315
        %5516 = vmatpush.msra.mxu0 %v5314
        %5517 = vmatpush.msra.mxu0 %v5313
        %5518 = vmatpush.msra.mxu0 %v5312
        %5519 = vmatpush.msra.mxu0 %v5311
        %5520 = vmatpush.msra.mxu0 %v5310
        %5521 = vmatpush.msra.mxu0 %v5309
        %5522 = vmatpush.msra.mxu0 %v5308
        %5523 = vmatpush.msra.mxu0 %v5307
        %5524 = vmatpush.msra.mxu0 %v5306
        %5525 = vmatpush.msra.mxu0 %v5305
        %5526 = vmatmul.f32.gmra.mxu0 %v5242
        %v5527 = vpop.f32.mrf.mxu0
        %v5528 = vadd.f32 %v5499, %v5527
        %5529 = vmatmul.f32.gmra.mxu0 %v5254
        %v5530 = vpop.f32.mrf.mxu0
        %v5531 = vadd.f32 %v5502, %v5530
        %5532 = vmatmul.f32.gmra.mxu0 %v5266
        %v5533 = vpop.f32.mrf.mxu0
        %v5534 = vadd.f32 %v5505, %v5533
        %5535 = vmatmul.f32.gmra.mxu0 %v5278
        %v5536 = vpop.f32.mrf.mxu0
        %v5537 = vadd.f32 %v5508, %v5536
        %5538 = vdwg.mxu0
        %5539 = vmatpush.msra.mxu0 %v5336
        %5540 = vmatpush.msra.mxu0 %v5335
        %5541 = vmatpush.msra.mxu0 %v5334
        %5542 = vmatpush.msra.mxu0 %v5333
        %5543 = vmatpush.msra.mxu0 %v5332
        %5544 = vmatpush.msra.mxu0 %v5331
        %5545 = vmatpush.msra.mxu0 %v5330
        %5546 = vmatpush.msra.mxu0 %v5329
        %5547 = vmatpush.msra.mxu0 %v5328
        %5548 = vmatpush.msra.mxu0 %v5327
        %5549 = vmatpush.msra.mxu0 %v5326
        %5550 = vmatpush.msra.mxu0 %v5325
        %5551 = vmatpush.msra.mxu0 %v5324
        %5552 = vmatpush.msra.mxu0 %v5323
        %5553 = vmatpush.msra.mxu0 %v5322
        %5554 = vmatpush.msra.mxu0 %v5321
        %5555 = vmatmul.f32.gmra.mxu0 %v5243
        %v5556 = vpop.f32.mrf.mxu0
        %v5557 = vadd.f32 %v5528, %v5556
        %5558 = vmatmul.f32.gmra.mxu0 %v5255
        %v5559 = vpop.f32.mrf.mxu0
        %v5560 = vadd.f32 %v5531, %v5559
        %5561 = vmatmul.f32.gmra.mxu0 %v5267
        %v5562 = vpop.f32.mrf.mxu0
        %v5563 = vadd.f32 %v5534, %v5562
        %5564 = vmatmul.f32.gmra.mxu0 %v5279
        %v5565 = vpop.f32.mrf.mxu0
        %v5566 = vadd.f32 %v5537, %v5565
        %5567 = vdwg.mxu0
        %5568 = vmatpush.msra.mxu0 %v5352
        %5569 = vmatpush.msra.mxu0 %v5351
        %5570 = vmatpush.msra.mxu0 %v5350
        %5571 = vmatpush.msra.mxu0 %v5349
        %5572 = vmatpush.msra.mxu0 %v5348
        %5573 = vmatpush.msra.mxu0 %v5347
        %5574 = vmatpush.msra.mxu0 %v5346
        %5575 = vmatpush.msra.mxu0 %v5345
        %5576 = vmatpush.msra.mxu0 %v5344
        %5577 = vmatpush.msra.mxu0 %v5343
        %5578 = vmatpush.msra.mxu0 %v5342
        %5579 = vmatpush.msra.mxu0 %v5341
        %5580 = vmatpush.msra.mxu0 %v5340
        %5581 = vmatpush.msra.mxu0 %v5339
        %5582 = vmatpush.msra.mxu0 %v5338
        %5583 = vmatpush.msra.mxu0 %v5337
        %5584 = vmatmul.f32.gmra.mxu0 %v5244
        %v5585 = vpop.f32.mrf.mxu0
        %v5586 = vadd.f32 %v5557, %v5585
        %5587 = vmatmul.f32.gmra.mxu0 %v5256
        %v5588 = vpop.f32.mrf.mxu0
        %v5589 = vadd.f32 %v5560, %v5588
        %5590 = vmatmul.f32.gmra.mxu0 %v5268
        %v5591 = vpop.f32.mrf.mxu0
        %v5592 = vadd.f32 %v5563, %v5591
        %5593 = vmatmul.f32.gmra.mxu0 %v5280
        %v5594 = vpop.f32.mrf.mxu0
        %v5595 = vadd.f32 %v5566, %v5594
        %5596 = vdwg.mxu0
        %5597 = vmatpush.msra.mxu0 %v5368
        %5598 = vmatpush.msra.mxu0 %v5367
        %5599 = vmatpush.msra.mxu0 %v5366
        %5600 = vmatpush.msra.mxu0 %v5365
        %5601 = vmatpush.msra.mxu0 %v5364
        %5602 = vmatpush.msra.mxu0 %v5363
        %5603 = vmatpush.msra.mxu0 %v5362
        %5604 = vmatpush.msra.mxu0 %v5361
        %5605 = vmatpush.msra.mxu0 %v5360
        %5606 = vmatpush.msra.mxu0 %v5359
        %5607 = vmatpush.msra.mxu0 %v5358
        %5608 = vmatpush.msra.mxu0 %v5357
        %5609 = vmatpush.msra.mxu0 %v5356
        %5610 = vmatpush.msra.mxu0 %v5355
        %5611 = vmatpush.msra.mxu0 %v5354
        %5612 = vmatpush.msra.mxu0 %v5353
        %5613 = vmatmul.f32.gmra.mxu0 %v5245
        %v5614 = vpop.f32.mrf.mxu0
        %v5615 = vadd.f32 %v5586, %v5614
        %5616 = vmatmul.f32.gmra.mxu0 %v5257
        %v5617 = vpop.f32.mrf.mxu0
        %v5618 = vadd.f32 %v5589, %v5617
        %5619 = vmatmul.f32.gmra.mxu0 %v5269
        %v5620 = vpop.f32.mrf.mxu0
        %v5621 = vadd.f32 %v5592, %v5620
        %5622 = vmatmul.f32.gmra.mxu0 %v5281
        %v5623 = vpop.f32.mrf.mxu0
        %v5624 = vadd.f32 %v5595, %v5623
        %5625 = vdwg.mxu0
        %5626 = vmatpush.msra.mxu0 %v5384
        %5627 = vmatpush.msra.mxu0 %v5383
        %5628 = vmatpush.msra.mxu0 %v5382
        %5629 = vmatpush.msra.mxu0 %v5381
        %5630 = vmatpush.msra.mxu0 %v5380
        %5631 = vmatpush.msra.mxu0 %v5379
        %5632 = vmatpush.msra.mxu0 %v5378
        %5633 = vmatpush.msra.mxu0 %v5377
        %5634 = vmatpush.msra.mxu0 %v5376
        %5635 = vmatpush.msra.mxu0 %v5375
        %5636 = vmatpush.msra.mxu0 %v5374
        %5637 = vmatpush.msra.mxu0 %v5373
        %5638 = vmatpush.msra.mxu0 %v5372
        %5639 = vmatpush.msra.mxu0 %v5371
        %5640 = vmatpush.msra.mxu0 %v5370
        %5641 = vmatpush.msra.mxu0 %v5369
        %5642 = vmatmul.f32.gmra.mxu0 %v5246
        %v5643 = vpop.f32.mrf.mxu0
        %v5644 = vadd.f32 %v5615, %v5643
        %5645 = vmatmul.f32.gmra.mxu0 %v5258
        %v5646 = vpop.f32.mrf.mxu0
        %v5647 = vadd.f32 %v5618, %v5646
        %5648 = vmatmul.f32.gmra.mxu0 %v5270
        %v5649 = vpop.f32.mrf.mxu0
        %v5650 = vadd.f32 %v5621, %v5649
        %5651 = vmatmul.f32.gmra.mxu0 %v5282
        %v5652 = vpop.f32.mrf.mxu0
        %v5653 = vadd.f32 %v5624, %v5652
        %5654 = vdwg.mxu0
        %5655 = vmatpush.msra.mxu0 %v5400
        %5656 = vmatpush.msra.mxu0 %v5399
        %5657 = vmatpush.msra.mxu0 %v5398
        %5658 = vmatpush.msra.mxu0 %v5397
        %5659 = vmatpush.msra.mxu0 %v5396
        %5660 = vmatpush.msra.mxu0 %v5395
        %5661 = vmatpush.msra.mxu0 %v5394
        %5662 = vmatpush.msra.mxu0 %v5393
        %5663 = vmatpush.msra.mxu0 %v5392
        %5664 = vmatpush.msra.mxu0 %v5391
        %5665 = vmatpush.msra.mxu0 %v5390
        %5666 = vmatpush.msra.mxu0 %v5389
        %5667 = vmatpush.msra.mxu0 %v5388
        %5668 = vmatpush.msra.mxu0 %v5387
        %5669 = vmatpush.msra.mxu0 %v5386
        %5670 = vmatpush.msra.mxu0 %v5385
        %5671 = vmatmul.f32.gmra.mxu0 %v5247
        %v5672 = vpop.f32.mrf.mxu0
        %v5673 = vadd.f32 %v5644, %v5672
        %5674 = vmatmul.f32.gmra.mxu0 %v5259
        %v5675 = vpop.f32.mrf.mxu0
        %v5676 = vadd.f32 %v5647, %v5675
        %5677 = vmatmul.f32.gmra.mxu0 %v5271
        %v5678 = vpop.f32.mrf.mxu0
        %v5679 = vadd.f32 %v5650, %v5678
        %5680 = vmatmul.f32.gmra.mxu0 %v5283
        %v5681 = vpop.f32.mrf.mxu0
        %v5682 = vadd.f32 %v5653, %v5681
        %5683 = vdwg.mxu0
        %5684 = vmatpush.msra.mxu0 %v5416
        %5685 = vmatpush.msra.mxu0 %v5415
        %5686 = vmatpush.msra.mxu0 %v5414
        %5687 = vmatpush.msra.mxu0 %v5413
        %5688 = vmatpush.msra.mxu0 %v5412
        %5689 = vmatpush.msra.mxu0 %v5411
        %5690 = vmatpush.msra.mxu0 %v5410
        %5691 = vmatpush.msra.mxu0 %v5409
        %5692 = vmatpush.msra.mxu0 %v5408
        %5693 = vmatpush.msra.mxu0 %v5407
        %5694 = vmatpush.msra.mxu0 %v5406
        %5695 = vmatpush.msra.mxu0 %v5405
        %5696 = vmatpush.msra.mxu0 %v5404
        %5697 = vmatpush.msra.mxu0 %v5403
        %5698 = vmatpush.msra.mxu0 %v5402
        %5699 = vmatpush.msra.mxu0 %v5401
        %5700 = vmatmul.f32.gmra.mxu0 %v5248
        %v5701 = vpop.f32.mrf.mxu0
        %v5702 = vadd.f32 %v5673, %v5701
        %5703 = vmatmul.f32.gmra.mxu0 %v5260
        %v5704 = vpop.f32.mrf.mxu0
        %v5705 = vadd.f32 %v5676, %v5704
        %5706 = vmatmul.f32.gmra.mxu0 %v5272
        %v5707 = vpop.f32.mrf.mxu0
        %v5708 = vadd.f32 %v5679, %v5707
        %5709 = vmatmul.f32.gmra.mxu0 %v5284
        %v5710 = vpop.f32.mrf.mxu0
        %v5711 = vadd.f32 %v5682, %v5710
        %5712 = vdwg.mxu0
        %5713 = vmatpush.msra.mxu0 %v5432
        %5714 = vmatpush.msra.mxu0 %v5431
        %5715 = vmatpush.msra.mxu0 %v5430
        %5716 = vmatpush.msra.mxu0 %v5429
        %5717 = vmatpush.msra.mxu0 %v5428
        %5718 = vmatpush.msra.mxu0 %v5427
        %5719 = vmatpush.msra.mxu0 %v5426
        %5720 = vmatpush.msra.mxu0 %v5425
        %5721 = vmatpush.msra.mxu0 %v5424
        %5722 = vmatpush.msra.mxu0 %v5423
        %5723 = vmatpush.msra.mxu0 %v5422
        %5724 = vmatpush.msra.mxu0 %v5421
        %5725 = vmatpush.msra.mxu0 %v5420
        %5726 = vmatpush.msra.mxu0 %v5419
        %5727 = vmatpush.msra.mxu0 %v5418
        %5728 = vmatpush.msra.mxu0 %v5417
        %5729 = vmatmul.f32.gmra.mxu0 %v5249
        %v5730 = vpop.f32.mrf.mxu0
        %v5731 = vadd.f32 %v5702, %v5730
        %5732 = vmatmul.f32.gmra.mxu0 %v5261
        %v5733 = vpop.f32.mrf.mxu0
        %v5734 = vadd.f32 %v5705, %v5733
        %5735 = vmatmul.f32.gmra.mxu0 %v5273
        %v5736 = vpop.f32.mrf.mxu0
        %v5737 = vadd.f32 %v5708, %v5736
        %5738 = vmatmul.f32.gmra.mxu0 %v5285
        %v5739 = vpop.f32.mrf.mxu0
        %v5740 = vadd.f32 %v5711, %v5739
        %5741 = vdwg.mxu0
        %5742 = vmatpush.msra.mxu0 %v5448
        %5743 = vmatpush.msra.mxu0 %v5447
        %5744 = vmatpush.msra.mxu0 %v5446
        %5745 = vmatpush.msra.mxu0 %v5445
        %5746 = vmatpush.msra.mxu0 %v5444
        %5747 = vmatpush.msra.mxu0 %v5443
        %5748 = vmatpush.msra.mxu0 %v5442
        %5749 = vmatpush.msra.mxu0 %v5441
        %5750 = vmatpush.msra.mxu0 %v5440
        %5751 = vmatpush.msra.mxu0 %v5439
        %5752 = vmatpush.msra.mxu0 %v5438
        %5753 = vmatpush.msra.mxu0 %v5437
        %5754 = vmatpush.msra.mxu0 %v5436
        %5755 = vmatpush.msra.mxu0 %v5435
        %5756 = vmatpush.msra.mxu0 %v5434
        %5757 = vmatpush.msra.mxu0 %v5433
        %5758 = vmatmul.f32.gmra.mxu0 %v5250
        %v5759 = vpop.f32.mrf.mxu0
        %v5760 = vadd.f32 %v5731, %v5759
        %5761 = vmatmul.f32.gmra.mxu0 %v5262
        %v5762 = vpop.f32.mrf.mxu0
        %v5763 = vadd.f32 %v5734, %v5762
        %5764 = vmatmul.f32.gmra.mxu0 %v5274
        %v5765 = vpop.f32.mrf.mxu0
        %v5766 = vadd.f32 %v5737, %v5765
        %5767 = vmatmul.f32.gmra.mxu0 %v5286
        %v5768 = vpop.f32.mrf.mxu0
        %v5769 = vadd.f32 %v5740, %v5768
        %5770 = vdwg.mxu0
        %5771 = vmatpush.msra.mxu0 %v5464
        %5772 = vmatpush.msra.mxu0 %v5463
        %5773 = vmatpush.msra.mxu0 %v5462
        %5774 = vmatpush.msra.mxu0 %v5461
        %5775 = vmatpush.msra.mxu0 %v5460
        %5776 = vmatpush.msra.mxu0 %v5459
        %5777 = vmatpush.msra.mxu0 %v5458
        %5778 = vmatpush.msra.mxu0 %v5457
        %5779 = vmatpush.msra.mxu0 %v5456
        %5780 = vmatpush.msra.mxu0 %v5455
        %5781 = vmatpush.msra.mxu0 %v5454
        %5782 = vmatpush.msra.mxu0 %v5453
        %5783 = vmatpush.msra.mxu0 %v5452
        %5784 = vmatpush.msra.mxu0 %v5451
        %5785 = vmatpush.msra.mxu0 %v5450
        %5786 = vmatpush.msra.mxu0 %v5449
        %5787 = vmatmul.f32.gmra.mxu0 %v5251
        %v5788 = vpop.f32.mrf.mxu0
        %v5789 = vadd.f32 %v5760, %v5788
        %5790 = vmatmul.f32.gmra.mxu0 %v5263
        %v5791 = vpop.f32.mrf.mxu0
        %v5792 = vadd.f32 %v5763, %v5791
        %5793 = vmatmul.f32.gmra.mxu0 %v5275
        %v5794 = vpop.f32.mrf.mxu0
        %v5795 = vadd.f32 %v5766, %v5794
        %5796 = vmatmul.f32.gmra.mxu0 %v5287
        %v5797 = vpop.f32.mrf.mxu0
        %v5798 = vadd.f32 %v5769, %v5797
        %5799 = vdwg.mxu0
        %5800 = vmatpush.msra.mxu0 %v5480
        %5801 = vmatpush.msra.mxu0 %v5479
        %5802 = vmatpush.msra.mxu0 %v5478
        %5803 = vmatpush.msra.mxu0 %v5477
        %5804 = vmatpush.msra.mxu0 %v5476
        %5805 = vmatpush.msra.mxu0 %v5475
        %5806 = vmatpush.msra.mxu0 %v5474
        %5807 = vmatpush.msra.mxu0 %v5473
        %5808 = vmatpush.msra.mxu0 %v5472
        %5809 = vmatpush.msra.mxu0 %v5471
        %5810 = vmatpush.msra.mxu0 %v5470
        %5811 = vmatpush.msra.mxu0 %v5469
        %5812 = vmatpush.msra.mxu0 %v5468
        %5813 = vmatpush.msra.mxu0 %v5467
        %5814 = vmatpush.msra.mxu0 %v5466
        %5815 = vmatpush.msra.mxu0 %v5465
        %5816 = vmatmul.f32.gmra.mxu0 %v5252
        %v5817 = vpop.f32.mrf.mxu0
        %v5818 = vadd.f32 %v5789, %v5817
        %5819 = vmatmul.f32.gmra.mxu0 %v5264
        %v5820 = vpop.f32.mrf.mxu0
        %v5821 = vadd.f32 %v5792, %v5820
        %5822 = vmatmul.f32.gmra.mxu0 %v5276
        %v5823 = vpop.f32.mrf.mxu0
        %v5824 = vadd.f32 %v5795, %v5823
        %5825 = vmatmul.f32.gmra.mxu0 %v5288
        %v5826 = vpop.f32.mrf.mxu0
        %v5827 = vadd.f32 %v5798, %v5826
        %5828 = vdwg.mxu0
        %v5829 = vmul.f32 %v5818, %v4015
        %v5830 = vmul.f32 %v5821, %v4015
        %v5831 = vmul.f32 %v5824, %v4015
        %v5832 = vmul.f32 %v5827, %v4015
        %v5833 = vadd.f32 %v5829, %v4020
        %v5834 = vadd.f32 %v5830, %v4020
        %v5835 = vadd.f32 %v5831, %v4020
        %v5836 = vadd.f32 %v5832, %v4020
        %v5837 = vmax.f32 %v5833, 0.0
        %v5838 = vmax.f32 %v5834, 0.0
        %v5839 = vmax.f32 %v5835, 0.0
        %v5840 = vmax.f32 %v5836, 0.0
        %5841 = vst [vmem:[#allocation3 + $0x18] sm:$0xff] %v5837
        %5842 = vst [vmem:[#allocation3 + $0x58] sm:$0xff] %v5838
        %5843 = vst [vmem:[#allocation3 + $0x98] sm:$0xff] %v5839
        %5844 = vst [vmem:[#allocation3 + $0xd8] sm:$0xff] %v5840
        %v5845 = vld [vmem:[#allocation2 + $0xc0] sm:$0xff]
        %v5846 = vld [vmem:[#allocation2 + $0xc8] sm:$0xff]
        %v5847 = vld [vmem:[#allocation2 + $0xd0] sm:$0xff]
        %v5848 = vld [vmem:[#allocation2 + $0xd8] sm:$0xff]
        %v5849 = vld [vmem:[#allocation2 + $0xe0] sm:$0xff]
        %v5850 = vld [vmem:[#allocation2 + $0xe8] sm:$0xff]
        %v5851 = vld [vmem:[#allocation2 + $0xf0] sm:$0xff]
        %v5852 = vld [vmem:[#allocation2 + $0xf8] sm:$0xff]
        %v5853 = vld [vmem:[#allocation2 + $0x100] sm:$0xff]
        %v5854 = vld [vmem:[#allocation2 + $0x108] sm:$0xff]
        %v5855 = vld [vmem:[#allocation2 + $0x110] sm:$0xff]
        %v5856 = vld [vmem:[#allocation2 + $0x118] sm:$0xff]
        %v5857 = vld [vmem:[#allocation2 + $0x270] sm:$0xff]
        %v5858 = vld [vmem:[#allocation2 + $0x278] sm:$0xff]
        %v5859 = vld [vmem:[#allocation2 + $0x280] sm:$0xff]
        %v5860 = vld [vmem:[#allocation2 + $0x288] sm:$0xff]
        %v5861 = vld [vmem:[#allocation2 + $0x290] sm:$0xff]
        %v5862 = vld [vmem:[#allocation2 + $0x298] sm:$0xff]
        %v5863 = vld [vmem:[#allocation2 + $0x2a0] sm:$0xff]
        %v5864 = vld [vmem:[#allocation2 + $0x2a8] sm:$0xff]
        %v5865 = vld [vmem:[#allocation2 + $0x2b0] sm:$0xff]
        %v5866 = vld [vmem:[#allocation2 + $0x2b8] sm:$0xff]
        %v5867 = vld [vmem:[#allocation2 + $0x2c0] sm:$0xff]
        %v5868 = vld [vmem:[#allocation2 + $0x2c8] sm:$0xff]
        %v5869 = vld [vmem:[#allocation2 + $0x420] sm:$0xff]
        %v5870 = vld [vmem:[#allocation2 + $0x428] sm:$0xff]
        %v5871 = vld [vmem:[#allocation2 + $0x430] sm:$0xff]
        %v5872 = vld [vmem:[#allocation2 + $0x438] sm:$0xff]
        %v5873 = vld [vmem:[#allocation2 + $0x440] sm:$0xff]
        %v5874 = vld [vmem:[#allocation2 + $0x448] sm:$0xff]
        %v5875 = vld [vmem:[#allocation2 + $0x450] sm:$0xff]
        %v5876 = vld [vmem:[#allocation2 + $0x458] sm:$0xff]
        %v5877 = vld [vmem:[#allocation2 + $0x460] sm:$0xff]
        %v5878 = vld [vmem:[#allocation2 + $0x468] sm:$0xff]
        %v5879 = vld [vmem:[#allocation2 + $0x470] sm:$0xff]
        %v5880 = vld [vmem:[#allocation2 + $0x478] sm:$0xff]
        %v5881 = vld [vmem:[#allocation2 + $0x5d0] sm:$0xff]
        %v5882 = vld [vmem:[#allocation2 + $0x5d8] sm:$0xff]
        %v5883 = vld [vmem:[#allocation2 + $0x5e0] sm:$0xff]
        %v5884 = vld [vmem:[#allocation2 + $0x5e8] sm:$0xff]
        %v5885 = vld [vmem:[#allocation2 + $0x5f0] sm:$0xff]
        %v5886 = vld [vmem:[#allocation2 + $0x5f8] sm:$0xff]
        %v5887 = vld [vmem:[#allocation2 + $0x600] sm:$0xff]
        %v5888 = vld [vmem:[#allocation2 + $0x608] sm:$0xff]
        %v5889 = vld [vmem:[#allocation2 + $0x610] sm:$0xff]
        %v5890 = vld [vmem:[#allocation2 + $0x618] sm:$0xff]
        %v5891 = vld [vmem:[#allocation2 + $0x620] sm:$0xff]
        %v5892 = vld [vmem:[#allocation2 + $0x628] sm:$0xff]
        %v5893 = vld [vmem:[%s2] sm:$0xff]
        %v5894 = vld [vmem:[%s2 + $0x8] sm:$0xff]
        %v5895 = vld [vmem:[%s2 + $0x10] sm:$0xff]
        %v5896 = vld [vmem:[%s2 + $0x18] sm:$0xff]
        %v5897 = vld [vmem:[%s2 + $0x20] sm:$0xff]
        %v5898 = vld [vmem:[%s2 + $0x28] sm:$0xff]
        %v5899 = vld [vmem:[%s2 + $0x30] sm:$0xff]
        %v5900 = vld [vmem:[%s2 + $0x38] sm:$0xff]
        %v5901 = vld [vmem:[%s2 + $0x40] sm:$0xff]
        %v5902 = vld [vmem:[%s2 + $0x48] sm:$0xff]
        %v5903 = vld [vmem:[%s2 + $0x50] sm:$0xff]
        %v5904 = vld [vmem:[%s2 + $0x58] sm:$0xff]
        %v5905 = vld [vmem:[%s2 + $0x60] sm:$0xff]
        %v5906 = vld [vmem:[%s2 + $0x68] sm:$0xff]
        %v5907 = vld [vmem:[%s2 + $0x70] sm:$0xff]
        %v5908 = vld [vmem:[%s2 + $0x78] sm:$0xff]
        %v5909 = vld [vmem:[%s2 + $0x80] sm:$0xff]
        %v5910 = vld [vmem:[%s2 + $0x88] sm:$0xff]
        %v5911 = vld [vmem:[%s2 + $0x90] sm:$0xff]
        %v5912 = vld [vmem:[%s2 + $0x98] sm:$0xff]
        %v5913 = vld [vmem:[%s2 + $0xa0] sm:$0xff]
        %v5914 = vld [vmem:[%s2 + $0xa8] sm:$0xff]
        %v5915 = vld [vmem:[%s2 + $0xb0] sm:$0xff]
        %v5916 = vld [vmem:[%s2 + $0xb8] sm:$0xff]
        %v5917 = vld [vmem:[%s2 + $0xc0] sm:$0xff]
        %v5918 = vld [vmem:[%s2 + $0xc8] sm:$0xff]
        %v5919 = vld [vmem:[%s2 + $0xd0] sm:$0xff]
        %v5920 = vld [vmem:[%s2 + $0xd8] sm:$0xff]
        %v5921 = vld [vmem:[%s2 + $0xe0] sm:$0xff]
        %v5922 = vld [vmem:[%s2 + $0xe8] sm:$0xff]
        %v5923 = vld [vmem:[%s2 + $0xf0] sm:$0xff]
        %v5924 = vld [vmem:[%s2 + $0xf8] sm:$0xff]
        %v5925 = vld [vmem:[%s2 + $0x100] sm:$0xff]
        %v5926 = vld [vmem:[%s2 + $0x108] sm:$0xff]
        %v5927 = vld [vmem:[%s2 + $0x110] sm:$0xff]
        %v5928 = vld [vmem:[%s2 + $0x118] sm:$0xff]
        %v5929 = vld [vmem:[%s2 + $0x120] sm:$0xff]
        %v5930 = vld [vmem:[%s2 + $0x128] sm:$0xff]
        %v5931 = vld [vmem:[%s2 + $0x130] sm:$0xff]
        %v5932 = vld [vmem:[%s2 + $0x138] sm:$0xff]
        %v5933 = vld [vmem:[%s2 + $0x140] sm:$0xff]
        %v5934 = vld [vmem:[%s2 + $0x148] sm:$0xff]
        %v5935 = vld [vmem:[%s2 + $0x150] sm:$0xff]
        %v5936 = vld [vmem:[%s2 + $0x158] sm:$0xff]
        %v5937 = vld [vmem:[%s2 + $0x160] sm:$0xff]
        %v5938 = vld [vmem:[%s2 + $0x168] sm:$0xff]
        %v5939 = vld [vmem:[%s2 + $0x170] sm:$0xff]
        %v5940 = vld [vmem:[%s2 + $0x178] sm:$0xff]
        %v5941 = vld [vmem:[%s2 + $0x180] sm:$0xff]
        %v5942 = vld [vmem:[%s2 + $0x188] sm:$0xff]
        %v5943 = vld [vmem:[%s2 + $0x190] sm:$0xff]
        %v5944 = vld [vmem:[%s2 + $0x198] sm:$0xff]
        %v5945 = vld [vmem:[%s2 + $0x1a0] sm:$0xff]
        %v5946 = vld [vmem:[%s2 + $0x1a8] sm:$0xff]
        %v5947 = vld [vmem:[%s2 + $0x1b0] sm:$0xff]
        %v5948 = vld [vmem:[%s2 + $0x1b8] sm:$0xff]
        %v5949 = vld [vmem:[%s2 + $0x1c0] sm:$0xff]
        %v5950 = vld [vmem:[%s2 + $0x1c8] sm:$0xff]
        %v5951 = vld [vmem:[%s2 + $0x1d0] sm:$0xff]
        %v5952 = vld [vmem:[%s2 + $0x1d8] sm:$0xff]
        %v5953 = vld [vmem:[%s2 + $0x1e0] sm:$0xff]
        %v5954 = vld [vmem:[%s2 + $0x1e8] sm:$0xff]
        %v5955 = vld [vmem:[%s2 + $0x1f0] sm:$0xff]
        %v5956 = vld [vmem:[%s2 + $0x1f8] sm:$0xff]
        %v5957 = vld [vmem:[%s2 + $0x200] sm:$0xff]
        %v5958 = vld [vmem:[%s2 + $0x208] sm:$0xff]
        %v5959 = vld [vmem:[%s2 + $0x210] sm:$0xff]
        %v5960 = vld [vmem:[%s2 + $0x218] sm:$0xff]
        %v5961 = vld [vmem:[%s2 + $0x220] sm:$0xff]
        %v5962 = vld [vmem:[%s2 + $0x228] sm:$0xff]
        %v5963 = vld [vmem:[%s2 + $0x230] sm:$0xff]
        %v5964 = vld [vmem:[%s2 + $0x238] sm:$0xff]
        %v5965 = vld [vmem:[%s2 + $0x240] sm:$0xff]
        %v5966 = vld [vmem:[%s2 + $0x248] sm:$0xff]
        %v5967 = vld [vmem:[%s2 + $0x250] sm:$0xff]
        %v5968 = vld [vmem:[%s2 + $0x258] sm:$0xff]
        %v5969 = vld [vmem:[%s2 + $0x260] sm:$0xff]
        %v5970 = vld [vmem:[%s2 + $0x268] sm:$0xff]
        %v5971 = vld [vmem:[%s2 + $0x270] sm:$0xff]
        %v5972 = vld [vmem:[%s2 + $0x278] sm:$0xff]
        %v5973 = vld [vmem:[%s2 + $0x280] sm:$0xff]
        %v5974 = vld [vmem:[%s2 + $0x288] sm:$0xff]
        %v5975 = vld [vmem:[%s2 + $0x290] sm:$0xff]
        %v5976 = vld [vmem:[%s2 + $0x298] sm:$0xff]
        %v5977 = vld [vmem:[%s2 + $0x2a0] sm:$0xff]
        %v5978 = vld [vmem:[%s2 + $0x2a8] sm:$0xff]
        %v5979 = vld [vmem:[%s2 + $0x2b0] sm:$0xff]
        %v5980 = vld [vmem:[%s2 + $0x2b8] sm:$0xff]
        %v5981 = vld [vmem:[%s2 + $0x2c0] sm:$0xff]
        %v5982 = vld [vmem:[%s2 + $0x2c8] sm:$0xff]
        %v5983 = vld [vmem:[%s2 + $0x2d0] sm:$0xff]
        %v5984 = vld [vmem:[%s2 + $0x2d8] sm:$0xff]
        %v5985 = vld [vmem:[%s2 + $0x2e0] sm:$0xff]
        %v5986 = vld [vmem:[%s2 + $0x2e8] sm:$0xff]
        %v5987 = vld [vmem:[%s2 + $0x2f0] sm:$0xff]
        %v5988 = vld [vmem:[%s2 + $0x2f8] sm:$0xff]
        %v5989 = vld [vmem:[%s2 + $0x300] sm:$0xff]
        %v5990 = vld [vmem:[%s2 + $0x308] sm:$0xff]
        %v5991 = vld [vmem:[%s2 + $0x310] sm:$0xff]
        %v5992 = vld [vmem:[%s2 + $0x318] sm:$0xff]
        %v5993 = vld [vmem:[%s2 + $0x320] sm:$0xff]
        %v5994 = vld [vmem:[%s2 + $0x328] sm:$0xff]
        %v5995 = vld [vmem:[%s2 + $0x330] sm:$0xff]
        %v5996 = vld [vmem:[%s2 + $0x338] sm:$0xff]
        %v5997 = vld [vmem:[%s2 + $0x340] sm:$0xff]
        %v5998 = vld [vmem:[%s2 + $0x348] sm:$0xff]
        %v5999 = vld [vmem:[%s2 + $0x350] sm:$0xff]
        %v6000 = vld [vmem:[%s2 + $0x358] sm:$0xff]
        %v6001 = vld [vmem:[%s2 + $0x360] sm:$0xff]
        %v6002 = vld [vmem:[%s2 + $0x368] sm:$0xff]
        %v6003 = vld [vmem:[%s2 + $0x370] sm:$0xff]
        %v6004 = vld [vmem:[%s2 + $0x378] sm:$0xff]
        %v6005 = vld [vmem:[%s2 + $0x380] sm:$0xff]
        %v6006 = vld [vmem:[%s2 + $0x388] sm:$0xff]
        %v6007 = vld [vmem:[%s2 + $0x390] sm:$0xff]
        %v6008 = vld [vmem:[%s2 + $0x398] sm:$0xff]
        %v6009 = vld [vmem:[%s2 + $0x3a0] sm:$0xff]
        %v6010 = vld [vmem:[%s2 + $0x3a8] sm:$0xff]
        %v6011 = vld [vmem:[%s2 + $0x3b0] sm:$0xff]
        %v6012 = vld [vmem:[%s2 + $0x3b8] sm:$0xff]
        %v6013 = vld [vmem:[%s2 + $0x3c0] sm:$0xff]
        %v6014 = vld [vmem:[%s2 + $0x3c8] sm:$0xff]
        %v6015 = vld [vmem:[%s2 + $0x3d0] sm:$0xff]
        %v6016 = vld [vmem:[%s2 + $0x3d8] sm:$0xff]
        %v6017 = vld [vmem:[%s2 + $0x3e0] sm:$0xff]
        %v6018 = vld [vmem:[%s2 + $0x3e8] sm:$0xff]
        %v6019 = vld [vmem:[%s2 + $0x3f0] sm:$0xff]
        %v6020 = vld [vmem:[%s2 + $0x3f8] sm:$0xff]
        %v6021 = vld [vmem:[%s2 + $0x400] sm:$0xff]
        %v6022 = vld [vmem:[%s2 + $0x408] sm:$0xff]
        %v6023 = vld [vmem:[%s2 + $0x410] sm:$0xff]
        %v6024 = vld [vmem:[%s2 + $0x418] sm:$0xff]
        %v6025 = vld [vmem:[%s2 + $0x420] sm:$0xff]
        %v6026 = vld [vmem:[%s2 + $0x428] sm:$0xff]
        %v6027 = vld [vmem:[%s2 + $0x430] sm:$0xff]
        %v6028 = vld [vmem:[%s2 + $0x438] sm:$0xff]
        %v6029 = vld [vmem:[%s2 + $0x440] sm:$0xff]
        %v6030 = vld [vmem:[%s2 + $0x448] sm:$0xff]
        %v6031 = vld [vmem:[%s2 + $0x450] sm:$0xff]
        %v6032 = vld [vmem:[%s2 + $0x458] sm:$0xff]
        %v6033 = vld [vmem:[%s2 + $0x460] sm:$0xff]
        %v6034 = vld [vmem:[%s2 + $0x468] sm:$0xff]
        %v6035 = vld [vmem:[%s2 + $0x470] sm:$0xff]
        %v6036 = vld [vmem:[%s2 + $0x478] sm:$0xff]
        %v6037 = vld [vmem:[%s2 + $0x480] sm:$0xff]
        %v6038 = vld [vmem:[%s2 + $0x488] sm:$0xff]
        %v6039 = vld [vmem:[%s2 + $0x490] sm:$0xff]
        %v6040 = vld [vmem:[%s2 + $0x498] sm:$0xff]
        %v6041 = vld [vmem:[%s2 + $0x4a0] sm:$0xff]
        %v6042 = vld [vmem:[%s2 + $0x4a8] sm:$0xff]
        %v6043 = vld [vmem:[%s2 + $0x4b0] sm:$0xff]
        %v6044 = vld [vmem:[%s2 + $0x4b8] sm:$0xff]
        %v6045 = vld [vmem:[%s2 + $0x4c0] sm:$0xff]
        %v6046 = vld [vmem:[%s2 + $0x4c8] sm:$0xff]
        %v6047 = vld [vmem:[%s2 + $0x4d0] sm:$0xff]
        %v6048 = vld [vmem:[%s2 + $0x4d8] sm:$0xff]
        %v6049 = vld [vmem:[%s2 + $0x4e0] sm:$0xff]
        %v6050 = vld [vmem:[%s2 + $0x4e8] sm:$0xff]
        %v6051 = vld [vmem:[%s2 + $0x4f0] sm:$0xff]
        %v6052 = vld [vmem:[%s2 + $0x4f8] sm:$0xff]
        %v6053 = vld [vmem:[%s2 + $0x500] sm:$0xff]
        %v6054 = vld [vmem:[%s2 + $0x508] sm:$0xff]
        %v6055 = vld [vmem:[%s2 + $0x510] sm:$0xff]
        %v6056 = vld [vmem:[%s2 + $0x518] sm:$0xff]
        %v6057 = vld [vmem:[%s2 + $0x520] sm:$0xff]
        %v6058 = vld [vmem:[%s2 + $0x528] sm:$0xff]
        %v6059 = vld [vmem:[%s2 + $0x530] sm:$0xff]
        %v6060 = vld [vmem:[%s2 + $0x538] sm:$0xff]
        %v6061 = vld [vmem:[%s2 + $0x540] sm:$0xff]
        %v6062 = vld [vmem:[%s2 + $0x548] sm:$0xff]
        %v6063 = vld [vmem:[%s2 + $0x550] sm:$0xff]
        %v6064 = vld [vmem:[%s2 + $0x558] sm:$0xff]
        %v6065 = vld [vmem:[%s2 + $0x560] sm:$0xff]
        %v6066 = vld [vmem:[%s2 + $0x568] sm:$0xff]
        %v6067 = vld [vmem:[%s2 + $0x570] sm:$0xff]
        %v6068 = vld [vmem:[%s2 + $0x578] sm:$0xff]
        %v6069 = vld [vmem:[%s2 + $0x580] sm:$0xff]
        %v6070 = vld [vmem:[%s2 + $0x588] sm:$0xff]
        %v6071 = vld [vmem:[%s2 + $0x590] sm:$0xff]
        %v6072 = vld [vmem:[%s2 + $0x598] sm:$0xff]
        %v6073 = vld [vmem:[%s2 + $0x5a0] sm:$0xff]
        %v6074 = vld [vmem:[%s2 + $0x5a8] sm:$0xff]
        %v6075 = vld [vmem:[%s2 + $0x5b0] sm:$0xff]
        %v6076 = vld [vmem:[%s2 + $0x5b8] sm:$0xff]
        %v6077 = vld [vmem:[%s2 + $0x5c0] sm:$0xff]
        %v6078 = vld [vmem:[%s2 + $0x5c8] sm:$0xff]
        %v6079 = vld [vmem:[%s2 + $0x5d0] sm:$0xff]
        %v6080 = vld [vmem:[%s2 + $0x5d8] sm:$0xff]
        %v6081 = vld [vmem:[%s2 + $0x5e0] sm:$0xff]
        %v6082 = vld [vmem:[%s2 + $0x5e8] sm:$0xff]
        %v6083 = vld [vmem:[%s2 + $0x5f0] sm:$0xff]
        %v6084 = vld [vmem:[%s2 + $0x5f8] sm:$0xff]
        %6085 = vmatpush.msra.mxu0 %v5908
        %6086 = vmatpush.msra.mxu0 %v5907
        %6087 = vmatpush.msra.mxu0 %v5906
        %6088 = vmatpush.msra.mxu0 %v5905
        %6089 = vmatpush.msra.mxu0 %v5904
        %6090 = vmatpush.msra.mxu0 %v5903
        %6091 = vmatpush.msra.mxu0 %v5902
        %6092 = vmatpush.msra.mxu0 %v5901
        %6093 = vmatpush.msra.mxu0 %v5900
        %6094 = vmatpush.msra.mxu0 %v5899
        %6095 = vmatpush.msra.mxu0 %v5898
        %6096 = vmatpush.msra.mxu0 %v5897
        %6097 = vmatpush.msra.mxu0 %v5896
        %6098 = vmatpush.msra.mxu0 %v5895
        %6099 = vmatpush.msra.mxu0 %v5894
        %6100 = vmatpush.msra.mxu0 %v5893
        %6101 = vmatmul.f32.gmra.mxu0 %v5845
        %v6102 = vpop.f32.mrf.mxu0
        %v6103 = vadd.f32 0.0, %v6102
        %6104 = vmatmul.f32.gmra.mxu0 %v5857
        %v6105 = vpop.f32.mrf.mxu0
        %v6106 = vadd.f32 0.0, %v6105
        %6107 = vmatmul.f32.gmra.mxu0 %v5869
        %v6108 = vpop.f32.mrf.mxu0
        %v6109 = vadd.f32 0.0, %v6108
        %6110 = vmatmul.f32.gmra.mxu0 %v5881
        %v6111 = vpop.f32.mrf.mxu0
        %v6112 = vadd.f32 0.0, %v6111
        %6113 = vdwg.mxu0
        %6114 = vmatpush.msra.mxu0 %v5924
        %6115 = vmatpush.msra.mxu0 %v5923
        %6116 = vmatpush.msra.mxu0 %v5922
        %6117 = vmatpush.msra.mxu0 %v5921
        %6118 = vmatpush.msra.mxu0 %v5920
        %6119 = vmatpush.msra.mxu0 %v5919
        %6120 = vmatpush.msra.mxu0 %v5918
        %6121 = vmatpush.msra.mxu0 %v5917
        %6122 = vmatpush.msra.mxu0 %v5916
        %6123 = vmatpush.msra.mxu0 %v5915
        %6124 = vmatpush.msra.mxu0 %v5914
        %6125 = vmatpush.msra.mxu0 %v5913
        %6126 = vmatpush.msra.mxu0 %v5912
        %6127 = vmatpush.msra.mxu0 %v5911
        %6128 = vmatpush.msra.mxu0 %v5910
        %6129 = vmatpush.msra.mxu0 %v5909
        %6130 = vmatmul.f32.gmra.mxu0 %v5846
        %v6131 = vpop.f32.mrf.mxu0
        %v6132 = vadd.f32 %v6103, %v6131
        %6133 = vmatmul.f32.gmra.mxu0 %v5858
        %v6134 = vpop.f32.mrf.mxu0
        %v6135 = vadd.f32 %v6106, %v6134
        %6136 = vmatmul.f32.gmra.mxu0 %v5870
        %v6137 = vpop.f32.mrf.mxu0
        %v6138 = vadd.f32 %v6109, %v6137
        %6139 = vmatmul.f32.gmra.mxu0 %v5882
        %v6140 = vpop.f32.mrf.mxu0
        %v6141 = vadd.f32 %v6112, %v6140
        %6142 = vdwg.mxu0
        %6143 = vmatpush.msra.mxu0 %v5940
        %6144 = vmatpush.msra.mxu0 %v5939
        %6145 = vmatpush.msra.mxu0 %v5938
        %6146 = vmatpush.msra.mxu0 %v5937
        %6147 = vmatpush.msra.mxu0 %v5936
        %6148 = vmatpush.msra.mxu0 %v5935
        %6149 = vmatpush.msra.mxu0 %v5934
        %6150 = vmatpush.msra.mxu0 %v5933
        %6151 = vmatpush.msra.mxu0 %v5932
        %6152 = vmatpush.msra.mxu0 %v5931
        %6153 = vmatpush.msra.mxu0 %v5930
        %6154 = vmatpush.msra.mxu0 %v5929
        %6155 = vmatpush.msra.mxu0 %v5928
        %6156 = vmatpush.msra.mxu0 %v5927
        %6157 = vmatpush.msra.mxu0 %v5926
        %6158 = vmatpush.msra.mxu0 %v5925
        %6159 = vmatmul.f32.gmra.mxu0 %v5847
        %v6160 = vpop.f32.mrf.mxu0
        %v6161 = vadd.f32 %v6132, %v6160
        %6162 = vmatmul.f32.gmra.mxu0 %v5859
        %v6163 = vpop.f32.mrf.mxu0
        %v6164 = vadd.f32 %v6135, %v6163
        %6165 = vmatmul.f32.gmra.mxu0 %v5871
        %v6166 = vpop.f32.mrf.mxu0
        %v6167 = vadd.f32 %v6138, %v6166
        %6168 = vmatmul.f32.gmra.mxu0 %v5883
        %v6169 = vpop.f32.mrf.mxu0
        %v6170 = vadd.f32 %v6141, %v6169
        %6171 = vdwg.mxu0
        %6172 = vmatpush.msra.mxu0 %v5956
        %6173 = vmatpush.msra.mxu0 %v5955
        %6174 = vmatpush.msra.mxu0 %v5954
        %6175 = vmatpush.msra.mxu0 %v5953
        %6176 = vmatpush.msra.mxu0 %v5952
        %6177 = vmatpush.msra.mxu0 %v5951
        %6178 = vmatpush.msra.mxu0 %v5950
        %6179 = vmatpush.msra.mxu0 %v5949
        %6180 = vmatpush.msra.mxu0 %v5948
        %6181 = vmatpush.msra.mxu0 %v5947
        %6182 = vmatpush.msra.mxu0 %v5946
        %6183 = vmatpush.msra.mxu0 %v5945
        %6184 = vmatpush.msra.mxu0 %v5944
        %6185 = vmatpush.msra.mxu0 %v5943
        %6186 = vmatpush.msra.mxu0 %v5942
        %6187 = vmatpush.msra.mxu0 %v5941
        %6188 = vmatmul.f32.gmra.mxu0 %v5848
        %v6189 = vpop.f32.mrf.mxu0
        %v6190 = vadd.f32 %v6161, %v6189
        %6191 = vmatmul.f32.gmra.mxu0 %v5860
        %v6192 = vpop.f32.mrf.mxu0
        %v6193 = vadd.f32 %v6164, %v6192
        %6194 = vmatmul.f32.gmra.mxu0 %v5872
        %v6195 = vpop.f32.mrf.mxu0
        %v6196 = vadd.f32 %v6167, %v6195
        %6197 = vmatmul.f32.gmra.mxu0 %v5884
        %v6198 = vpop.f32.mrf.mxu0
        %v6199 = vadd.f32 %v6170, %v6198
        %6200 = vdwg.mxu0
        %6201 = vmatpush.msra.mxu0 %v5972
        %6202 = vmatpush.msra.mxu0 %v5971
        %6203 = vmatpush.msra.mxu0 %v5970
        %6204 = vmatpush.msra.mxu0 %v5969
        %6205 = vmatpush.msra.mxu0 %v5968
        %6206 = vmatpush.msra.mxu0 %v5967
        %6207 = vmatpush.msra.mxu0 %v5966
        %6208 = vmatpush.msra.mxu0 %v5965
        %6209 = vmatpush.msra.mxu0 %v5964
        %6210 = vmatpush.msra.mxu0 %v5963
        %6211 = vmatpush.msra.mxu0 %v5962
        %6212 = vmatpush.msra.mxu0 %v5961
        %6213 = vmatpush.msra.mxu0 %v5960
        %6214 = vmatpush.msra.mxu0 %v5959
        %6215 = vmatpush.msra.mxu0 %v5958
        %6216 = vmatpush.msra.mxu0 %v5957
        %6217 = vmatmul.f32.gmra.mxu0 %v5849
        %v6218 = vpop.f32.mrf.mxu0
        %v6219 = vadd.f32 %v6190, %v6218
        %6220 = vmatmul.f32.gmra.mxu0 %v5861
        %v6221 = vpop.f32.mrf.mxu0
        %v6222 = vadd.f32 %v6193, %v6221
        %6223 = vmatmul.f32.gmra.mxu0 %v5873
        %v6224 = vpop.f32.mrf.mxu0
        %v6225 = vadd.f32 %v6196, %v6224
        %6226 = vmatmul.f32.gmra.mxu0 %v5885
        %v6227 = vpop.f32.mrf.mxu0
        %v6228 = vadd.f32 %v6199, %v6227
        %6229 = vdwg.mxu0
        %6230 = vmatpush.msra.mxu0 %v5988
        %6231 = vmatpush.msra.mxu0 %v5987
        %6232 = vmatpush.msra.mxu0 %v5986
        %6233 = vmatpush.msra.mxu0 %v5985
        %6234 = vmatpush.msra.mxu0 %v5984
        %6235 = vmatpush.msra.mxu0 %v5983
        %6236 = vmatpush.msra.mxu0 %v5982
        %6237 = vmatpush.msra.mxu0 %v5981
        %6238 = vmatpush.msra.mxu0 %v5980
        %6239 = vmatpush.msra.mxu0 %v5979
        %6240 = vmatpush.msra.mxu0 %v5978
        %6241 = vmatpush.msra.mxu0 %v5977
        %6242 = vmatpush.msra.mxu0 %v5976
        %6243 = vmatpush.msra.mxu0 %v5975
        %6244 = vmatpush.msra.mxu0 %v5974
        %6245 = vmatpush.msra.mxu0 %v5973
        %6246 = vmatmul.f32.gmra.mxu0 %v5850
        %v6247 = vpop.f32.mrf.mxu0
        %v6248 = vadd.f32 %v6219, %v6247
        %6249 = vmatmul.f32.gmra.mxu0 %v5862
        %v6250 = vpop.f32.mrf.mxu0
        %v6251 = vadd.f32 %v6222, %v6250
        %6252 = vmatmul.f32.gmra.mxu0 %v5874
        %v6253 = vpop.f32.mrf.mxu0
        %v6254 = vadd.f32 %v6225, %v6253
        %6255 = vmatmul.f32.gmra.mxu0 %v5886
        %v6256 = vpop.f32.mrf.mxu0
        %v6257 = vadd.f32 %v6228, %v6256
        %6258 = vdwg.mxu0
        %6259 = vmatpush.msra.mxu0 %v6004
        %6260 = vmatpush.msra.mxu0 %v6003
        %6261 = vmatpush.msra.mxu0 %v6002
        %6262 = vmatpush.msra.mxu0 %v6001
        %6263 = vmatpush.msra.mxu0 %v6000
        %6264 = vmatpush.msra.mxu0 %v5999
        %6265 = vmatpush.msra.mxu0 %v5998
        %6266 = vmatpush.msra.mxu0 %v5997
        %6267 = vmatpush.msra.mxu0 %v5996
        %6268 = vmatpush.msra.mxu0 %v5995
        %6269 = vmatpush.msra.mxu0 %v5994
        %6270 = vmatpush.msra.mxu0 %v5993
        %6271 = vmatpush.msra.mxu0 %v5992
        %6272 = vmatpush.msra.mxu0 %v5991
        %6273 = vmatpush.msra.mxu0 %v5990
        %6274 = vmatpush.msra.mxu0 %v5989
        %6275 = vmatmul.f32.gmra.mxu0 %v5851
        %v6276 = vpop.f32.mrf.mxu0
        %v6277 = vadd.f32 %v6248, %v6276
        %6278 = vmatmul.f32.gmra.mxu0 %v5863
        %v6279 = vpop.f32.mrf.mxu0
        %v6280 = vadd.f32 %v6251, %v6279
        %6281 = vmatmul.f32.gmra.mxu0 %v5875
        %v6282 = vpop.f32.mrf.mxu0
        %v6283 = vadd.f32 %v6254, %v6282
        %6284 = vmatmul.f32.gmra.mxu0 %v5887
        %v6285 = vpop.f32.mrf.mxu0
        %v6286 = vadd.f32 %v6257, %v6285
        %6287 = vdwg.mxu0
        %6288 = vmatpush.msra.mxu0 %v6020
        %6289 = vmatpush.msra.mxu0 %v6019
        %6290 = vmatpush.msra.mxu0 %v6018
        %6291 = vmatpush.msra.mxu0 %v6017
        %6292 = vmatpush.msra.mxu0 %v6016
        %6293 = vmatpush.msra.mxu0 %v6015
        %6294 = vmatpush.msra.mxu0 %v6014
        %6295 = vmatpush.msra.mxu0 %v6013
        %6296 = vmatpush.msra.mxu0 %v6012
        %6297 = vmatpush.msra.mxu0 %v6011
        %6298 = vmatpush.msra.mxu0 %v6010
        %6299 = vmatpush.msra.mxu0 %v6009
        %6300 = vmatpush.msra.mxu0 %v6008
        %6301 = vmatpush.msra.mxu0 %v6007
        %6302 = vmatpush.msra.mxu0 %v6006
        %6303 = vmatpush.msra.mxu0 %v6005
        %6304 = vmatmul.f32.gmra.mxu0 %v5852
        %v6305 = vpop.f32.mrf.mxu0
        %v6306 = vadd.f32 %v6277, %v6305
        %6307 = vmatmul.f32.gmra.mxu0 %v5864
        %v6308 = vpop.f32.mrf.mxu0
        %v6309 = vadd.f32 %v6280, %v6308
        %6310 = vmatmul.f32.gmra.mxu0 %v5876
        %v6311 = vpop.f32.mrf.mxu0
        %v6312 = vadd.f32 %v6283, %v6311
        %6313 = vmatmul.f32.gmra.mxu0 %v5888
        %v6314 = vpop.f32.mrf.mxu0
        %v6315 = vadd.f32 %v6286, %v6314
        %6316 = vdwg.mxu0
        %6317 = vmatpush.msra.mxu0 %v6036
        %6318 = vmatpush.msra.mxu0 %v6035
        %6319 = vmatpush.msra.mxu0 %v6034
        %6320 = vmatpush.msra.mxu0 %v6033
        %6321 = vmatpush.msra.mxu0 %v6032
        %6322 = vmatpush.msra.mxu0 %v6031
        %6323 = vmatpush.msra.mxu0 %v6030
        %6324 = vmatpush.msra.mxu0 %v6029
        %6325 = vmatpush.msra.mxu0 %v6028
        %6326 = vmatpush.msra.mxu0 %v6027
        %6327 = vmatpush.msra.mxu0 %v6026
        %6328 = vmatpush.msra.mxu0 %v6025
        %6329 = vmatpush.msra.mxu0 %v6024
        %6330 = vmatpush.msra.mxu0 %v6023
        %6331 = vmatpush.msra.mxu0 %v6022
        %6332 = vmatpush.msra.mxu0 %v6021
        %6333 = vmatmul.f32.gmra.mxu0 %v5853
        %v6334 = vpop.f32.mrf.mxu0
        %v6335 = vadd.f32 %v6306, %v6334
        %6336 = vmatmul.f32.gmra.mxu0 %v5865
        %v6337 = vpop.f32.mrf.mxu0
        %v6338 = vadd.f32 %v6309, %v6337
        %6339 = vmatmul.f32.gmra.mxu0 %v5877
        %v6340 = vpop.f32.mrf.mxu0
        %v6341 = vadd.f32 %v6312, %v6340
        %6342 = vmatmul.f32.gmra.mxu0 %v5889
        %v6343 = vpop.f32.mrf.mxu0
        %v6344 = vadd.f32 %v6315, %v6343
        %6345 = vdwg.mxu0
        %6346 = vmatpush.msra.mxu0 %v6052
        %6347 = vmatpush.msra.mxu0 %v6051
        %6348 = vmatpush.msra.mxu0 %v6050
        %6349 = vmatpush.msra.mxu0 %v6049
        %6350 = vmatpush.msra.mxu0 %v6048
        %6351 = vmatpush.msra.mxu0 %v6047
        %6352 = vmatpush.msra.mxu0 %v6046
        %6353 = vmatpush.msra.mxu0 %v6045
        %6354 = vmatpush.msra.mxu0 %v6044
        %6355 = vmatpush.msra.mxu0 %v6043
        %6356 = vmatpush.msra.mxu0 %v6042
        %6357 = vmatpush.msra.mxu0 %v6041
        %6358 = vmatpush.msra.mxu0 %v6040
        %6359 = vmatpush.msra.mxu0 %v6039
        %6360 = vmatpush.msra.mxu0 %v6038
        %6361 = vmatpush.msra.mxu0 %v6037
        %6362 = vmatmul.f32.gmra.mxu0 %v5854
        %v6363 = vpop.f32.mrf.mxu0
        %v6364 = vadd.f32 %v6335, %v6363
        %6365 = vmatmul.f32.gmra.mxu0 %v5866
        %v6366 = vpop.f32.mrf.mxu0
        %v6367 = vadd.f32 %v6338, %v6366
        %6368 = vmatmul.f32.gmra.mxu0 %v5878
        %v6369 = vpop.f32.mrf.mxu0
        %v6370 = vadd.f32 %v6341, %v6369
        %6371 = vmatmul.f32.gmra.mxu0 %v5890
        %v6372 = vpop.f32.mrf.mxu0
        %v6373 = vadd.f32 %v6344, %v6372
        %6374 = vdwg.mxu0
        %6375 = vmatpush.msra.mxu0 %v6068
        %6376 = vmatpush.msra.mxu0 %v6067
        %6377 = vmatpush.msra.mxu0 %v6066
        %6378 = vmatpush.msra.mxu0 %v6065
        %6379 = vmatpush.msra.mxu0 %v6064
        %6380 = vmatpush.msra.mxu0 %v6063
        %6381 = vmatpush.msra.mxu0 %v6062
        %6382 = vmatpush.msra.mxu0 %v6061
        %6383 = vmatpush.msra.mxu0 %v6060
        %6384 = vmatpush.msra.mxu0 %v6059
        %6385 = vmatpush.msra.mxu0 %v6058
        %6386 = vmatpush.msra.mxu0 %v6057
        %6387 = vmatpush.msra.mxu0 %v6056
        %6388 = vmatpush.msra.mxu0 %v6055
        %6389 = vmatpush.msra.mxu0 %v6054
        %6390 = vmatpush.msra.mxu0 %v6053
        %6391 = vmatmul.f32.gmra.mxu0 %v5855
        %v6392 = vpop.f32.mrf.mxu0
        %v6393 = vadd.f32 %v6364, %v6392
        %6394 = vmatmul.f32.gmra.mxu0 %v5867
        %v6395 = vpop.f32.mrf.mxu0
        %v6396 = vadd.f32 %v6367, %v6395
        %6397 = vmatmul.f32.gmra.mxu0 %v5879
        %v6398 = vpop.f32.mrf.mxu0
        %v6399 = vadd.f32 %v6370, %v6398
        %6400 = vmatmul.f32.gmra.mxu0 %v5891
        %v6401 = vpop.f32.mrf.mxu0
        %v6402 = vadd.f32 %v6373, %v6401
        %6403 = vdwg.mxu0
        %6404 = vmatpush.msra.mxu0 %v6084
        %6405 = vmatpush.msra.mxu0 %v6083
        %6406 = vmatpush.msra.mxu0 %v6082
        %6407 = vmatpush.msra.mxu0 %v6081
        %6408 = vmatpush.msra.mxu0 %v6080
        %6409 = vmatpush.msra.mxu0 %v6079
        %6410 = vmatpush.msra.mxu0 %v6078
        %6411 = vmatpush.msra.mxu0 %v6077
        %6412 = vmatpush.msra.mxu0 %v6076
        %6413 = vmatpush.msra.mxu0 %v6075
        %6414 = vmatpush.msra.mxu0 %v6074
        %6415 = vmatpush.msra.mxu0 %v6073
        %6416 = vmatpush.msra.mxu0 %v6072
        %6417 = vmatpush.msra.mxu0 %v6071
        %6418 = vmatpush.msra.mxu0 %v6070
        %6419 = vmatpush.msra.mxu0 %v6069
        %6420 = vmatmul.f32.gmra.mxu0 %v5856
        %v6421 = vpop.f32.mrf.mxu0
        %v6422 = vadd.f32 %v6393, %v6421
        %6423 = vmatmul.f32.gmra.mxu0 %v5868
        %v6424 = vpop.f32.mrf.mxu0
        %v6425 = vadd.f32 %v6396, %v6424
        %6426 = vmatmul.f32.gmra.mxu0 %v5880
        %v6427 = vpop.f32.mrf.mxu0
        %v6428 = vadd.f32 %v6399, %v6427
        %6429 = vmatmul.f32.gmra.mxu0 %v5892
        %v6430 = vpop.f32.mrf.mxu0
        %v6431 = vadd.f32 %v6402, %v6430
        %6432 = vdwg.mxu0
        %v6433 = vmul.f32 %v6422, %v4015
        %v6434 = vmul.f32 %v6425, %v4015
        %v6435 = vmul.f32 %v6428, %v4015
        %v6436 = vmul.f32 %v6431, %v4015
        %v6437 = vadd.f32 %v6433, %v4020
        %v6438 = vadd.f32 %v6434, %v4020
        %v6439 = vadd.f32 %v6435, %v4020
        %v6440 = vadd.f32 %v6436, %v4020
        %v6441 = vmax.f32 %v6437, 0.0
        %v6442 = vmax.f32 %v6438, 0.0
        %v6443 = vmax.f32 %v6439, 0.0
        %v6444 = vmax.f32 %v6440, 0.0
        %6445 = vst [vmem:[#allocation3 + $0x20] sm:$0xff] %v6441
        %6446 = vst [vmem:[#allocation3 + $0x60] sm:$0xff] %v6442
        %6447 = vst [vmem:[#allocation3 + $0xa0] sm:$0xff] %v6443
        %6448 = vst [vmem:[#allocation3 + $0xe0] sm:$0xff] %v6444
        %v6449 = vld [vmem:[#allocation2 + $0xf0] sm:$0xff]
        %v6450 = vld [vmem:[#allocation2 + $0xf8] sm:$0xff]
        %v6451 = vld [vmem:[#allocation2 + $0x100] sm:$0xff]
        %v6452 = vld [vmem:[#allocation2 + $0x108] sm:$0xff]
        %v6453 = vld [vmem:[#allocation2 + $0x110] sm:$0xff]
        %v6454 = vld [vmem:[#allocation2 + $0x118] sm:$0xff]
        %v6455 = vld [vmem:[#allocation2 + $0x120] sm:$0xff]
        %v6456 = vld [vmem:[#allocation2 + $0x128] sm:$0xff]
        %v6457 = vld [vmem:[#allocation2 + $0x130] sm:$0xff]
        %v6458 = vld [vmem:[#allocation2 + $0x138] sm:$0xff]
        %v6459 = vld [vmem:[#allocation2 + $0x140] sm:$0xff]
        %v6460 = vld [vmem:[#allocation2 + $0x148] sm:$0xff]
        %v6461 = vld [vmem:[#allocation2 + $0x2a0] sm:$0xff]
        %v6462 = vld [vmem:[#allocation2 + $0x2a8] sm:$0xff]
        %v6463 = vld [vmem:[#allocation2 + $0x2b0] sm:$0xff]
        %v6464 = vld [vmem:[#allocation2 + $0x2b8] sm:$0xff]
        %v6465 = vld [vmem:[#allocation2 + $0x2c0] sm:$0xff]
        %v6466 = vld [vmem:[#allocation2 + $0x2c8] sm:$0xff]
        %v6467 = vld [vmem:[#allocation2 + $0x2d0] sm:$0xff]
        %v6468 = vld [vmem:[#allocation2 + $0x2d8] sm:$0xff]
        %v6469 = vld [vmem:[#allocation2 + $0x2e0] sm:$0xff]
        %v6470 = vld [vmem:[#allocation2 + $0x2e8] sm:$0xff]
        %v6471 = vld [vmem:[#allocation2 + $0x2f0] sm:$0xff]
        %v6472 = vld [vmem:[#allocation2 + $0x2f8] sm:$0xff]
        %v6473 = vld [vmem:[#allocation2 + $0x450] sm:$0xff]
        %v6474 = vld [vmem:[#allocation2 + $0x458] sm:$0xff]
        %v6475 = vld [vmem:[#allocation2 + $0x460] sm:$0xff]
        %v6476 = vld [vmem:[#allocation2 + $0x468] sm:$0xff]
        %v6477 = vld [vmem:[#allocation2 + $0x470] sm:$0xff]
        %v6478 = vld [vmem:[#allocation2 + $0x478] sm:$0xff]
        %v6479 = vld [vmem:[#allocation2 + $0x480] sm:$0xff]
        %v6480 = vld [vmem:[#allocation2 + $0x488] sm:$0xff]
        %v6481 = vld [vmem:[#allocation2 + $0x490] sm:$0xff]
        %v6482 = vld [vmem:[#allocation2 + $0x498] sm:$0xff]
        %v6483 = vld [vmem:[#allocation2 + $0x4a0] sm:$0xff]
        %v6484 = vld [vmem:[#allocation2 + $0x4a8] sm:$0xff]
        %v6485 = vld [vmem:[#allocation2 + $0x600] sm:$0xff]
        %v6486 = vld [vmem:[#allocation2 + $0x608] sm:$0xff]
        %v6487 = vld [vmem:[#allocation2 + $0x610] sm:$0xff]
        %v6488 = vld [vmem:[#allocation2 + $0x618] sm:$0xff]
        %v6489 = vld [vmem:[#allocation2 + $0x620] sm:$0xff]
        %v6490 = vld [vmem:[#allocation2 + $0x628] sm:$0xff]
        %v6491 = vld [vmem:[#allocation2 + $0x630] sm:$0xff]
        %v6492 = vld [vmem:[#allocation2 + $0x638] sm:$0xff]
        %v6493 = vld [vmem:[#allocation2 + $0x640] sm:$0xff]
        %v6494 = vld [vmem:[#allocation2 + $0x648] sm:$0xff]
        %v6495 = vld [vmem:[#allocation2 + $0x650] sm:$0xff]
        %v6496 = vld [vmem:[#allocation2 + $0x658] sm:$0xff]
        %v6497 = vld [vmem:[%s2] sm:$0xff]
        %v6498 = vld [vmem:[%s2 + $0x8] sm:$0xff]
        %v6499 = vld [vmem:[%s2 + $0x10] sm:$0xff]
        %v6500 = vld [vmem:[%s2 + $0x18] sm:$0xff]
        %v6501 = vld [vmem:[%s2 + $0x20] sm:$0xff]
        %v6502 = vld [vmem:[%s2 + $0x28] sm:$0xff]
        %v6503 = vld [vmem:[%s2 + $0x30] sm:$0xff]
        %v6504 = vld [vmem:[%s2 + $0x38] sm:$0xff]
        %v6505 = vld [vmem:[%s2 + $0x40] sm:$0xff]
        %v6506 = vld [vmem:[%s2 + $0x48] sm:$0xff]
        %v6507 = vld [vmem:[%s2 + $0x50] sm:$0xff]
        %v6508 = vld [vmem:[%s2 + $0x58] sm:$0xff]
        %v6509 = vld [vmem:[%s2 + $0x60] sm:$0xff]
        %v6510 = vld [vmem:[%s2 + $0x68] sm:$0xff]
        %v6511 = vld [vmem:[%s2 + $0x70] sm:$0xff]
        %v6512 = vld [vmem:[%s2 + $0x78] sm:$0xff]
        %v6513 = vld [vmem:[%s2 + $0x80] sm:$0xff]
        %v6514 = vld [vmem:[%s2 + $0x88] sm:$0xff]
        %v6515 = vld [vmem:[%s2 + $0x90] sm:$0xff]
        %v6516 = vld [vmem:[%s2 + $0x98] sm:$0xff]
        %v6517 = vld [vmem:[%s2 + $0xa0] sm:$0xff]
        %v6518 = vld [vmem:[%s2 + $0xa8] sm:$0xff]
        %v6519 = vld [vmem:[%s2 + $0xb0] sm:$0xff]
        %v6520 = vld [vmem:[%s2 + $0xb8] sm:$0xff]
        %v6521 = vld [vmem:[%s2 + $0xc0] sm:$0xff]
        %v6522 = vld [vmem:[%s2 + $0xc8] sm:$0xff]
        %v6523 = vld [vmem:[%s2 + $0xd0] sm:$0xff]
        %v6524 = vld [vmem:[%s2 + $0xd8] sm:$0xff]
        %v6525 = vld [vmem:[%s2 + $0xe0] sm:$0xff]
        %v6526 = vld [vmem:[%s2 + $0xe8] sm:$0xff]
        %v6527 = vld [vmem:[%s2 + $0xf0] sm:$0xff]
        %v6528 = vld [vmem:[%s2 + $0xf8] sm:$0xff]
        %v6529 = vld [vmem:[%s2 + $0x100] sm:$0xff]
        %v6530 = vld [vmem:[%s2 + $0x108] sm:$0xff]
        %v6531 = vld [vmem:[%s2 + $0x110] sm:$0xff]
        %v6532 = vld [vmem:[%s2 + $0x118] sm:$0xff]
        %v6533 = vld [vmem:[%s2 + $0x120] sm:$0xff]
        %v6534 = vld [vmem:[%s2 + $0x128] sm:$0xff]
        %v6535 = vld [vmem:[%s2 + $0x130] sm:$0xff]
        %v6536 = vld [vmem:[%s2 + $0x138] sm:$0xff]
        %v6537 = vld [vmem:[%s2 + $0x140] sm:$0xff]
        %v6538 = vld [vmem:[%s2 + $0x148] sm:$0xff]
        %v6539 = vld [vmem:[%s2 + $0x150] sm:$0xff]
        %v6540 = vld [vmem:[%s2 + $0x158] sm:$0xff]
        %v6541 = vld [vmem:[%s2 + $0x160] sm:$0xff]
        %v6542 = vld [vmem:[%s2 + $0x168] sm:$0xff]
        %v6543 = vld [vmem:[%s2 + $0x170] sm:$0xff]
        %v6544 = vld [vmem:[%s2 + $0x178] sm:$0xff]
        %v6545 = vld [vmem:[%s2 + $0x180] sm:$0xff]
        %v6546 = vld [vmem:[%s2 + $0x188] sm:$0xff]
        %v6547 = vld [vmem:[%s2 + $0x190] sm:$0xff]
        %v6548 = vld [vmem:[%s2 + $0x198] sm:$0xff]
        %v6549 = vld [vmem:[%s2 + $0x1a0] sm:$0xff]
        %v6550 = vld [vmem:[%s2 + $0x1a8] sm:$0xff]
        %v6551 = vld [vmem:[%s2 + $0x1b0] sm:$0xff]
        %v6552 = vld [vmem:[%s2 + $0x1b8] sm:$0xff]
        %v6553 = vld [vmem:[%s2 + $0x1c0] sm:$0xff]
        %v6554 = vld [vmem:[%s2 + $0x1c8] sm:$0xff]
        %v6555 = vld [vmem:[%s2 + $0x1d0] sm:$0xff]
        %v6556 = vld [vmem:[%s2 + $0x1d8] sm:$0xff]
        %v6557 = vld [vmem:[%s2 + $0x1e0] sm:$0xff]
        %v6558 = vld [vmem:[%s2 + $0x1e8] sm:$0xff]
        %v6559 = vld [vmem:[%s2 + $0x1f0] sm:$0xff]
        %v6560 = vld [vmem:[%s2 + $0x1f8] sm:$0xff]
        %v6561 = vld [vmem:[%s2 + $0x200] sm:$0xff]
        %v6562 = vld [vmem:[%s2 + $0x208] sm:$0xff]
        %v6563 = vld [vmem:[%s2 + $0x210] sm:$0xff]
        %v6564 = vld [vmem:[%s2 + $0x218] sm:$0xff]
        %v6565 = vld [vmem:[%s2 + $0x220] sm:$0xff]
        %v6566 = vld [vmem:[%s2 + $0x228] sm:$0xff]
        %v6567 = vld [vmem:[%s2 + $0x230] sm:$0xff]
        %v6568 = vld [vmem:[%s2 + $0x238] sm:$0xff]
        %v6569 = vld [vmem:[%s2 + $0x240] sm:$0xff]
        %v6570 = vld [vmem:[%s2 + $0x248] sm:$0xff]
        %v6571 = vld [vmem:[%s2 + $0x250] sm:$0xff]
        %v6572 = vld [vmem:[%s2 + $0x258] sm:$0xff]
        %v6573 = vld [vmem:[%s2 + $0x260] sm:$0xff]
        %v6574 = vld [vmem:[%s2 + $0x268] sm:$0xff]
        %v6575 = vld [vmem:[%s2 + $0x270] sm:$0xff]
        %v6576 = vld [vmem:[%s2 + $0x278] sm:$0xff]
        %v6577 = vld [vmem:[%s2 + $0x280] sm:$0xff]
        %v6578 = vld [vmem:[%s2 + $0x288] sm:$0xff]
        %v6579 = vld [vmem:[%s2 + $0x290] sm:$0xff]
        %v6580 = vld [vmem:[%s2 + $0x298] sm:$0xff]
        %v6581 = vld [vmem:[%s2 + $0x2a0] sm:$0xff]
        %v6582 = vld [vmem:[%s2 + $0x2a8] sm:$0xff]
        %v6583 = vld [vmem:[%s2 + $0x2b0] sm:$0xff]
        %v6584 = vld [vmem:[%s2 + $0x2b8] sm:$0xff]
        %v6585 = vld [vmem:[%s2 + $0x2c0] sm:$0xff]
        %v6586 = vld [vmem:[%s2 + $0x2c8] sm:$0xff]
        %v6587 = vld [vmem:[%s2 + $0x2d0] sm:$0xff]
        %v6588 = vld [vmem:[%s2 + $0x2d8] sm:$0xff]
        %v6589 = vld [vmem:[%s2 + $0x2e0] sm:$0xff]
        %v6590 = vld [vmem:[%s2 + $0x2e8] sm:$0xff]
        %v6591 = vld [vmem:[%s2 + $0x2f0] sm:$0xff]
        %v6592 = vld [vmem:[%s2 + $0x2f8] sm:$0xff]
        %v6593 = vld [vmem:[%s2 + $0x300] sm:$0xff]
        %v6594 = vld [vmem:[%s2 + $0x308] sm:$0xff]
        %v6595 = vld [vmem:[%s2 + $0x310] sm:$0xff]
        %v6596 = vld [vmem:[%s2 + $0x318] sm:$0xff]
        %v6597 = vld [vmem:[%s2 + $0x320] sm:$0xff]
        %v6598 = vld [vmem:[%s2 + $0x328] sm:$0xff]
        %v6599 = vld [vmem:[%s2 + $0x330] sm:$0xff]
        %v6600 = vld [vmem:[%s2 + $0x338] sm:$0xff]
        %v6601 = vld [vmem:[%s2 + $0x340] sm:$0xff]
        %v6602 = vld [vmem:[%s2 + $0x348] sm:$0xff]
        %v6603 = vld [vmem:[%s2 + $0x350] sm:$0xff]
        %v6604 = vld [vmem:[%s2 + $0x358] sm:$0xff]
        %v6605 = vld [vmem:[%s2 + $0x360] sm:$0xff]
        %v6606 = vld [vmem:[%s2 + $0x368] sm:$0xff]
        %v6607 = vld [vmem:[%s2 + $0x370] sm:$0xff]
        %v6608 = vld [vmem:[%s2 + $0x378] sm:$0xff]
        %v6609 = vld [vmem:[%s2 + $0x380] sm:$0xff]
        %v6610 = vld [vmem:[%s2 + $0x388] sm:$0xff]
        %v6611 = vld [vmem:[%s2 + $0x390] sm:$0xff]
        %v6612 = vld [vmem:[%s2 + $0x398] sm:$0xff]
        %v6613 = vld [vmem:[%s2 + $0x3a0] sm:$0xff]
        %v6614 = vld [vmem:[%s2 + $0x3a8] sm:$0xff]
        %v6615 = vld [vmem:[%s2 + $0x3b0] sm:$0xff]
        %v6616 = vld [vmem:[%s2 + $0x3b8] sm:$0xff]
        %v6617 = vld [vmem:[%s2 + $0x3c0] sm:$0xff]
        %v6618 = vld [vmem:[%s2 + $0x3c8] sm:$0xff]
        %v6619 = vld [vmem:[%s2 + $0x3d0] sm:$0xff]
        %v6620 = vld [vmem:[%s2 + $0x3d8] sm:$0xff]
        %v6621 = vld [vmem:[%s2 + $0x3e0] sm:$0xff]
        %v6622 = vld [vmem:[%s2 + $0x3e8] sm:$0xff]
        %v6623 = vld [vmem:[%s2 + $0x3f0] sm:$0xff]
        %v6624 = vld [vmem:[%s2 + $0x3f8] sm:$0xff]
        %v6625 = vld [vmem:[%s2 + $0x400] sm:$0xff]
        %v6626 = vld [vmem:[%s2 + $0x408] sm:$0xff]
        %v6627 = vld [vmem:[%s2 + $0x410] sm:$0xff]
        %v6628 = vld [vmem:[%s2 + $0x418] sm:$0xff]
        %v6629 = vld [vmem:[%s2 + $0x420] sm:$0xff]
        %v6630 = vld [vmem:[%s2 + $0x428] sm:$0xff]
        %v6631 = vld [vmem:[%s2 + $0x430] sm:$0xff]
        %v6632 = vld [vmem:[%s2 + $0x438] sm:$0xff]
        %v6633 = vld [vmem:[%s2 + $0x440] sm:$0xff]
        %v6634 = vld [vmem:[%s2 + $0x448] sm:$0xff]
        %v6635 = vld [vmem:[%s2 + $0x450] sm:$0xff]
        %v6636 = vld [vmem:[%s2 + $0x458] sm:$0xff]
        %v6637 = vld [vmem:[%s2 + $0x460] sm:$0xff]
        %v6638 = vld [vmem:[%s2 + $0x468] sm:$0xff]
        %v6639 = vld [vmem:[%s2 + $0x470] sm:$0xff]
        %v6640 = vld [vmem:[%s2 + $0x478] sm:$0xff]
        %v6641 = vld [vmem:[%s2 + $0x480] sm:$0xff]
        %v6642 = vld [vmem:[%s2 + $0x488] sm:$0xff]
        %v6643 = vld [vmem:[%s2 + $0x490] sm:$0xff]
        %v6644 = vld [vmem:[%s2 + $0x498] sm:$0xff]
        %v6645 = vld [vmem:[%s2 + $0x4a0] sm:$0xff]
        %v6646 = vld [vmem:[%s2 + $0x4a8] sm:$0xff]
        %v6647 = vld [vmem:[%s2 + $0x4b0] sm:$0xff]
        %v6648 = vld [vmem:[%s2 + $0x4b8] sm:$0xff]
        %v6649 = vld [vmem:[%s2 + $0x4c0] sm:$0xff]
        %v6650 = vld [vmem:[%s2 + $0x4c8] sm:$0xff]
        %v6651 = vld [vmem:[%s2 + $0x4d0] sm:$0xff]
        %v6652 = vld [vmem:[%s2 + $0x4d8] sm:$0xff]
        %v6653 = vld [vmem:[%s2 + $0x4e0] sm:$0xff]
        %v6654 = vld [vmem:[%s2 + $0x4e8] sm:$0xff]
        %v6655 = vld [vmem:[%s2 + $0x4f0] sm:$0xff]
        %v6656 = vld [vmem:[%s2 + $0x4f8] sm:$0xff]
        %v6657 = vld [vmem:[%s2 + $0x500] sm:$0xff]
        %v6658 = vld [vmem:[%s2 + $0x508] sm:$0xff]
        %v6659 = vld [vmem:[%s2 + $0x510] sm:$0xff]
        %v6660 = vld [vmem:[%s2 + $0x518] sm:$0xff]
        %v6661 = vld [vmem:[%s2 + $0x520] sm:$0xff]
        %v6662 = vld [vmem:[%s2 + $0x528] sm:$0xff]
        %v6663 = vld [vmem:[%s2 + $0x530] sm:$0xff]
        %v6664 = vld [vmem:[%s2 + $0x538] sm:$0xff]
        %v6665 = vld [vmem:[%s2 + $0x540] sm:$0xff]
        %v6666 = vld [vmem:[%s2 + $0x548] sm:$0xff]
        %v6667 = vld [vmem:[%s2 + $0x550] sm:$0xff]
        %v6668 = vld [vmem:[%s2 + $0x558] sm:$0xff]
        %v6669 = vld [vmem:[%s2 + $0x560] sm:$0xff]
        %v6670 = vld [vmem:[%s2 + $0x568] sm:$0xff]
        %v6671 = vld [vmem:[%s2 + $0x570] sm:$0xff]
        %v6672 = vld [vmem:[%s2 + $0x578] sm:$0xff]
        %v6673 = vld [vmem:[%s2 + $0x580] sm:$0xff]
        %v6674 = vld [vmem:[%s2 + $0x588] sm:$0xff]
        %v6675 = vld [vmem:[%s2 + $0x590] sm:$0xff]
        %v6676 = vld [vmem:[%s2 + $0x598] sm:$0xff]
        %v6677 = vld [vmem:[%s2 + $0x5a0] sm:$0xff]
        %v6678 = vld [vmem:[%s2 + $0x5a8] sm:$0xff]
        %v6679 = vld [vmem:[%s2 + $0x5b0] sm:$0xff]
        %v6680 = vld [vmem:[%s2 + $0x5b8] sm:$0xff]
        %v6681 = vld [vmem:[%s2 + $0x5c0] sm:$0xff]
        %v6682 = vld [vmem:[%s2 + $0x5c8] sm:$0xff]
        %v6683 = vld [vmem:[%s2 + $0x5d0] sm:$0xff]
        %v6684 = vld [vmem:[%s2 + $0x5d8] sm:$0xff]
        %v6685 = vld [vmem:[%s2 + $0x5e0] sm:$0xff]
        %v6686 = vld [vmem:[%s2 + $0x5e8] sm:$0xff]
        %v6687 = vld [vmem:[%s2 + $0x5f0] sm:$0xff]
        %v6688 = vld [vmem:[%s2 + $0x5f8] sm:$0xff]
        %6689 = vmatpush.msra.mxu0 %v6512
        %6690 = vmatpush.msra.mxu0 %v6511
        %6691 = vmatpush.msra.mxu0 %v6510
        %6692 = vmatpush.msra.mxu0 %v6509
        %6693 = vmatpush.msra.mxu0 %v6508
        %6694 = vmatpush.msra.mxu0 %v6507
        %6695 = vmatpush.msra.mxu0 %v6506
        %6696 = vmatpush.msra.mxu0 %v6505
        %6697 = vmatpush.msra.mxu0 %v6504
        %6698 = vmatpush.msra.mxu0 %v6503
        %6699 = vmatpush.msra.mxu0 %v6502
        %6700 = vmatpush.msra.mxu0 %v6501
        %6701 = vmatpush.msra.mxu0 %v6500
        %6702 = vmatpush.msra.mxu0 %v6499
        %6703 = vmatpush.msra.mxu0 %v6498
        %6704 = vmatpush.msra.mxu0 %v6497
        %6705 = vmatmul.f32.gmra.mxu0 %v6449
        %v6706 = vpop.f32.mrf.mxu0
        %v6707 = vadd.f32 0.0, %v6706
        %6708 = vmatmul.f32.gmra.mxu0 %v6461
        %v6709 = vpop.f32.mrf.mxu0
        %v6710 = vadd.f32 0.0, %v6709
        %6711 = vmatmul.f32.gmra.mxu0 %v6473
        %v6712 = vpop.f32.mrf.mxu0
        %v6713 = vadd.f32 0.0, %v6712
        %6714 = vmatmul.f32.gmra.mxu0 %v6485
        %v6715 = vpop.f32.mrf.mxu0
        %v6716 = vadd.f32 0.0, %v6715
        %6717 = vdwg.mxu0
        %6718 = vmatpush.msra.mxu0 %v6528
        %6719 = vmatpush.msra.mxu0 %v6527
        %6720 = vmatpush.msra.mxu0 %v6526
        %6721 = vmatpush.msra.mxu0 %v6525
        %6722 = vmatpush.msra.mxu0 %v6524
        %6723 = vmatpush.msra.mxu0 %v6523
        %6724 = vmatpush.msra.mxu0 %v6522
        %6725 = vmatpush.msra.mxu0 %v6521
        %6726 = vmatpush.msra.mxu0 %v6520
        %6727 = vmatpush.msra.mxu0 %v6519
        %6728 = vmatpush.msra.mxu0 %v6518
        %6729 = vmatpush.msra.mxu0 %v6517
        %6730 = vmatpush.msra.mxu0 %v6516
        %6731 = vmatpush.msra.mxu0 %v6515
        %6732 = vmatpush.msra.mxu0 %v6514
        %6733 = vmatpush.msra.mxu0 %v6513
        %6734 = vmatmul.f32.gmra.mxu0 %v6450
        %v6735 = vpop.f32.mrf.mxu0
        %v6736 = vadd.f32 %v6707, %v6735
        %6737 = vmatmul.f32.gmra.mxu0 %v6462
        %v6738 = vpop.f32.mrf.mxu0
        %v6739 = vadd.f32 %v6710, %v6738
        %6740 = vmatmul.f32.gmra.mxu0 %v6474
        %v6741 = vpop.f32.mrf.mxu0
        %v6742 = vadd.f32 %v6713, %v6741
        %6743 = vmatmul.f32.gmra.mxu0 %v6486
        %v6744 = vpop.f32.mrf.mxu0
        %v6745 = vadd.f32 %v6716, %v6744
        %6746 = vdwg.mxu0
        %6747 = vmatpush.msra.mxu0 %v6544
        %6748 = vmatpush.msra.mxu0 %v6543
        %6749 = vmatpush.msra.mxu0 %v6542
        %6750 = vmatpush.msra.mxu0 %v6541
        %6751 = vmatpush.msra.mxu0 %v6540
        %6752 = vmatpush.msra.mxu0 %v6539
        %6753 = vmatpush.msra.mxu0 %v6538
        %6754 = vmatpush.msra.mxu0 %v6537
        %6755 = vmatpush.msra.mxu0 %v6536
        %6756 = vmatpush.msra.mxu0 %v6535
        %6757 = vmatpush.msra.mxu0 %v6534
        %6758 = vmatpush.msra.mxu0 %v6533
        %6759 = vmatpush.msra.mxu0 %v6532
        %6760 = vmatpush.msra.mxu0 %v6531
        %6761 = vmatpush.msra.mxu0 %v6530
        %6762 = vmatpush.msra.mxu0 %v6529
        %6763 = vmatmul.f32.gmra.mxu0 %v6451
        %v6764 = vpop.f32.mrf.mxu0
        %v6765 = vadd.f32 %v6736, %v6764
        %6766 = vmatmul.f32.gmra.mxu0 %v6463
        %v6767 = vpop.f32.mrf.mxu0
        %v6768 = vadd.f32 %v6739, %v6767
        %6769 = vmatmul.f32.gmra.mxu0 %v6475
        %v6770 = vpop.f32.mrf.mxu0
        %v6771 = vadd.f32 %v6742, %v6770
        %6772 = vmatmul.f32.gmra.mxu0 %v6487
        %v6773 = vpop.f32.mrf.mxu0
        %v6774 = vadd.f32 %v6745, %v6773
        %6775 = vdwg.mxu0
        %6776 = vmatpush.msra.mxu0 %v6560
        %6777 = vmatpush.msra.mxu0 %v6559
        %6778 = vmatpush.msra.mxu0 %v6558
        %6779 = vmatpush.msra.mxu0 %v6557
        %6780 = vmatpush.msra.mxu0 %v6556
        %6781 = vmatpush.msra.mxu0 %v6555
        %6782 = vmatpush.msra.mxu0 %v6554
        %6783 = vmatpush.msra.mxu0 %v6553
        %6784 = vmatpush.msra.mxu0 %v6552
        %6785 = vmatpush.msra.mxu0 %v6551
        %6786 = vmatpush.msra.mxu0 %v6550
        %6787 = vmatpush.msra.mxu0 %v6549
        %6788 = vmatpush.msra.mxu0 %v6548
        %6789 = vmatpush.msra.mxu0 %v6547
        %6790 = vmatpush.msra.mxu0 %v6546
        %6791 = vmatpush.msra.mxu0 %v6545
        %6792 = vmatmul.f32.gmra.mxu0 %v6452
        %v6793 = vpop.f32.mrf.mxu0
        %v6794 = vadd.f32 %v6765, %v6793
        %6795 = vmatmul.f32.gmra.mxu0 %v6464
        %v6796 = vpop.f32.mrf.mxu0
        %v6797 = vadd.f32 %v6768, %v6796
        %6798 = vmatmul.f32.gmra.mxu0 %v6476
        %v6799 = vpop.f32.mrf.mxu0
        %v6800 = vadd.f32 %v6771, %v6799
        %6801 = vmatmul.f32.gmra.mxu0 %v6488
        %v6802 = vpop.f32.mrf.mxu0
        %v6803 = vadd.f32 %v6774, %v6802
        %6804 = vdwg.mxu0
        %6805 = vmatpush.msra.mxu0 %v6576
        %6806 = vmatpush.msra.mxu0 %v6575
        %6807 = vmatpush.msra.mxu0 %v6574
        %6808 = vmatpush.msra.mxu0 %v6573
        %6809 = vmatpush.msra.mxu0 %v6572
        %6810 = vmatpush.msra.mxu0 %v6571
        %6811 = vmatpush.msra.mxu0 %v6570
        %6812 = vmatpush.msra.mxu0 %v6569
        %6813 = vmatpush.msra.mxu0 %v6568
        %6814 = vmatpush.msra.mxu0 %v6567
        %6815 = vmatpush.msra.mxu0 %v6566
        %6816 = vmatpush.msra.mxu0 %v6565
        %6817 = vmatpush.msra.mxu0 %v6564
        %6818 = vmatpush.msra.mxu0 %v6563
        %6819 = vmatpush.msra.mxu0 %v6562
        %6820 = vmatpush.msra.mxu0 %v6561
        %6821 = vmatmul.f32.gmra.mxu0 %v6453
        %v6822 = vpop.f32.mrf.mxu0
        %v6823 = vadd.f32 %v6794, %v6822
        %6824 = vmatmul.f32.gmra.mxu0 %v6465
        %v6825 = vpop.f32.mrf.mxu0
        %v6826 = vadd.f32 %v6797, %v6825
        %6827 = vmatmul.f32.gmra.mxu0 %v6477
        %v6828 = vpop.f32.mrf.mxu0
        %v6829 = vadd.f32 %v6800, %v6828
        %6830 = vmatmul.f32.gmra.mxu0 %v6489
        %v6831 = vpop.f32.mrf.mxu0
        %v6832 = vadd.f32 %v6803, %v6831
        %6833 = vdwg.mxu0
        %6834 = vmatpush.msra.mxu0 %v6592
        %6835 = vmatpush.msra.mxu0 %v6591
        %6836 = vmatpush.msra.mxu0 %v6590
        %6837 = vmatpush.msra.mxu0 %v6589
        %6838 = vmatpush.msra.mxu0 %v6588
        %6839 = vmatpush.msra.mxu0 %v6587
        %6840 = vmatpush.msra.mxu0 %v6586
        %6841 = vmatpush.msra.mxu0 %v6585
        %6842 = vmatpush.msra.mxu0 %v6584
        %6843 = vmatpush.msra.mxu0 %v6583
        %6844 = vmatpush.msra.mxu0 %v6582
        %6845 = vmatpush.msra.mxu0 %v6581
        %6846 = vmatpush.msra.mxu0 %v6580
        %6847 = vmatpush.msra.mxu0 %v6579
        %6848 = vmatpush.msra.mxu0 %v6578
        %6849 = vmatpush.msra.mxu0 %v6577
        %6850 = vmatmul.f32.gmra.mxu0 %v6454
        %v6851 = vpop.f32.mrf.mxu0
        %v6852 = vadd.f32 %v6823, %v6851
        %6853 = vmatmul.f32.gmra.mxu0 %v6466
        %v6854 = vpop.f32.mrf.mxu0
        %v6855 = vadd.f32 %v6826, %v6854
        %6856 = vmatmul.f32.gmra.mxu0 %v6478
        %v6857 = vpop.f32.mrf.mxu0
        %v6858 = vadd.f32 %v6829, %v6857
        %6859 = vmatmul.f32.gmra.mxu0 %v6490
        %v6860 = vpop.f32.mrf.mxu0
        %v6861 = vadd.f32 %v6832, %v6860
        %6862 = vdwg.mxu0
        %6863 = vmatpush.msra.mxu0 %v6608
        %6864 = vmatpush.msra.mxu0 %v6607
        %6865 = vmatpush.msra.mxu0 %v6606
        %6866 = vmatpush.msra.mxu0 %v6605
        %6867 = vmatpush.msra.mxu0 %v6604
        %6868 = vmatpush.msra.mxu0 %v6603
        %6869 = vmatpush.msra.mxu0 %v6602
        %6870 = vmatpush.msra.mxu0 %v6601
        %6871 = vmatpush.msra.mxu0 %v6600
        %6872 = vmatpush.msra.mxu0 %v6599
        %6873 = vmatpush.msra.mxu0 %v6598
        %6874 = vmatpush.msra.mxu0 %v6597
        %6875 = vmatpush.msra.mxu0 %v6596
        %6876 = vmatpush.msra.mxu0 %v6595
        %6877 = vmatpush.msra.mxu0 %v6594
        %6878 = vmatpush.msra.mxu0 %v6593
        %6879 = vmatmul.f32.gmra.mxu0 %v6455
        %v6880 = vpop.f32.mrf.mxu0
        %v6881 = vadd.f32 %v6852, %v6880
        %6882 = vmatmul.f32.gmra.mxu0 %v6467
        %v6883 = vpop.f32.mrf.mxu0
        %v6884 = vadd.f32 %v6855, %v6883
        %6885 = vmatmul.f32.gmra.mxu0 %v6479
        %v6886 = vpop.f32.mrf.mxu0
        %v6887 = vadd.f32 %v6858, %v6886
        %6888 = vmatmul.f32.gmra.mxu0 %v6491
        %v6889 = vpop.f32.mrf.mxu0
        %v6890 = vadd.f32 %v6861, %v6889
        %6891 = vdwg.mxu0
        %6892 = vmatpush.msra.mxu0 %v6624
        %6893 = vmatpush.msra.mxu0 %v6623
        %6894 = vmatpush.msra.mxu0 %v6622
        %6895 = vmatpush.msra.mxu0 %v6621
        %6896 = vmatpush.msra.mxu0 %v6620
        %6897 = vmatpush.msra.mxu0 %v6619
        %6898 = vmatpush.msra.mxu0 %v6618
        %6899 = vmatpush.msra.mxu0 %v6617
        %6900 = vmatpush.msra.mxu0 %v6616
        %6901 = vmatpush.msra.mxu0 %v6615
        %6902 = vmatpush.msra.mxu0 %v6614
        %6903 = vmatpush.msra.mxu0 %v6613
        %6904 = vmatpush.msra.mxu0 %v6612
        %6905 = vmatpush.msra.mxu0 %v6611
        %6906 = vmatpush.msra.mxu0 %v6610
        %6907 = vmatpush.msra.mxu0 %v6609
        %6908 = vmatmul.f32.gmra.mxu0 %v6456
        %v6909 = vpop.f32.mrf.mxu0
        %v6910 = vadd.f32 %v6881, %v6909
        %6911 = vmatmul.f32.gmra.mxu0 %v6468
        %v6912 = vpop.f32.mrf.mxu0
        %v6913 = vadd.f32 %v6884, %v6912
        %6914 = vmatmul.f32.gmra.mxu0 %v6480
        %v6915 = vpop.f32.mrf.mxu0
        %v6916 = vadd.f32 %v6887, %v6915
        %6917 = vmatmul.f32.gmra.mxu0 %v6492
        %v6918 = vpop.f32.mrf.mxu0
        %v6919 = vadd.f32 %v6890, %v6918
        %6920 = vdwg.mxu0
        %6921 = vmatpush.msra.mxu0 %v6640
        %6922 = vmatpush.msra.mxu0 %v6639
        %6923 = vmatpush.msra.mxu0 %v6638
        %6924 = vmatpush.msra.mxu0 %v6637
        %6925 = vmatpush.msra.mxu0 %v6636
        %6926 = vmatpush.msra.mxu0 %v6635
        %6927 = vmatpush.msra.mxu0 %v6634
        %6928 = vmatpush.msra.mxu0 %v6633
        %6929 = vmatpush.msra.mxu0 %v6632
        %6930 = vmatpush.msra.mxu0 %v6631
        %6931 = vmatpush.msra.mxu0 %v6630
        %6932 = vmatpush.msra.mxu0 %v6629
        %6933 = vmatpush.msra.mxu0 %v6628
        %6934 = vmatpush.msra.mxu0 %v6627
        %6935 = vmatpush.msra.mxu0 %v6626
        %6936 = vmatpush.msra.mxu0 %v6625
        %6937 = vmatmul.f32.gmra.mxu0 %v6457
        %v6938 = vpop.f32.mrf.mxu0
        %v6939 = vadd.f32 %v6910, %v6938
        %6940 = vmatmul.f32.gmra.mxu0 %v6469
        %v6941 = vpop.f32.mrf.mxu0
        %v6942 = vadd.f32 %v6913, %v6941
        %6943 = vmatmul.f32.gmra.mxu0 %v6481
        %v6944 = vpop.f32.mrf.mxu0
        %v6945 = vadd.f32 %v6916, %v6944
        %6946 = vmatmul.f32.gmra.mxu0 %v6493
        %v6947 = vpop.f32.mrf.mxu0
        %v6948 = vadd.f32 %v6919, %v6947
        %6949 = vdwg.mxu0
        %6950 = vmatpush.msra.mxu0 %v6656
        %6951 = vmatpush.msra.mxu0 %v6655
        %6952 = vmatpush.msra.mxu0 %v6654
        %6953 = vmatpush.msra.mxu0 %v6653
        %6954 = vmatpush.msra.mxu0 %v6652
        %6955 = vmatpush.msra.mxu0 %v6651
        %6956 = vmatpush.msra.mxu0 %v6650
        %6957 = vmatpush.msra.mxu0 %v6649
        %6958 = vmatpush.msra.mxu0 %v6648
        %6959 = vmatpush.msra.mxu0 %v6647
        %6960 = vmatpush.msra.mxu0 %v6646
        %6961 = vmatpush.msra.mxu0 %v6645
        %6962 = vmatpush.msra.mxu0 %v6644
        %6963 = vmatpush.msra.mxu0 %v6643
        %6964 = vmatpush.msra.mxu0 %v6642
        %6965 = vmatpush.msra.mxu0 %v6641
        %6966 = vmatmul.f32.gmra.mxu0 %v6458
        %v6967 = vpop.f32.mrf.mxu0
        %v6968 = vadd.f32 %v6939, %v6967
        %6969 = vmatmul.f32.gmra.mxu0 %v6470
        %v6970 = vpop.f32.mrf.mxu0
        %v6971 = vadd.f32 %v6942, %v6970
        %6972 = vmatmul.f32.gmra.mxu0 %v6482
        %v6973 = vpop.f32.mrf.mxu0
        %v6974 = vadd.f32 %v6945, %v6973
        %6975 = vmatmul.f32.gmra.mxu0 %v6494
        %v6976 = vpop.f32.mrf.mxu0
        %v6977 = vadd.f32 %v6948, %v6976
        %6978 = vdwg.mxu0
        %6979 = vmatpush.msra.mxu0 %v6672
        %6980 = vmatpush.msra.mxu0 %v6671
        %6981 = vmatpush.msra.mxu0 %v6670
        %6982 = vmatpush.msra.mxu0 %v6669
        %6983 = vmatpush.msra.mxu0 %v6668
        %6984 = vmatpush.msra.mxu0 %v6667
        %6985 = vmatpush.msra.mxu0 %v6666
        %6986 = vmatpush.msra.mxu0 %v6665
        %6987 = vmatpush.msra.mxu0 %v6664
        %6988 = vmatpush.msra.mxu0 %v6663
        %6989 = vmatpush.msra.mxu0 %v6662
        %6990 = vmatpush.msra.mxu0 %v6661
        %6991 = vmatpush.msra.mxu0 %v6660
        %6992 = vmatpush.msra.mxu0 %v6659
        %6993 = vmatpush.msra.mxu0 %v6658
        %6994 = vmatpush.msra.mxu0 %v6657
        %6995 = vmatmul.f32.gmra.mxu0 %v6459
        %v6996 = vpop.f32.mrf.mxu0
        %v6997 = vadd.f32 %v6968, %v6996
        %6998 = vmatmul.f32.gmra.mxu0 %v6471
        %v6999 = vpop.f32.mrf.mxu0
        %v7000 = vadd.f32 %v6971, %v6999
        %7001 = vmatmul.f32.gmra.mxu0 %v6483
        %v7002 = vpop.f32.mrf.mxu0
        %v7003 = vadd.f32 %v6974, %v7002
        %7004 = vmatmul.f32.gmra.mxu0 %v6495
        %v7005 = vpop.f32.mrf.mxu0
        %v7006 = vadd.f32 %v6977, %v7005
        %7007 = vdwg.mxu0
        %7008 = vmatpush.msra.mxu0 %v6688
        %7009 = vmatpush.msra.mxu0 %v6687
        %7010 = vmatpush.msra.mxu0 %v6686
        %7011 = vmatpush.msra.mxu0 %v6685
        %7012 = vmatpush.msra.mxu0 %v6684
        %7013 = vmatpush.msra.mxu0 %v6683
        %7014 = vmatpush.msra.mxu0 %v6682
        %7015 = vmatpush.msra.mxu0 %v6681
        %7016 = vmatpush.msra.mxu0 %v6680
        %7017 = vmatpush.msra.mxu0 %v6679
        %7018 = vmatpush.msra.mxu0 %v6678
        %7019 = vmatpush.msra.mxu0 %v6677
        %7020 = vmatpush.msra.mxu0 %v6676
        %7021 = vmatpush.msra.mxu0 %v6675
        %7022 = vmatpush.msra.mxu0 %v6674
        %7023 = vmatpush.msra.mxu0 %v6673
        %7024 = vmatmul.f32.gmra.mxu0 %v6460
        %v7025 = vpop.f32.mrf.mxu0
        %v7026 = vadd.f32 %v6997, %v7025
        %7027 = vmatmul.f32.gmra.mxu0 %v6472
        %v7028 = vpop.f32.mrf.mxu0
        %v7029 = vadd.f32 %v7000, %v7028
        %7030 = vmatmul.f32.gmra.mxu0 %v6484
        %v7031 = vpop.f32.mrf.mxu0
        %v7032 = vadd.f32 %v7003, %v7031
        %7033 = vmatmul.f32.gmra.mxu0 %v6496
        %v7034 = vpop.f32.mrf.mxu0
        %v7035 = vadd.f32 %v7006, %v7034
        %7036 = vdwg.mxu0
        %v7037 = vmul.f32 %v7026, %v4015
        %v7038 = vmul.f32 %v7029, %v4015
        %v7039 = vmul.f32 %v7032, %v4015
        %v7040 = vmul.f32 %v7035, %v4015
        %v7041 = vadd.f32 %v7037, %v4020
        %v7042 = vadd.f32 %v7038, %v4020
        %v7043 = vadd.f32 %v7039, %v4020
        %v7044 = vadd.f32 %v7040, %v4020
        %v7045 = vmax.f32 %v7041, 0.0
        %v7046 = vmax.f32 %v7042, 0.0
        %v7047 = vmax.f32 %v7043, 0.0
        %v7048 = vmax.f32 %v7044, 0.0
        %7049 = vst [vmem:[#allocation3 + $0x28] sm:$0xff] %v7045
        %7050 = vst [vmem:[#allocation3 + $0x68] sm:$0xff] %v7046
        %7051 = vst [vmem:[#allocation3 + $0xa8] sm:$0xff] %v7047
        %7052 = vst [vmem:[#allocation3 + $0xe8] sm:$0xff] %v7048
        %v7053 = vld [vmem:[#allocation2 + $0x120] sm:$0xff]
        %v7054 = vld [vmem:[#allocation2 + $0x128] sm:$0xff]
        %v7055 = vld [vmem:[#allocation2 + $0x130] sm:$0xff]
        %v7056 = vld [vmem:[#allocation2 + $0x138] sm:$0xff]
        %v7057 = vld [vmem:[#allocation2 + $0x140] sm:$0xff]
        %v7058 = vld [vmem:[#allocation2 + $0x148] sm:$0xff]
        %v7059 = vld [vmem:[#allocation2 + $0x150] sm:$0xff]
        %v7060 = vld [vmem:[#allocation2 + $0x158] sm:$0xff]
        %v7061 = vld [vmem:[#allocation2 + $0x160] sm:$0xff]
        %v7062 = vld [vmem:[#allocation2 + $0x168] sm:$0xff]
        %v7063 = vld [vmem:[#allocation2 + $0x170] sm:$0xff]
        %v7064 = vld [vmem:[#allocation2 + $0x178] sm:$0xff]
        %v7065 = vld [vmem:[#allocation2 + $0x2d0] sm:$0xff]
        %v7066 = vld [vmem:[#allocation2 + $0x2d8] sm:$0xff]
        %v7067 = vld [vmem:[#allocation2 + $0x2e0] sm:$0xff]
        %v7068 = vld [vmem:[#allocation2 + $0x2e8] sm:$0xff]
        %v7069 = vld [vmem:[#allocation2 + $0x2f0] sm:$0xff]
        %v7070 = vld [vmem:[#allocation2 + $0x2f8] sm:$0xff]
        %v7071 = vld [vmem:[#allocation2 + $0x300] sm:$0xff]
        %v7072 = vld [vmem:[#allocation2 + $0x308] sm:$0xff]
        %v7073 = vld [vmem:[#allocation2 + $0x310] sm:$0xff]
        %v7074 = vld [vmem:[#allocation2 + $0x318] sm:$0xff]
        %v7075 = vld [vmem:[#allocation2 + $0x320] sm:$0xff]
        %v7076 = vld [vmem:[#allocation2 + $0x328] sm:$0xff]
        %v7077 = vld [vmem:[#allocation2 + $0x480] sm:$0xff]
        %v7078 = vld [vmem:[#allocation2 + $0x488] sm:$0xff]
        %v7079 = vld [vmem:[#allocation2 + $0x490] sm:$0xff]
        %v7080 = vld [vmem:[#allocation2 + $0x498] sm:$0xff]
        %v7081 = vld [vmem:[#allocation2 + $0x4a0] sm:$0xff]
        %v7082 = vld [vmem:[#allocation2 + $0x4a8] sm:$0xff]
        %v7083 = vld [vmem:[#allocation2 + $0x4b0] sm:$0xff]
        %v7084 = vld [vmem:[#allocation2 + $0x4b8] sm:$0xff]
        %v7085 = vld [vmem:[#allocation2 + $0x4c0] sm:$0xff]
        %v7086 = vld [vmem:[#allocation2 + $0x4c8] sm:$0xff]
        %v7087 = vld [vmem:[#allocation2 + $0x4d0] sm:$0xff]
        %v7088 = vld [vmem:[#allocation2 + $0x4d8] sm:$0xff]
        %v7089 = vld [vmem:[#allocation2 + $0x630] sm:$0xff]
        %v7090 = vld [vmem:[#allocation2 + $0x638] sm:$0xff]
        %v7091 = vld [vmem:[#allocation2 + $0x640] sm:$0xff]
        %v7092 = vld [vmem:[#allocation2 + $0x648] sm:$0xff]
        %v7093 = vld [vmem:[#allocation2 + $0x650] sm:$0xff]
        %v7094 = vld [vmem:[#allocation2 + $0x658] sm:$0xff]
        %v7095 = vld [vmem:[#allocation2 + $0x660] sm:$0xff]
        %v7096 = vld [vmem:[#allocation2 + $0x668] sm:$0xff]
        %v7097 = vld [vmem:[#allocation2 + $0x670] sm:$0xff]
        %v7098 = vld [vmem:[#allocation2 + $0x678] sm:$0xff]
        %v7099 = vld [vmem:[#allocation2 + $0x680] sm:$0xff]
        %v7100 = vld [vmem:[#allocation2 + $0x688] sm:$0xff]
        %v7101 = vld [vmem:[%s2] sm:$0xff]
        %v7102 = vld [vmem:[%s2 + $0x8] sm:$0xff]
        %v7103 = vld [vmem:[%s2 + $0x10] sm:$0xff]
        %v7104 = vld [vmem:[%s2 + $0x18] sm:$0xff]
        %v7105 = vld [vmem:[%s2 + $0x20] sm:$0xff]
        %v7106 = vld [vmem:[%s2 + $0x28] sm:$0xff]
        %v7107 = vld [vmem:[%s2 + $0x30] sm:$0xff]
        %v7108 = vld [vmem:[%s2 + $0x38] sm:$0xff]
        %v7109 = vld [vmem:[%s2 + $0x40] sm:$0xff]
        %v7110 = vld [vmem:[%s2 + $0x48] sm:$0xff]
        %v7111 = vld [vmem:[%s2 + $0x50] sm:$0xff]
        %v7112 = vld [vmem:[%s2 + $0x58] sm:$0xff]
        %v7113 = vld [vmem:[%s2 + $0x60] sm:$0xff]
        %v7114 = vld [vmem:[%s2 + $0x68] sm:$0xff]
        %v7115 = vld [vmem:[%s2 + $0x70] sm:$0xff]
        %v7116 = vld [vmem:[%s2 + $0x78] sm:$0xff]
        %v7117 = vld [vmem:[%s2 + $0x80] sm:$0xff]
        %v7118 = vld [vmem:[%s2 + $0x88] sm:$0xff]
        %v7119 = vld [vmem:[%s2 + $0x90] sm:$0xff]
        %v7120 = vld [vmem:[%s2 + $0x98] sm:$0xff]
        %v7121 = vld [vmem:[%s2 + $0xa0] sm:$0xff]
        %v7122 = vld [vmem:[%s2 + $0xa8] sm:$0xff]
        %v7123 = vld [vmem:[%s2 + $0xb0] sm:$0xff]
        %v7124 = vld [vmem:[%s2 + $0xb8] sm:$0xff]
        %v7125 = vld [vmem:[%s2 + $0xc0] sm:$0xff]
        %v7126 = vld [vmem:[%s2 + $0xc8] sm:$0xff]
        %v7127 = vld [vmem:[%s2 + $0xd0] sm:$0xff]
        %v7128 = vld [vmem:[%s2 + $0xd8] sm:$0xff]
        %v7129 = vld [vmem:[%s2 + $0xe0] sm:$0xff]
        %v7130 = vld [vmem:[%s2 + $0xe8] sm:$0xff]
        %v7131 = vld [vmem:[%s2 + $0xf0] sm:$0xff]
        %v7132 = vld [vmem:[%s2 + $0xf8] sm:$0xff]
        %v7133 = vld [vmem:[%s2 + $0x100] sm:$0xff]
        %v7134 = vld [vmem:[%s2 + $0x108] sm:$0xff]
        %v7135 = vld [vmem:[%s2 + $0x110] sm:$0xff]
        %v7136 = vld [vmem:[%s2 + $0x118] sm:$0xff]
        %v7137 = vld [vmem:[%s2 + $0x120] sm:$0xff]
        %v7138 = vld [vmem:[%s2 + $0x128] sm:$0xff]
        %v7139 = vld [vmem:[%s2 + $0x130] sm:$0xff]
        %v7140 = vld [vmem:[%s2 + $0x138] sm:$0xff]
        %v7141 = vld [vmem:[%s2 + $0x140] sm:$0xff]
        %v7142 = vld [vmem:[%s2 + $0x148] sm:$0xff]
        %v7143 = vld [vmem:[%s2 + $0x150] sm:$0xff]
        %v7144 = vld [vmem:[%s2 + $0x158] sm:$0xff]
        %v7145 = vld [vmem:[%s2 + $0x160] sm:$0xff]
        %v7146 = vld [vmem:[%s2 + $0x168] sm:$0xff]
        %v7147 = vld [vmem:[%s2 + $0x170] sm:$0xff]
        %v7148 = vld [vmem:[%s2 + $0x178] sm:$0xff]
        %v7149 = vld [vmem:[%s2 + $0x180] sm:$0xff]
        %v7150 = vld [vmem:[%s2 + $0x188] sm:$0xff]
        %v7151 = vld [vmem:[%s2 + $0x190] sm:$0xff]
        %v7152 = vld [vmem:[%s2 + $0x198] sm:$0xff]
        %v7153 = vld [vmem:[%s2 + $0x1a0] sm:$0xff]
        %v7154 = vld [vmem:[%s2 + $0x1a8] sm:$0xff]
        %v7155 = vld [vmem:[%s2 + $0x1b0] sm:$0xff]
        %v7156 = vld [vmem:[%s2 + $0x1b8] sm:$0xff]
        %v7157 = vld [vmem:[%s2 + $0x1c0] sm:$0xff]
        %v7158 = vld [vmem:[%s2 + $0x1c8] sm:$0xff]
        %v7159 = vld [vmem:[%s2 + $0x1d0] sm:$0xff]
        %v7160 = vld [vmem:[%s2 + $0x1d8] sm:$0xff]
        %v7161 = vld [vmem:[%s2 + $0x1e0] sm:$0xff]
        %v7162 = vld [vmem:[%s2 + $0x1e8] sm:$0xff]
        %v7163 = vld [vmem:[%s2 + $0x1f0] sm:$0xff]
        %v7164 = vld [vmem:[%s2 + $0x1f8] sm:$0xff]
        %v7165 = vld [vmem:[%s2 + $0x200] sm:$0xff]
        %v7166 = vld [vmem:[%s2 + $0x208] sm:$0xff]
        %v7167 = vld [vmem:[%s2 + $0x210] sm:$0xff]
        %v7168 = vld [vmem:[%s2 + $0x218] sm:$0xff]
        %v7169 = vld [vmem:[%s2 + $0x220] sm:$0xff]
        %v7170 = vld [vmem:[%s2 + $0x228] sm:$0xff]
        %v7171 = vld [vmem:[%s2 + $0x230] sm:$0xff]
        %v7172 = vld [vmem:[%s2 + $0x238] sm:$0xff]
        %v7173 = vld [vmem:[%s2 + $0x240] sm:$0xff]
        %v7174 = vld [vmem:[%s2 + $0x248] sm:$0xff]
        %v7175 = vld [vmem:[%s2 + $0x250] sm:$0xff]
        %v7176 = vld [vmem:[%s2 + $0x258] sm:$0xff]
        %v7177 = vld [vmem:[%s2 + $0x260] sm:$0xff]
        %v7178 = vld [vmem:[%s2 + $0x268] sm:$0xff]
        %v7179 = vld [vmem:[%s2 + $0x270] sm:$0xff]
        %v7180 = vld [vmem:[%s2 + $0x278] sm:$0xff]
        %v7181 = vld [vmem:[%s2 + $0x280] sm:$0xff]
        %v7182 = vld [vmem:[%s2 + $0x288] sm:$0xff]
        %v7183 = vld [vmem:[%s2 + $0x290] sm:$0xff]
        %v7184 = vld [vmem:[%s2 + $0x298] sm:$0xff]
        %v7185 = vld [vmem:[%s2 + $0x2a0] sm:$0xff]
        %v7186 = vld [vmem:[%s2 + $0x2a8] sm:$0xff]
        %v7187 = vld [vmem:[%s2 + $0x2b0] sm:$0xff]
        %v7188 = vld [vmem:[%s2 + $0x2b8] sm:$0xff]
        %v7189 = vld [vmem:[%s2 + $0x2c0] sm:$0xff]
        %v7190 = vld [vmem:[%s2 + $0x2c8] sm:$0xff]
        %v7191 = vld [vmem:[%s2 + $0x2d0] sm:$0xff]
        %v7192 = vld [vmem:[%s2 + $0x2d8] sm:$0xff]
        %v7193 = vld [vmem:[%s2 + $0x2e0] sm:$0xff]
        %v7194 = vld [vmem:[%s2 + $0x2e8] sm:$0xff]
        %v7195 = vld [vmem:[%s2 + $0x2f0] sm:$0xff]
        %v7196 = vld [vmem:[%s2 + $0x2f8] sm:$0xff]
        %v7197 = vld [vmem:[%s2 + $0x300] sm:$0xff]
        %v7198 = vld [vmem:[%s2 + $0x308] sm:$0xff]
        %v7199 = vld [vmem:[%s2 + $0x310] sm:$0xff]
        %v7200 = vld [vmem:[%s2 + $0x318] sm:$0xff]
        %v7201 = vld [vmem:[%s2 + $0x320] sm:$0xff]
        %v7202 = vld [vmem:[%s2 + $0x328] sm:$0xff]
        %v7203 = vld [vmem:[%s2 + $0x330] sm:$0xff]
        %v7204 = vld [vmem:[%s2 + $0x338] sm:$0xff]
        %v7205 = vld [vmem:[%s2 + $0x340] sm:$0xff]
        %v7206 = vld [vmem:[%s2 + $0x348] sm:$0xff]
        %v7207 = vld [vmem:[%s2 + $0x350] sm:$0xff]
        %v7208 = vld [vmem:[%s2 + $0x358] sm:$0xff]
        %v7209 = vld [vmem:[%s2 + $0x360] sm:$0xff]
        %v7210 = vld [vmem:[%s2 + $0x368] sm:$0xff]
        %v7211 = vld [vmem:[%s2 + $0x370] sm:$0xff]
        %v7212 = vld [vmem:[%s2 + $0x378] sm:$0xff]
        %v7213 = vld [vmem:[%s2 + $0x380] sm:$0xff]
        %v7214 = vld [vmem:[%s2 + $0x388] sm:$0xff]
        %v7215 = vld [vmem:[%s2 + $0x390] sm:$0xff]
        %v7216 = vld [vmem:[%s2 + $0x398] sm:$0xff]
        %v7217 = vld [vmem:[%s2 + $0x3a0] sm:$0xff]
        %v7218 = vld [vmem:[%s2 + $0x3a8] sm:$0xff]
        %v7219 = vld [vmem:[%s2 + $0x3b0] sm:$0xff]
        %v7220 = vld [vmem:[%s2 + $0x3b8] sm:$0xff]
        %v7221 = vld [vmem:[%s2 + $0x3c0] sm:$0xff]
        %v7222 = vld [vmem:[%s2 + $0x3c8] sm:$0xff]
        %v7223 = vld [vmem:[%s2 + $0x3d0] sm:$0xff]
        %v7224 = vld [vmem:[%s2 + $0x3d8] sm:$0xff]
        %v7225 = vld [vmem:[%s2 + $0x3e0] sm:$0xff]
        %v7226 = vld [vmem:[%s2 + $0x3e8] sm:$0xff]
        %v7227 = vld [vmem:[%s2 + $0x3f0] sm:$0xff]
        %v7228 = vld [vmem:[%s2 + $0x3f8] sm:$0xff]
        %v7229 = vld [vmem:[%s2 + $0x400] sm:$0xff]
        %v7230 = vld [vmem:[%s2 + $0x408] sm:$0xff]
        %v7231 = vld [vmem:[%s2 + $0x410] sm:$0xff]
        %v7232 = vld [vmem:[%s2 + $0x418] sm:$0xff]
        %v7233 = vld [vmem:[%s2 + $0x420] sm:$0xff]
        %v7234 = vld [vmem:[%s2 + $0x428] sm:$0xff]
        %v7235 = vld [vmem:[%s2 + $0x430] sm:$0xff]
        %v7236 = vld [vmem:[%s2 + $0x438] sm:$0xff]
        %v7237 = vld [vmem:[%s2 + $0x440] sm:$0xff]
        %v7238 = vld [vmem:[%s2 + $0x448] sm:$0xff]
        %v7239 = vld [vmem:[%s2 + $0x450] sm:$0xff]
        %v7240 = vld [vmem:[%s2 + $0x458] sm:$0xff]
        %v7241 = vld [vmem:[%s2 + $0x460] sm:$0xff]
        %v7242 = vld [vmem:[%s2 + $0x468] sm:$0xff]
        %v7243 = vld [vmem:[%s2 + $0x470] sm:$0xff]
        %v7244 = vld [vmem:[%s2 + $0x478] sm:$0xff]
        %v7245 = vld [vmem:[%s2 + $0x480] sm:$0xff]
        %v7246 = vld [vmem:[%s2 + $0x488] sm:$0xff]
        %v7247 = vld [vmem:[%s2 + $0x490] sm:$0xff]
        %v7248 = vld [vmem:[%s2 + $0x498] sm:$0xff]
        %v7249 = vld [vmem:[%s2 + $0x4a0] sm:$0xff]
        %v7250 = vld [vmem:[%s2 + $0x4a8] sm:$0xff]
        %v7251 = vld [vmem:[%s2 + $0x4b0] sm:$0xff]
        %v7252 = vld [vmem:[%s2 + $0x4b8] sm:$0xff]
        %v7253 = vld [vmem:[%s2 + $0x4c0] sm:$0xff]
        %v7254 = vld [vmem:[%s2 + $0x4c8] sm:$0xff]
        %v7255 = vld [vmem:[%s2 + $0x4d0] sm:$0xff]
        %v7256 = vld [vmem:[%s2 + $0x4d8] sm:$0xff]
        %v7257 = vld [vmem:[%s2 + $0x4e0] sm:$0xff]
        %v7258 = vld [vmem:[%s2 + $0x4e8] sm:$0xff]
        %v7259 = vld [vmem:[%s2 + $0x4f0] sm:$0xff]
        %v7260 = vld [vmem:[%s2 + $0x4f8] sm:$0xff]
        %v7261 = vld [vmem:[%s2 + $0x500] sm:$0xff]
        %v7262 = vld [vmem:[%s2 + $0x508] sm:$0xff]
        %v7263 = vld [vmem:[%s2 + $0x510] sm:$0xff]
        %v7264 = vld [vmem:[%s2 + $0x518] sm:$0xff]
        %v7265 = vld [vmem:[%s2 + $0x520] sm:$0xff]
        %v7266 = vld [vmem:[%s2 + $0x528] sm:$0xff]
        %v7267 = vld [vmem:[%s2 + $0x530] sm:$0xff]
        %v7268 = vld [vmem:[%s2 + $0x538] sm:$0xff]
        %v7269 = vld [vmem:[%s2 + $0x540] sm:$0xff]
        %v7270 = vld [vmem:[%s2 + $0x548] sm:$0xff]
        %v7271 = vld [vmem:[%s2 + $0x550] sm:$0xff]
        %v7272 = vld [vmem:[%s2 + $0x558] sm:$0xff]
        %v7273 = vld [vmem:[%s2 + $0x560] sm:$0xff]
        %v7274 = vld [vmem:[%s2 + $0x568] sm:$0xff]
        %v7275 = vld [vmem:[%s2 + $0x570] sm:$0xff]
        %v7276 = vld [vmem:[%s2 + $0x578] sm:$0xff]
        %v7277 = vld [vmem:[%s2 + $0x580] sm:$0xff]
        %v7278 = vld [vmem:[%s2 + $0x588] sm:$0xff]
        %v7279 = vld [vmem:[%s2 + $0x590] sm:$0xff]
        %v7280 = vld [vmem:[%s2 + $0x598] sm:$0xff]
        %v7281 = vld [vmem:[%s2 + $0x5a0] sm:$0xff]
        %v7282 = vld [vmem:[%s2 + $0x5a8] sm:$0xff]
        %v7283 = vld [vmem:[%s2 + $0x5b0] sm:$0xff]
        %v7284 = vld [vmem:[%s2 + $0x5b8] sm:$0xff]
        %v7285 = vld [vmem:[%s2 + $0x5c0] sm:$0xff]
        %v7286 = vld [vmem:[%s2 + $0x5c8] sm:$0xff]
        %v7287 = vld [vmem:[%s2 + $0x5d0] sm:$0xff]
        %v7288 = vld [vmem:[%s2 + $0x5d8] sm:$0xff]
        %v7289 = vld [vmem:[%s2 + $0x5e0] sm:$0xff]
        %v7290 = vld [vmem:[%s2 + $0x5e8] sm:$0xff]
        %v7291 = vld [vmem:[%s2 + $0x5f0] sm:$0xff]
        %v7292 = vld [vmem:[%s2 + $0x5f8] sm:$0xff]
        %7293 = vmatpush.msra.mxu0 %v7116
        %7294 = vmatpush.msra.mxu0 %v7115
        %7295 = vmatpush.msra.mxu0 %v7114
        %7296 = vmatpush.msra.mxu0 %v7113
        %7297 = vmatpush.msra.mxu0 %v7112
        %7298 = vmatpush.msra.mxu0 %v7111
        %7299 = vmatpush.msra.mxu0 %v7110
        %7300 = vmatpush.msra.mxu0 %v7109
        %7301 = vmatpush.msra.mxu0 %v7108
        %7302 = vmatpush.msra.mxu0 %v7107
        %7303 = vmatpush.msra.mxu0 %v7106
        %7304 = vmatpush.msra.mxu0 %v7105
        %7305 = vmatpush.msra.mxu0 %v7104
        %7306 = vmatpush.msra.mxu0 %v7103
        %7307 = vmatpush.msra.mxu0 %v7102
        %7308 = vmatpush.msra.mxu0 %v7101
        %7309 = vmatmul.f32.gmra.mxu0 %v7053
        %v7310 = vpop.f32.mrf.mxu0
        %v7311 = vadd.f32 0.0, %v7310
        %7312 = vmatmul.f32.gmra.mxu0 %v7065
        %v7313 = vpop.f32.mrf.mxu0
        %v7314 = vadd.f32 0.0, %v7313
        %7315 = vmatmul.f32.gmra.mxu0 %v7077
        %v7316 = vpop.f32.mrf.mxu0
        %v7317 = vadd.f32 0.0, %v7316
        %7318 = vmatmul.f32.gmra.mxu0 %v7089
        %v7319 = vpop.f32.mrf.mxu0
        %v7320 = vadd.f32 0.0, %v7319
        %7321 = vdwg.mxu0
        %7322 = vmatpush.msra.mxu0 %v7132
        %7323 = vmatpush.msra.mxu0 %v7131
        %7324 = vmatpush.msra.mxu0 %v7130
        %7325 = vmatpush.msra.mxu0 %v7129
        %7326 = vmatpush.msra.mxu0 %v7128
        %7327 = vmatpush.msra.mxu0 %v7127
        %7328 = vmatpush.msra.mxu0 %v7126
        %7329 = vmatpush.msra.mxu0 %v7125
        %7330 = vmatpush.msra.mxu0 %v7124
        %7331 = vmatpush.msra.mxu0 %v7123
        %7332 = vmatpush.msra.mxu0 %v7122
        %7333 = vmatpush.msra.mxu0 %v7121
        %7334 = vmatpush.msra.mxu0 %v7120
        %7335 = vmatpush.msra.mxu0 %v7119
        %7336 = vmatpush.msra.mxu0 %v7118
        %7337 = vmatpush.msra.mxu0 %v7117
        %7338 = vmatmul.f32.gmra.mxu0 %v7054
        %v7339 = vpop.f32.mrf.mxu0
        %v7340 = vadd.f32 %v7311, %v7339
        %7341 = vmatmul.f32.gmra.mxu0 %v7066
        %v7342 = vpop.f32.mrf.mxu0
        %v7343 = vadd.f32 %v7314, %v7342
        %7344 = vmatmul.f32.gmra.mxu0 %v7078
        %v7345 = vpop.f32.mrf.mxu0
        %v7346 = vadd.f32 %v7317, %v7345
        %7347 = vmatmul.f32.gmra.mxu0 %v7090
        %v7348 = vpop.f32.mrf.mxu0
        %v7349 = vadd.f32 %v7320, %v7348
        %7350 = vdwg.mxu0
        %7351 = vmatpush.msra.mxu0 %v7148
        %7352 = vmatpush.msra.mxu0 %v7147
        %7353 = vmatpush.msra.mxu0 %v7146
        %7354 = vmatpush.msra.mxu0 %v7145
        %7355 = vmatpush.msra.mxu0 %v7144
        %7356 = vmatpush.msra.mxu0 %v7143
        %7357 = vmatpush.msra.mxu0 %v7142
        %7358 = vmatpush.msra.mxu0 %v7141
        %7359 = vmatpush.msra.mxu0 %v7140
        %7360 = vmatpush.msra.mxu0 %v7139
        %7361 = vmatpush.msra.mxu0 %v7138
        %7362 = vmatpush.msra.mxu0 %v7137
        %7363 = vmatpush.msra.mxu0 %v7136
        %7364 = vmatpush.msra.mxu0 %v7135
        %7365 = vmatpush.msra.mxu0 %v7134
        %7366 = vmatpush.msra.mxu0 %v7133
        %7367 = vmatmul.f32.gmra.mxu0 %v7055
        %v7368 = vpop.f32.mrf.mxu0
        %v7369 = vadd.f32 %v7340, %v7368
        %7370 = vmatmul.f32.gmra.mxu0 %v7067
        %v7371 = vpop.f32.mrf.mxu0
        %v7372 = vadd.f32 %v7343, %v7371
        %7373 = vmatmul.f32.gmra.mxu0 %v7079
        %v7374 = vpop.f32.mrf.mxu0
        %v7375 = vadd.f32 %v7346, %v7374
        %7376 = vmatmul.f32.gmra.mxu0 %v7091
        %v7377 = vpop.f32.mrf.mxu0
        %v7378 = vadd.f32 %v7349, %v7377
        %7379 = vdwg.mxu0
        %7380 = vmatpush.msra.mxu0 %v7164
        %7381 = vmatpush.msra.mxu0 %v7163
        %7382 = vmatpush.msra.mxu0 %v7162
        %7383 = vmatpush.msra.mxu0 %v7161
        %7384 = vmatpush.msra.mxu0 %v7160
        %7385 = vmatpush.msra.mxu0 %v7159
        %7386 = vmatpush.msra.mxu0 %v7158
        %7387 = vmatpush.msra.mxu0 %v7157
        %7388 = vmatpush.msra.mxu0 %v7156
        %7389 = vmatpush.msra.mxu0 %v7155
        %7390 = vmatpush.msra.mxu0 %v7154
        %7391 = vmatpush.msra.mxu0 %v7153
        %7392 = vmatpush.msra.mxu0 %v7152
        %7393 = vmatpush.msra.mxu0 %v7151
        %7394 = vmatpush.msra.mxu0 %v7150
        %7395 = vmatpush.msra.mxu0 %v7149
        %7396 = vmatmul.f32.gmra.mxu0 %v7056
        %v7397 = vpop.f32.mrf.mxu0
        %v7398 = vadd.f32 %v7369, %v7397
        %7399 = vmatmul.f32.gmra.mxu0 %v7068
        %v7400 = vpop.f32.mrf.mxu0
        %v7401 = vadd.f32 %v7372, %v7400
        %7402 = vmatmul.f32.gmra.mxu0 %v7080
        %v7403 = vpop.f32.mrf.mxu0
        %v7404 = vadd.f32 %v7375, %v7403
        %7405 = vmatmul.f32.gmra.mxu0 %v7092
        %v7406 = vpop.f32.mrf.mxu0
        %v7407 = vadd.f32 %v7378, %v7406
        %7408 = vdwg.mxu0
        %7409 = vmatpush.msra.mxu0 %v7180
        %7410 = vmatpush.msra.mxu0 %v7179
        %7411 = vmatpush.msra.mxu0 %v7178
        %7412 = vmatpush.msra.mxu0 %v7177
        %7413 = vmatpush.msra.mxu0 %v7176
        %7414 = vmatpush.msra.mxu0 %v7175
        %7415 = vmatpush.msra.mxu0 %v7174
        %7416 = vmatpush.msra.mxu0 %v7173
        %7417 = vmatpush.msra.mxu0 %v7172
        %7418 = vmatpush.msra.mxu0 %v7171
        %7419 = vmatpush.msra.mxu0 %v7170
        %7420 = vmatpush.msra.mxu0 %v7169
        %7421 = vmatpush.msra.mxu0 %v7168
        %7422 = vmatpush.msra.mxu0 %v7167
        %7423 = vmatpush.msra.mxu0 %v7166
        %7424 = vmatpush.msra.mxu0 %v7165
        %7425 = vmatmul.f32.gmra.mxu0 %v7057
        %v7426 = vpop.f32.mrf.mxu0
        %v7427 = vadd.f32 %v7398, %v7426
        %7428 = vmatmul.f32.gmra.mxu0 %v7069
        %v7429 = vpop.f32.mrf.mxu0
        %v7430 = vadd.f32 %v7401, %v7429
        %7431 = vmatmul.f32.gmra.mxu0 %v7081
        %v7432 = vpop.f32.mrf.mxu0
        %v7433 = vadd.f32 %v7404, %v7432
        %7434 = vmatmul.f32.gmra.mxu0 %v7093
        %v7435 = vpop.f32.mrf.mxu0
        %v7436 = vadd.f32 %v7407, %v7435
        %7437 = vdwg.mxu0
        %7438 = vmatpush.msra.mxu0 %v7196
        %7439 = vmatpush.msra.mxu0 %v7195
        %7440 = vmatpush.msra.mxu0 %v7194
        %7441 = vmatpush.msra.mxu0 %v7193
        %7442 = vmatpush.msra.mxu0 %v7192
        %7443 = vmatpush.msra.mxu0 %v7191
        %7444 = vmatpush.msra.mxu0 %v7190
        %7445 = vmatpush.msra.mxu0 %v7189
        %7446 = vmatpush.msra.mxu0 %v7188
        %7447 = vmatpush.msra.mxu0 %v7187
        %7448 = vmatpush.msra.mxu0 %v7186
        %7449 = vmatpush.msra.mxu0 %v7185
        %7450 = vmatpush.msra.mxu0 %v7184
        %7451 = vmatpush.msra.mxu0 %v7183
        %7452 = vmatpush.msra.mxu0 %v7182
        %7453 = vmatpush.msra.mxu0 %v7181
        %7454 = vmatmul.f32.gmra.mxu0 %v7058
        %v7455 = vpop.f32.mrf.mxu0
        %v7456 = vadd.f32 %v7427, %v7455
        %7457 = vmatmul.f32.gmra.mxu0 %v7070
        %v7458 = vpop.f32.mrf.mxu0
        %v7459 = vadd.f32 %v7430, %v7458
        %7460 = vmatmul.f32.gmra.mxu0 %v7082
        %v7461 = vpop.f32.mrf.mxu0
        %v7462 = vadd.f32 %v7433, %v7461
        %7463 = vmatmul.f32.gmra.mxu0 %v7094
        %v7464 = vpop.f32.mrf.mxu0
        %v7465 = vadd.f32 %v7436, %v7464
        %7466 = vdwg.mxu0
        %7467 = vmatpush.msra.mxu0 %v7212
        %7468 = vmatpush.msra.mxu0 %v7211
        %7469 = vmatpush.msra.mxu0 %v7210
        %7470 = vmatpush.msra.mxu0 %v7209
        %7471 = vmatpush.msra.mxu0 %v7208
        %7472 = vmatpush.msra.mxu0 %v7207
        %7473 = vmatpush.msra.mxu0 %v7206
        %7474 = vmatpush.msra.mxu0 %v7205
        %7475 = vmatpush.msra.mxu0 %v7204
        %7476 = vmatpush.msra.mxu0 %v7203
        %7477 = vmatpush.msra.mxu0 %v7202
        %7478 = vmatpush.msra.mxu0 %v7201
        %7479 = vmatpush.msra.mxu0 %v7200
        %7480 = vmatpush.msra.mxu0 %v7199
        %7481 = vmatpush.msra.mxu0 %v7198
        %7482 = vmatpush.msra.mxu0 %v7197
        %7483 = vmatmul.f32.gmra.mxu0 %v7059
        %v7484 = vpop.f32.mrf.mxu0
        %v7485 = vadd.f32 %v7456, %v7484
        %7486 = vmatmul.f32.gmra.mxu0 %v7071
        %v7487 = vpop.f32.mrf.mxu0
        %v7488 = vadd.f32 %v7459, %v7487
        %7489 = vmatmul.f32.gmra.mxu0 %v7083
        %v7490 = vpop.f32.mrf.mxu0
        %v7491 = vadd.f32 %v7462, %v7490
        %7492 = vmatmul.f32.gmra.mxu0 %v7095
        %v7493 = vpop.f32.mrf.mxu0
        %v7494 = vadd.f32 %v7465, %v7493
        %7495 = vdwg.mxu0
        %7496 = vmatpush.msra.mxu0 %v7228
        %7497 = vmatpush.msra.mxu0 %v7227
        %7498 = vmatpush.msra.mxu0 %v7226
        %7499 = vmatpush.msra.mxu0 %v7225
        %7500 = vmatpush.msra.mxu0 %v7224
        %7501 = vmatpush.msra.mxu0 %v7223
        %7502 = vmatpush.msra.mxu0 %v7222
        %7503 = vmatpush.msra.mxu0 %v7221
        %7504 = vmatpush.msra.mxu0 %v7220
        %7505 = vmatpush.msra.mxu0 %v7219
        %7506 = vmatpush.msra.mxu0 %v7218
        %7507 = vmatpush.msra.mxu0 %v7217
        %7508 = vmatpush.msra.mxu0 %v7216
        %7509 = vmatpush.msra.mxu0 %v7215
        %7510 = vmatpush.msra.mxu0 %v7214
        %7511 = vmatpush.msra.mxu0 %v7213
        %7512 = vmatmul.f32.gmra.mxu0 %v7060
        %v7513 = vpop.f32.mrf.mxu0
        %v7514 = vadd.f32 %v7485, %v7513
        %7515 = vmatmul.f32.gmra.mxu0 %v7072
        %v7516 = vpop.f32.mrf.mxu0
        %v7517 = vadd.f32 %v7488, %v7516
        %7518 = vmatmul.f32.gmra.mxu0 %v7084
        %v7519 = vpop.f32.mrf.mxu0
        %v7520 = vadd.f32 %v7491, %v7519
        %7521 = vmatmul.f32.gmra.mxu0 %v7096
        %v7522 = vpop.f32.mrf.mxu0
        %v7523 = vadd.f32 %v7494, %v7522
        %7524 = vdwg.mxu0
        %7525 = vmatpush.msra.mxu0 %v7244
        %7526 = vmatpush.msra.mxu0 %v7243
        %7527 = vmatpush.msra.mxu0 %v7242
        %7528 = vmatpush.msra.mxu0 %v7241
        %7529 = vmatpush.msra.mxu0 %v7240
        %7530 = vmatpush.msra.mxu0 %v7239
        %7531 = vmatpush.msra.mxu0 %v7238
        %7532 = vmatpush.msra.mxu0 %v7237
        %7533 = vmatpush.msra.mxu0 %v7236
        %7534 = vmatpush.msra.mxu0 %v7235
        %7535 = vmatpush.msra.mxu0 %v7234
        %7536 = vmatpush.msra.mxu0 %v7233
        %7537 = vmatpush.msra.mxu0 %v7232
        %7538 = vmatpush.msra.mxu0 %v7231
        %7539 = vmatpush.msra.mxu0 %v7230
        %7540 = vmatpush.msra.mxu0 %v7229
        %7541 = vmatmul.f32.gmra.mxu0 %v7061
        %v7542 = vpop.f32.mrf.mxu0
        %v7543 = vadd.f32 %v7514, %v7542
        %7544 = vmatmul.f32.gmra.mxu0 %v7073
        %v7545 = vpop.f32.mrf.mxu0
        %v7546 = vadd.f32 %v7517, %v7545
        %7547 = vmatmul.f32.gmra.mxu0 %v7085
        %v7548 = vpop.f32.mrf.mxu0
        %v7549 = vadd.f32 %v7520, %v7548
        %7550 = vmatmul.f32.gmra.mxu0 %v7097
        %v7551 = vpop.f32.mrf.mxu0
        %v7552 = vadd.f32 %v7523, %v7551
        %7553 = vdwg.mxu0
        %7554 = vmatpush.msra.mxu0 %v7260
        %7555 = vmatpush.msra.mxu0 %v7259
        %7556 = vmatpush.msra.mxu0 %v7258
        %7557 = vmatpush.msra.mxu0 %v7257
        %7558 = vmatpush.msra.mxu0 %v7256
        %7559 = vmatpush.msra.mxu0 %v7255
        %7560 = vmatpush.msra.mxu0 %v7254
        %7561 = vmatpush.msra.mxu0 %v7253
        %7562 = vmatpush.msra.mxu0 %v7252
        %7563 = vmatpush.msra.mxu0 %v7251
        %7564 = vmatpush.msra.mxu0 %v7250
        %7565 = vmatpush.msra.mxu0 %v7249
        %7566 = vmatpush.msra.mxu0 %v7248
        %7567 = vmatpush.msra.mxu0 %v7247
        %7568 = vmatpush.msra.mxu0 %v7246
        %7569 = vmatpush.msra.mxu0 %v7245
        %7570 = vmatmul.f32.gmra.mxu0 %v7062
        %v7571 = vpop.f32.mrf.mxu0
        %v7572 = vadd.f32 %v7543, %v7571
        %7573 = vmatmul.f32.gmra.mxu0 %v7074
        %v7574 = vpop.f32.mrf.mxu0
        %v7575 = vadd.f32 %v7546, %v7574
        %7576 = vmatmul.f32.gmra.mxu0 %v7086
        %v7577 = vpop.f32.mrf.mxu0
        %v7578 = vadd.f32 %v7549, %v7577
        %7579 = vmatmul.f32.gmra.mxu0 %v7098
        %v7580 = vpop.f32.mrf.mxu0
        %v7581 = vadd.f32 %v7552, %v7580
        %7582 = vdwg.mxu0
        %7583 = vmatpush.msra.mxu0 %v7276
        %7584 = vmatpush.msra.mxu0 %v7275
        %7585 = vmatpush.msra.mxu0 %v7274
        %7586 = vmatpush.msra.mxu0 %v7273
        %7587 = vmatpush.msra.mxu0 %v7272
        %7588 = vmatpush.msra.mxu0 %v7271
        %7589 = vmatpush.msra.mxu0 %v7270
        %7590 = vmatpush.msra.mxu0 %v7269
        %7591 = vmatpush.msra.mxu0 %v7268
        %7592 = vmatpush.msra.mxu0 %v7267
        %7593 = vmatpush.msra.mxu0 %v7266
        %7594 = vmatpush.msra.mxu0 %v7265
        %7595 = vmatpush.msra.mxu0 %v7264
        %7596 = vmatpush.msra.mxu0 %v7263
        %7597 = vmatpush.msra.mxu0 %v7262
        %7598 = vmatpush.msra.mxu0 %v7261
        %7599 = vmatmul.f32.gmra.mxu0 %v7063
        %v7600 = vpop.f32.mrf.mxu0
        %v7601 = vadd.f32 %v7572, %v7600
        %7602 = vmatmul.f32.gmra.mxu0 %v7075
        %v7603 = vpop.f32.mrf.mxu0
        %v7604 = vadd.f32 %v7575, %v7603
        %7605 = vmatmul.f32.gmra.mxu0 %v7087
        %v7606 = vpop.f32.mrf.mxu0
        %v7607 = vadd.f32 %v7578, %v7606
        %7608 = vmatmul.f32.gmra.mxu0 %v7099
        %v7609 = vpop.f32.mrf.mxu0
        %v7610 = vadd.f32 %v7581, %v7609
        %7611 = vdwg.mxu0
        %7612 = vmatpush.msra.mxu0 %v7292
        %7613 = vmatpush.msra.mxu0 %v7291
        %7614 = vmatpush.msra.mxu0 %v7290
        %7615 = vmatpush.msra.mxu0 %v7289
        %7616 = vmatpush.msra.mxu0 %v7288
        %7617 = vmatpush.msra.mxu0 %v7287
        %7618 = vmatpush.msra.mxu0 %v7286
        %7619 = vmatpush.msra.mxu0 %v7285
        %7620 = vmatpush.msra.mxu0 %v7284
        %7621 = vmatpush.msra.mxu0 %v7283
        %7622 = vmatpush.msra.mxu0 %v7282
        %7623 = vmatpush.msra.mxu0 %v7281
        %7624 = vmatpush.msra.mxu0 %v7280
        %7625 = vmatpush.msra.mxu0 %v7279
        %7626 = vmatpush.msra.mxu0 %v7278
        %7627 = vmatpush.msra.mxu0 %v7277
        %7628 = vmatmul.f32.gmra.mxu0 %v7064
        %v7629 = vpop.f32.mrf.mxu0
        %v7630 = vadd.f32 %v7601, %v7629
        %7631 = vmatmul.f32.gmra.mxu0 %v7076
        %v7632 = vpop.f32.mrf.mxu0
        %v7633 = vadd.f32 %v7604, %v7632
        %7634 = vmatmul.f32.gmra.mxu0 %v7088
        %v7635 = vpop.f32.mrf.mxu0
        %v7636 = vadd.f32 %v7607, %v7635
        %7637 = vmatmul.f32.gmra.mxu0 %v7100
        %v7638 = vpop.f32.mrf.mxu0
        %v7639 = vadd.f32 %v7610, %v7638
        %7640 = vdwg.mxu0
        %v7641 = vmul.f32 %v7630, %v4015
        %v7642 = vmul.f32 %v7633, %v4015
        %v7643 = vmul.f32 %v7636, %v4015
        %v7644 = vmul.f32 %v7639, %v4015
        %v7645 = vadd.f32 %v7641, %v4020
        %v7646 = vadd.f32 %v7642, %v4020
        %v7647 = vadd.f32 %v7643, %v4020
        %v7648 = vadd.f32 %v7644, %v4020
        %v7649 = vmax.f32 %v7645, 0.0
        %v7650 = vmax.f32 %v7646, 0.0
        %v7651 = vmax.f32 %v7647, 0.0
        %v7652 = vmax.f32 %v7648, 0.0
        %7653 = vst [vmem:[#allocation3 + $0x30] sm:$0xff] %v7649
        %7654 = vst [vmem:[#allocation3 + $0x70] sm:$0xff] %v7650
        %7655 = vst [vmem:[#allocation3 + $0xb0] sm:$0xff] %v7651
        %7656 = vst [vmem:[#allocation3 + $0xf0] sm:$0xff] %v7652
        %v7657 = vld [vmem:[#allocation2 + $0x150] sm:$0xff]
        %v7658 = vld [vmem:[#allocation2 + $0x158] sm:$0xff]
        %v7659 = vld [vmem:[#allocation2 + $0x160] sm:$0xff]
        %v7660 = vld [vmem:[#allocation2 + $0x168] sm:$0xff]
        %v7661 = vld [vmem:[#allocation2 + $0x170] sm:$0xff]
        %v7662 = vld [vmem:[#allocation2 + $0x178] sm:$0xff]
        %v7663 = vld [vmem:[#allocation2 + $0x180] sm:$0xff]
        %v7664 = vld [vmem:[#allocation2 + $0x188] sm:$0xff]
        %v7665 = vld [vmem:[#allocation2 + $0x190] sm:$0xff]
        %v7666 = vld [vmem:[#allocation2 + $0x198] sm:$0xff]
        %v7667 = vld [vmem:[#allocation2 + $0x1a0] sm:$0xff]
        %v7668 = vld [vmem:[#allocation2 + $0x1a8] sm:$0xff]
        %v7669 = vld [vmem:[#allocation2 + $0x300] sm:$0xff]
        %v7670 = vld [vmem:[#allocation2 + $0x308] sm:$0xff]
        %v7671 = vld [vmem:[#allocation2 + $0x310] sm:$0xff]
        %v7672 = vld [vmem:[#allocation2 + $0x318] sm:$0xff]
        %v7673 = vld [vmem:[#allocation2 + $0x320] sm:$0xff]
        %v7674 = vld [vmem:[#allocation2 + $0x328] sm:$0xff]
        %v7675 = vld [vmem:[#allocation2 + $0x330] sm:$0xff]
        %v7676 = vld [vmem:[#allocation2 + $0x338] sm:$0xff]
        %v7677 = vld [vmem:[#allocation2 + $0x340] sm:$0xff]
        %v7678 = vld [vmem:[#allocation2 + $0x348] sm:$0xff]
        %v7679 = vld [vmem:[#allocation2 + $0x350] sm:$0xff]
        %v7680 = vld [vmem:[#allocation2 + $0x358] sm:$0xff]
        %v7681 = vld [vmem:[#allocation2 + $0x4b0] sm:$0xff]
        %v7682 = vld [vmem:[#allocation2 + $0x4b8] sm:$0xff]
        %v7683 = vld [vmem:[#allocation2 + $0x4c0] sm:$0xff]
        %v7684 = vld [vmem:[#allocation2 + $0x4c8] sm:$0xff]
        %v7685 = vld [vmem:[#allocation2 + $0x4d0] sm:$0xff]
        %v7686 = vld [vmem:[#allocation2 + $0x4d8] sm:$0xff]
        %v7687 = vld [vmem:[#allocation2 + $0x4e0] sm:$0xff]
        %v7688 = vld [vmem:[#allocation2 + $0x4e8] sm:$0xff]
        %v7689 = vld [vmem:[#allocation2 + $0x4f0] sm:$0xff]
        %v7690 = vld [vmem:[#allocation2 + $0x4f8] sm:$0xff]
        %v7691 = vld [vmem:[#allocation2 + $0x500] sm:$0xff]
        %v7692 = vld [vmem:[#allocation2 + $0x508] sm:$0xff]
        %v7693 = vld [vmem:[#allocation2 + $0x660] sm:$0xff]
        %v7694 = vld [vmem:[#allocation2 + $0x668] sm:$0xff]
        %v7695 = vld [vmem:[#allocation2 + $0x670] sm:$0xff]
        %v7696 = vld [vmem:[#allocation2 + $0x678] sm:$0xff]
        %v7697 = vld [vmem:[#allocation2 + $0x680] sm:$0xff]
        %v7698 = vld [vmem:[#allocation2 + $0x688] sm:$0xff]
        %v7699 = vld [vmem:[#allocation2 + $0x690] sm:$0xff]
        %v7700 = vld [vmem:[#allocation2 + $0x698] sm:$0xff]
        %v7701 = vld [vmem:[#allocation2 + $0x6a0] sm:$0xff]
        %v7702 = vld [vmem:[#allocation2 + $0x6a8] sm:$0xff]
        %v7703 = vld [vmem:[#allocation2 + $0x6b0] sm:$0xff]
        %v7704 = vld [vmem:[#allocation2 + $0x6b8] sm:$0xff]
        %v7705 = vld [vmem:[%s2] sm:$0xff]
        %v7706 = vld [vmem:[%s2 + $0x8] sm:$0xff]
        %v7707 = vld [vmem:[%s2 + $0x10] sm:$0xff]
        %v7708 = vld [vmem:[%s2 + $0x18] sm:$0xff]
        %v7709 = vld [vmem:[%s2 + $0x20] sm:$0xff]
        %v7710 = vld [vmem:[%s2 + $0x28] sm:$0xff]
        %v7711 = vld [vmem:[%s2 + $0x30] sm:$0xff]
        %v7712 = vld [vmem:[%s2 + $0x38] sm:$0xff]
        %v7713 = vld [vmem:[%s2 + $0x40] sm:$0xff]
        %v7714 = vld [vmem:[%s2 + $0x48] sm:$0xff]
        %v7715 = vld [vmem:[%s2 + $0x50] sm:$0xff]
        %v7716 = vld [vmem:[%s2 + $0x58] sm:$0xff]
        %v7717 = vld [vmem:[%s2 + $0x60] sm:$0xff]
        %v7718 = vld [vmem:[%s2 + $0x68] sm:$0xff]
        %v7719 = vld [vmem:[%s2 + $0x70] sm:$0xff]
        %v7720 = vld [vmem:[%s2 + $0x78] sm:$0xff]
        %v7721 = vld [vmem:[%s2 + $0x80] sm:$0xff]
        %v7722 = vld [vmem:[%s2 + $0x88] sm:$0xff]
        %v7723 = vld [vmem:[%s2 + $0x90] sm:$0xff]
        %v7724 = vld [vmem:[%s2 + $0x98] sm:$0xff]
        %v7725 = vld [vmem:[%s2 + $0xa0] sm:$0xff]
        %v7726 = vld [vmem:[%s2 + $0xa8] sm:$0xff]
        %v7727 = vld [vmem:[%s2 + $0xb0] sm:$0xff]
        %v7728 = vld [vmem:[%s2 + $0xb8] sm:$0xff]
        %v7729 = vld [vmem:[%s2 + $0xc0] sm:$0xff]
        %v7730 = vld [vmem:[%s2 + $0xc8] sm:$0xff]
        %v7731 = vld [vmem:[%s2 + $0xd0] sm:$0xff]
        %v7732 = vld [vmem:[%s2 + $0xd8] sm:$0xff]
        %v7733 = vld [vmem:[%s2 + $0xe0] sm:$0xff]
        %v7734 = vld [vmem:[%s2 + $0xe8] sm:$0xff]
        %v7735 = vld [vmem:[%s2 + $0xf0] sm:$0xff]
        %v7736 = vld [vmem:[%s2 + $0xf8] sm:$0xff]
        %v7737 = vld [vmem:[%s2 + $0x100] sm:$0xff]
        %v7738 = vld [vmem:[%s2 + $0x108] sm:$0xff]
        %v7739 = vld [vmem:[%s2 + $0x110] sm:$0xff]
        %v7740 = vld [vmem:[%s2 + $0x118] sm:$0xff]
        %v7741 = vld [vmem:[%s2 + $0x120] sm:$0xff]
        %v7742 = vld [vmem:[%s2 + $0x128] sm:$0xff]
        %v7743 = vld [vmem:[%s2 + $0x130] sm:$0xff]
        %v7744 = vld [vmem:[%s2 + $0x138] sm:$0xff]
        %v7745 = vld [vmem:[%s2 + $0x140] sm:$0xff]
        %v7746 = vld [vmem:[%s2 + $0x148] sm:$0xff]
        %v7747 = vld [vmem:[%s2 + $0x150] sm:$0xff]
        %v7748 = vld [vmem:[%s2 + $0x158] sm:$0xff]
        %v7749 = vld [vmem:[%s2 + $0x160] sm:$0xff]
        %v7750 = vld [vmem:[%s2 + $0x168] sm:$0xff]
        %v7751 = vld [vmem:[%s2 + $0x170] sm:$0xff]
        %v7752 = vld [vmem:[%s2 + $0x178] sm:$0xff]
        %v7753 = vld [vmem:[%s2 + $0x180] sm:$0xff]
        %v7754 = vld [vmem:[%s2 + $0x188] sm:$0xff]
        %v7755 = vld [vmem:[%s2 + $0x190] sm:$0xff]
        %v7756 = vld [vmem:[%s2 + $0x198] sm:$0xff]
        %v7757 = vld [vmem:[%s2 + $0x1a0] sm:$0xff]
        %v7758 = vld [vmem:[%s2 + $0x1a8] sm:$0xff]
        %v7759 = vld [vmem:[%s2 + $0x1b0] sm:$0xff]
        %v7760 = vld [vmem:[%s2 + $0x1b8] sm:$0xff]
        %v7761 = vld [vmem:[%s2 + $0x1c0] sm:$0xff]
        %v7762 = vld [vmem:[%s2 + $0x1c8] sm:$0xff]
        %v7763 = vld [vmem:[%s2 + $0x1d0] sm:$0xff]
        %v7764 = vld [vmem:[%s2 + $0x1d8] sm:$0xff]
        %v7765 = vld [vmem:[%s2 + $0x1e0] sm:$0xff]
        %v7766 = vld [vmem:[%s2 + $0x1e8] sm:$0xff]
        %v7767 = vld [vmem:[%s2 + $0x1f0] sm:$0xff]
        %v7768 = vld [vmem:[%s2 + $0x1f8] sm:$0xff]
        %v7769 = vld [vmem:[%s2 + $0x200] sm:$0xff]
        %v7770 = vld [vmem:[%s2 + $0x208] sm:$0xff]
        %v7771 = vld [vmem:[%s2 + $0x210] sm:$0xff]
        %v7772 = vld [vmem:[%s2 + $0x218] sm:$0xff]
        %v7773 = vld [vmem:[%s2 + $0x220] sm:$0xff]
        %v7774 = vld [vmem:[%s2 + $0x228] sm:$0xff]
        %v7775 = vld [vmem:[%s2 + $0x230] sm:$0xff]
        %v7776 = vld [vmem:[%s2 + $0x238] sm:$0xff]
        %v7777 = vld [vmem:[%s2 + $0x240] sm:$0xff]
        %v7778 = vld [vmem:[%s2 + $0x248] sm:$0xff]
        %v7779 = vld [vmem:[%s2 + $0x250] sm:$0xff]
        %v7780 = vld [vmem:[%s2 + $0x258] sm:$0xff]
        %v7781 = vld [vmem:[%s2 + $0x260] sm:$0xff]
        %v7782 = vld [vmem:[%s2 + $0x268] sm:$0xff]
        %v7783 = vld [vmem:[%s2 + $0x270] sm:$0xff]
        %v7784 = vld [vmem:[%s2 + $0x278] sm:$0xff]
        %v7785 = vld [vmem:[%s2 + $0x280] sm:$0xff]
        %v7786 = vld [vmem:[%s2 + $0x288] sm:$0xff]
        %v7787 = vld [vmem:[%s2 + $0x290] sm:$0xff]
        %v7788 = vld [vmem:[%s2 + $0x298] sm:$0xff]
        %v7789 = vld [vmem:[%s2 + $0x2a0] sm:$0xff]
        %v7790 = vld [vmem:[%s2 + $0x2a8] sm:$0xff]
        %v7791 = vld [vmem:[%s2 + $0x2b0] sm:$0xff]
        %v7792 = vld [vmem:[%s2 + $0x2b8] sm:$0xff]
        %v7793 = vld [vmem:[%s2 + $0x2c0] sm:$0xff]
        %v7794 = vld [vmem:[%s2 + $0x2c8] sm:$0xff]
        %v7795 = vld [vmem:[%s2 + $0x2d0] sm:$0xff]
        %v7796 = vld [vmem:[%s2 + $0x2d8] sm:$0xff]
        %v7797 = vld [vmem:[%s2 + $0x2e0] sm:$0xff]
        %v7798 = vld [vmem:[%s2 + $0x2e8] sm:$0xff]
        %v7799 = vld [vmem:[%s2 + $0x2f0] sm:$0xff]
        %v7800 = vld [vmem:[%s2 + $0x2f8] sm:$0xff]
        %v7801 = vld [vmem:[%s2 + $0x300] sm:$0xff]
        %v7802 = vld [vmem:[%s2 + $0x308] sm:$0xff]
        %v7803 = vld [vmem:[%s2 + $0x310] sm:$0xff]
        %v7804 = vld [vmem:[%s2 + $0x318] sm:$0xff]
        %v7805 = vld [vmem:[%s2 + $0x320] sm:$0xff]
        %v7806 = vld [vmem:[%s2 + $0x328] sm:$0xff]
        %v7807 = vld [vmem:[%s2 + $0x330] sm:$0xff]
        %v7808 = vld [vmem:[%s2 + $0x338] sm:$0xff]
        %v7809 = vld [vmem:[%s2 + $0x340] sm:$0xff]
        %v7810 = vld [vmem:[%s2 + $0x348] sm:$0xff]
        %v7811 = vld [vmem:[%s2 + $0x350] sm:$0xff]
        %v7812 = vld [vmem:[%s2 + $0x358] sm:$0xff]
        %v7813 = vld [vmem:[%s2 + $0x360] sm:$0xff]
        %v7814 = vld [vmem:[%s2 + $0x368] sm:$0xff]
        %v7815 = vld [vmem:[%s2 + $0x370] sm:$0xff]
        %v7816 = vld [vmem:[%s2 + $0x378] sm:$0xff]
        %v7817 = vld [vmem:[%s2 + $0x380] sm:$0xff]
        %v7818 = vld [vmem:[%s2 + $0x388] sm:$0xff]
        %v7819 = vld [vmem:[%s2 + $0x390] sm:$0xff]
        %v7820 = vld [vmem:[%s2 + $0x398] sm:$0xff]
        %v7821 = vld [vmem:[%s2 + $0x3a0] sm:$0xff]
        %v7822 = vld [vmem:[%s2 + $0x3a8] sm:$0xff]
        %v7823 = vld [vmem:[%s2 + $0x3b0] sm:$0xff]
        %v7824 = vld [vmem:[%s2 + $0x3b8] sm:$0xff]
        %v7825 = vld [vmem:[%s2 + $0x3c0] sm:$0xff]
        %v7826 = vld [vmem:[%s2 + $0x3c8] sm:$0xff]
        %v7827 = vld [vmem:[%s2 + $0x3d0] sm:$0xff]
        %v7828 = vld [vmem:[%s2 + $0x3d8] sm:$0xff]
        %v7829 = vld [vmem:[%s2 + $0x3e0] sm:$0xff]
        %v7830 = vld [vmem:[%s2 + $0x3e8] sm:$0xff]
        %v7831 = vld [vmem:[%s2 + $0x3f0] sm:$0xff]
        %v7832 = vld [vmem:[%s2 + $0x3f8] sm:$0xff]
        %v7833 = vld [vmem:[%s2 + $0x400] sm:$0xff]
        %v7834 = vld [vmem:[%s2 + $0x408] sm:$0xff]
        %v7835 = vld [vmem:[%s2 + $0x410] sm:$0xff]
        %v7836 = vld [vmem:[%s2 + $0x418] sm:$0xff]
        %v7837 = vld [vmem:[%s2 + $0x420] sm:$0xff]
        %v7838 = vld [vmem:[%s2 + $0x428] sm:$0xff]
        %v7839 = vld [vmem:[%s2 + $0x430] sm:$0xff]
        %v7840 = vld [vmem:[%s2 + $0x438] sm:$0xff]
        %v7841 = vld [vmem:[%s2 + $0x440] sm:$0xff]
        %v7842 = vld [vmem:[%s2 + $0x448] sm:$0xff]
        %v7843 = vld [vmem:[%s2 + $0x450] sm:$0xff]
        %v7844 = vld [vmem:[%s2 + $0x458] sm:$0xff]
        %v7845 = vld [vmem:[%s2 + $0x460] sm:$0xff]
        %v7846 = vld [vmem:[%s2 + $0x468] sm:$0xff]
        %v7847 = vld [vmem:[%s2 + $0x470] sm:$0xff]
        %v7848 = vld [vmem:[%s2 + $0x478] sm:$0xff]
        %v7849 = vld [vmem:[%s2 + $0x480] sm:$0xff]
        %v7850 = vld [vmem:[%s2 + $0x488] sm:$0xff]
        %v7851 = vld [vmem:[%s2 + $0x490] sm:$0xff]
        %v7852 = vld [vmem:[%s2 + $0x498] sm:$0xff]
        %v7853 = vld [vmem:[%s2 + $0x4a0] sm:$0xff]
        %v7854 = vld [vmem:[%s2 + $0x4a8] sm:$0xff]
        %v7855 = vld [vmem:[%s2 + $0x4b0] sm:$0xff]
        %v7856 = vld [vmem:[%s2 + $0x4b8] sm:$0xff]
        %v7857 = vld [vmem:[%s2 + $0x4c0] sm:$0xff]
        %v7858 = vld [vmem:[%s2 + $0x4c8] sm:$0xff]
        %v7859 = vld [vmem:[%s2 + $0x4d0] sm:$0xff]
        %v7860 = vld [vmem:[%s2 + $0x4d8] sm:$0xff]
        %v7861 = vld [vmem:[%s2 + $0x4e0] sm:$0xff]
        %v7862 = vld [vmem:[%s2 + $0x4e8] sm:$0xff]
        %v7863 = vld [vmem:[%s2 + $0x4f0] sm:$0xff]
        %v7864 = vld [vmem:[%s2 + $0x4f8] sm:$0xff]
        %v7865 = vld [vmem:[%s2 + $0x500] sm:$0xff]
        %v7866 = vld [vmem:[%s2 + $0x508] sm:$0xff]
        %v7867 = vld [vmem:[%s2 + $0x510] sm:$0xff]
        %v7868 = vld [vmem:[%s2 + $0x518] sm:$0xff]
        %v7869 = vld [vmem:[%s2 + $0x520] sm:$0xff]
        %v7870 = vld [vmem:[%s2 + $0x528] sm:$0xff]
        %v7871 = vld [vmem:[%s2 + $0x530] sm:$0xff]
        %v7872 = vld [vmem:[%s2 + $0x538] sm:$0xff]
        %v7873 = vld [vmem:[%s2 + $0x540] sm:$0xff]
        %v7874 = vld [vmem:[%s2 + $0x548] sm:$0xff]
        %v7875 = vld [vmem:[%s2 + $0x550] sm:$0xff]
        %v7876 = vld [vmem:[%s2 + $0x558] sm:$0xff]
        %v7877 = vld [vmem:[%s2 + $0x560] sm:$0xff]
        %v7878 = vld [vmem:[%s2 + $0x568] sm:$0xff]
        %v7879 = vld [vmem:[%s2 + $0x570] sm:$0xff]
        %v7880 = vld [vmem:[%s2 + $0x578] sm:$0xff]
        %v7881 = vld [vmem:[%s2 + $0x580] sm:$0xff]
        %v7882 = vld [vmem:[%s2 + $0x588] sm:$0xff]
        %v7883 = vld [vmem:[%s2 + $0x590] sm:$0xff]
        %v7884 = vld [vmem:[%s2 + $0x598] sm:$0xff]
        %v7885 = vld [vmem:[%s2 + $0x5a0] sm:$0xff]
        %v7886 = vld [vmem:[%s2 + $0x5a8] sm:$0xff]
        %v7887 = vld [vmem:[%s2 + $0x5b0] sm:$0xff]
        %v7888 = vld [vmem:[%s2 + $0x5b8] sm:$0xff]
        %v7889 = vld [vmem:[%s2 + $0x5c0] sm:$0xff]
        %v7890 = vld [vmem:[%s2 + $0x5c8] sm:$0xff]
        %v7891 = vld [vmem:[%s2 + $0x5d0] sm:$0xff]
        %v7892 = vld [vmem:[%s2 + $0x5d8] sm:$0xff]
        %v7893 = vld [vmem:[%s2 + $0x5e0] sm:$0xff]
        %v7894 = vld [vmem:[%s2 + $0x5e8] sm:$0xff]
        %v7895 = vld [vmem:[%s2 + $0x5f0] sm:$0xff]
        %v7896 = vld [vmem:[%s2 + $0x5f8] sm:$0xff]
        %7897 = vmatpush.msra.mxu0 %v7720
        %7898 = vmatpush.msra.mxu0 %v7719
        %7899 = vmatpush.msra.mxu0 %v7718
        %7900 = vmatpush.msra.mxu0 %v7717
        %7901 = vmatpush.msra.mxu0 %v7716
        %7902 = vmatpush.msra.mxu0 %v7715
        %7903 = vmatpush.msra.mxu0 %v7714
        %7904 = vmatpush.msra.mxu0 %v7713
        %7905 = vmatpush.msra.mxu0 %v7712
        %7906 = vmatpush.msra.mxu0 %v7711
        %7907 = vmatpush.msra.mxu0 %v7710
        %7908 = vmatpush.msra.mxu0 %v7709
        %7909 = vmatpush.msra.mxu0 %v7708
        %7910 = vmatpush.msra.mxu0 %v7707
        %7911 = vmatpush.msra.mxu0 %v7706
        %7912 = vmatpush.msra.mxu0 %v7705
        %7913 = vmatmul.f32.gmra.mxu0 %v7657
        %v7914 = vpop.f32.mrf.mxu0
        %v7915 = vadd.f32 0.0, %v7914
        %7916 = vmatmul.f32.gmra.mxu0 %v7669
        %v7917 = vpop.f32.mrf.mxu0
        %v7918 = vadd.f32 0.0, %v7917
        %7919 = vmatmul.f32.gmra.mxu0 %v7681
        %v7920 = vpop.f32.mrf.mxu0
        %v7921 = vadd.f32 0.0, %v7920
        %7922 = vmatmul.f32.gmra.mxu0 %v7693
        %v7923 = vpop.f32.mrf.mxu0
        %v7924 = vadd.f32 0.0, %v7923
        %7925 = vdwg.mxu0
        %7926 = vmatpush.msra.mxu0 %v7736
        %7927 = vmatpush.msra.mxu0 %v7735
        %7928 = vmatpush.msra.mxu0 %v7734
        %7929 = vmatpush.msra.mxu0 %v7733
        %7930 = vmatpush.msra.mxu0 %v7732
        %7931 = vmatpush.msra.mxu0 %v7731
        %7932 = vmatpush.msra.mxu0 %v7730
        %7933 = vmatpush.msra.mxu0 %v7729
        %7934 = vmatpush.msra.mxu0 %v7728
        %7935 = vmatpush.msra.mxu0 %v7727
        %7936 = vmatpush.msra.mxu0 %v7726
        %7937 = vmatpush.msra.mxu0 %v7725
        %7938 = vmatpush.msra.mxu0 %v7724
        %7939 = vmatpush.msra.mxu0 %v7723
        %7940 = vmatpush.msra.mxu0 %v7722
        %7941 = vmatpush.msra.mxu0 %v7721
        %7942 = vmatmul.f32.gmra.mxu0 %v7658
        %v7943 = vpop.f32.mrf.mxu0
        %v7944 = vadd.f32 %v7915, %v7943
        %7945 = vmatmul.f32.gmra.mxu0 %v7670
        %v7946 = vpop.f32.mrf.mxu0
        %v7947 = vadd.f32 %v7918, %v7946
        %7948 = vmatmul.f32.gmra.mxu0 %v7682
        %v7949 = vpop.f32.mrf.mxu0
        %v7950 = vadd.f32 %v7921, %v7949
        %7951 = vmatmul.f32.gmra.mxu0 %v7694
        %v7952 = vpop.f32.mrf.mxu0
        %v7953 = vadd.f32 %v7924, %v7952
        %7954 = vdwg.mxu0
        %7955 = vmatpush.msra.mxu0 %v7752
        %7956 = vmatpush.msra.mxu0 %v7751
        %7957 = vmatpush.msra.mxu0 %v7750
        %7958 = vmatpush.msra.mxu0 %v7749
        %7959 = vmatpush.msra.mxu0 %v7748
        %7960 = vmatpush.msra.mxu0 %v7747
        %7961 = vmatpush.msra.mxu0 %v7746
        %7962 = vmatpush.msra.mxu0 %v7745
        %7963 = vmatpush.msra.mxu0 %v7744
        %7964 = vmatpush.msra.mxu0 %v7743
        %7965 = vmatpush.msra.mxu0 %v7742
        %7966 = vmatpush.msra.mxu0 %v7741
        %7967 = vmatpush.msra.mxu0 %v7740
        %7968 = vmatpush.msra.mxu0 %v7739
        %7969 = vmatpush.msra.mxu0 %v7738
        %7970 = vmatpush.msra.mxu0 %v7737
        %7971 = vmatmul.f32.gmra.mxu0 %v7659
        %v7972 = vpop.f32.mrf.mxu0
        %v7973 = vadd.f32 %v7944, %v7972
        %7974 = vmatmul.f32.gmra.mxu0 %v7671
        %v7975 = vpop.f32.mrf.mxu0
        %v7976 = vadd.f32 %v7947, %v7975
        %7977 = vmatmul.f32.gmra.mxu0 %v7683
        %v7978 = vpop.f32.mrf.mxu0
        %v7979 = vadd.f32 %v7950, %v7978
        %7980 = vmatmul.f32.gmra.mxu0 %v7695
        %v7981 = vpop.f32.mrf.mxu0
        %v7982 = vadd.f32 %v7953, %v7981
        %7983 = vdwg.mxu0
        %7984 = vmatpush.msra.mxu0 %v7768
        %7985 = vmatpush.msra.mxu0 %v7767
        %7986 = vmatpush.msra.mxu0 %v7766
        %7987 = vmatpush.msra.mxu0 %v7765
        %7988 = vmatpush.msra.mxu0 %v7764
        %7989 = vmatpush.msra.mxu0 %v7763
        %7990 = vmatpush.msra.mxu0 %v7762
        %7991 = vmatpush.msra.mxu0 %v7761
        %7992 = vmatpush.msra.mxu0 %v7760
        %7993 = vmatpush.msra.mxu0 %v7759
        %7994 = vmatpush.msra.mxu0 %v7758
        %7995 = vmatpush.msra.mxu0 %v7757
        %7996 = vmatpush.msra.mxu0 %v7756
        %7997 = vmatpush.msra.mxu0 %v7755
        %7998 = vmatpush.msra.mxu0 %v7754
        %7999 = vmatpush.msra.mxu0 %v7753
        %8000 = vmatmul.f32.gmra.mxu0 %v7660
        %v8001 = vpop.f32.mrf.mxu0
        %v8002 = vadd.f32 %v7973, %v8001
        %8003 = vmatmul.f32.gmra.mxu0 %v7672
        %v8004 = vpop.f32.mrf.mxu0
        %v8005 = vadd.f32 %v7976, %v8004
        %8006 = vmatmul.f32.gmra.mxu0 %v7684
        %v8007 = vpop.f32.mrf.mxu0
        %v8008 = vadd.f32 %v7979, %v8007
        %8009 = vmatmul.f32.gmra.mxu0 %v7696
        %v8010 = vpop.f32.mrf.mxu0
        %v8011 = vadd.f32 %v7982, %v8010
        %8012 = vdwg.mxu0
        %8013 = vmatpush.msra.mxu0 %v7784
        %8014 = vmatpush.msra.mxu0 %v7783
        %8015 = vmatpush.msra.mxu0 %v7782
        %8016 = vmatpush.msra.mxu0 %v7781
        %8017 = vmatpush.msra.mxu0 %v7780
        %8018 = vmatpush.msra.mxu0 %v7779
        %8019 = vmatpush.msra.mxu0 %v7778
        %8020 = vmatpush.msra.mxu0 %v7777
        %8021 = vmatpush.msra.mxu0 %v7776
        %8022 = vmatpush.msra.mxu0 %v7775
        %8023 = vmatpush.msra.mxu0 %v7774
        %8024 = vmatpush.msra.mxu0 %v7773
        %8025 = vmatpush.msra.mxu0 %v7772
        %8026 = vmatpush.msra.mxu0 %v7771
        %8027 = vmatpush.msra.mxu0 %v7770
        %8028 = vmatpush.msra.mxu0 %v7769
        %8029 = vmatmul.f32.gmra.mxu0 %v7661
        %v8030 = vpop.f32.mrf.mxu0
        %v8031 = vadd.f32 %v8002, %v8030
        %8032 = vmatmul.f32.gmra.mxu0 %v7673
        %v8033 = vpop.f32.mrf.mxu0
        %v8034 = vadd.f32 %v8005, %v8033
        %8035 = vmatmul.f32.gmra.mxu0 %v7685
        %v8036 = vpop.f32.mrf.mxu0
        %v8037 = vadd.f32 %v8008, %v8036
        %8038 = vmatmul.f32.gmra.mxu0 %v7697
        %v8039 = vpop.f32.mrf.mxu0
        %v8040 = vadd.f32 %v8011, %v8039
        %8041 = vdwg.mxu0
        %8042 = vmatpush.msra.mxu0 %v7800
        %8043 = vmatpush.msra.mxu0 %v7799
        %8044 = vmatpush.msra.mxu0 %v7798
        %8045 = vmatpush.msra.mxu0 %v7797
        %8046 = vmatpush.msra.mxu0 %v7796
        %8047 = vmatpush.msra.mxu0 %v7795
        %8048 = vmatpush.msra.mxu0 %v7794
        %8049 = vmatpush.msra.mxu0 %v7793
        %8050 = vmatpush.msra.mxu0 %v7792
        %8051 = vmatpush.msra.mxu0 %v7791
        %8052 = vmatpush.msra.mxu0 %v7790
        %8053 = vmatpush.msra.mxu0 %v7789
        %8054 = vmatpush.msra.mxu0 %v7788
        %8055 = vmatpush.msra.mxu0 %v7787
        %8056 = vmatpush.msra.mxu0 %v7786
        %8057 = vmatpush.msra.mxu0 %v7785
        %8058 = vmatmul.f32.gmra.mxu0 %v7662
        %v8059 = vpop.f32.mrf.mxu0
        %v8060 = vadd.f32 %v8031, %v8059
        %8061 = vmatmul.f32.gmra.mxu0 %v7674
        %v8062 = vpop.f32.mrf.mxu0
        %v8063 = vadd.f32 %v8034, %v8062
        %8064 = vmatmul.f32.gmra.mxu0 %v7686
        %v8065 = vpop.f32.mrf.mxu0
        %v8066 = vadd.f32 %v8037, %v8065
        %8067 = vmatmul.f32.gmra.mxu0 %v7698
        %v8068 = vpop.f32.mrf.mxu0
        %v8069 = vadd.f32 %v8040, %v8068
        %8070 = vdwg.mxu0
        %8071 = vmatpush.msra.mxu0 %v7816
        %8072 = vmatpush.msra.mxu0 %v7815
        %8073 = vmatpush.msra.mxu0 %v7814
        %8074 = vmatpush.msra.mxu0 %v7813
        %8075 = vmatpush.msra.mxu0 %v7812
        %8076 = vmatpush.msra.mxu0 %v7811
        %8077 = vmatpush.msra.mxu0 %v7810
        %8078 = vmatpush.msra.mxu0 %v7809
        %8079 = vmatpush.msra.mxu0 %v7808
        %8080 = vmatpush.msra.mxu0 %v7807
        %8081 = vmatpush.msra.mxu0 %v7806
        %8082 = vmatpush.msra.mxu0 %v7805
        %8083 = vmatpush.msra.mxu0 %v7804
        %8084 = vmatpush.msra.mxu0 %v7803
        %8085 = vmatpush.msra.mxu0 %v7802
        %8086 = vmatpush.msra.mxu0 %v7801
        %8087 = vmatmul.f32.gmra.mxu0 %v7663
        %v8088 = vpop.f32.mrf.mxu0
        %v8089 = vadd.f32 %v8060, %v8088
        %8090 = vmatmul.f32.gmra.mxu0 %v7675
        %v8091 = vpop.f32.mrf.mxu0
        %v8092 = vadd.f32 %v8063, %v8091
        %8093 = vmatmul.f32.gmra.mxu0 %v7687
        %v8094 = vpop.f32.mrf.mxu0
        %v8095 = vadd.f32 %v8066, %v8094
        %8096 = vmatmul.f32.gmra.mxu0 %v7699
        %v8097 = vpop.f32.mrf.mxu0
        %v8098 = vadd.f32 %v8069, %v8097
        %8099 = vdwg.mxu0
        %8100 = vmatpush.msra.mxu0 %v7832
        %8101 = vmatpush.msra.mxu0 %v7831
        %8102 = vmatpush.msra.mxu0 %v7830
        %8103 = vmatpush.msra.mxu0 %v7829
        %8104 = vmatpush.msra.mxu0 %v7828
        %8105 = vmatpush.msra.mxu0 %v7827
        %8106 = vmatpush.msra.mxu0 %v7826
        %8107 = vmatpush.msra.mxu0 %v7825
        %8108 = vmatpush.msra.mxu0 %v7824
        %8109 = vmatpush.msra.mxu0 %v7823
        %8110 = vmatpush.msra.mxu0 %v7822
        %8111 = vmatpush.msra.mxu0 %v7821
        %8112 = vmatpush.msra.mxu0 %v7820
        %8113 = vmatpush.msra.mxu0 %v7819
        %8114 = vmatpush.msra.mxu0 %v7818
        %8115 = vmatpush.msra.mxu0 %v7817
        %8116 = vmatmul.f32.gmra.mxu0 %v7664
        %v8117 = vpop.f32.mrf.mxu0
        %v8118 = vadd.f32 %v8089, %v8117
        %8119 = vmatmul.f32.gmra.mxu0 %v7676
        %v8120 = vpop.f32.mrf.mxu0
        %v8121 = vadd.f32 %v8092, %v8120
        %8122 = vmatmul.f32.gmra.mxu0 %v7688
        %v8123 = vpop.f32.mrf.mxu0
        %v8124 = vadd.f32 %v8095, %v8123
        %8125 = vmatmul.f32.gmra.mxu0 %v7700
        %v8126 = vpop.f32.mrf.mxu0
        %v8127 = vadd.f32 %v8098, %v8126
        %8128 = vdwg.mxu0
        %8129 = vmatpush.msra.mxu0 %v7848
        %8130 = vmatpush.msra.mxu0 %v7847
        %8131 = vmatpush.msra.mxu0 %v7846
        %8132 = vmatpush.msra.mxu0 %v7845
        %8133 = vmatpush.msra.mxu0 %v7844
        %8134 = vmatpush.msra.mxu0 %v7843
        %8135 = vmatpush.msra.mxu0 %v7842
        %8136 = vmatpush.msra.mxu0 %v7841
        %8137 = vmatpush.msra.mxu0 %v7840
        %8138 = vmatpush.msra.mxu0 %v7839
        %8139 = vmatpush.msra.mxu0 %v7838
        %8140 = vmatpush.msra.mxu0 %v7837
        %8141 = vmatpush.msra.mxu0 %v7836
        %8142 = vmatpush.msra.mxu0 %v7835
        %8143 = vmatpush.msra.mxu0 %v7834
        %8144 = vmatpush.msra.mxu0 %v7833
        %8145 = vmatmul.f32.gmra.mxu0 %v7665
        %v8146 = vpop.f32.mrf.mxu0
        %v8147 = vadd.f32 %v8118, %v8146
        %8148 = vmatmul.f32.gmra.mxu0 %v7677
        %v8149 = vpop.f32.mrf.mxu0
        %v8150 = vadd.f32 %v8121, %v8149
        %8151 = vmatmul.f32.gmra.mxu0 %v7689
        %v8152 = vpop.f32.mrf.mxu0
        %v8153 = vadd.f32 %v8124, %v8152
        %8154 = vmatmul.f32.gmra.mxu0 %v7701
        %v8155 = vpop.f32.mrf.mxu0
        %v8156 = vadd.f32 %v8127, %v8155
        %8157 = vdwg.mxu0
        %8158 = vmatpush.msra.mxu0 %v7864
        %8159 = vmatpush.msra.mxu0 %v7863
        %8160 = vmatpush.msra.mxu0 %v7862
        %8161 = vmatpush.msra.mxu0 %v7861
        %8162 = vmatpush.msra.mxu0 %v7860
        %8163 = vmatpush.msra.mxu0 %v7859
        %8164 = vmatpush.msra.mxu0 %v7858
        %8165 = vmatpush.msra.mxu0 %v7857
        %8166 = vmatpush.msra.mxu0 %v7856
        %8167 = vmatpush.msra.mxu0 %v7855
        %8168 = vmatpush.msra.mxu0 %v7854
        %8169 = vmatpush.msra.mxu0 %v7853
        %8170 = vmatpush.msra.mxu0 %v7852
        %8171 = vmatpush.msra.mxu0 %v7851
        %8172 = vmatpush.msra.mxu0 %v7850
        %8173 = vmatpush.msra.mxu0 %v7849
        %8174 = vmatmul.f32.gmra.mxu0 %v7666
        %v8175 = vpop.f32.mrf.mxu0
        %v8176 = vadd.f32 %v8147, %v8175
        %8177 = vmatmul.f32.gmra.mxu0 %v7678
        %v8178 = vpop.f32.mrf.mxu0
        %v8179 = vadd.f32 %v8150, %v8178
        %8180 = vmatmul.f32.gmra.mxu0 %v7690
        %v8181 = vpop.f32.mrf.mxu0
        %v8182 = vadd.f32 %v8153, %v8181
        %8183 = vmatmul.f32.gmra.mxu0 %v7702
        %v8184 = vpop.f32.mrf.mxu0
        %v8185 = vadd.f32 %v8156, %v8184
        %8186 = vdwg.mxu0
        %8187 = vmatpush.msra.mxu0 %v7880
        %8188 = vmatpush.msra.mxu0 %v7879
        %8189 = vmatpush.msra.mxu0 %v7878
        %8190 = vmatpush.msra.mxu0 %v7877
        %8191 = vmatpush.msra.mxu0 %v7876
        %8192 = vmatpush.msra.mxu0 %v7875
        %8193 = vmatpush.msra.mxu0 %v7874
        %8194 = vmatpush.msra.mxu0 %v7873
        %8195 = vmatpush.msra.mxu0 %v7872
        %8196 = vmatpush.msra.mxu0 %v7871
        %8197 = vmatpush.msra.mxu0 %v7870
        %8198 = vmatpush.msra.mxu0 %v7869
        %8199 = vmatpush.msra.mxu0 %v7868
        %8200 = vmatpush.msra.mxu0 %v7867
        %8201 = vmatpush.msra.mxu0 %v7866
        %8202 = vmatpush.msra.mxu0 %v7865
        %8203 = vmatmul.f32.gmra.mxu0 %v7667
        %v8204 = vpop.f32.mrf.mxu0
        %v8205 = vadd.f32 %v8176, %v8204
        %8206 = vmatmul.f32.gmra.mxu0 %v7679
        %v8207 = vpop.f32.mrf.mxu0
        %v8208 = vadd.f32 %v8179, %v8207
        %8209 = vmatmul.f32.gmra.mxu0 %v7691
        %v8210 = vpop.f32.mrf.mxu0
        %v8211 = vadd.f32 %v8182, %v8210
        %8212 = vmatmul.f32.gmra.mxu0 %v7703
        %v8213 = vpop.f32.mrf.mxu0
        %v8214 = vadd.f32 %v8185, %v8213
        %8215 = vdwg.mxu0
        %8216 = vmatpush.msra.mxu0 %v7896
        %8217 = vmatpush.msra.mxu0 %v7895
        %8218 = vmatpush.msra.mxu0 %v7894
        %8219 = vmatpush.msra.mxu0 %v7893
        %8220 = vmatpush.msra.mxu0 %v7892
        %8221 = vmatpush.msra.mxu0 %v7891
        %8222 = vmatpush.msra.mxu0 %v7890
        %8223 = vmatpush.msra.mxu0 %v7889
        %8224 = vmatpush.msra.mxu0 %v7888
        %8225 = vmatpush.msra.mxu0 %v7887
        %8226 = vmatpush.msra.mxu0 %v7886
        %8227 = vmatpush.msra.mxu0 %v7885
        %8228 = vmatpush.msra.mxu0 %v7884
        %8229 = vmatpush.msra.mxu0 %v7883
        %8230 = vmatpush.msra.mxu0 %v7882
        %8231 = vmatpush.msra.mxu0 %v7881
        %8232 = vmatmul.f32.gmra.mxu0 %v7668
        %v8233 = vpop.f32.mrf.mxu0
        %v8234 = vadd.f32 %v8205, %v8233
        %8235 = vmatmul.f32.gmra.mxu0 %v7680
        %v8236 = vpop.f32.mrf.mxu0
        %v8237 = vadd.f32 %v8208, %v8236
        %8238 = vmatmul.f32.gmra.mxu0 %v7692
        %v8239 = vpop.f32.mrf.mxu0
        %v8240 = vadd.f32 %v8211, %v8239
        %8241 = vmatmul.f32.gmra.mxu0 %v7704
        %v8242 = vpop.f32.mrf.mxu0
        %v8243 = vadd.f32 %v8214, %v8242
        %8244 = vdwg.mxu0
        %v8245 = vmul.f32 %v8234, %v4015
        %v8246 = vmul.f32 %v8237, %v4015
        %v8247 = vmul.f32 %v8240, %v4015
        %v8248 = vmul.f32 %v8243, %v4015
        %v8249 = vadd.f32 %v8245, %v4020
        %v8250 = vadd.f32 %v8246, %v4020
        %v8251 = vadd.f32 %v8247, %v4020
        %v8252 = vadd.f32 %v8248, %v4020
        %v8253 = vmax.f32 %v8249, 0.0
        %v8254 = vmax.f32 %v8250, 0.0
        %v8255 = vmax.f32 %v8251, 0.0
        %v8256 = vmax.f32 %v8252, 0.0
        %8257 = vst [vmem:[#allocation3 + $0x38] sm:$0xff] %v8253
        %8258 = vst [vmem:[#allocation3 + $0x78] sm:$0xff] %v8254
        %8259 = vst [vmem:[#allocation3 + $0xb8] sm:$0xff] %v8255
        %8260 = vst [vmem:[#allocation3 + $0xf8] sm:$0xff] %v8256
        %v8261 = vld [vmem:[%s6] sm:$0x1]
        %v8262 = vld [vmem:[%s6 + $0x1] sm:$0x1]
        %v8263 = vld [vmem:[#allocation3] sm:$0xff]
        %v8264 = vld [vmem:[#allocation3 + $0x8] sm:$0xff]
        %v8265 = vld [vmem:[#allocation3 + $0x10] sm:$0xff]
        %v8266 = vld [vmem:[#allocation3 + $0x18] sm:$0xff]
        %v8267 = vld [vmem:[#allocation3 + $0x20] sm:$0xff]
        %v8268 = vld [vmem:[#allocation3 + $0x28] sm:$0xff]
        %v8269 = vld [vmem:[#allocation3 + $0x30] sm:$0xff]
        %v8270 = vld [vmem:[#allocation3 + $0x38] sm:$0xff]
        %v8271 = vld [vmem:[#allocation3 + $0x40] sm:$0xff]
        %v8272 = vld [vmem:[#allocation3 + $0x48] sm:$0xff]
        %v8273 = vld [vmem:[#allocation3 + $0x50] sm:$0xff]
        %v8274 = vld [vmem:[#allocation3 + $0x58] sm:$0xff]
        %v8275 = vld [vmem:[#allocation3 + $0x60] sm:$0xff]
        %v8276 = vld [vmem:[#allocation3 + $0x68] sm:$0xff]
        %v8277 = vld [vmem:[#allocation3 + $0x70] sm:$0xff]
        %v8278 = vld [vmem:[#allocation3 + $0x78] sm:$0xff]
        %v8279 = vld [vmem:[#allocation3 + $0x80] sm:$0xff]
        %v8280 = vld [vmem:[#allocation3 + $0x88] sm:$0xff]
        %v8281 = vld [vmem:[#allocation3 + $0x90] sm:$0xff]
        %v8282 = vld [vmem:[#allocation3 + $0x98] sm:$0xff]
        %v8283 = vld [vmem:[#allocation3 + $0xa0] sm:$0xff]
        %v8284 = vld [vmem:[#allocation3 + $0xa8] sm:$0xff]
        %v8285 = vld [vmem:[#allocation3 + $0xb0] sm:$0xff]
        %v8286 = vld [vmem:[#allocation3 + $0xb8] sm:$0xff]
        %v8287 = vld [vmem:[#allocation3 + $0xc0] sm:$0xff]
        %v8288 = vld [vmem:[#allocation3 + $0xc8] sm:$0xff]
        %v8289 = vld [vmem:[#allocation3 + $0xd0] sm:$0xff]
        %v8290 = vld [vmem:[#allocation3 + $0xd8] sm:$0xff]
        %v8291 = vld [vmem:[#allocation3 + $0xe0] sm:$0xff]
        %v8292 = vld [vmem:[#allocation3 + $0xe8] sm:$0xff]
        %v8293 = vld [vmem:[#allocation3 + $0xf0] sm:$0xff]
        %v8294 = vld [vmem:[#allocation3 + $0xf8] sm:$0xff]
        %v8295 = vld [vmem:[#allocation4] sm:$0xff]
        %v8296 = vld [vmem:[#allocation4 + $0x8] sm:$0xff]
        %v8297 = vld [vmem:[#allocation4 + $0x10] sm:$0xff]
        %v8298 = vld [vmem:[#allocation4 + $0x18] sm:$0xff]
        %v8299 = vld [vmem:[#allocation4 + $0x20] sm:$0xff]
        %v8300 = vld [vmem:[#allocation4 + $0x28] sm:$0xff]
        %v8301 = vld [vmem:[#allocation4 + $0x30] sm:$0xff]
        %v8302 = vld [vmem:[#allocation4 + $0x38] sm:$0xff]
        %v8303 = vld [vmem:[#allocation4 + $0x40] sm:$0xff]
        %v8304 = vld [vmem:[#allocation4 + $0x48] sm:$0xff]
        %v8305 = vld [vmem:[#allocation4 + $0x50] sm:$0xff]
        %v8306 = vld [vmem:[#allocation4 + $0x58] sm:$0xff]
        %v8307 = vld [vmem:[#allocation4 + $0x60] sm:$0xff]
        %v8308 = vld [vmem:[#allocation4 + $0x68] sm:$0xff]
        %v8309 = vld [vmem:[#allocation4 + $0x70] sm:$0xff]
        %v8310 = vld [vmem:[#allocation4 + $0x78] sm:$0xff]
        %v8311 = vld [vmem:[#allocation4 + $0x80] sm:$0xff]
        %v8312 = vld [vmem:[#allocation4 + $0x88] sm:$0xff]
        %v8313 = vld [vmem:[#allocation4 + $0x90] sm:$0xff]
        %v8314 = vld [vmem:[#allocation4 + $0x98] sm:$0xff]
        %v8315 = vld [vmem:[#allocation4 + $0xa0] sm:$0xff]
        %v8316 = vld [vmem:[#allocation4 + $0xa8] sm:$0xff]
        %v8317 = vld [vmem:[#allocation4 + $0xb0] sm:$0xff]
        %v8318 = vld [vmem:[#allocation4 + $0xb8] sm:$0xff]
        %v8319 = vld [vmem:[#allocation4 + $0xc0] sm:$0xff]
        %v8320 = vld [vmem:[#allocation4 + $0xc8] sm:$0xff]
        %v8321 = vld [vmem:[#allocation4 + $0xd0] sm:$0xff]
        %v8322 = vld [vmem:[#allocation4 + $0xd8] sm:$0xff]
        %v8323 = vld [vmem:[#allocation4 + $0xe0] sm:$0xff]
        %v8324 = vld [vmem:[#allocation4 + $0xe8] sm:$0xff]
        %v8325 = vld [vmem:[#allocation4 + $0xf0] sm:$0xff]
        %v8326 = vld [vmem:[#allocation4 + $0xf8] sm:$0xff]
        %v8327 = vld [vmem:[#allocation4 + $0x100] sm:$0xff]
        %v8328 = vld [vmem:[#allocation4 + $0x108] sm:$0xff]
        %v8329 = vld [vmem:[#allocation4 + $0x110] sm:$0xff]
        %v8330 = vld [vmem:[#allocation4 + $0x118] sm:$0xff]
        %v8331 = vld [vmem:[#allocation4 + $0x120] sm:$0xff]
        %v8332 = vld [vmem:[#allocation4 + $0x128] sm:$0xff]
        %v8333 = vld [vmem:[#allocation4 + $0x130] sm:$0xff]
        %v8334 = vld [vmem:[#allocation4 + $0x138] sm:$0xff]
        %v8335 = vld [vmem:[#allocation4 + $0x140] sm:$0xff]
        %v8336 = vld [vmem:[#allocation4 + $0x148] sm:$0xff]
        %v8337 = vld [vmem:[#allocation4 + $0x150] sm:$0xff]
        %v8338 = vld [vmem:[#allocation4 + $0x158] sm:$0xff]
        %v8339 = vld [vmem:[#allocation4 + $0x160] sm:$0xff]
        %v8340 = vld [vmem:[#allocation4 + $0x168] sm:$0xff]
        %v8341 = vld [vmem:[#allocation4 + $0x170] sm:$0xff]
        %v8342 = vld [vmem:[#allocation4 + $0x178] sm:$0xff]
        %v8343 = vld [vmem:[#allocation4 + $0x180] sm:$0xff]
        %v8344 = vld [vmem:[#allocation4 + $0x188] sm:$0xff]
        %v8345 = vld [vmem:[#allocation4 + $0x190] sm:$0xff]
        %v8346 = vld [vmem:[#allocation4 + $0x198] sm:$0xff]
        %v8347 = vld [vmem:[#allocation4 + $0x1a0] sm:$0xff]
        %v8348 = vld [vmem:[#allocation4 + $0x1a8] sm:$0xff]
        %v8349 = vld [vmem:[#allocation4 + $0x1b0] sm:$0xff]
        %v8350 = vld [vmem:[#allocation4 + $0x1b8] sm:$0xff]
        %v8351 = vld [vmem:[#allocation4 + $0x1c0] sm:$0xff]
        %v8352 = vld [vmem:[#allocation4 + $0x1c8] sm:$0xff]
        %v8353 = vld [vmem:[#allocation4 + $0x1d0] sm:$0xff]
        %v8354 = vld [vmem:[#allocation4 + $0x1d8] sm:$0xff]
        %v8355 = vld [vmem:[#allocation4 + $0x1e0] sm:$0xff]
        %v8356 = vld [vmem:[#allocation4 + $0x1e8] sm:$0xff]
        %v8357 = vld [vmem:[#allocation4 + $0x1f0] sm:$0xff]
        %v8358 = vld [vmem:[#allocation4 + $0x1f8] sm:$0xff]
        %v8359 = vld [vmem:[#allocation4 + $0x200] sm:$0xff]
        %v8360 = vld [vmem:[#allocation4 + $0x208] sm:$0xff]
        %v8361 = vld [vmem:[#allocation4 + $0x210] sm:$0xff]
        %v8362 = vld [vmem:[#allocation4 + $0x218] sm:$0xff]
        %v8363 = vld [vmem:[#allocation4 + $0x220] sm:$0xff]
        %v8364 = vld [vmem:[#allocation4 + $0x228] sm:$0xff]
        %v8365 = vld [vmem:[#allocation4 + $0x230] sm:$0xff]
        %v8366 = vld [vmem:[#allocation4 + $0x238] sm:$0xff]
        %v8367 = vld [vmem:[#allocation4 + $0x240] sm:$0xff]
        %v8368 = vld [vmem:[#allocation4 + $0x248] sm:$0xff]
        %v8369 = vld [vmem:[#allocation4 + $0x250] sm:$0xff]
        %v8370 = vld [vmem:[#allocation4 + $0x258] sm:$0xff]
        %v8371 = vld [vmem:[#allocation4 + $0x260] sm:$0xff]
        %v8372 = vld [vmem:[#allocation4 + $0x268] sm:$0xff]
        %v8373 = vld [vmem:[#allocation4 + $0x270] sm:$0xff]
        %v8374 = vld [vmem:[#allocation4 + $0x278] sm:$0xff]
        %v8375 = vld [vmem:[#allocation4 + $0x280] sm:$0xff]
        %v8376 = vld [vmem:[#allocation4 + $0x288] sm:$0xff]
        %v8377 = vld [vmem:[#allocation4 + $0x290] sm:$0xff]
        %v8378 = vld [vmem:[#allocation4 + $0x298] sm:$0xff]
        %v8379 = vld [vmem:[#allocation4 + $0x2a0] sm:$0xff]
        %v8380 = vld [vmem:[#allocation4 + $0x2a8] sm:$0xff]
        %v8381 = vld [vmem:[#allocation4 + $0x2b0] sm:$0xff]
        %v8382 = vld [vmem:[#allocation4 + $0x2b8] sm:$0xff]
        %v8383 = vld [vmem:[#allocation4 + $0x2c0] sm:$0xff]
        %v8384 = vld [vmem:[#allocation4 + $0x2c8] sm:$0xff]
        %v8385 = vld [vmem:[#allocation4 + $0x2d0] sm:$0xff]
        %v8386 = vld [vmem:[#allocation4 + $0x2d8] sm:$0xff]
        %v8387 = vld [vmem:[#allocation4 + $0x2e0] sm:$0xff]
        %v8388 = vld [vmem:[#allocation4 + $0x2e8] sm:$0xff]
        %v8389 = vld [vmem:[#allocation4 + $0x2f0] sm:$0xff]
        %v8390 = vld [vmem:[#allocation4 + $0x2f8] sm:$0xff]
        %v8391 = vld [vmem:[#allocation4 + $0x300] sm:$0xff]
        %v8392 = vld [vmem:[#allocation4 + $0x308] sm:$0xff]
        %v8393 = vld [vmem:[#allocation4 + $0x310] sm:$0xff]
        %v8394 = vld [vmem:[#allocation4 + $0x318] sm:$0xff]
        %v8395 = vld [vmem:[#allocation4 + $0x320] sm:$0xff]
        %v8396 = vld [vmem:[#allocation4 + $0x328] sm:$0xff]
        %v8397 = vld [vmem:[#allocation4 + $0x330] sm:$0xff]
        %v8398 = vld [vmem:[#allocation4 + $0x338] sm:$0xff]
        %v8399 = vld [vmem:[#allocation4 + $0x340] sm:$0xff]
        %v8400 = vld [vmem:[#allocation4 + $0x348] sm:$0xff]
        %v8401 = vld [vmem:[#allocation4 + $0x350] sm:$0xff]
        %v8402 = vld [vmem:[#allocation4 + $0x358] sm:$0xff]
        %v8403 = vld [vmem:[#allocation4 + $0x360] sm:$0xff]
        %v8404 = vld [vmem:[#allocation4 + $0x368] sm:$0xff]
        %v8405 = vld [vmem:[#allocation4 + $0x370] sm:$0xff]
        %v8406 = vld [vmem:[#allocation4 + $0x378] sm:$0xff]
        %v8407 = vld [vmem:[#allocation4 + $0x380] sm:$0xff]
        %v8408 = vld [vmem:[#allocation4 + $0x388] sm:$0xff]
        %v8409 = vld [vmem:[#allocation4 + $0x390] sm:$0xff]
        %v8410 = vld [vmem:[#allocation4 + $0x398] sm:$0xff]
        %v8411 = vld [vmem:[#allocation4 + $0x3a0] sm:$0xff]
        %v8412 = vld [vmem:[#allocation4 + $0x3a8] sm:$0xff]
        %v8413 = vld [vmem:[#allocation4 + $0x3b0] sm:$0xff]
        %v8414 = vld [vmem:[#allocation4 + $0x3b8] sm:$0xff]
        %v8415 = vld [vmem:[#allocation4 + $0x3c0] sm:$0xff]
        %v8416 = vld [vmem:[#allocation4 + $0x3c8] sm:$0xff]
        %v8417 = vld [vmem:[#allocation4 + $0x3d0] sm:$0xff]
        %v8418 = vld [vmem:[#allocation4 + $0x3d8] sm:$0xff]
        %v8419 = vld [vmem:[#allocation4 + $0x3e0] sm:$0xff]
        %v8420 = vld [vmem:[#allocation4 + $0x3e8] sm:$0xff]
        %v8421 = vld [vmem:[#allocation4 + $0x3f0] sm:$0xff]
        %v8422 = vld [vmem:[#allocation4 + $0x3f8] sm:$0xff]
        %8423 = vmatpush.msra.mxu0 %v8310
        %8424 = vmatpush.msra.mxu0 %v8309
        %8425 = vmatpush.msra.mxu0 %v8308
        %8426 = vmatpush.msra.mxu0 %v8307
        %8427 = vmatpush.msra.mxu0 %v8306
        %8428 = vmatpush.msra.mxu0 %v8305
        %8429 = vmatpush.msra.mxu0 %v8304
        %8430 = vmatpush.msra.mxu0 %v8303
        %8431 = vmatpush.msra.mxu0 %v8302
        %8432 = vmatpush.msra.mxu0 %v8301
        %8433 = vmatpush.msra.mxu0 %v8300
        %8434 = vmatpush.msra.mxu0 %v8299
        %8435 = vmatpush.msra.mxu0 %v8298
        %8436 = vmatpush.msra.mxu0 %v8297
        %8437 = vmatpush.msra.mxu0 %v8296
        %8438 = vmatpush.msra.mxu0 %v8295
        %8439 = vmatmul.f32.gmra.mxu0 %v8263
        %v8440 = vpop.f32.mrf.mxu0
        %v8441 = vadd.f32 0.0, %v8440
        %8442 = vmatmul.f32.gmra.mxu0 %v8271
        %v8443 = vpop.f32.mrf.mxu0
        %v8444 = vadd.f32 0.0, %v8443
        %8445 = vmatmul.f32.gmra.mxu0 %v8279
        %v8446 = vpop.f32.mrf.mxu0
        %v8447 = vadd.f32 0.0, %v8446
        %8448 = vmatmul.f32.gmra.mxu0 %v8287
        %v8449 = vpop.f32.mrf.mxu0
        %v8450 = vadd.f32 0.0, %v8449
        %8451 = vdwg.mxu0
        %8452 = vmatpush.msra.mxu0 %v8326
        %8453 = vmatpush.msra.mxu0 %v8325
        %8454 = vmatpush.msra.mxu0 %v8324
        %8455 = vmatpush.msra.mxu0 %v8323
        %8456 = vmatpush.msra.mxu0 %v8322
        %8457 = vmatpush.msra.mxu0 %v8321
        %8458 = vmatpush.msra.mxu0 %v8320
        %8459 = vmatpush.msra.mxu0 %v8319
        %8460 = vmatpush.msra.mxu0 %v8318
        %8461 = vmatpush.msra.mxu0 %v8317
        %8462 = vmatpush.msra.mxu0 %v8316
        %8463 = vmatpush.msra.mxu0 %v8315
        %8464 = vmatpush.msra.mxu0 %v8314
        %8465 = vmatpush.msra.mxu0 %v8313
        %8466 = vmatpush.msra.mxu0 %v8312
        %8467 = vmatpush.msra.mxu0 %v8311
        %8468 = vmatmul.f32.gmra.mxu0 %v8264
        %v8469 = vpop.f32.mrf.mxu0
        %v8470 = vadd.f32 %v8441, %v8469
        %8471 = vmatmul.f32.gmra.mxu0 %v8272
        %v8472 = vpop.f32.mrf.mxu0
        %v8473 = vadd.f32 %v8444, %v8472
        %8474 = vmatmul.f32.gmra.mxu0 %v8280
        %v8475 = vpop.f32.mrf.mxu0
        %v8476 = vadd.f32 %v8447, %v8475
        %8477 = vmatmul.f32.gmra.mxu0 %v8288
        %v8478 = vpop.f32.mrf.mxu0
        %v8479 = vadd.f32 %v8450, %v8478
        %8480 = vdwg.mxu0
        %8481 = vmatpush.msra.mxu0 %v8342
        %8482 = vmatpush.msra.mxu0 %v8341
        %8483 = vmatpush.msra.mxu0 %v8340
        %8484 = vmatpush.msra.mxu0 %v8339
        %8485 = vmatpush.msra.mxu0 %v8338
        %8486 = vmatpush.msra.mxu0 %v8337
        %8487 = vmatpush.msra.mxu0 %v8336
        %8488 = vmatpush.msra.mxu0 %v8335
        %8489 = vmatpush.msra.mxu0 %v8334
        %8490 = vmatpush.msra.mxu0 %v8333
        %8491 = vmatpush.msra.mxu0 %v8332
        %8492 = vmatpush.msra.mxu0 %v8331
        %8493 = vmatpush.msra.mxu0 %v8330
        %8494 = vmatpush.msra.mxu0 %v8329
        %8495 = vmatpush.msra.mxu0 %v8328
        %8496 = vmatpush.msra.mxu0 %v8327
        %8497 = vmatmul.f32.gmra.mxu0 %v8265
        %v8498 = vpop.f32.mrf.mxu0
        %v8499 = vadd.f32 %v8470, %v8498
        %8500 = vmatmul.f32.gmra.mxu0 %v8273
        %v8501 = vpop.f32.mrf.mxu0
        %v8502 = vadd.f32 %v8473, %v8501
        %8503 = vmatmul.f32.gmra.mxu0 %v8281
        %v8504 = vpop.f32.mrf.mxu0
        %v8505 = vadd.f32 %v8476, %v8504
        %8506 = vmatmul.f32.gmra.mxu0 %v8289
        %v8507 = vpop.f32.mrf.mxu0
        %v8508 = vadd.f32 %v8479, %v8507
        %8509 = vdwg.mxu0
        %8510 = vmatpush.msra.mxu0 %v8358
        %8511 = vmatpush.msra.mxu0 %v8357
        %8512 = vmatpush.msra.mxu0 %v8356
        %8513 = vmatpush.msra.mxu0 %v8355
        %8514 = vmatpush.msra.mxu0 %v8354
        %8515 = vmatpush.msra.mxu0 %v8353
        %8516 = vmatpush.msra.mxu0 %v8352
        %8517 = vmatpush.msra.mxu0 %v8351
        %8518 = vmatpush.msra.mxu0 %v8350
        %8519 = vmatpush.msra.mxu0 %v8349
        %8520 = vmatpush.msra.mxu0 %v8348
        %8521 = vmatpush.msra.mxu0 %v8347
        %8522 = vmatpush.msra.mxu0 %v8346
        %8523 = vmatpush.msra.mxu0 %v8345
        %8524 = vmatpush.msra.mxu0 %v8344
        %8525 = vmatpush.msra.mxu0 %v8343
        %8526 = vmatmul.f32.gmra.mxu0 %v8266
        %v8527 = vpop.f32.mrf.mxu0
        %v8528 = vadd.f32 %v8499, %v8527
        %8529 = vmatmul.f32.gmra.mxu0 %v8274
        %v8530 = vpop.f32.mrf.mxu0
        %v8531 = vadd.f32 %v8502, %v8530
        %8532 = vmatmul.f32.gmra.mxu0 %v8282
        %v8533 = vpop.f32.mrf.mxu0
        %v8534 = vadd.f32 %v8505, %v8533
        %8535 = vmatmul.f32.gmra.mxu0 %v8290
        %v8536 = vpop.f32.mrf.mxu0
        %v8537 = vadd.f32 %v8508, %v8536
        %8538 = vdwg.mxu0
        %8539 = vmatpush.msra.mxu0 %v8374
        %8540 = vmatpush.msra.mxu0 %v8373
        %8541 = vmatpush.msra.mxu0 %v8372
        %8542 = vmatpush.msra.mxu0 %v8371
        %8543 = vmatpush.msra.mxu0 %v8370
        %8544 = vmatpush.msra.mxu0 %v8369
        %8545 = vmatpush.msra.mxu0 %v8368
        %8546 = vmatpush.msra.mxu0 %v8367
        %8547 = vmatpush.msra.mxu0 %v8366
        %8548 = vmatpush.msra.mxu0 %v8365
        %8549 = vmatpush.msra.mxu0 %v8364
        %8550 = vmatpush.msra.mxu0 %v8363
        %8551 = vmatpush.msra.mxu0 %v8362
        %8552 = vmatpush.msra.mxu0 %v8361
        %8553 = vmatpush.msra.mxu0 %v8360
        %8554 = vmatpush.msra.mxu0 %v8359
        %8555 = vmatmul.f32.gmra.mxu0 %v8267
        %v8556 = vpop.f32.mrf.mxu0
        %v8557 = vadd.f32 %v8528, %v8556
        %8558 = vmatmul.f32.gmra.mxu0 %v8275
        %v8559 = vpop.f32.mrf.mxu0
        %v8560 = vadd.f32 %v8531, %v8559
        %8561 = vmatmul.f32.gmra.mxu0 %v8283
        %v8562 = vpop.f32.mrf.mxu0
        %v8563 = vadd.f32 %v8534, %v8562
        %8564 = vmatmul.f32.gmra.mxu0 %v8291
        %v8565 = vpop.f32.mrf.mxu0
        %v8566 = vadd.f32 %v8537, %v8565
        %8567 = vdwg.mxu0
        %8568 = vmatpush.msra.mxu0 %v8390
        %8569 = vmatpush.msra.mxu0 %v8389
        %8570 = vmatpush.msra.mxu0 %v8388
        %8571 = vmatpush.msra.mxu0 %v8387
        %8572 = vmatpush.msra.mxu0 %v8386
        %8573 = vmatpush.msra.mxu0 %v8385
        %8574 = vmatpush.msra.mxu0 %v8384
        %8575 = vmatpush.msra.mxu0 %v8383
        %8576 = vmatpush.msra.mxu0 %v8382
        %8577 = vmatpush.msra.mxu0 %v8381
        %8578 = vmatpush.msra.mxu0 %v8380
        %8579 = vmatpush.msra.mxu0 %v8379
        %8580 = vmatpush.msra.mxu0 %v8378
        %8581 = vmatpush.msra.mxu0 %v8377
        %8582 = vmatpush.msra.mxu0 %v8376
        %8583 = vmatpush.msra.mxu0 %v8375
        %8584 = vmatmul.f32.gmra.mxu0 %v8268
        %v8585 = vpop.f32.mrf.mxu0
        %v8586 = vadd.f32 %v8557, %v8585
        %8587 = vmatmul.f32.gmra.mxu0 %v8276
        %v8588 = vpop.f32.mrf.mxu0
        %v8589 = vadd.f32 %v8560, %v8588
        %8590 = vmatmul.f32.gmra.mxu0 %v8284
        %v8591 = vpop.f32.mrf.mxu0
        %v8592 = vadd.f32 %v8563, %v8591
        %8593 = vmatmul.f32.gmra.mxu0 %v8292
        %v8594 = vpop.f32.mrf.mxu0
        %v8595 = vadd.f32 %v8566, %v8594
        %8596 = vdwg.mxu0
        %8597 = vmatpush.msra.mxu0 %v8406
        %8598 = vmatpush.msra.mxu0 %v8405
        %8599 = vmatpush.msra.mxu0 %v8404
        %8600 = vmatpush.msra.mxu0 %v8403
        %8601 = vmatpush.msra.mxu0 %v8402
        %8602 = vmatpush.msra.mxu0 %v8401
        %8603 = vmatpush.msra.mxu0 %v8400
        %8604 = vmatpush.msra.mxu0 %v8399
        %8605 = vmatpush.msra.mxu0 %v8398
        %8606 = vmatpush.msra.mxu0 %v8397
        %8607 = vmatpush.msra.mxu0 %v8396
        %8608 = vmatpush.msra.mxu0 %v8395
        %8609 = vmatpush.msra.mxu0 %v8394
        %8610 = vmatpush.msra.mxu0 %v8393
        %8611 = vmatpush.msra.mxu0 %v8392
        %8612 = vmatpush.msra.mxu0 %v8391
        %8613 = vmatmul.f32.gmra.mxu0 %v8269
        %v8614 = vpop.f32.mrf.mxu0
        %v8615 = vadd.f32 %v8586, %v8614
        %8616 = vmatmul.f32.gmra.mxu0 %v8277
        %v8617 = vpop.f32.mrf.mxu0
        %v8618 = vadd.f32 %v8589, %v8617
        %8619 = vmatmul.f32.gmra.mxu0 %v8285
        %v8620 = vpop.f32.mrf.mxu0
        %v8621 = vadd.f32 %v8592, %v8620
        %8622 = vmatmul.f32.gmra.mxu0 %v8293
        %v8623 = vpop.f32.mrf.mxu0
        %v8624 = vadd.f32 %v8595, %v8623
        %8625 = vdwg.mxu0
        %8626 = vmatpush.msra.mxu0 %v8422
        %8627 = vmatpush.msra.mxu0 %v8421
        %8628 = vmatpush.msra.mxu0 %v8420
        %8629 = vmatpush.msra.mxu0 %v8419
        %8630 = vmatpush.msra.mxu0 %v8418
        %8631 = vmatpush.msra.mxu0 %v8417
        %8632 = vmatpush.msra.mxu0 %v8416
        %8633 = vmatpush.msra.mxu0 %v8415
        %8634 = vmatpush.msra.mxu0 %v8414
        %8635 = vmatpush.msra.mxu0 %v8413
        %8636 = vmatpush.msra.mxu0 %v8412
        %8637 = vmatpush.msra.mxu0 %v8411
        %8638 = vmatpush.msra.mxu0 %v8410
        %8639 = vmatpush.msra.mxu0 %v8409
        %8640 = vmatpush.msra.mxu0 %v8408
        %8641 = vmatpush.msra.mxu0 %v8407
        %8642 = vmatmul.f32.gmra.mxu0 %v8270
        %v8643 = vpop.f32.mrf.mxu0
        %v8644 = vadd.f32 %v8615, %v8643
        %8645 = vmatmul.f32.gmra.mxu0 %v8278
        %v8646 = vpop.f32.mrf.mxu0
        %v8647 = vadd.f32 %v8618, %v8646
        %8648 = vmatmul.f32.gmra.mxu0 %v8286
        %v8649 = vpop.f32.mrf.mxu0
        %v8650 = vadd.f32 %v8621, %v8649
        %8651 = vmatmul.f32.gmra.mxu0 %v8294
        %v8652 = vpop.f32.mrf.mxu0
        %v8653 = vadd.f32 %v8624, %v8652
        %8654 = vdwg.mxu0
        %v8655 = vperm.slane %v8261, 0
        %v8656 = vmul.f32 %v8644, %v8655
        %v8657 = vmul.f32 %v8647, %v8655
        %v8658 = vmul.f32 %v8650, %v8655
        %v8659 = vmul.f32 %v8653, %v8655
        %v8660 = vperm.slane %v8262, 0
        %v8661 = vadd.f32 %v8656, %v8660
        %v8662 = vadd.f32 %v8657, %v8660
        %v8663 = vadd.f32 %v8658, %v8660
        %v8664 = vadd.f32 %v8659, %v8660
        %8665 = vst [vmem:[%s300] sm:$0xff] %v8661
        %8666 = vst [vmem:[%s300 + $0x8] sm:$0xff] %v8662
        %8667 = vst [vmem:[%s300 + $0x10] sm:$0xff] %v8663
        %8668 = vst [vmem:[%s300 + $0x18] sm:$0xff] %v8664
        %s8669 = smul.u32 4, %s19
        %p8670 = scmp.lt.s32.totalorder %s8669, 7
        %s8671 = scalar_select %p8670, %s8669, 7
        %s8672 = smul.addr %s8671, 8
        %s8673 = scalar_lea.vmem %s7, %s8672
        // Predicated region
        $region53: #{middlecut_forward.1} parent=47 // pred_check
          %p8674 = pneg %p189
        $region54: #{middlecut_forward.1} parent=47 // pred_check_branch
          %8676 = sbr.rel (%p8674) target = $region56
        $region55: #{middlecut_forward.1} parent=47 // pred_region
          %s8677 = smul.u32 4, %s19
        $region56: #{middlecut_forward.1} parent=47 // pred_fallthru
          _
      $region48: #{middlecut_forward.1} parent=5 // pred_fallthru
        _
      %p8678 = scmp.le.s32.totalorder 2, %s14
      // Predicated region
      $region57: #{middlecut_forward.1} parent=5 // pred_check
        %p8679 = pneg %p8678
      $region58: #{middlecut_forward.1} parent=5 // pred_check_branch
        %8681 = sbr.rel (%p8679) target = $region60
      $region59: #{middlecut_forward.1} parent=5 // pred_region
        %s8682 = ssub.s32 %s14, 2
        // Predicated region
        $region61: #{middlecut_forward.1} parent=59 // pred_check
          %p8683 = pneg %p195
        $region62: #{middlecut_forward.1} parent=59 // pred_check_branch
          %8685 = sbr.rel (%p8683) target = $region64
        $region63: #{middlecut_forward.1} parent=59 // pred_region
          %s8686 = smul.u32 4, %s20
          %p8687 = scmp.lt.s32.totalorder %s8686, 7
          %s8688 = scalar_select %p8687, %s8686, 7
          %s8689 = smul.addr %s8688, 8
          %s8690 = scalar_lea.vmem %s7, %s8689
        $region64: #{middlecut_forward.1} parent=59 // pred_fallthru
          _
      $region60: #{middlecut_forward.1} parent=5 // pred_fallthru
        _
    $region6: #{middlecut_forward.1} parent=1 // loop_footer
      %s18 = sadd.s32 1, %s14
    $region7: #{middlecut_forward.1} parent=1 // loop_footer_branch
      %13 = sbr.rel target = $region3
    $region8: #{middlecut_forward.1} parent=1 // loop_exit
      _
    %8691 = vsyncpa [#allocation5], 1
    %s8692 = scalar_lea.sflag [#allocation5], 1
    %8693 = vsyncpa %s8692, 1

</llo_original>
